<compile_context>
chip_gen: v5e
topology: v5e:2x2
jax: 0.10.0
libtpu: 0.0.40
codegen_flags: <defaults>
</compile_context>

<pallas_src>
import jax
import jax.numpy as jnp
from jax import lax
from jax.experimental import pallas as pl
from jax.experimental.pallas import tpu as pltpu

EPS = 1e-5  # F.instance_norm default eps


# ---------------------------------------------------------------------------
# Fused conv(3x3) + bias + instance-norm + ReLU kernel (one per layer).
# ---------------------------------------------------------------------------
def _make_conv_kernel(taps, has_input_norm, in_count, out_count):
    """taps: tuple of (phase_index, flat_offset) -- static per layer."""
    inv_in = 0.0 if in_count is None else 1.0 / float(in_count)
    inv_out = 1.0 / float(out_count)

    def kernel(*refs):
        if has_input_norm:
            x_ref, w_ref, b_ref, inmask_ref, outmask_ref, o_ref = refs
        else:
            x_ref, w_ref, b_ref, outmask_ref, o_ref = refs
            inmask_ref = None
        n_phases = x_ref.shape[1]
        cout, lout = o_ref.shape[1], o_ref.shape[2]

        # Load each phase once; optionally fuse the leading instance norm
        # (stats over the central, un-padded region only).
        phases = []
        for p in range(n_phases):
            xp = x_ref[0, p]                                   # (Cin, Lin) f32
            if has_input_norm:
                m = inmask_ref[...]                            # (1, Lin) f32
                s = jnp.sum(xp * m, axis=1, keepdims=True)
                ss = jnp.sum(xp * xp * m, axis=1, keepdims=True)
                mean = s * inv_in
                var = jnp.maximum(ss * inv_in - mean * mean, 0.0)
                xp = (xp - mean) * lax.rsqrt(var + EPS)
            phases.append(xp.astype(jnp.bfloat16))             # bf16 MXU input

        # In-kernel im2col: 9 contiguous shifted slices, one small matmul each,
        # accumulated in f32 (never materializes a 9x patch tensor anywhere).
        acc = jnp.zeros((cout, lout), jnp.float32)
        for t, (p, off) in enumerate(taps):
            patch = phases[p][:, off:off + lout]               # (Cin, Lout) bf16
            acc = acc + jnp.dot(w_ref[t], patch,
                                preferred_element_type=jnp.float32)
        acc = acc + b_ref[...]                                 # (Cout, 1) bias

        # One-pass instance-norm stats over valid columns only, then ReLU.
        m = outmask_ref[...]                                   # (1, Lout) f32
        s = jnp.sum(acc * m, axis=1, keepdims=True)
        ss = jnp.sum(acc * acc * m, axis=1, keepdims=True)
        mean = s * inv_out
        var = jnp.maximum(ss * inv_out - mean * mean, 0.0)
        y = (acc - mean) * lax.rsqrt(var + EPS)
        o_ref[0] = jnp.maximum(y, 0.0)

    return kernel


def _conv_in_relu_layer(x_phases, w9, bias, taps, lout, out_mask, out_count,
                        in_mask=None, in_count=None):
    """x_phases: (N, n_phases, Cin, Lin) f32; w9: (9, Cout, Cin) bf16."""
    n, n_ph, cin, lin = x_phases.shape
    cout = w9.shape[1]
    kernel = _make_conv_kernel(taps, in_mask is not None, in_count, out_count)

    inputs = [x_phases, w9, bias]
    in_specs = [
        pl.BlockSpec((1, n_ph, cin, lin), lambda i: (i, 0, 0, 0)),
        pl.BlockSpec((9, cout, cin), lambda i: (0, 0, 0)),   # weights resident
        pl.BlockSpec((cout, 1), lambda i: (0, 0)),
    ]
    if in_mask is not None:
        inputs.append(in_mask)
        in_specs.append(pl.BlockSpec((1, lin), lambda i: (0, 0)))
    inputs.append(out_mask)
    in_specs.append(pl.BlockSpec((1, lout), lambda i: (0, 0)))

    return pl.pallas_call(
        kernel,
        out_shape=jax.ShapeDtypeStruct((n, cout, lout), jnp.float32),
        grid=(n,),
        in_specs=in_specs,
        out_specs=pl.BlockSpec((1, cout, lout), lambda i: (i, 0, 0)),
        compiler_params=pltpu.CompilerParams(
            dimension_semantics=("parallel",),      # >=2 steps: feeds both v7x TCs
            vmem_limit_bytes=32 * 1024 * 1024),
    )(*inputs)


# ---------------------------------------------------------------------------
# XLA-side glue (all tiny, ~activation-sized; no 9x blow-up, no transposes).
# ---------------------------------------------------------------------------
def _fold_weight(w):
    # (Cout, Cin, 3, 3) -> (9, Cout, Cin), tap index t = ky*3 + kx, bf16.
    cout, cin = w.shape[0], w.shape[1]
    return jnp.transpose(w, (2, 3, 0, 1)).reshape(9, cout, cin).astype(jnp.bfloat16)


def _space_to_depth(xv):
    """(N, C, Hv, Wv) -> (N, 4, C, Hh*Wh) phase view for a stride-2 conv."""
    n, c, hv, wv = xv.shape
    he, we = hv + (hv % 2), wv + (wv % 2)
    xp = jnp.pad(xv, ((0, 0), (0, 0), (0, he - hv), (0, we - wv)))
    hh, wh = he // 2, we // 2
    xp = xp.reshape(n, c, hh, 2, wh, 2)
    xp = jnp.transpose(xp, (0, 3, 5, 1, 2, 4))      # (N, py, px, C, Hh, Wh)
    return xp.reshape(n, 4, c, hh * wh), hh, wh


def _valid_mask(lout, pitch, wo):
    m = (jnp.arange(lout, dtype=jnp.int32) % pitch) < wo
    return m.astype(jnp.float32).reshape(1, lout)


def encoder_forward(x_nchw, params):
    """Forward pass equivalent to encoder.forward. Input/output NCHW."""
    x = x_nchw.astype(jnp.float32)
    n, c0, h0, w0 = x.shape

    # Reflect pad once up front (the leading instance norm is fused into the
    # first conv kernel, computed over the central un-padded region).
    xpad = jnp.pad(x, ((0, 0), (0, 0), (15, 15), (15, 15)), mode="reflect")
    hp, wp = h0 + 30, w0 + 30

    # ---------------- layer 1: 3x3, stride 1 ----------------
    w1, b1 = params[0]
    cin, cout = w1.shape[1], w1.shape[0]
    ho, wo = hp - 2, wp - 2
    pitch = wp
    lout = ho * pitch
    taps = tuple((0, ky * pitch + kx) for ky in range(3) for kx in range(3))
    lraw = hp * wp
    lin = max(lraw, max(off for _, off in taps) + lout)
    xf = jnp.pad(xpad.reshape(n, 1, cin, lraw),
                 ((0, 0), (0, 0), (0, 0), (0, lin - lraw)))
    idx = jnp.arange(lin, dtype=jnp.int32)
    row, col = idx // pitch, idx % pitch
    in_mask = ((row >= 15) & (row < 15 + h0) & (col >= 15) & (col < 15 + w0))
    in_mask = in_mask.astype(jnp.float32).reshape(1, lin)

    y = _conv_in_relu_layer(
        xf, _fold_weight(w1), b1.reshape(cout, 1).astype(jnp.float32),
        taps, lout, _valid_mask(lout, pitch, wo), ho * wo,
        in_mask=in_mask, in_count=h0 * w0)
    hv, wv, pitch_prev = ho, wo, pitch

    # ------------- layers 2..5: 3x3, stride 2 ---------------
    for w, b in params[1:]:
        cin, cout = w.shape[1], w.shape[0]
        xv = y.reshape(n, cin, hv, pitch_prev)[:, :, :, :wv]    # valid region
        xph, hh, wh = _space_to_depth(xv)
        ho, wo = (hv - 3) // 2 + 1, (wv - 3) // 2 + 1
        pitch = wh
        lout = ho * pitch
        taps = tuple(((ky % 2) * 2 + (kx % 2), (ky // 2) * pitch + (kx // 2))
                     for ky in range(3) for kx in range(3))
        lraw = hh * wh
        lin = max(lraw, max(off for _, off in taps) + lout)
        xph = jnp.pad(xph, ((0, 0), (0, 0), (0, 0), (0, lin - lraw)))

        y = _conv_in_relu_layer(
            xph, _fold_weight(w), b.reshape(cout, 1).astype(jnp.float32),
            taps, lout, _valid_mask(lout, pitch, wo), ho * wo)
        hv, wv, pitch_prev = ho, wo, pitch

    # strip the wide-row padding -> NCHW output
    return y.reshape(n, -1, hv, pitch_prev)[:, :, :, :wv]


# ---------------------------------------------------------------------------
# Deterministic parameter construction (synthetic, no checkpoint load)
# ---------------------------------------------------------------------------
def make_params(key, dim, gf_dim):
    layer_io = [
        (dim, gf_dim),
        (gf_dim, gf_dim),
        (gf_dim, gf_dim * 2),
        (gf_dim * 2, gf_dim * 4),
        (gf_dim * 4, gf_dim * 8),
    ]
    params = []
    for cin, cout in layer_io:
        key, kw, kb = jax.random.split(key, 3)
        w = 0.1 * jax.random.normal(kw, (cout, cin, 3, 3), jnp.float32)
        b = 0.1 * jax.random.normal(kb, (cout,), jnp.float32)
        params.append((w, b))
    return params


if __name__ == "__main__":
    # options.dim = 4, options.gf_dim = 8; batch=2, spatial=20 (pad 15 needs >15)
    dim, gf_dim = 4, 8
    key = jax.random.PRNGKey(0)
    key, kx = jax.random.split(key)
    x = jax.random.normal(kx, (2, dim, 20, 20), jnp.float32)   # NCHW input
    params = make_params(key, dim, gf_dim)

    out = jax.jit(encoder_forward)(x, params)
    out = jax.block_until_ready(out)

    # sanity: 20 -> pad 50 -> 48 -> 23 -> 11 -> 5 -> 2, channels gf_dim*8
    assert out.shape == (2, gf_dim * 8, 2, 2), out.shape
    assert bool(jnp.all(jnp.isfinite(out)))
    print("KERNEL_OK")
</pallas_src>

<mosaic_0001>
module attributes {stable_mosaic.version = 11 : i64} {
  func.func @kernel(%arg0: i32, %arg1: memref<1x1x4x2502xf32, #tpu.memory_space<vmem>>, %arg2: memref<9x8x4xbf16, #tpu.memory_space<vmem>>, %arg3: memref<8x1xf32, #tpu.memory_space<vmem>>, %arg4: memref<1x2502xf32, #tpu.memory_space<vmem>>, %arg5: memref<1x2400xf32, #tpu.memory_space<vmem>>, %arg6: memref<1x8x2400xf32, #tpu.memory_space<vmem>>) attributes {dimension_semantics = [#tpu.dimension_semantics<parallel>], iteration_bounds = array<i64: 2>, scalar_prefetch = 0 : i64, scratch_operands = 0 : i64, tpu.core_type = #tpu.core_type<tc>, window_params = [{transform_indices = @transform_0, window_bounds = array<i64: 1, 1, 4, 2502>}, {pipeline_mode = #tpu.pipeline_mode<synchronous>, transform_indices = @transform_1, window_bounds = array<i64: 9, 8, 4>}, {pipeline_mode = #tpu.pipeline_mode<synchronous>, transform_indices = @transform_2, window_bounds = array<i64: 8, 1>}, {pipeline_mode = #tpu.pipeline_mode<synchronous>, transform_indices = @transform_3, window_bounds = array<i64: 1, 2502>}, {pipeline_mode = #tpu.pipeline_mode<synchronous>, transform_indices = @transform_4, window_bounds = array<i64: 1, 2400>}, {transform_indices = @transform_5, window_bounds = array<i64: 1, 8, 2400>}]} {
    %c0 = arith.constant 0 : index
    %c0_0 = arith.constant 0 : index
    %c0_1 = arith.constant 0 : index
    %c0_2 = arith.constant 0 : index
    %0 = vector.load %arg1[%c0, %c0_0, %c0_1, %c0_2] : memref<1x1x4x2502xf32, #tpu.memory_space<vmem>>, vector<1x1x4x2502xf32>
    %1 = vector.shape_cast %0 : vector<1x1x4x2502xf32> to vector<4x2502xf32>
    %c0_3 = arith.constant 0 : index
    %c0_4 = arith.constant 0 : index
    %2 = vector.load %arg4[%c0_3, %c0_4] : memref<1x2502xf32, #tpu.memory_space<vmem>>, vector<1x2502xf32>
    %3 = vector.broadcast %2 : vector<1x2502xf32> to vector<4x2502xf32>
    %4 = arith.mulf %1, %3 : vector<4x2502xf32>
    %cst = arith.constant dense<0.000000e+00> : vector<4xf32>
    %5 = vector.multi_reduction <add>, %4, %cst [1] : vector<4x2502xf32> to vector<4xf32>
    %6 = vector.shape_cast %5 : vector<4xf32> to vector<4x1xf32>
    %7 = arith.mulf %1, %1 : vector<4x2502xf32>
    %8 = vector.broadcast %2 : vector<1x2502xf32> to vector<4x2502xf32>
    %9 = arith.mulf %7, %8 : vector<4x2502xf32>
    %cst_5 = arith.constant dense<0.000000e+00> : vector<4xf32>
    %10 = vector.multi_reduction <add>, %9, %cst_5 [1] : vector<4x2502xf32> to vector<4xf32>
    %11 = vector.shape_cast %10 : vector<4xf32> to vector<4x1xf32>
    %cst_6 = arith.constant 2.500000e-03 : f32
    %12 = vector.broadcast %cst_6 : f32 to vector<4x1xf32>
    %13 = arith.mulf %6, %12 : vector<4x1xf32>
    %cst_7 = arith.constant 2.500000e-03 : f32
    %14 = vector.broadcast %cst_7 : f32 to vector<4x1xf32>
    %15 = arith.mulf %11, %14 : vector<4x1xf32>
    %16 = arith.mulf %13, %13 : vector<4x1xf32>
    %17 = arith.subf %15, %16 : vector<4x1xf32>
    %cst_8 = arith.constant 0.000000e+00 : f32
    %18 = vector.broadcast %cst_8 : f32 to vector<4x1xf32>
    %19 = arith.maximumf %17, %18 : vector<4x1xf32>
    %20 = vector.broadcast %13 : vector<4x1xf32> to vector<4x2502xf32>
    %21 = arith.subf %1, %20 : vector<4x2502xf32>
    %cst_9 = arith.constant 9.99999974E-6 : f32
    %22 = vector.broadcast %cst_9 : f32 to vector<4x1xf32>
    %23 = arith.addf %19, %22 : vector<4x1xf32>
    %24 = math.rsqrt %23 : vector<4x1xf32>
    %25 = vector.broadcast %24 : vector<4x1xf32> to vector<4x2502xf32>
    %26 = arith.mulf %21, %25 : vector<4x2502xf32>
    %27 = arith.truncf %26 : vector<4x2502xf32> to vector<4x2502xbf16>
    %cst_10 = arith.constant 0.000000e+00 : f32
    %28 = vector.broadcast %cst_10 : f32 to vector<8x2400xf32>
    %29 = vector.extract_strided_slice %27 {offsets = [0, 0], sizes = [4, 2400], strides = [1, 1]} : vector<4x2502xbf16> to vector<4x2400xbf16>
    %c0_11 = arith.constant 0 : index
    %c0_12 = arith.constant 0 : index
    %c0_13 = arith.constant 0 : index
    %30 = vector.load %arg2[%c0_11, %c0_12, %c0_13] : memref<9x8x4xbf16, #tpu.memory_space<vmem>>, vector<1x8x4xbf16>
    %31 = vector.shape_cast %30 : vector<1x8x4xbf16> to vector<8x4xbf16>
    %cst_14 = arith.constant dense<0.000000e+00> : vector<8x2400xf32>
    %32 = tpu.matmul %31, %29, %cst_14 {dimension_numbers = #tpu.dot_dimension_numbers<[1], [0], [0], [1], [0, 0, 1, 1], [], []>} : vector<8x4xbf16>, vector<4x2400xbf16>, vector<8x2400xf32> -> vector<8x2400xf32>
    %33 = arith.addf %28, %32 : vector<8x2400xf32>
    %34 = vector.extract_strided_slice %27 {offsets = [0, 1], sizes = [4, 2400], strides = [1, 1]} : vector<4x2502xbf16> to vector<4x2400xbf16>
    %c1 = arith.constant 1 : index
    %c0_15 = arith.constant 0 : index
    %c0_16 = arith.constant 0 : index
    %35 = vector.load %arg2[%c1, %c0_15, %c0_16] : memref<9x8x4xbf16, #tpu.memory_space<vmem>>, vector<1x8x4xbf16>
    %36 = vector.shape_cast %35 : vector<1x8x4xbf16> to vector<8x4xbf16>
    %cst_17 = arith.constant dense<0.000000e+00> : vector<8x2400xf32>
    %37 = tpu.matmul %36, %34, %cst_17 {dimension_numbers = #tpu.dot_dimension_numbers<[1], [0], [0], [1], [0, 0, 1, 1], [], []>} : vector<8x4xbf16>, vector<4x2400xbf16>, vector<8x2400xf32> -> vector<8x2400xf32>
    %38 = arith.addf %33, %37 : vector<8x2400xf32>
    %39 = vector.extract_strided_slice %27 {offsets = [0, 2], sizes = [4, 2400], strides = [1, 1]} : vector<4x2502xbf16> to vector<4x2400xbf16>
    %c2 = arith.constant 2 : index
    %c0_18 = arith.constant 0 : index
    %c0_19 = arith.constant 0 : index
    %40 = vector.load %arg2[%c2, %c0_18, %c0_19] : memref<9x8x4xbf16, #tpu.memory_space<vmem>>, vector<1x8x4xbf16>
    %41 = vector.shape_cast %40 : vector<1x8x4xbf16> to vector<8x4xbf16>
    %cst_20 = arith.constant dense<0.000000e+00> : vector<8x2400xf32>
    %42 = tpu.matmul %41, %39, %cst_20 {dimension_numbers = #tpu.dot_dimension_numbers<[1], [0], [0], [1], [0, 0, 1, 1], [], []>} : vector<8x4xbf16>, vector<4x2400xbf16>, vector<8x2400xf32> -> vector<8x2400xf32>
    %43 = arith.addf %38, %42 : vector<8x2400xf32>
    %44 = vector.extract_strided_slice %27 {offsets = [0, 50], sizes = [4, 2400], strides = [1, 1]} : vector<4x2502xbf16> to vector<4x2400xbf16>
    %c3 = arith.constant 3 : index
    %c0_21 = arith.constant 0 : index
    %c0_22 = arith.constant 0 : index
    %45 = vector.load %arg2[%c3, %c0_21, %c0_22] : memref<9x8x4xbf16, #tpu.memory_space<vmem>>, vector<1x8x4xbf16>
    %46 = vector.shape_cast %45 : vector<1x8x4xbf16> to vector<8x4xbf16>
    %cst_23 = arith.constant dense<0.000000e+00> : vector<8x2400xf32>
    %47 = tpu.matmul %46, %44, %cst_23 {dimension_numbers = #tpu.dot_dimension_numbers<[1], [0], [0], [1], [0, 0, 1, 1], [], []>} : vector<8x4xbf16>, vector<4x2400xbf16>, vector<8x2400xf32> -> vector<8x2400xf32>
    %48 = arith.addf %43, %47 : vector<8x2400xf32>
    %49 = vector.extract_strided_slice %27 {offsets = [0, 51], sizes = [4, 2400], strides = [1, 1]} : vector<4x2502xbf16> to vector<4x2400xbf16>
    %c4 = arith.constant 4 : index
    %c0_24 = arith.constant 0 : index
    %c0_25 = arith.constant 0 : index
    %50 = vector.load %arg2[%c4, %c0_24, %c0_25] : memref<9x8x4xbf16, #tpu.memory_space<vmem>>, vector<1x8x4xbf16>
    %51 = vector.shape_cast %50 : vector<1x8x4xbf16> to vector<8x4xbf16>
    %cst_26 = arith.constant dense<0.000000e+00> : vector<8x2400xf32>
    %52 = tpu.matmul %51, %49, %cst_26 {dimension_numbers = #tpu.dot_dimension_numbers<[1], [0], [0], [1], [0, 0, 1, 1], [], []>} : vector<8x4xbf16>, vector<4x2400xbf16>, vector<8x2400xf32> -> vector<8x2400xf32>
    %53 = arith.addf %48, %52 : vector<8x2400xf32>
    %54 = vector.extract_strided_slice %27 {offsets = [0, 52], sizes = [4, 2400], strides = [1, 1]} : vector<4x2502xbf16> to vector<4x2400xbf16>
    %c5 = arith.constant 5 : index
    %c0_27 = arith.constant 0 : index
    %c0_28 = arith.constant 0 : index
    %55 = vector.load %arg2[%c5, %c0_27, %c0_28] : memref<9x8x4xbf16, #tpu.memory_space<vmem>>, vector<1x8x4xbf16>
    %56 = vector.shape_cast %55 : vector<1x8x4xbf16> to vector<8x4xbf16>
    %cst_29 = arith.constant dense<0.000000e+00> : vector<8x2400xf32>
    %57 = tpu.matmul %56, %54, %cst_29 {dimension_numbers = #tpu.dot_dimension_numbers<[1], [0], [0], [1], [0, 0, 1, 1], [], []>} : vector<8x4xbf16>, vector<4x2400xbf16>, vector<8x2400xf32> -> vector<8x2400xf32>
    %58 = arith.addf %53, %57 : vector<8x2400xf32>
    %59 = vector.extract_strided_slice %27 {offsets = [0, 100], sizes = [4, 2400], strides = [1, 1]} : vector<4x2502xbf16> to vector<4x2400xbf16>
    %c6 = arith.constant 6 : index
    %c0_30 = arith.constant 0 : index
    %c0_31 = arith.constant 0 : index
    %60 = vector.load %arg2[%c6, %c0_30, %c0_31] : memref<9x8x4xbf16, #tpu.memory_space<vmem>>, vector<1x8x4xbf16>
    %61 = vector.shape_cast %60 : vector<1x8x4xbf16> to vector<8x4xbf16>
    %cst_32 = arith.constant dense<0.000000e+00> : vector<8x2400xf32>
    %62 = tpu.matmul %61, %59, %cst_32 {dimension_numbers = #tpu.dot_dimension_numbers<[1], [0], [0], [1], [0, 0, 1, 1], [], []>} : vector<8x4xbf16>, vector<4x2400xbf16>, vector<8x2400xf32> -> vector<8x2400xf32>
    %63 = arith.addf %58, %62 : vector<8x2400xf32>
    %64 = vector.extract_strided_slice %27 {offsets = [0, 101], sizes = [4, 2400], strides = [1, 1]} : vector<4x2502xbf16> to vector<4x2400xbf16>
    %c7 = arith.constant 7 : index
    %c0_33 = arith.constant 0 : index
    %c0_34 = arith.constant 0 : index
    %65 = vector.load %arg2[%c7, %c0_33, %c0_34] : memref<9x8x4xbf16, #tpu.memory_space<vmem>>, vector<1x8x4xbf16>
    %66 = vector.shape_cast %65 : vector<1x8x4xbf16> to vector<8x4xbf16>
    %cst_35 = arith.constant dense<0.000000e+00> : vector<8x2400xf32>
    %67 = tpu.matmul %66, %64, %cst_35 {dimension_numbers = #tpu.dot_dimension_numbers<[1], [0], [0], [1], [0, 0, 1, 1], [], []>} : vector<8x4xbf16>, vector<4x2400xbf16>, vector<8x2400xf32> -> vector<8x2400xf32>
    %68 = arith.addf %63, %67 : vector<8x2400xf32>
    %69 = vector.extract_strided_slice %27 {offsets = [0, 102], sizes = [4, 2400], strides = [1, 1]} : vector<4x2502xbf16> to vector<4x2400xbf16>
    %c8 = arith.constant 8 : index
    %c0_36 = arith.constant 0 : index
    %c0_37 = arith.constant 0 : index
    %70 = vector.load %arg2[%c8, %c0_36, %c0_37] : memref<9x8x4xbf16, #tpu.memory_space<vmem>>, vector<1x8x4xbf16>
    %71 = vector.shape_cast %70 : vector<1x8x4xbf16> to vector<8x4xbf16>
    %cst_38 = arith.constant dense<0.000000e+00> : vector<8x2400xf32>
    %72 = tpu.matmul %71, %69, %cst_38 {dimension_numbers = #tpu.dot_dimension_numbers<[1], [0], [0], [1], [0, 0, 1, 1], [], []>} : vector<8x4xbf16>, vector<4x2400xbf16>, vector<8x2400xf32> -> vector<8x2400xf32>
    %73 = arith.addf %68, %72 : vector<8x2400xf32>
    %c0_39 = arith.constant 0 : index
    %c0_40 = arith.constant 0 : index
    %74 = vector.load %arg3[%c0_39, %c0_40] : memref<8x1xf32, #tpu.memory_space<vmem>>, vector<8x1xf32>
    %75 = vector.broadcast %74 : vector<8x1xf32> to vector<8x2400xf32>
    %76 = arith.addf %73, %75 : vector<8x2400xf32>
    %c0_41 = arith.constant 0 : index
    %c0_42 = arith.constant 0 : index
    %77 = vector.load %arg5[%c0_41, %c0_42] : memref<1x2400xf32, #tpu.memory_space<vmem>>, vector<1x2400xf32>
    %78 = vector.broadcast %77 : vector<1x2400xf32> to vector<8x2400xf32>
    %79 = arith.mulf %76, %78 : vector<8x2400xf32>
    %cst_43 = arith.constant dense<0.000000e+00> : vector<8xf32>
    %80 = vector.multi_reduction <add>, %79, %cst_43 [1] : vector<8x2400xf32> to vector<8xf32>
    %81 = vector.shape_cast %80 : vector<8xf32> to vector<8x1xf32>
    %82 = arith.mulf %76, %76 : vector<8x2400xf32>
    %83 = vector.broadcast %77 : vector<1x2400xf32> to vector<8x2400xf32>
    %84 = arith.mulf %82, %83 : vector<8x2400xf32>
    %cst_44 = arith.constant dense<0.000000e+00> : vector<8xf32>
    %85 = vector.multi_reduction <add>, %84, %cst_44 [1] : vector<8x2400xf32> to vector<8xf32>
    %86 = vector.shape_cast %85 : vector<8xf32> to vector<8x1xf32>
    %cst_45 = arith.constant 4.34027781E-4 : f32
    %87 = vector.broadcast %cst_45 : f32 to vector<8x1xf32>
    %88 = arith.mulf %81, %87 : vector<8x1xf32>
    %cst_46 = arith.constant 4.34027781E-4 : f32
    %89 = vector.broadcast %cst_46 : f32 to vector<8x1xf32>
    %90 = arith.mulf %86, %89 : vector<8x1xf32>
    %91 = arith.mulf %88, %88 : vector<8x1xf32>
    %92 = arith.subf %90, %91 : vector<8x1xf32>
    %cst_47 = arith.constant 0.000000e+00 : f32
    %93 = vector.broadcast %cst_47 : f32 to vector<8x1xf32>
    %94 = arith.maximumf %92, %93 : vector<8x1xf32>
    %95 = vector.broadcast %88 : vector<8x1xf32> to vector<8x2400xf32>
    %96 = arith.subf %76, %95 : vector<8x2400xf32>
    %cst_48 = arith.constant 9.99999974E-6 : f32
    %97 = vector.broadcast %cst_48 : f32 to vector<8x1xf32>
    %98 = arith.addf %94, %97 : vector<8x1xf32>
    %99 = math.rsqrt %98 : vector<8x1xf32>
    %100 = vector.broadcast %99 : vector<8x1xf32> to vector<8x2400xf32>
    %101 = arith.mulf %96, %100 : vector<8x2400xf32>
    %cst_49 = arith.constant 0.000000e+00 : f32
    %102 = vector.broadcast %cst_49 : f32 to vector<8x2400xf32>
    %103 = arith.maximumf %101, %102 : vector<8x2400xf32>
    %c0_50 = arith.constant 0 : index
    %c0_51 = arith.constant 0 : index
    %c0_52 = arith.constant 0 : index
    %104 = vector.load %arg6[%c0_50, %c0_51, %c0_52] : memref<1x8x2400xf32, #tpu.memory_space<vmem>>, vector<1x8x2400xf32>
    %105 = vector.shape_cast %104 : vector<1x8x2400xf32> to vector<8x2400xf32>
    %106 = vector.shape_cast %103 : vector<8x2400xf32> to vector<1x8x2400xf32>
    tpu.vector_store %arg6[%c0_50, %c0_51, %c0_52], %106 {strides = array<i32>} : memref<1x8x2400xf32, #tpu.memory_space<vmem>>, vector<1x8x2400xf32>,
    return
  }
  func.func @transform_0(%arg0: i32) -> (i32, i32, i32, i32) {
    %c0_i32 = arith.constant 0 : i32
    %c0_i32_0 = arith.constant 0 : i32
    %c0_i32_1 = arith.constant 0 : i32
    %c0_i32_2 = arith.constant 0 : i32
    return %arg0, %c0_i32, %c0_i32_0, %c0_i32_1 : i32, i32, i32, i32
  }
  func.func @transform_1(%arg0: i32) -> (i32, i32, i32) {
    %c0_i32 = arith.constant 0 : i32
    %c0_i32_0 = arith.constant 0 : i32
    %c0_i32_1 = arith.constant 0 : i32
    %c0_i32_2 = arith.constant 0 : i32
    return %c0_i32, %c0_i32_0, %c0_i32_1 : i32, i32, i32
  }
  func.func @transform_2(%arg0: i32) -> (i32, i32) {
    %c0_i32 = arith.constant 0 : i32
    %c0_i32_0 = arith.constant 0 : i32
    %c0_i32_1 = arith.constant 0 : i32
    return %c0_i32, %c0_i32_0 : i32, i32
  }
  func.func @transform_3(%arg0: i32) -> (i32, i32) {
    %c0_i32 = arith.constant 0 : i32
    %c0_i32_0 = arith.constant 0 : i32
    %c0_i32_1 = arith.constant 0 : i32
    return %c0_i32, %c0_i32_0 : i32, i32
  }
  func.func @transform_4(%arg0: i32) -> (i32, i32) {
    %c0_i32 = arith.constant 0 : i32
    %c0_i32_0 = arith.constant 0 : i32
    %c0_i32_1 = arith.constant 0 : i32
    return %c0_i32, %c0_i32_0 : i32, i32
  }
  func.func @transform_5(%arg0: i32) -> (i32, i32, i32) {
    %c0_i32 = arith.constant 0 : i32
    %c0_i32_0 = arith.constant 0 : i32
    %c0_i32_1 = arith.constant 0 : i32
    return %arg0, %c0_i32, %c0_i32_0 : i32, i32, i32
  }
}

module attributes {stable_mosaic.version = 11 : i64} {
  func.func @kernel(%arg0: i32, %arg1: memref<1x4x8x577xf32, #tpu.memory_space<vmem>>, %arg2: memref<9x8x8xbf16, #tpu.memory_space<vmem>>, %arg3: memref<8x1xf32, #tpu.memory_space<vmem>>, %arg4: memref<1x552xf32, #tpu.memory_space<vmem>>, %arg5: memref<1x8x552xf32, #tpu.memory_space<vmem>>) attributes {dimension_semantics = [#tpu.dimension_semantics<parallel>], iteration_bounds = array<i64: 2>, scalar_prefetch = 0 : i64, scratch_operands = 0 : i64, tpu.core_type = #tpu.core_type<tc>, window_params = [{transform_indices = @transform_0, window_bounds = array<i64: 1, 4, 8, 577>}, {pipeline_mode = #tpu.pipeline_mode<synchronous>, transform_indices = @transform_1, window_bounds = array<i64: 9, 8, 8>}, {pipeline_mode = #tpu.pipeline_mode<synchronous>, transform_indices = @transform_2, window_bounds = array<i64: 8, 1>}, {pipeline_mode = #tpu.pipeline_mode<synchronous>, transform_indices = @transform_3, window_bounds = array<i64: 1, 552>}, {transform_indices = @transform_4, window_bounds = array<i64: 1, 8, 552>}]} {
    %c0 = arith.constant 0 : index
    %c0_0 = arith.constant 0 : index
    %c0_1 = arith.constant 0 : index
    %c0_2 = arith.constant 0 : index
    %0 = vector.load %arg1[%c0, %c0_0, %c0_1, %c0_2] : memref<1x4x8x577xf32, #tpu.memory_space<vmem>>, vector<1x1x8x577xf32>
    %1 = vector.shape_cast %0 : vector<1x1x8x577xf32> to vector<8x577xf32>
    %2 = arith.truncf %1 : vector<8x577xf32> to vector<8x577xbf16>
    %c0_3 = arith.constant 0 : index
    %c1 = arith.constant 1 : index
    %c0_4 = arith.constant 0 : index
    %c0_5 = arith.constant 0 : index
    %3 = vector.load %arg1[%c0_3, %c1, %c0_4, %c0_5] : memref<1x4x8x577xf32, #tpu.memory_space<vmem>>, vector<1x1x8x577xf32>
    %4 = vector.shape_cast %3 : vector<1x1x8x577xf32> to vector<8x577xf32>
    %5 = arith.truncf %4 : vector<8x577xf32> to vector<8x577xbf16>
    %c0_6 = arith.constant 0 : index
    %c2 = arith.constant 2 : index
    %c0_7 = arith.constant 0 : index
    %c0_8 = arith.constant 0 : index
    %6 = vector.load %arg1[%c0_6, %c2, %c0_7, %c0_8] : memref<1x4x8x577xf32, #tpu.memory_space<vmem>>, vector<1x1x8x577xf32>
    %7 = vector.shape_cast %6 : vector<1x1x8x577xf32> to vector<8x577xf32>
    %8 = arith.truncf %7 : vector<8x577xf32> to vector<8x577xbf16>
    %c0_9 = arith.constant 0 : index
    %c3 = arith.constant 3 : index
    %c0_10 = arith.constant 0 : index
    %c0_11 = arith.constant 0 : index
    %9 = vector.load %arg1[%c0_9, %c3, %c0_10, %c0_11] : memref<1x4x8x577xf32, #tpu.memory_space<vmem>>, vector<1x1x8x577xf32>
    %10 = vector.shape_cast %9 : vector<1x1x8x577xf32> to vector<8x577xf32>
    %11 = arith.truncf %10 : vector<8x577xf32> to vector<8x577xbf16>
    %cst = arith.constant 0.000000e+00 : f32
    %12 = vector.broadcast %cst : f32 to vector<8x552xf32>
    %13 = vector.extract_strided_slice %2 {offsets = [0, 0], sizes = [8, 552], strides = [1, 1]} : vector<8x577xbf16> to vector<8x552xbf16>
    %c0_12 = arith.constant 0 : index
    %c0_13 = arith.constant 0 : index
    %c0_14 = arith.constant 0 : index
    %14 = vector.load %arg2[%c0_12, %c0_13, %c0_14] : memref<9x8x8xbf16, #tpu.memory_space<vmem>>, vector<1x8x8xbf16>
    %15 = vector.shape_cast %14 : vector<1x8x8xbf16> to vector<8x8xbf16>
    %cst_15 = arith.constant dense<0.000000e+00> : vector<8x552xf32>
    %16 = tpu.matmul %15, %13, %cst_15 {dimension_numbers = #tpu.dot_dimension_numbers<[1], [0], [0], [1], [0, 0, 1, 1], [], []>} : vector<8x8xbf16>, vector<8x552xbf16>, vector<8x552xf32> -> vector<8x552xf32>
    %17 = arith.addf %12, %16 : vector<8x552xf32>
    %18 = vector.extract_strided_slice %5 {offsets = [0, 0], sizes = [8, 552], strides = [1, 1]} : vector<8x577xbf16> to vector<8x552xbf16>
    %c1_16 = arith.constant 1 : index
    %c0_17 = arith.constant 0 : index
    %c0_18 = arith.constant 0 : index
    %19 = vector.load %arg2[%c1_16, %c0_17, %c0_18] : memref<9x8x8xbf16, #tpu.memory_space<vmem>>, vector<1x8x8xbf16>
    %20 = vector.shape_cast %19 : vector<1x8x8xbf16> to vector<8x8xbf16>
    %cst_19 = arith.constant dense<0.000000e+00> : vector<8x552xf32>
    %21 = tpu.matmul %20, %18, %cst_19 {dimension_numbers = #tpu.dot_dimension_numbers<[1], [0], [0], [1], [0, 0, 1, 1], [], []>} : vector<8x8xbf16>, vector<8x552xbf16>, vector<8x552xf32> -> vector<8x552xf32>
    %22 = arith.addf %17, %21 : vector<8x552xf32>
    %23 = vector.extract_strided_slice %2 {offsets = [0, 1], sizes = [8, 552], strides = [1, 1]} : vector<8x577xbf16> to vector<8x552xbf16>
    %c2_20 = arith.constant 2 : index
    %c0_21 = arith.constant 0 : index
    %c0_22 = arith.constant 0 : index
    %24 = vector.load %arg2[%c2_20, %c0_21, %c0_22] : memref<9x8x8xbf16, #tpu.memory_space<vmem>>, vector<1x8x8xbf16>
    %25 = vector.shape_cast %24 : vector<1x8x8xbf16> to vector<8x8xbf16>
    %cst_23 = arith.constant dense<0.000000e+00> : vector<8x552xf32>
    %26 = tpu.matmul %25, %23, %cst_23 {dimension_numbers = #tpu.dot_dimension_numbers<[1], [0], [0], [1], [0, 0, 1, 1], [], []>} : vector<8x8xbf16>, vector<8x552xbf16>, vector<8x552xf32> -> vector<8x552xf32>
    %27 = arith.addf %22, %26 : vector<8x552xf32>
    %28 = vector.extract_strided_slice %8 {offsets = [0, 0], sizes = [8, 552], strides = [1, 1]} : vector<8x577xbf16> to vector<8x552xbf16>
    %c3_24 = arith.constant 3 : index
    %c0_25 = arith.constant 0 : index
    %c0_26 = arith.constant 0 : index
    %29 = vector.load %arg2[%c3_24, %c0_25, %c0_26] : memref<9x8x8xbf16, #tpu.memory_space<vmem>>, vector<1x8x8xbf16>
    %30 = vector.shape_cast %29 : vector<1x8x8xbf16> to vector<8x8xbf16>
    %cst_27 = arith.constant dense<0.000000e+00> : vector<8x552xf32>
    %31 = tpu.matmul %30, %28, %cst_27 {dimension_numbers = #tpu.dot_dimension_numbers<[1], [0], [0], [1], [0, 0, 1, 1], [], []>} : vector<8x8xbf16>, vector<8x552xbf16>, vector<8x552xf32> -> vector<8x552xf32>
    %32 = arith.addf %27, %31 : vector<8x552xf32>
    %33 = vector.extract_strided_slice %11 {offsets = [0, 0], sizes = [8, 552], strides = [1, 1]} : vector<8x577xbf16> to vector<8x552xbf16>
    %c4 = arith.constant 4 : index
    %c0_28 = arith.constant 0 : index
    %c0_29 = arith.constant 0 : index
    %34 = vector.load %arg2[%c4, %c0_28, %c0_29] : memref<9x8x8xbf16, #tpu.memory_space<vmem>>, vector<1x8x8xbf16>
    %35 = vector.shape_cast %34 : vector<1x8x8xbf16> to vector<8x8xbf16>
    %cst_30 = arith.constant dense<0.000000e+00> : vector<8x552xf32>
    %36 = tpu.matmul %35, %33, %cst_30 {dimension_numbers = #tpu.dot_dimension_numbers<[1], [0], [0], [1], [0, 0, 1, 1], [], []>} : vector<8x8xbf16>, vector<8x552xbf16>, vector<8x552xf32> -> vector<8x552xf32>
    %37 = arith.addf %32, %36 : vector<8x552xf32>
    %38 = vector.extract_strided_slice %8 {offsets = [0, 1], sizes = [8, 552], strides = [1, 1]} : vector<8x577xbf16> to vector<8x552xbf16>
    %c5 = arith.constant 5 : index
    %c0_31 = arith.constant 0 : index
    %c0_32 = arith.constant 0 : index
    %39 = vector.load %arg2[%c5, %c0_31, %c0_32] : memref<9x8x8xbf16, #tpu.memory_space<vmem>>, vector<1x8x8xbf16>
    %40 = vector.shape_cast %39 : vector<1x8x8xbf16> to vector<8x8xbf16>
    %cst_33 = arith.constant dense<0.000000e+00> : vector<8x552xf32>
    %41 = tpu.matmul %40, %38, %cst_33 {dimension_numbers = #tpu.dot_dimension_numbers<[1], [0], [0], [1], [0, 0, 1, 1], [], []>} : vector<8x8xbf16>, vector<8x552xbf16>, vector<8x552xf32> -> vector<8x552xf32>
    %42 = arith.addf %37, %41 : vector<8x552xf32>
    %43 = vector.extract_strided_slice %2 {offsets = [0, 24], sizes = [8, 552], strides = [1, 1]} : vector<8x577xbf16> to vector<8x552xbf16>
    %c6 = arith.constant 6 : index
    %c0_34 = arith.constant 0 : index
    %c0_35 = arith.constant 0 : index
    %44 = vector.load %arg2[%c6, %c0_34, %c0_35] : memref<9x8x8xbf16, #tpu.memory_space<vmem>>, vector<1x8x8xbf16>
    %45 = vector.shape_cast %44 : vector<1x8x8xbf16> to vector<8x8xbf16>
    %cst_36 = arith.constant dense<0.000000e+00> : vector<8x552xf32>
    %46 = tpu.matmul %45, %43, %cst_36 {dimension_numbers = #tpu.dot_dimension_numbers<[1], [0], [0], [1], [0, 0, 1, 1], [], []>} : vector<8x8xbf16>, vector<8x552xbf16>, vector<8x552xf32> -> vector<8x552xf32>
    %47 = arith.addf %42, %46 : vector<8x552xf32>
    %48 = vector.extract_strided_slice %5 {offsets = [0, 24], sizes = [8, 552], strides = [1, 1]} : vector<8x577xbf16> to vector<8x552xbf16>
    %c7 = arith.constant 7 : index
    %c0_37 = arith.constant 0 : index
    %c0_38 = arith.constant 0 : index
    %49 = vector.load %arg2[%c7, %c0_37, %c0_38] : memref<9x8x8xbf16, #tpu.memory_space<vmem>>, vector<1x8x8xbf16>
    %50 = vector.shape_cast %49 : vector<1x8x8xbf16> to vector<8x8xbf16>
    %cst_39 = arith.constant dense<0.000000e+00> : vector<8x552xf32>
    %51 = tpu.matmul %50, %48, %cst_39 {dimension_numbers = #tpu.dot_dimension_numbers<[1], [0], [0], [1], [0, 0, 1, 1], [], []>} : vector<8x8xbf16>, vector<8x552xbf16>, vector<8x552xf32> -> vector<8x552xf32>
    %52 = arith.addf %47, %51 : vector<8x552xf32>
    %53 = vector.extract_strided_slice %2 {offsets = [0, 25], sizes = [8, 552], strides = [1, 1]} : vector<8x577xbf16> to vector<8x552xbf16>
    %c8 = arith.constant 8 : index
    %c0_40 = arith.constant 0 : index
    %c0_41 = arith.constant 0 : index
    %54 = vector.load %arg2[%c8, %c0_40, %c0_41] : memref<9x8x8xbf16, #tpu.memory_space<vmem>>, vector<1x8x8xbf16>
    %55 = vector.shape_cast %54 : vector<1x8x8xbf16> to vector<8x8xbf16>
    %cst_42 = arith.constant dense<0.000000e+00> : vector<8x552xf32>
    %56 = tpu.matmul %55, %53, %cst_42 {dimension_numbers = #tpu.dot_dimension_numbers<[1], [0], [0], [1], [0, 0, 1, 1], [], []>} : vector<8x8xbf16>, vector<8x552xbf16>, vector<8x552xf32> -> vector<8x552xf32>
    %57 = arith.addf %52, %56 : vector<8x552xf32>
    %c0_43 = arith.constant 0 : index
    %c0_44 = arith.constant 0 : index
    %58 = vector.load %arg3[%c0_43, %c0_44] : memref<8x1xf32, #tpu.memory_space<vmem>>, vector<8x1xf32>
    %59 = vector.broadcast %58 : vector<8x1xf32> to vector<8x552xf32>
    %60 = arith.addf %57, %59 : vector<8x552xf32>
    %c0_45 = arith.constant 0 : index
    %c0_46 = arith.constant 0 : index
    %61 = vector.load %arg4[%c0_45, %c0_46] : memref<1x552xf32, #tpu.memory_space<vmem>>, vector<1x552xf32>
    %62 = vector.broadcast %61 : vector<1x552xf32> to vector<8x552xf32>
    %63 = arith.mulf %60, %62 : vector<8x552xf32>
    %cst_47 = arith.constant dense<0.000000e+00> : vector<8xf32>
    %64 = vector.multi_reduction <add>, %63, %cst_47 [1] : vector<8x552xf32> to vector<8xf32>
    %65 = vector.shape_cast %64 : vector<8xf32> to vector<8x1xf32>
    %66 = arith.mulf %60, %60 : vector<8x552xf32>
    %67 = vector.broadcast %61 : vector<1x552xf32> to vector<8x552xf32>
    %68 = arith.mulf %66, %67 : vector<8x552xf32>
    %cst_48 = arith.constant dense<0.000000e+00> : vector<8xf32>
    %69 = vector.multi_reduction <add>, %68, %cst_48 [1] : vector<8x552xf32> to vector<8xf32>
    %70 = vector.shape_cast %69 : vector<8xf32> to vector<8x1xf32>
    %cst_49 = arith.constant 0.00189035921 : f32
    %71 = vector.broadcast %cst_49 : f32 to vector<8x1xf32>
    %72 = arith.mulf %65, %71 : vector<8x1xf32>
    %cst_50 = arith.constant 0.00189035921 : f32
    %73 = vector.broadcast %cst_50 : f32 to vector<8x1xf32>
    %74 = arith.mulf %70, %73 : vector<8x1xf32>
    %75 = arith.mulf %72, %72 : vector<8x1xf32>
    %76 = arith.subf %74, %75 : vector<8x1xf32>
    %cst_51 = arith.constant 0.000000e+00 : f32
    %77 = vector.broadcast %cst_51 : f32 to vector<8x1xf32>
    %78 = arith.maximumf %76, %77 : vector<8x1xf32>
    %79 = vector.broadcast %72 : vector<8x1xf32> to vector<8x552xf32>
    %80 = arith.subf %60, %79 : vector<8x552xf32>
    %cst_52 = arith.constant 9.99999974E-6 : f32
    %81 = vector.broadcast %cst_52 : f32 to vector<8x1xf32>
    %82 = arith.addf %78, %81 : vector<8x1xf32>
    %83 = math.rsqrt %82 : vector<8x1xf32>
    %84 = vector.broadcast %83 : vector<8x1xf32> to vector<8x552xf32>
    %85 = arith.mulf %80, %84 : vector<8x552xf32>
    %cst_53 = arith.constant 0.000000e+00 : f32
    %86 = vector.broadcast %cst_53 : f32 to vector<8x552xf32>
    %87 = arith.maximumf %85, %86 : vector<8x552xf32>
    %c0_54 = arith.constant 0 : index
    %c0_55 = arith.constant 0 : index
    %c0_56 = arith.constant 0 : index
    %88 = vector.load %arg5[%c0_54, %c0_55, %c0_56] : memref<1x8x552xf32, #tpu.memory_space<vmem>>, vector<1x8x552xf32>
    %89 = vector.shape_cast %88 : vector<1x8x552xf32> to vector<8x552xf32>
    %90 = vector.shape_cast %87 : vector<8x552xf32> to vector<1x8x552xf32>
    tpu.vector_store %arg5[%c0_54, %c0_55, %c0_56], %90 {strides = array<i32>} : memref<1x8x552xf32, #tpu.memory_space<vmem>>, vector<1x8x552xf32>,
    return
  }
  func.func @transform_0(%arg0: i32) -> (i32, i32, i32, i32) {
    %c0_i32 = arith.constant 0 : i32
    %c0_i32_0 = arith.constant 0 : i32
    %c0_i32_1 = arith.constant 0 : i32
    %c0_i32_2 = arith.constant 0 : i32
    return %arg0, %c0_i32, %c0_i32_0, %c0_i32_1 : i32, i32, i32, i32
  }
  func.func @transform_1(%arg0: i32) -> (i32, i32, i32) {
    %c0_i32 = arith.constant 0 : i32
    %c0_i32_0 = arith.constant 0 : i32
    %c0_i32_1 = arith.constant 0 : i32
    %c0_i32_2 = arith.constant 0 : i32
    return %c0_i32, %c0_i32_0, %c0_i32_1 : i32, i32, i32
  }
  func.func @transform_2(%arg0: i32) -> (i32, i32) {
    %c0_i32 = arith.constant 0 : i32
    %c0_i32_0 = arith.constant 0 : i32
    %c0_i32_1 = arith.constant 0 : i32
    return %c0_i32, %c0_i32_0 : i32, i32
  }
  func.func @transform_3(%arg0: i32) -> (i32, i32) {
    %c0_i32 = arith.constant 0 : i32
    %c0_i32_0 = arith.constant 0 : i32
    %c0_i32_1 = arith.constant 0 : i32
    return %c0_i32, %c0_i32_0 : i32, i32
  }
  func.func @transform_4(%arg0: i32) -> (i32, i32, i32) {
    %c0_i32 = arith.constant 0 : i32
    %c0_i32_0 = arith.constant 0 : i32
    %c0_i32_1 = arith.constant 0 : i32
    return %arg0, %c0_i32, %c0_i32_0 : i32, i32, i32
  }
}

module attributes {stable_mosaic.version = 11 : i64} {
  func.func @kernel(%arg0: i32, %arg1: memref<1x4x8x145xf32, #tpu.memory_space<vmem>>, %arg2: memref<9x16x8xbf16, #tpu.memory_space<vmem>>, %arg3: memref<16x1xf32, #tpu.memory_space<vmem>>, %arg4: memref<1x132xf32, #tpu.memory_space<vmem>>, %arg5: memref<1x16x132xf32, #tpu.memory_space<vmem>>) attributes {dimension_semantics = [#tpu.dimension_semantics<parallel>], iteration_bounds = array<i64: 2>, scalar_prefetch = 0 : i64, scratch_operands = 0 : i64, tpu.core_type = #tpu.core_type<tc>, window_params = [{transform_indices = @transform_0, window_bounds = array<i64: 1, 4, 8, 145>}, {pipeline_mode = #tpu.pipeline_mode<synchronous>, transform_indices = @transform_1, window_bounds = array<i64: 9, 16, 8>}, {pipeline_mode = #tpu.pipeline_mode<synchronous>, transform_indices = @transform_2, window_bounds = array<i64: 16, 1>}, {pipeline_mode = #tpu.pipeline_mode<synchronous>, transform_indices = @transform_3, window_bounds = array<i64: 1, 132>}, {transform_indices = @transform_4, window_bounds = array<i64: 1, 16, 132>}]} {
    %c0 = arith.constant 0 : index
    %c0_0 = arith.constant 0 : index
    %c0_1 = arith.constant 0 : index
    %c0_2 = arith.constant 0 : index
    %0 = vector.load %arg1[%c0, %c0_0, %c0_1, %c0_2] : memref<1x4x8x145xf32, #tpu.memory_space<vmem>>, vector<1x1x8x145xf32>
    %1 = vector.shape_cast %0 : vector<1x1x8x145xf32> to vector<8x145xf32>
    %2 = arith.truncf %1 : vector<8x145xf32> to vector<8x145xbf16>
    %c0_3 = arith.constant 0 : index
    %c1 = arith.constant 1 : index
    %c0_4 = arith.constant 0 : index
    %c0_5 = arith.constant 0 : index
    %3 = vector.load %arg1[%c0_3, %c1, %c0_4, %c0_5] : memref<1x4x8x145xf32, #tpu.memory_space<vmem>>, vector<1x1x8x145xf32>
    %4 = vector.shape_cast %3 : vector<1x1x8x145xf32> to vector<8x145xf32>
    %5 = arith.truncf %4 : vector<8x145xf32> to vector<8x145xbf16>
    %c0_6 = arith.constant 0 : index
    %c2 = arith.constant 2 : index
    %c0_7 = arith.constant 0 : index
    %c0_8 = arith.constant 0 : index
    %6 = vector.load %arg1[%c0_6, %c2, %c0_7, %c0_8] : memref<1x4x8x145xf32, #tpu.memory_space<vmem>>, vector<1x1x8x145xf32>
    %7 = vector.shape_cast %6 : vector<1x1x8x145xf32> to vector<8x145xf32>
    %8 = arith.truncf %7 : vector<8x145xf32> to vector<8x145xbf16>
    %c0_9 = arith.constant 0 : index
    %c3 = arith.constant 3 : index
    %c0_10 = arith.constant 0 : index
    %c0_11 = arith.constant 0 : index
    %9 = vector.load %arg1[%c0_9, %c3, %c0_10, %c0_11] : memref<1x4x8x145xf32, #tpu.memory_space<vmem>>, vector<1x1x8x145xf32>
    %10 = vector.shape_cast %9 : vector<1x1x8x145xf32> to vector<8x145xf32>
    %11 = arith.truncf %10 : vector<8x145xf32> to vector<8x145xbf16>
    %cst = arith.constant 0.000000e+00 : f32
    %12 = vector.broadcast %cst : f32 to vector<16x132xf32>
    %13 = vector.extract_strided_slice %2 {offsets = [0, 0], sizes = [8, 132], strides = [1, 1]} : vector<8x145xbf16> to vector<8x132xbf16>
    %c0_12 = arith.constant 0 : index
    %c0_13 = arith.constant 0 : index
    %c0_14 = arith.constant 0 : index
    %14 = vector.load %arg2[%c0_12, %c0_13, %c0_14] : memref<9x16x8xbf16, #tpu.memory_space<vmem>>, vector<1x16x8xbf16>
    %15 = vector.shape_cast %14 : vector<1x16x8xbf16> to vector<16x8xbf16>
    %cst_15 = arith.constant dense<0.000000e+00> : vector<16x132xf32>
    %16 = tpu.matmul %15, %13, %cst_15 {dimension_numbers = #tpu.dot_dimension_numbers<[1], [0], [0], [1], [0, 0, 1, 1], [], []>} : vector<16x8xbf16>, vector<8x132xbf16>, vector<16x132xf32> -> vector<16x132xf32>
    %17 = arith.addf %12, %16 : vector<16x132xf32>
    %18 = vector.extract_strided_slice %5 {offsets = [0, 0], sizes = [8, 132], strides = [1, 1]} : vector<8x145xbf16> to vector<8x132xbf16>
    %c1_16 = arith.constant 1 : index
    %c0_17 = arith.constant 0 : index
    %c0_18 = arith.constant 0 : index
    %19 = vector.load %arg2[%c1_16, %c0_17, %c0_18] : memref<9x16x8xbf16, #tpu.memory_space<vmem>>, vector<1x16x8xbf16>
    %20 = vector.shape_cast %19 : vector<1x16x8xbf16> to vector<16x8xbf16>
    %cst_19 = arith.constant dense<0.000000e+00> : vector<16x132xf32>
    %21 = tpu.matmul %20, %18, %cst_19 {dimension_numbers = #tpu.dot_dimension_numbers<[1], [0], [0], [1], [0, 0, 1, 1], [], []>} : vector<16x8xbf16>, vector<8x132xbf16>, vector<16x132xf32> -> vector<16x132xf32>
    %22 = arith.addf %17, %21 : vector<16x132xf32>
    %23 = vector.extract_strided_slice %2 {offsets = [0, 1], sizes = [8, 132], strides = [1, 1]} : vector<8x145xbf16> to vector<8x132xbf16>
    %c2_20 = arith.constant 2 : index
    %c0_21 = arith.constant 0 : index
    %c0_22 = arith.constant 0 : index
    %24 = vector.load %arg2[%c2_20, %c0_21, %c0_22] : memref<9x16x8xbf16, #tpu.memory_space<vmem>>, vector<1x16x8xbf16>
    %25 = vector.shape_cast %24 : vector<1x16x8xbf16> to vector<16x8xbf16>
    %cst_23 = arith.constant dense<0.000000e+00> : vector<16x132xf32>
    %26 = tpu.matmul %25, %23, %cst_23 {dimension_numbers = #tpu.dot_dimension_numbers<[1], [0], [0], [1], [0, 0, 1, 1], [], []>} : vector<16x8xbf16>, vector<8x132xbf16>, vector<16x132xf32> -> vector<16x132xf32>
    %27 = arith.addf %22, %26 : vector<16x132xf32>
    %28 = vector.extract_strided_slice %8 {offsets = [0, 0], sizes = [8, 132], strides = [1, 1]} : vector<8x145xbf16> to vector<8x132xbf16>
    %c3_24 = arith.constant 3 : index
    %c0_25 = arith.constant 0 : index
    %c0_26 = arith.constant 0 : index
    %29 = vector.load %arg2[%c3_24, %c0_25, %c0_26] : memref<9x16x8xbf16, #tpu.memory_space<vmem>>, vector<1x16x8xbf16>
    %30 = vector.shape_cast %29 : vector<1x16x8xbf16> to vector<16x8xbf16>
    %cst_27 = arith.constant dense<0.000000e+00> : vector<16x132xf32>
    %31 = tpu.matmul %30, %28, %cst_27 {dimension_numbers = #tpu.dot_dimension_numbers<[1], [0], [0], [1], [0, 0, 1, 1], [], []>} : vector<16x8xbf16>, vector<8x132xbf16>, vector<16x132xf32> -> vector<16x132xf32>
    %32 = arith.addf %27, %31 : vector<16x132xf32>
    %33 = vector.extract_strided_slice %11 {offsets = [0, 0], sizes = [8, 132], strides = [1, 1]} : vector<8x145xbf16> to vector<8x132xbf16>
    %c4 = arith.constant 4 : index
    %c0_28 = arith.constant 0 : index
    %c0_29 = arith.constant 0 : index
    %34 = vector.load %arg2[%c4, %c0_28, %c0_29] : memref<9x16x8xbf16, #tpu.memory_space<vmem>>, vector<1x16x8xbf16>
    %35 = vector.shape_cast %34 : vector<1x16x8xbf16> to vector<16x8xbf16>
    %cst_30 = arith.constant dense<0.000000e+00> : vector<16x132xf32>
    %36 = tpu.matmul %35, %33, %cst_30 {dimension_numbers = #tpu.dot_dimension_numbers<[1], [0], [0], [1], [0, 0, 1, 1], [], []>} : vector<16x8xbf16>, vector<8x132xbf16>, vector<16x132xf32> -> vector<16x132xf32>
    %37 = arith.addf %32, %36 : vector<16x132xf32>
    %38 = vector.extract_strided_slice %8 {offsets = [0, 1], sizes = [8, 132], strides = [1, 1]} : vector<8x145xbf16> to vector<8x132xbf16>
    %c5 = arith.constant 5 : index
    %c0_31 = arith.constant 0 : index
    %c0_32 = arith.constant 0 : index
    %39 = vector.load %arg2[%c5, %c0_31, %c0_32] : memref<9x16x8xbf16, #tpu.memory_space<vmem>>, vector<1x16x8xbf16>
    %40 = vector.shape_cast %39 : vector<1x16x8xbf16> to vector<16x8xbf16>
    %cst_33 = arith.constant dense<0.000000e+00> : vector<16x132xf32>
    %41 = tpu.matmul %40, %38, %cst_33 {dimension_numbers = #tpu.dot_dimension_numbers<[1], [0], [0], [1], [0, 0, 1, 1], [], []>} : vector<16x8xbf16>, vector<8x132xbf16>, vector<16x132xf32> -> vector<16x132xf32>
    %42 = arith.addf %37, %41 : vector<16x132xf32>
    %43 = vector.extract_strided_slice %2 {offsets = [0, 12], sizes = [8, 132], strides = [1, 1]} : vector<8x145xbf16> to vector<8x132xbf16>
    %c6 = arith.constant 6 : index
    %c0_34 = arith.constant 0 : index
    %c0_35 = arith.constant 0 : index
    %44 = vector.load %arg2[%c6, %c0_34, %c0_35] : memref<9x16x8xbf16, #tpu.memory_space<vmem>>, vector<1x16x8xbf16>
    %45 = vector.shape_cast %44 : vector<1x16x8xbf16> to vector<16x8xbf16>
    %cst_36 = arith.constant dense<0.000000e+00> : vector<16x132xf32>
    %46 = tpu.matmul %45, %43, %cst_36 {dimension_numbers = #tpu.dot_dimension_numbers<[1], [0], [0], [1], [0, 0, 1, 1], [], []>} : vector<16x8xbf16>, vector<8x132xbf16>, vector<16x132xf32> -> vector<16x132xf32>
    %47 = arith.addf %42, %46 : vector<16x132xf32>
    %48 = vector.extract_strided_slice %5 {offsets = [0, 12], sizes = [8, 132], strides = [1, 1]} : vector<8x145xbf16> to vector<8x132xbf16>
    %c7 = arith.constant 7 : index
    %c0_37 = arith.constant 0 : index
    %c0_38 = arith.constant 0 : index
    %49 = vector.load %arg2[%c7, %c0_37, %c0_38] : memref<9x16x8xbf16, #tpu.memory_space<vmem>>, vector<1x16x8xbf16>
    %50 = vector.shape_cast %49 : vector<1x16x8xbf16> to vector<16x8xbf16>
    %cst_39 = arith.constant dense<0.000000e+00> : vector<16x132xf32>
    %51 = tpu.matmul %50, %48, %cst_39 {dimension_numbers = #tpu.dot_dimension_numbers<[1], [0], [0], [1], [0, 0, 1, 1], [], []>} : vector<16x8xbf16>, vector<8x132xbf16>, vector<16x132xf32> -> vector<16x132xf32>
    %52 = arith.addf %47, %51 : vector<16x132xf32>
    %53 = vector.extract_strided_slice %2 {offsets = [0, 13], sizes = [8, 132], strides = [1, 1]} : vector<8x145xbf16> to vector<8x132xbf16>
    %c8 = arith.constant 8 : index
    %c0_40 = arith.constant 0 : index
    %c0_41 = arith.constant 0 : index
    %54 = vector.load %arg2[%c8, %c0_40, %c0_41] : memref<9x16x8xbf16, #tpu.memory_space<vmem>>, vector<1x16x8xbf16>
    %55 = vector.shape_cast %54 : vector<1x16x8xbf16> to vector<16x8xbf16>
    %cst_42 = arith.constant dense<0.000000e+00> : vector<16x132xf32>
    %56 = tpu.matmul %55, %53, %cst_42 {dimension_numbers = #tpu.dot_dimension_numbers<[1], [0], [0], [1], [0, 0, 1, 1], [], []>} : vector<16x8xbf16>, vector<8x132xbf16>, vector<16x132xf32> -> vector<16x132xf32>
    %57 = arith.addf %52, %56 : vector<16x132xf32>
    %c0_43 = arith.constant 0 : index
    %c0_44 = arith.constant 0 : index
    %58 = vector.load %arg3[%c0_43, %c0_44] : memref<16x1xf32, #tpu.memory_space<vmem>>, vector<16x1xf32>
    %59 = vector.broadcast %58 : vector<16x1xf32> to vector<16x132xf32>
    %60 = arith.addf %57, %59 : vector<16x132xf32>
    %c0_45 = arith.constant 0 : index
    %c0_46 = arith.constant 0 : index
    %61 = vector.load %arg4[%c0_45, %c0_46] : memref<1x132xf32, #tpu.memory_space<vmem>>, vector<1x132xf32>
    %62 = vector.broadcast %61 : vector<1x132xf32> to vector<16x132xf32>
    %63 = arith.mulf %60, %62 : vector<16x132xf32>
    %cst_47 = arith.constant dense<0.000000e+00> : vector<16xf32>
    %64 = vector.multi_reduction <add>, %63, %cst_47 [1] : vector<16x132xf32> to vector<16xf32>
    %65 = vector.shape_cast %64 : vector<16xf32> to vector<16x1xf32>
    %66 = arith.mulf %60, %60 : vector<16x132xf32>
    %67 = vector.broadcast %61 : vector<1x132xf32> to vector<16x132xf32>
    %68 = arith.mulf %66, %67 : vector<16x132xf32>
    %cst_48 = arith.constant dense<0.000000e+00> : vector<16xf32>
    %69 = vector.multi_reduction <add>, %68, %cst_48 [1] : vector<16x132xf32> to vector<16xf32>
    %70 = vector.shape_cast %69 : vector<16xf32> to vector<16x1xf32>
    %cst_49 = arith.constant 0.00826446246 : f32
    %71 = vector.broadcast %cst_49 : f32 to vector<16x1xf32>
    %72 = arith.mulf %65, %71 : vector<16x1xf32>
    %cst_50 = arith.constant 0.00826446246 : f32
    %73 = vector.broadcast %cst_50 : f32 to vector<16x1xf32>
    %74 = arith.mulf %70, %73 : vector<16x1xf32>
    %75 = arith.mulf %72, %72 : vector<16x1xf32>
    %76 = arith.subf %74, %75 : vector<16x1xf32>
    %cst_51 = arith.constant 0.000000e+00 : f32
    %77 = vector.broadcast %cst_51 : f32 to vector<16x1xf32>
    %78 = arith.maximumf %76, %77 : vector<16x1xf32>
    %79 = vector.broadcast %72 : vector<16x1xf32> to vector<16x132xf32>
    %80 = arith.subf %60, %79 : vector<16x132xf32>
    %cst_52 = arith.constant 9.99999974E-6 : f32
    %81 = vector.broadcast %cst_52 : f32 to vector<16x1xf32>
    %82 = arith.addf %78, %81 : vector<16x1xf32>
    %83 = math.rsqrt %82 : vector<16x1xf32>
    %84 = vector.broadcast %83 : vector<16x1xf32> to vector<16x132xf32>
    %85 = arith.mulf %80, %84 : vector<16x132xf32>
    %cst_53 = arith.constant 0.000000e+00 : f32
    %86 = vector.broadcast %cst_53 : f32 to vector<16x132xf32>
    %87 = arith.maximumf %85, %86 : vector<16x132xf32>
    %c0_54 = arith.constant 0 : index
    %c0_55 = arith.constant 0 : index
    %c0_56 = arith.constant 0 : index
    %88 = vector.load %arg5[%c0_54, %c0_55, %c0_56] : memref<1x16x132xf32, #tpu.memory_space<vmem>>, vector<1x16x132xf32>
    %89 = vector.shape_cast %88 : vector<1x16x132xf32> to vector<16x132xf32>
    %90 = vector.shape_cast %87 : vector<16x132xf32> to vector<1x16x132xf32>
    tpu.vector_store %arg5[%c0_54, %c0_55, %c0_56], %90 {strides = array<i32>} : memref<1x16x132xf32, #tpu.memory_space<vmem>>, vector<1x16x132xf32>,
    return
  }
  func.func @transform_0(%arg0: i32) -> (i32, i32, i32, i32) {
    %c0_i32 = arith.constant 0 : i32
    %c0_i32_0 = arith.constant 0 : i32
    %c0_i32_1 = arith.constant 0 : i32
    %c0_i32_2 = arith.constant 0 : i32
    return %arg0, %c0_i32, %c0_i32_0, %c0_i32_1 : i32, i32, i32, i32
  }
  func.func @transform_1(%arg0: i32) -> (i32, i32, i32) {
    %c0_i32 = arith.constant 0 : i32
    %c0_i32_0 = arith.constant 0 : i32
    %c0_i32_1 = arith.constant 0 : i32
    %c0_i32_2 = arith.constant 0 : i32
    return %c0_i32, %c0_i32_0, %c0_i32_1 : i32, i32, i32
  }
  func.func @transform_2(%arg0: i32) -> (i32, i32) {
    %c0_i32 = arith.constant 0 : i32
    %c0_i32_0 = arith.constant 0 : i32
    %c0_i32_1 = arith.constant 0 : i32
    return %c0_i32, %c0_i32_0 : i32, i32
  }
  func.func @transform_3(%arg0: i32) -> (i32, i32) {
    %c0_i32 = arith.constant 0 : i32
    %c0_i32_0 = arith.constant 0 : i32
    %c0_i32_1 = arith.constant 0 : i32
    return %c0_i32, %c0_i32_0 : i32, i32
  }
  func.func @transform_4(%arg0: i32) -> (i32, i32, i32) {
    %c0_i32 = arith.constant 0 : i32
    %c0_i32_0 = arith.constant 0 : i32
    %c0_i32_1 = arith.constant 0 : i32
    return %arg0, %c0_i32, %c0_i32_0 : i32, i32, i32
  }
}

module attributes {stable_mosaic.version = 11 : i64} {
  func.func @kernel(%arg0: i32, %arg1: memref<1x4x16x37xf32, #tpu.memory_space<vmem>>, %arg2: memref<9x32x16xbf16, #tpu.memory_space<vmem>>, %arg3: memref<32x1xf32, #tpu.memory_space<vmem>>, %arg4: memref<1x30xf32, #tpu.memory_space<vmem>>, %arg5: memref<1x32x30xf32, #tpu.memory_space<vmem>>) attributes {dimension_semantics = [#tpu.dimension_semantics<parallel>], iteration_bounds = array<i64: 2>, scalar_prefetch = 0 : i64, scratch_operands = 0 : i64, tpu.core_type = #tpu.core_type<tc>, window_params = [{transform_indices = @transform_0, window_bounds = array<i64: 1, 4, 16, 37>}, {pipeline_mode = #tpu.pipeline_mode<synchronous>, transform_indices = @transform_1, window_bounds = array<i64: 9, 32, 16>}, {pipeline_mode = #tpu.pipeline_mode<synchronous>, transform_indices = @transform_2, window_bounds = array<i64: 32, 1>}, {pipeline_mode = #tpu.pipeline_mode<synchronous>, transform_indices = @transform_3, window_bounds = array<i64: 1, 30>}, {transform_indices = @transform_4, window_bounds = array<i64: 1, 32, 30>}]} {
    %c0 = arith.constant 0 : index
    %c0_0 = arith.constant 0 : index
    %c0_1 = arith.constant 0 : index
    %c0_2 = arith.constant 0 : index
    %0 = vector.load %arg1[%c0, %c0_0, %c0_1, %c0_2] : memref<1x4x16x37xf32, #tpu.memory_space<vmem>>, vector<1x1x16x37xf32>
    %1 = vector.shape_cast %0 : vector<1x1x16x37xf32> to vector<16x37xf32>
    %2 = arith.truncf %1 : vector<16x37xf32> to vector<16x37xbf16>
    %c0_3 = arith.constant 0 : index
    %c1 = arith.constant 1 : index
    %c0_4 = arith.constant 0 : index
    %c0_5 = arith.constant 0 : index
    %3 = vector.load %arg1[%c0_3, %c1, %c0_4, %c0_5] : memref<1x4x16x37xf32, #tpu.memory_space<vmem>>, vector<1x1x16x37xf32>
    %4 = vector.shape_cast %3 : vector<1x1x16x37xf32> to vector<16x37xf32>
    %5 = arith.truncf %4 : vector<16x37xf32> to vector<16x37xbf16>
    %c0_6 = arith.constant 0 : index
    %c2 = arith.constant 2 : index
    %c0_7 = arith.constant 0 : index
    %c0_8 = arith.constant 0 : index
    %6 = vector.load %arg1[%c0_6, %c2, %c0_7, %c0_8] : memref<1x4x16x37xf32, #tpu.memory_space<vmem>>, vector<1x1x16x37xf32>
    %7 = vector.shape_cast %6 : vector<1x1x16x37xf32> to vector<16x37xf32>
    %8 = arith.truncf %7 : vector<16x37xf32> to vector<16x37xbf16>
    %c0_9 = arith.constant 0 : index
    %c3 = arith.constant 3 : index
    %c0_10 = arith.constant 0 : index
    %c0_11 = arith.constant 0 : index
    %9 = vector.load %arg1[%c0_9, %c3, %c0_10, %c0_11] : memref<1x4x16x37xf32, #tpu.memory_space<vmem>>, vector<1x1x16x37xf32>
    %10 = vector.shape_cast %9 : vector<1x1x16x37xf32> to vector<16x37xf32>
    %11 = arith.truncf %10 : vector<16x37xf32> to vector<16x37xbf16>
    %cst = arith.constant 0.000000e+00 : f32
    %12 = vector.broadcast %cst : f32 to vector<32x30xf32>
    %13 = vector.extract_strided_slice %2 {offsets = [0, 0], sizes = [16, 30], strides = [1, 1]} : vector<16x37xbf16> to vector<16x30xbf16>
    %c0_12 = arith.constant 0 : index
    %c0_13 = arith.constant 0 : index
    %c0_14 = arith.constant 0 : index
    %14 = vector.load %arg2[%c0_12, %c0_13, %c0_14] : memref<9x32x16xbf16, #tpu.memory_space<vmem>>, vector<1x32x16xbf16>
    %15 = vector.shape_cast %14 : vector<1x32x16xbf16> to vector<32x16xbf16>
    %cst_15 = arith.constant dense<0.000000e+00> : vector<32x30xf32>
    %16 = tpu.matmul %15, %13, %cst_15 {dimension_numbers = #tpu.dot_dimension_numbers<[1], [0], [0], [1], [0, 0, 1, 1], [], []>} : vector<32x16xbf16>, vector<16x30xbf16>, vector<32x30xf32> -> vector<32x30xf32>
    %17 = arith.addf %12, %16 : vector<32x30xf32>
    %18 = vector.extract_strided_slice %5 {offsets = [0, 0], sizes = [16, 30], strides = [1, 1]} : vector<16x37xbf16> to vector<16x30xbf16>
    %c1_16 = arith.constant 1 : index
    %c0_17 = arith.constant 0 : index
    %c0_18 = arith.constant 0 : index
    %19 = vector.load %arg2[%c1_16, %c0_17, %c0_18] : memref<9x32x16xbf16, #tpu.memory_space<vmem>>, vector<1x32x16xbf16>
    %20 = vector.shape_cast %19 : vector<1x32x16xbf16> to vector<32x16xbf16>
    %cst_19 = arith.constant dense<0.000000e+00> : vector<32x30xf32>
    %21 = tpu.matmul %20, %18, %cst_19 {dimension_numbers = #tpu.dot_dimension_numbers<[1], [0], [0], [1], [0, 0, 1, 1], [], []>} : vector<32x16xbf16>, vector<16x30xbf16>, vector<32x30xf32> -> vector<32x30xf32>
    %22 = arith.addf %17, %21 : vector<32x30xf32>
    %23 = vector.extract_strided_slice %2 {offsets = [0, 1], sizes = [16, 30], strides = [1, 1]} : vector<16x37xbf16> to vector<16x30xbf16>
    %c2_20 = arith.constant 2 : index
    %c0_21 = arith.constant 0 : index
    %c0_22 = arith.constant 0 : index
    %24 = vector.load %arg2[%c2_20, %c0_21, %c0_22] : memref<9x32x16xbf16, #tpu.memory_space<vmem>>, vector<1x32x16xbf16>
    %25 = vector.shape_cast %24 : vector<1x32x16xbf16> to vector<32x16xbf16>
    %cst_23 = arith.constant dense<0.000000e+00> : vector<32x30xf32>
    %26 = tpu.matmul %25, %23, %cst_23 {dimension_numbers = #tpu.dot_dimension_numbers<[1], [0], [0], [1], [0, 0, 1, 1], [], []>} : vector<32x16xbf16>, vector<16x30xbf16>, vector<32x30xf32> -> vector<32x30xf32>
    %27 = arith.addf %22, %26 : vector<32x30xf32>
    %28 = vector.extract_strided_slice %8 {offsets = [0, 0], sizes = [16, 30], strides = [1, 1]} : vector<16x37xbf16> to vector<16x30xbf16>
    %c3_24 = arith.constant 3 : index
    %c0_25 = arith.constant 0 : index
    %c0_26 = arith.constant 0 : index
    %29 = vector.load %arg2[%c3_24, %c0_25, %c0_26] : memref<9x32x16xbf16, #tpu.memory_space<vmem>>, vector<1x32x16xbf16>
    %30 = vector.shape_cast %29 : vector<1x32x16xbf16> to vector<32x16xbf16>
    %cst_27 = arith.constant dense<0.000000e+00> : vector<32x30xf32>
    %31 = tpu.matmul %30, %28, %cst_27 {dimension_numbers = #tpu.dot_dimension_numbers<[1], [0], [0], [1], [0, 0, 1, 1], [], []>} : vector<32x16xbf16>, vector<16x30xbf16>, vector<32x30xf32> -> vector<32x30xf32>
    %32 = arith.addf %27, %31 : vector<32x30xf32>
    %33 = vector.extract_strided_slice %11 {offsets = [0, 0], sizes = [16, 30], strides = [1, 1]} : vector<16x37xbf16> to vector<16x30xbf16>
    %c4 = arith.constant 4 : index
    %c0_28 = arith.constant 0 : index
    %c0_29 = arith.constant 0 : index
    %34 = vector.load %arg2[%c4, %c0_28, %c0_29] : memref<9x32x16xbf16, #tpu.memory_space<vmem>>, vector<1x32x16xbf16>
    %35 = vector.shape_cast %34 : vector<1x32x16xbf16> to vector<32x16xbf16>
    %cst_30 = arith.constant dense<0.000000e+00> : vector<32x30xf32>
    %36 = tpu.matmul %35, %33, %cst_30 {dimension_numbers = #tpu.dot_dimension_numbers<[1], [0], [0], [1], [0, 0, 1, 1], [], []>} : vector<32x16xbf16>, vector<16x30xbf16>, vector<32x30xf32> -> vector<32x30xf32>
    %37 = arith.addf %32, %36 : vector<32x30xf32>
    %38 = vector.extract_strided_slice %8 {offsets = [0, 1], sizes = [16, 30], strides = [1, 1]} : vector<16x37xbf16> to vector<16x30xbf16>
    %c5 = arith.constant 5 : index
    %c0_31 = arith.constant 0 : index
    %c0_32 = arith.constant 0 : index
    %39 = vector.load %arg2[%c5, %c0_31, %c0_32] : memref<9x32x16xbf16, #tpu.memory_space<vmem>>, vector<1x32x16xbf16>
    %40 = vector.shape_cast %39 : vector<1x32x16xbf16> to vector<32x16xbf16>
    %cst_33 = arith.constant dense<0.000000e+00> : vector<32x30xf32>
    %41 = tpu.matmul %40, %38, %cst_33 {dimension_numbers = #tpu.dot_dimension_numbers<[1], [0], [0], [1], [0, 0, 1, 1], [], []>} : vector<32x16xbf16>, vector<16x30xbf16>, vector<32x30xf32> -> vector<32x30xf32>
    %42 = arith.addf %37, %41 : vector<32x30xf32>
    %43 = vector.extract_strided_slice %2 {offsets = [0, 6], sizes = [16, 30], strides = [1, 1]} : vector<16x37xbf16> to vector<16x30xbf16>
    %c6 = arith.constant 6 : index
    %c0_34 = arith.constant 0 : index
    %c0_35 = arith.constant 0 : index
    %44 = vector.load %arg2[%c6, %c0_34, %c0_35] : memref<9x32x16xbf16, #tpu.memory_space<vmem>>, vector<1x32x16xbf16>
    %45 = vector.shape_cast %44 : vector<1x32x16xbf16> to vector<32x16xbf16>
    %cst_36 = arith.constant dense<0.000000e+00> : vector<32x30xf32>
    %46 = tpu.matmul %45, %43, %cst_36 {dimension_numbers = #tpu.dot_dimension_numbers<[1], [0], [0], [1], [0, 0, 1, 1], [], []>} : vector<32x16xbf16>, vector<16x30xbf16>, vector<32x30xf32> -> vector<32x30xf32>
    %47 = arith.addf %42, %46 : vector<32x30xf32>
    %48 = vector.extract_strided_slice %5 {offsets = [0, 6], sizes = [16, 30], strides = [1, 1]} : vector<16x37xbf16> to vector<16x30xbf16>
    %c7 = arith.constant 7 : index
    %c0_37 = arith.constant 0 : index
    %c0_38 = arith.constant 0 : index
    %49 = vector.load %arg2[%c7, %c0_37, %c0_38] : memref<9x32x16xbf16, #tpu.memory_space<vmem>>, vector<1x32x16xbf16>
    %50 = vector.shape_cast %49 : vector<1x32x16xbf16> to vector<32x16xbf16>
    %cst_39 = arith.constant dense<0.000000e+00> : vector<32x30xf32>
    %51 = tpu.matmul %50, %48, %cst_39 {dimension_numbers = #tpu.dot_dimension_numbers<[1], [0], [0], [1], [0, 0, 1, 1], [], []>} : vector<32x16xbf16>, vector<16x30xbf16>, vector<32x30xf32> -> vector<32x30xf32>
    %52 = arith.addf %47, %51 : vector<32x30xf32>
    %53 = vector.extract_strided_slice %2 {offsets = [0, 7], sizes = [16, 30], strides = [1, 1]} : vector<16x37xbf16> to vector<16x30xbf16>
    %c8 = arith.constant 8 : index
    %c0_40 = arith.constant 0 : index
    %c0_41 = arith.constant 0 : index
    %54 = vector.load %arg2[%c8, %c0_40, %c0_41] : memref<9x32x16xbf16, #tpu.memory_space<vmem>>, vector<1x32x16xbf16>
    %55 = vector.shape_cast %54 : vector<1x32x16xbf16> to vector<32x16xbf16>
    %cst_42 = arith.constant dense<0.000000e+00> : vector<32x30xf32>
    %56 = tpu.matmul %55, %53, %cst_42 {dimension_numbers = #tpu.dot_dimension_numbers<[1], [0], [0], [1], [0, 0, 1, 1], [], []>} : vector<32x16xbf16>, vector<16x30xbf16>, vector<32x30xf32> -> vector<32x30xf32>
    %57 = arith.addf %52, %56 : vector<32x30xf32>
    %c0_43 = arith.constant 0 : index
    %c0_44 = arith.constant 0 : index
    %58 = vector.load %arg3[%c0_43, %c0_44] : memref<32x1xf32, #tpu.memory_space<vmem>>, vector<32x1xf32>
    %59 = vector.broadcast %58 : vector<32x1xf32> to vector<32x30xf32>
    %60 = arith.addf %57, %59 : vector<32x30xf32>
    %c0_45 = arith.constant 0 : index
    %c0_46 = arith.constant 0 : index
    %61 = vector.load %arg4[%c0_45, %c0_46] : memref<1x30xf32, #tpu.memory_space<vmem>>, vector<1x30xf32>
    %62 = vector.broadcast %61 : vector<1x30xf32> to vector<32x30xf32>
    %63 = arith.mulf %60, %62 : vector<32x30xf32>
    %cst_47 = arith.constant dense<0.000000e+00> : vector<32xf32>
    %64 = vector.multi_reduction <add>, %63, %cst_47 [1] : vector<32x30xf32> to vector<32xf32>
    %65 = vector.shape_cast %64 : vector<32xf32> to vector<32x1xf32>
    %66 = arith.mulf %60, %60 : vector<32x30xf32>
    %67 = vector.broadcast %61 : vector<1x30xf32> to vector<32x30xf32>
    %68 = arith.mulf %66, %67 : vector<32x30xf32>
    %cst_48 = arith.constant dense<0.000000e+00> : vector<32xf32>
    %69 = vector.multi_reduction <add>, %68, %cst_48 [1] : vector<32x30xf32> to vector<32xf32>
    %70 = vector.shape_cast %69 : vector<32xf32> to vector<32x1xf32>
    %cst_49 = arith.constant 4.000000e-02 : f32
    %71 = vector.broadcast %cst_49 : f32 to vector<32x1xf32>
    %72 = arith.mulf %65, %71 : vector<32x1xf32>
    %cst_50 = arith.constant 4.000000e-02 : f32
    %73 = vector.broadcast %cst_50 : f32 to vector<32x1xf32>
    %74 = arith.mulf %70, %73 : vector<32x1xf32>
    %75 = arith.mulf %72, %72 : vector<32x1xf32>
    %76 = arith.subf %74, %75 : vector<32x1xf32>
    %cst_51 = arith.constant 0.000000e+00 : f32
    %77 = vector.broadcast %cst_51 : f32 to vector<32x1xf32>
    %78 = arith.maximumf %76, %77 : vector<32x1xf32>
    %79 = vector.broadcast %72 : vector<32x1xf32> to vector<32x30xf32>
    %80 = arith.subf %60, %79 : vector<32x30xf32>
    %cst_52 = arith.constant 9.99999974E-6 : f32
    %81 = vector.broadcast %cst_52 : f32 to vector<32x1xf32>
    %82 = arith.addf %78, %81 : vector<32x1xf32>
    %83 = math.rsqrt %82 : vector<32x1xf32>
    %84 = vector.broadcast %83 : vector<32x1xf32> to vector<32x30xf32>
    %85 = arith.mulf %80, %84 : vector<32x30xf32>
    %cst_53 = arith.constant 0.000000e+00 : f32
    %86 = vector.broadcast %cst_53 : f32 to vector<32x30xf32>
    %87 = arith.maximumf %85, %86 : vector<32x30xf32>
    %c0_54 = arith.constant 0 : index
    %c0_55 = arith.constant 0 : index
    %c0_56 = arith.constant 0 : index
    %88 = vector.load %arg5[%c0_54, %c0_55, %c0_56] : memref<1x32x30xf32, #tpu.memory_space<vmem>>, vector<1x32x30xf32>
    %89 = vector.shape_cast %88 : vector<1x32x30xf32> to vector<32x30xf32>
    %90 = vector.shape_cast %87 : vector<32x30xf32> to vector<1x32x30xf32>
    tpu.vector_store %arg5[%c0_54, %c0_55, %c0_56], %90 {strides = array<i32>} : memref<1x32x30xf32, #tpu.memory_space<vmem>>, vector<1x32x30xf32>,
    return
  }
  func.func @transform_0(%arg0: i32) -> (i32, i32, i32, i32) {
    %c0_i32 = arith.constant 0 : i32
    %c0_i32_0 = arith.constant 0 : i32
    %c0_i32_1 = arith.constant 0 : i32
    %c0_i32_2 = arith.constant 0 : i32
    return %arg0, %c0_i32, %c0_i32_0, %c0_i32_1 : i32, i32, i32, i32
  }
  func.func @transform_1(%arg0: i32) -> (i32, i32, i32) {
    %c0_i32 = arith.constant 0 : i32
    %c0_i32_0 = arith.constant 0 : i32
    %c0_i32_1 = arith.constant 0 : i32
    %c0_i32_2 = arith.constant 0 : i32
    return %c0_i32, %c0_i32_0, %c0_i32_1 : i32, i32, i32
  }
  func.func @transform_2(%arg0: i32) -> (i32, i32) {
    %c0_i32 = arith.constant 0 : i32
    %c0_i32_0 = arith.constant 0 : i32
    %c0_i32_1 = arith.constant 0 : i32
    return %c0_i32, %c0_i32_0 : i32, i32
  }
  func.func @transform_3(%arg0: i32) -> (i32, i32) {
    %c0_i32 = arith.constant 0 : i32
    %c0_i32_0 = arith.constant 0 : i32
    %c0_i32_1 = arith.constant 0 : i32
    return %c0_i32, %c0_i32_0 : i32, i32
  }
  func.func @transform_4(%arg0: i32) -> (i32, i32, i32) {
    %c0_i32 = arith.constant 0 : i32
    %c0_i32_0 = arith.constant 0 : i32
    %c0_i32_1 = arith.constant 0 : i32
    return %arg0, %c0_i32, %c0_i32_0 : i32, i32, i32
  }
}

module attributes {stable_mosaic.version = 11 : i64} {
  func.func @kernel(%arg0: i32, %arg1: memref<1x4x32x10xf32, #tpu.memory_space<vmem>>, %arg2: memref<9x64x32xbf16, #tpu.memory_space<vmem>>, %arg3: memref<64x1xf32, #tpu.memory_space<vmem>>, %arg4: memref<1x6xf32, #tpu.memory_space<vmem>>, %arg5: memref<1x64x6xf32, #tpu.memory_space<vmem>>) attributes {dimension_semantics = [#tpu.dimension_semantics<parallel>], iteration_bounds = array<i64: 2>, scalar_prefetch = 0 : i64, scratch_operands = 0 : i64, tpu.core_type = #tpu.core_type<tc>, window_params = [{transform_indices = @transform_0, window_bounds = array<i64: 1, 4, 32, 10>}, {pipeline_mode = #tpu.pipeline_mode<synchronous>, transform_indices = @transform_1, window_bounds = array<i64: 9, 64, 32>}, {pipeline_mode = #tpu.pipeline_mode<synchronous>, transform_indices = @transform_2, window_bounds = array<i64: 64, 1>}, {pipeline_mode = #tpu.pipeline_mode<synchronous>, transform_indices = @transform_3, window_bounds = array<i64: 1, 6>}, {transform_indices = @transform_4, window_bounds = array<i64: 1, 64, 6>}]} {
    %c0 = arith.constant 0 : index
    %c0_0 = arith.constant 0 : index
    %c0_1 = arith.constant 0 : index
    %c0_2 = arith.constant 0 : index
    %0 = vector.load %arg1[%c0, %c0_0, %c0_1, %c0_2] : memref<1x4x32x10xf32, #tpu.memory_space<vmem>>, vector<1x1x32x10xf32>
    %1 = vector.shape_cast %0 : vector<1x1x32x10xf32> to vector<32x10xf32>
    %2 = arith.truncf %1 : vector<32x10xf32> to vector<32x10xbf16>
    %c0_3 = arith.constant 0 : index
    %c1 = arith.constant 1 : index
    %c0_4 = arith.constant 0 : index
    %c0_5 = arith.constant 0 : index
    %3 = vector.load %arg1[%c0_3, %c1, %c0_4, %c0_5] : memref<1x4x32x10xf32, #tpu.memory_space<vmem>>, vector<1x1x32x10xf32>
    %4 = vector.shape_cast %3 : vector<1x1x32x10xf32> to vector<32x10xf32>
    %5 = arith.truncf %4 : vector<32x10xf32> to vector<32x10xbf16>
    %c0_6 = arith.constant 0 : index
    %c2 = arith.constant 2 : index
    %c0_7 = arith.constant 0 : index
    %c0_8 = arith.constant 0 : index
    %6 = vector.load %arg1[%c0_6, %c2, %c0_7, %c0_8] : memref<1x4x32x10xf32, #tpu.memory_space<vmem>>, vector<1x1x32x10xf32>
    %7 = vector.shape_cast %6 : vector<1x1x32x10xf32> to vector<32x10xf32>
    %8 = arith.truncf %7 : vector<32x10xf32> to vector<32x10xbf16>
    %c0_9 = arith.constant 0 : index
    %c3 = arith.constant 3 : index
    %c0_10 = arith.constant 0 : index
    %c0_11 = arith.constant 0 : index
    %9 = vector.load %arg1[%c0_9, %c3, %c0_10, %c0_11] : memref<1x4x32x10xf32, #tpu.memory_space<vmem>>, vector<1x1x32x10xf32>
    %10 = vector.shape_cast %9 : vector<1x1x32x10xf32> to vector<32x10xf32>
    %11 = arith.truncf %10 : vector<32x10xf32> to vector<32x10xbf16>
    %cst = arith.constant 0.000000e+00 : f32
    %12 = vector.broadcast %cst : f32 to vector<64x6xf32>
    %13 = vector.extract_strided_slice %2 {offsets = [0, 0], sizes = [32, 6], strides = [1, 1]} : vector<32x10xbf16> to vector<32x6xbf16>
    %c0_12 = arith.constant 0 : index
    %c0_13 = arith.constant 0 : index
    %c0_14 = arith.constant 0 : index
    %14 = vector.load %arg2[%c0_12, %c0_13, %c0_14] : memref<9x64x32xbf16, #tpu.memory_space<vmem>>, vector<1x64x32xbf16>
    %15 = vector.shape_cast %14 : vector<1x64x32xbf16> to vector<64x32xbf16>
    %cst_15 = arith.constant dense<0.000000e+00> : vector<64x6xf32>
    %16 = tpu.matmul %15, %13, %cst_15 {dimension_numbers = #tpu.dot_dimension_numbers<[1], [0], [0], [1], [0, 0, 1, 1], [], []>} : vector<64x32xbf16>, vector<32x6xbf16>, vector<64x6xf32> -> vector<64x6xf32>
    %17 = arith.addf %12, %16 : vector<64x6xf32>
    %18 = vector.extract_strided_slice %5 {offsets = [0, 0], sizes = [32, 6], strides = [1, 1]} : vector<32x10xbf16> to vector<32x6xbf16>
    %c1_16 = arith.constant 1 : index
    %c0_17 = arith.constant 0 : index
    %c0_18 = arith.constant 0 : index
    %19 = vector.load %arg2[%c1_16, %c0_17, %c0_18] : memref<9x64x32xbf16, #tpu.memory_space<vmem>>, vector<1x64x32xbf16>
    %20 = vector.shape_cast %19 : vector<1x64x32xbf16> to vector<64x32xbf16>
    %cst_19 = arith.constant dense<0.000000e+00> : vector<64x6xf32>
    %21 = tpu.matmul %20, %18, %cst_19 {dimension_numbers = #tpu.dot_dimension_numbers<[1], [0], [0], [1], [0, 0, 1, 1], [], []>} : vector<64x32xbf16>, vector<32x6xbf16>, vector<64x6xf32> -> vector<64x6xf32>
    %22 = arith.addf %17, %21 : vector<64x6xf32>
    %23 = vector.extract_strided_slice %2 {offsets = [0, 1], sizes = [32, 6], strides = [1, 1]} : vector<32x10xbf16> to vector<32x6xbf16>
    %c2_20 = arith.constant 2 : index
    %c0_21 = arith.constant 0 : index
    %c0_22 = arith.constant 0 : index
    %24 = vector.load %arg2[%c2_20, %c0_21, %c0_22] : memref<9x64x32xbf16, #tpu.memory_space<vmem>>, vector<1x64x32xbf16>
    %25 = vector.shape_cast %24 : vector<1x64x32xbf16> to vector<64x32xbf16>
    %cst_23 = arith.constant dense<0.000000e+00> : vector<64x6xf32>
    %26 = tpu.matmul %25, %23, %cst_23 {dimension_numbers = #tpu.dot_dimension_numbers<[1], [0], [0], [1], [0, 0, 1, 1], [], []>} : vector<64x32xbf16>, vector<32x6xbf16>, vector<64x6xf32> -> vector<64x6xf32>
    %27 = arith.addf %22, %26 : vector<64x6xf32>
    %28 = vector.extract_strided_slice %8 {offsets = [0, 0], sizes = [32, 6], strides = [1, 1]} : vector<32x10xbf16> to vector<32x6xbf16>
    %c3_24 = arith.constant 3 : index
    %c0_25 = arith.constant 0 : index
    %c0_26 = arith.constant 0 : index
    %29 = vector.load %arg2[%c3_24, %c0_25, %c0_26] : memref<9x64x32xbf16, #tpu.memory_space<vmem>>, vector<1x64x32xbf16>
    %30 = vector.shape_cast %29 : vector<1x64x32xbf16> to vector<64x32xbf16>
    %cst_27 = arith.constant dense<0.000000e+00> : vector<64x6xf32>
    %31 = tpu.matmul %30, %28, %cst_27 {dimension_numbers = #tpu.dot_dimension_numbers<[1], [0], [0], [1], [0, 0, 1, 1], [], []>} : vector<64x32xbf16>, vector<32x6xbf16>, vector<64x6xf32> -> vector<64x6xf32>
    %32 = arith.addf %27, %31 : vector<64x6xf32>
    %33 = vector.extract_strided_slice %11 {offsets = [0, 0], sizes = [32, 6], strides = [1, 1]} : vector<32x10xbf16> to vector<32x6xbf16>
    %c4 = arith.constant 4 : index
    %c0_28 = arith.constant 0 : index
    %c0_29 = arith.constant 0 : index
    %34 = vector.load %arg2[%c4, %c0_28, %c0_29] : memref<9x64x32xbf16, #tpu.memory_space<vmem>>, vector<1x64x32xbf16>
    %35 = vector.shape_cast %34 : vector<1x64x32xbf16> to vector<64x32xbf16>
    %cst_30 = arith.constant dense<0.000000e+00> : vector<64x6xf32>
    %36 = tpu.matmul %35, %33, %cst_30 {dimension_numbers = #tpu.dot_dimension_numbers<[1], [0], [0], [1], [0, 0, 1, 1], [], []>} : vector<64x32xbf16>, vector<32x6xbf16>, vector<64x6xf32> -> vector<64x6xf32>
    %37 = arith.addf %32, %36 : vector<64x6xf32>
    %38 = vector.extract_strided_slice %8 {offsets = [0, 1], sizes = [32, 6], strides = [1, 1]} : vector<32x10xbf16> to vector<32x6xbf16>
    %c5 = arith.constant 5 : index
    %c0_31 = arith.constant 0 : index
    %c0_32 = arith.constant 0 : index
    %39 = vector.load %arg2[%c5, %c0_31, %c0_32] : memref<9x64x32xbf16, #tpu.memory_space<vmem>>, vector<1x64x32xbf16>
    %40 = vector.shape_cast %39 : vector<1x64x32xbf16> to vector<64x32xbf16>
    %cst_33 = arith.constant dense<0.000000e+00> : vector<64x6xf32>
    %41 = tpu.matmul %40, %38, %cst_33 {dimension_numbers = #tpu.dot_dimension_numbers<[1], [0], [0], [1], [0, 0, 1, 1], [], []>} : vector<64x32xbf16>, vector<32x6xbf16>, vector<64x6xf32> -> vector<64x6xf32>
    %42 = arith.addf %37, %41 : vector<64x6xf32>
    %43 = vector.extract_strided_slice %2 {offsets = [0, 3], sizes = [32, 6], strides = [1, 1]} : vector<32x10xbf16> to vector<32x6xbf16>
    %c6 = arith.constant 6 : index
    %c0_34 = arith.constant 0 : index
    %c0_35 = arith.constant 0 : index
    %44 = vector.load %arg2[%c6, %c0_34, %c0_35] : memref<9x64x32xbf16, #tpu.memory_space<vmem>>, vector<1x64x32xbf16>
    %45 = vector.shape_cast %44 : vector<1x64x32xbf16> to vector<64x32xbf16>
    %cst_36 = arith.constant dense<0.000000e+00> : vector<64x6xf32>
    %46 = tpu.matmul %45, %43, %cst_36 {dimension_numbers = #tpu.dot_dimension_numbers<[1], [0], [0], [1], [0, 0, 1, 1], [], []>} : vector<64x32xbf16>, vector<32x6xbf16>, vector<64x6xf32> -> vector<64x6xf32>
    %47 = arith.addf %42, %46 : vector<64x6xf32>
    %48 = vector.extract_strided_slice %5 {offsets = [0, 3], sizes = [32, 6], strides = [1, 1]} : vector<32x10xbf16> to vector<32x6xbf16>
    %c7 = arith.constant 7 : index
    %c0_37 = arith.constant 0 : index
    %c0_38 = arith.constant 0 : index
    %49 = vector.load %arg2[%c7, %c0_37, %c0_38] : memref<9x64x32xbf16, #tpu.memory_space<vmem>>, vector<1x64x32xbf16>
    %50 = vector.shape_cast %49 : vector<1x64x32xbf16> to vector<64x32xbf16>
    %cst_39 = arith.constant dense<0.000000e+00> : vector<64x6xf32>
    %51 = tpu.matmul %50, %48, %cst_39 {dimension_numbers = #tpu.dot_dimension_numbers<[1], [0], [0], [1], [0, 0, 1, 1], [], []>} : vector<64x32xbf16>, vector<32x6xbf16>, vector<64x6xf32> -> vector<64x6xf32>
    %52 = arith.addf %47, %51 : vector<64x6xf32>
    %53 = vector.extract_strided_slice %2 {offsets = [0, 4], sizes = [32, 6], strides = [1, 1]} : vector<32x10xbf16> to vector<32x6xbf16>
    %c8 = arith.constant 8 : index
    %c0_40 = arith.constant 0 : index
    %c0_41 = arith.constant 0 : index
    %54 = vector.load %arg2[%c8, %c0_40, %c0_41] : memref<9x64x32xbf16, #tpu.memory_space<vmem>>, vector<1x64x32xbf16>
    %55 = vector.shape_cast %54 : vector<1x64x32xbf16> to vector<64x32xbf16>
    %cst_42 = arith.constant dense<0.000000e+00> : vector<64x6xf32>
    %56 = tpu.matmul %55, %53, %cst_42 {dimension_numbers = #tpu.dot_dimension_numbers<[1], [0], [0], [1], [0, 0, 1, 1], [], []>} : vector<64x32xbf16>, vector<32x6xbf16>, vector<64x6xf32> -> vector<64x6xf32>
    %57 = arith.addf %52, %56 : vector<64x6xf32>
    %c0_43 = arith.constant 0 : index
    %c0_44 = arith.constant 0 : index
    %58 = vector.load %arg3[%c0_43, %c0_44] : memref<64x1xf32, #tpu.memory_space<vmem>>, vector<64x1xf32>
    %59 = vector.broadcast %58 : vector<64x1xf32> to vector<64x6xf32>
    %60 = arith.addf %57, %59 : vector<64x6xf32>
    %c0_45 = arith.constant 0 : index
    %c0_46 = arith.constant 0 : index
    %61 = vector.load %arg4[%c0_45, %c0_46] : memref<1x6xf32, #tpu.memory_space<vmem>>, vector<1x6xf32>
    %62 = vector.broadcast %61 : vector<1x6xf32> to vector<64x6xf32>
    %63 = arith.mulf %60, %62 : vector<64x6xf32>
    %cst_47 = arith.constant dense<0.000000e+00> : vector<64xf32>
    %64 = vector.multi_reduction <add>, %63, %cst_47 [1] : vector<64x6xf32> to vector<64xf32>
    %65 = vector.shape_cast %64 : vector<64xf32> to vector<64x1xf32>
    %66 = arith.mulf %60, %60 : vector<64x6xf32>
    %67 = vector.broadcast %61 : vector<1x6xf32> to vector<64x6xf32>
    %68 = arith.mulf %66, %67 : vector<64x6xf32>
    %cst_48 = arith.constant dense<0.000000e+00> : vector<64xf32>
    %69 = vector.multi_reduction <add>, %68, %cst_48 [1] : vector<64x6xf32> to vector<64xf32>
    %70 = vector.shape_cast %69 : vector<64xf32> to vector<64x1xf32>
    %cst_49 = arith.constant 2.500000e-01 : f32
    %71 = vector.broadcast %cst_49 : f32 to vector<64x1xf32>
    %72 = arith.mulf %65, %71 : vector<64x1xf32>
    %cst_50 = arith.constant 2.500000e-01 : f32
    %73 = vector.broadcast %cst_50 : f32 to vector<64x1xf32>
    %74 = arith.mulf %70, %73 : vector<64x1xf32>
    %75 = arith.mulf %72, %72 : vector<64x1xf32>
    %76 = arith.subf %74, %75 : vector<64x1xf32>
    %cst_51 = arith.constant 0.000000e+00 : f32
    %77 = vector.broadcast %cst_51 : f32 to vector<64x1xf32>
    %78 = arith.maximumf %76, %77 : vector<64x1xf32>
    %79 = vector.broadcast %72 : vector<64x1xf32> to vector<64x6xf32>
    %80 = arith.subf %60, %79 : vector<64x6xf32>
    %cst_52 = arith.constant 9.99999974E-6 : f32
    %81 = vector.broadcast %cst_52 : f32 to vector<64x1xf32>
    %82 = arith.addf %78, %81 : vector<64x1xf32>
    %83 = math.rsqrt %82 : vector<64x1xf32>
    %84 = vector.broadcast %83 : vector<64x1xf32> to vector<64x6xf32>
    %85 = arith.mulf %80, %84 : vector<64x6xf32>
    %cst_53 = arith.constant 0.000000e+00 : f32
    %86 = vector.broadcast %cst_53 : f32 to vector<64x6xf32>
    %87 = arith.maximumf %85, %86 : vector<64x6xf32>
    %c0_54 = arith.constant 0 : index
    %c0_55 = arith.constant 0 : index
    %c0_56 = arith.constant 0 : index
    %88 = vector.load %arg5[%c0_54, %c0_55, %c0_56] : memref<1x64x6xf32, #tpu.memory_space<vmem>>, vector<1x64x6xf32>
    %89 = vector.shape_cast %88 : vector<1x64x6xf32> to vector<64x6xf32>
    %90 = vector.shape_cast %87 : vector<64x6xf32> to vector<1x64x6xf32>
    tpu.vector_store %arg5[%c0_54, %c0_55, %c0_56], %90 {strides = array<i32>} : memref<1x64x6xf32, #tpu.memory_space<vmem>>, vector<1x64x6xf32>,
    return
  }
  func.func @transform_0(%arg0: i32) -> (i32, i32, i32, i32) {
    %c0_i32 = arith.constant 0 : i32
    %c0_i32_0 = arith.constant 0 : i32
    %c0_i32_1 = arith.constant 0 : i32
    %c0_i32_2 = arith.constant 0 : i32
    return %arg0, %c0_i32, %c0_i32_0, %c0_i32_1 : i32, i32, i32, i32
  }
  func.func @transform_1(%arg0: i32) -> (i32, i32, i32) {
    %c0_i32 = arith.constant 0 : i32
    %c0_i32_0 = arith.constant 0 : i32
    %c0_i32_1 = arith.constant 0 : i32
    %c0_i32_2 = arith.constant 0 : i32
    return %c0_i32, %c0_i32_0, %c0_i32_1 : i32, i32, i32
  }
  func.func @transform_2(%arg0: i32) -> (i32, i32) {
    %c0_i32 = arith.constant 0 : i32
    %c0_i32_0 = arith.constant 0 : i32
    %c0_i32_1 = arith.constant 0 : i32
    return %c0_i32, %c0_i32_0 : i32, i32
  }
  func.func @transform_3(%arg0: i32) -> (i32, i32) {
    %c0_i32 = arith.constant 0 : i32
    %c0_i32_0 = arith.constant 0 : i32
    %c0_i32_1 = arith.constant 0 : i32
    return %c0_i32, %c0_i32_0 : i32, i32
  }
  func.func @transform_4(%arg0: i32) -> (i32, i32, i32) {
    %c0_i32 = arith.constant 0 : i32
    %c0_i32_0 = arith.constant 0 : i32
    %c0_i32_1 = arith.constant 0 : i32
    return %arg0, %c0_i32, %c0_i32_0 : i32, i32, i32
  }
}

</mosaic_0001>

<llo_original>
// kernel: encoder_forward.5
$region0: #{encoder_forward.5}
  #allocation0 [shape = 'u32[]', space=smem, size = 0x4, offset = 0x4, fixed_abs, tag = 'smem constant byte address 0x4 - core index']
  #allocation1 [shape = 'u32[72,128]{1,0:T(1,128)}', space=vmem, size = 0x9000, scoped, tag = 'internal scratch']
  %s0 = inlined_call_operand.vmem [shape: f32[2,1,4,2502], index: 0, kind: input, shape index: {}]
  %s1 = inlined_call_operand.vmem [shape: bf16[9,8,4], index: 1, kind: input, shape index: {}]
  %s2 = inlined_call_operand.vmem [shape: f32[8,1], index: 2, kind: input, shape index: {}]
  %s3 = inlined_call_operand.vmem [shape: f32[1,2502], index: 3, kind: input, shape index: {}]
  %s4 = inlined_call_operand.vmem [shape: f32[1,2400], index: 4, kind: input, shape index: {}]
  %s5 = inlined_call_operand.vmem [shape: f32[2,8,2400], index: 5, kind: output, shape index: {}]
  %s6 = sld [smem:[#allocation0]]
  $region53: #{encoder_forward.5} parent=0
    _
  %s8 = ssub.s32 1, %s6
  %s9 = scalar_select 0, %s8, %s6
  loop: start=0, step=1, limit=4
  $region2: #{encoder_forward.5} parent=0 // loop_pre_header
    _
  $region3: #{encoder_forward.5} parent=0 // loop_header
    %s11 = sphi 0, %s15
    %p12 = scmp.ge.s32.totalorder %s11, 4
    %s21 = sphi 0, %s23
    %s24 = sphi 0, %s21
    %s25 = sphi 0, %s24
    %s41 = sphi 0, %s25
    %s45 = sphi 0, %s45
    %s47 = sphi 0, %s45
    %s48 = sphi 0, %s47
    %s62 = sphi 0, %s48
    %s66 = sphi 0, %s66
    %s68 = sphi 0, %s66
    %s69 = sphi 0, %s68
    %s83 = sphi 0, %s69
    %s87 = sphi 0, %s87
    %s89 = sphi 0, %s87
    %s90 = sphi 0, %s89
    %s104 = sphi 0, %s90
    %s108 = sphi 0, %s108
    %s110 = sphi 0, %s108
    %s111 = sphi 0, %s110
    %s125 = sphi 0, %s111
    %s131 = sphi 0, %s133
    %s134 = sphi 0, %s131
    %s135 = sphi 0, %s134
    %s151 = sphi 0, %s135
  $region4: #{encoder_forward.5} parent=0 // loop_header_branch
    %14 = sbr.rel (%p12) target = $region8
  $region5: #{encoder_forward.5} parent=0 // loop_body
    %s16 = ssub.s32 %s11, 1
    %s17 = ssub.s32 %s11, 2
    %s18 = sadd.s32 %s11, 1
    %s19 = ssub.s32 %s11, %s18
    %p20 = scmp.eq.s32.totalorder %s19, 0
    %s22 = sadd.s32 %s21, 1
    %s23 = scalar_select %p20, %s21, %s22
    %p26 = pneg %p20
    %p27 = scmp.eq.s32.totalorder %s11, 1
    %p28 = por %p26, %p27
    %p29 = scmp.ne.s32.totalorder %s21, %s24
    %p30 = scmp.eq.s32.totalorder %s11, 0
    %p31 = por %p29, %p30
    %p32 = scmp.ne.s32.totalorder %s21, %s24
    %p33 = scmp.eq.s32.totalorder %s16, 1
    %p34 = por %p32, %p33
    %p35 = scmp.ne.s32.totalorder %s24, %s25
    %p36 = scmp.eq.s32.totalorder %s16, 0
    %p37 = por %p35, %p36
    %p38 = scmp.ne.s32.totalorder %s24, %s25
    %p39 = scmp.eq.s32.totalorder %s17, 1
    %p40 = por %p38, %p39
    %p42 = scmp.ne.s32.totalorder %s25, %s41
    %p43 = scmp.eq.s32.totalorder %s17, 0
    %p44 = por %p42, %p43
    %s46 = sadd.s32 %s45, 1
    %p49 = scmp.eq.s32.totalorder %s11, 1
    %p50 = scmp.ne.s32.totalorder %s45, %s47
    %p51 = scmp.eq.s32.totalorder %s11, 0
    %p52 = por %p50, %p51
    %p53 = scmp.ne.s32.totalorder %s45, %s47
    %p54 = scmp.eq.s32.totalorder %s16, 1
    %p55 = por %p53, %p54
    %p56 = scmp.ne.s32.totalorder %s47, %s48
    %p57 = scmp.eq.s32.totalorder %s16, 0
    %p58 = por %p56, %p57
    %p59 = scmp.ne.s32.totalorder %s47, %s48
    %p60 = scmp.eq.s32.totalorder %s17, 1
    %p61 = por %p59, %p60
    %p63 = scmp.ne.s32.totalorder %s48, %s62
    %p64 = scmp.eq.s32.totalorder %s17, 0
    %p65 = por %p63, %p64
    %s67 = sadd.s32 %s66, 1
    %p70 = scmp.eq.s32.totalorder %s11, 1
    %p71 = scmp.ne.s32.totalorder %s66, %s68
    %p72 = scmp.eq.s32.totalorder %s11, 0
    %p73 = por %p71, %p72
    %p74 = scmp.ne.s32.totalorder %s66, %s68
    %p75 = scmp.eq.s32.totalorder %s16, 1
    %p76 = por %p74, %p75
    %p77 = scmp.ne.s32.totalorder %s68, %s69
    %p78 = scmp.eq.s32.totalorder %s16, 0
    %p79 = por %p77, %p78
    %p80 = scmp.ne.s32.totalorder %s68, %s69
    %p81 = scmp.eq.s32.totalorder %s17, 1
    %p82 = por %p80, %p81
    %p84 = scmp.ne.s32.totalorder %s69, %s83
    %p85 = scmp.eq.s32.totalorder %s17, 0
    %p86 = por %p84, %p85
    %s88 = sadd.s32 %s87, 1
    %p91 = scmp.eq.s32.totalorder %s11, 1
    %p92 = scmp.ne.s32.totalorder %s87, %s89
    %p93 = scmp.eq.s32.totalorder %s11, 0
    %p94 = por %p92, %p93
    %p95 = scmp.ne.s32.totalorder %s87, %s89
    %p96 = scmp.eq.s32.totalorder %s16, 1
    %p97 = por %p95, %p96
    %p98 = scmp.ne.s32.totalorder %s89, %s90
    %p99 = scmp.eq.s32.totalorder %s16, 0
    %p100 = por %p98, %p99
    %p101 = scmp.ne.s32.totalorder %s89, %s90
    %p102 = scmp.eq.s32.totalorder %s17, 1
    %p103 = por %p101, %p102
    %p105 = scmp.ne.s32.totalorder %s90, %s104
    %p106 = scmp.eq.s32.totalorder %s17, 0
    %p107 = por %p105, %p106
    %s109 = sadd.s32 %s108, 1
    %p112 = scmp.eq.s32.totalorder %s11, 1
    %p113 = scmp.ne.s32.totalorder %s108, %s110
    %p114 = scmp.eq.s32.totalorder %s11, 0
    %p115 = por %p113, %p114
    %p116 = scmp.ne.s32.totalorder %s108, %s110
    %p117 = scmp.eq.s32.totalorder %s16, 1
    %p118 = por %p116, %p117
    %p119 = scmp.ne.s32.totalorder %s110, %s111
    %p120 = scmp.eq.s32.totalorder %s16, 0
    %p121 = por %p119, %p120
    %p122 = scmp.ne.s32.totalorder %s110, %s111
    %p123 = scmp.eq.s32.totalorder %s17, 1
    %p124 = por %p122, %p123
    %p126 = scmp.ne.s32.totalorder %s111, %s125
    %p127 = scmp.eq.s32.totalorder %s17, 0
    %p128 = por %p126, %p127
    %s129 = ssub.s32 %s11, %s18
    %p130 = scmp.eq.s32.totalorder %s129, 0
    %s132 = sadd.s32 %s131, 1
    %s133 = scalar_select %p130, %s131, %s132
    %p136 = pneg %p130
    %p137 = scmp.eq.s32.totalorder %s11, 1
    %p138 = por %p136, %p137
    %p139 = scmp.ne.s32.totalorder %s131, %s134
    %p140 = scmp.eq.s32.totalorder %s11, 0
    %p141 = por %p139, %p140
    %p142 = scmp.ne.s32.totalorder %s131, %s134
    %p143 = scmp.eq.s32.totalorder %s16, 1
    %p144 = por %p142, %p143
    %p145 = scmp.ne.s32.totalorder %s134, %s135
    %p146 = scmp.eq.s32.totalorder %s16, 0
    %p147 = por %p145, %p146
    %p148 = scmp.ne.s32.totalorder %s134, %s135
    %p149 = scmp.eq.s32.totalorder %s17, 1
    %p150 = por %p148, %p149
    %p152 = scmp.ne.s32.totalorder %s135, %s151
    %p153 = scmp.eq.s32.totalorder %s17, 0
    %p154 = por %p152, %p153
    %p155 = scmp.le.s32.totalorder 1, %s11
    %p156 = scmp.lt.s32.totalorder %s11, 3
    %p157 = pnand %p155, %p156
    %p158 = pneg %p157
    // Predicated region
    $region9: #{encoder_forward.5} parent=5 // pred_check
      _
    $region10: #{encoder_forward.5} parent=5 // pred_check_branch
      %160 = sbr.rel (%p157) target = $region12
    $region11: #{encoder_forward.5} parent=5 // pred_region
      %s161 = ssub.s32 %s11, 1
      // Predicated region
      $region13: #{encoder_forward.5} parent=11 // pred_check
        %p162 = pneg %p58
      $region14: #{encoder_forward.5} parent=11 // pred_check_branch
        %164 = sbr.rel (%p162) target = $region16
      $region15: #{encoder_forward.5} parent=11 // pred_region
        _
      $region16: #{encoder_forward.5} parent=11 // pred_fallthru
        _
      // Predicated region
      $region17: #{encoder_forward.5} parent=11 // pred_check
        %p165 = pneg %p79
      $region18: #{encoder_forward.5} parent=11 // pred_check_branch
        %167 = sbr.rel (%p165) target = $region20
      $region19: #{encoder_forward.5} parent=11 // pred_region
        _
      $region20: #{encoder_forward.5} parent=11 // pred_fallthru
        _
      // Predicated region
      $region21: #{encoder_forward.5} parent=11 // pred_check
        %p168 = pneg %p100
      $region22: #{encoder_forward.5} parent=11 // pred_check_branch
        %170 = sbr.rel (%p168) target = $region24
      $region23: #{encoder_forward.5} parent=11 // pred_region
        _
      $region24: #{encoder_forward.5} parent=11 // pred_fallthru
        _
      // Predicated region
      $region25: #{encoder_forward.5} parent=11 // pred_check
        %p171 = pneg %p121
      $region26: #{encoder_forward.5} parent=11 // pred_check_branch
        %173 = sbr.rel (%p171) target = $region28
      $region27: #{encoder_forward.5} parent=11 // pred_region
        _
      $region28: #{encoder_forward.5} parent=11 // pred_fallthru
        _
    $region12: #{encoder_forward.5} parent=5 // pred_fallthru
      _
    %p174 = scmp.lt.s32.totalorder %s11, 2
    // Predicated region
    $region29: #{encoder_forward.5} parent=5 // pred_check
      %p175 = pneg %p174
    $region30: #{encoder_forward.5} parent=5 // pred_check_branch
      %177 = sbr.rel (%p175) target = $region32
    $region31: #{encoder_forward.5} parent=5 // pred_region
      // Predicated region
      $region33: #{encoder_forward.5} parent=31 // pred_check
        %p178 = pneg %p31
      $region34: #{encoder_forward.5} parent=31 // pred_check_branch
        %180 = sbr.rel (%p178) target = $region36
      $region35: #{encoder_forward.5} parent=31 // pred_region
        %p181 = scmp.lt.s32.totalorder %s11, 1
        %s182 = scalar_select %p181, %s11, 1
        %s183 = smul.addr %s182, 20
        %s184 = smul.addr %s183, 4
        %s185 = scalar_lea.vmem %s0, %s184
      $region36: #{encoder_forward.5} parent=31 // pred_fallthru
        _
    $region32: #{encoder_forward.5} parent=5 // pred_fallthru
      _
    %p186 = scmp.le.s32.totalorder 1, %s11
    %p187 = scmp.lt.s32.totalorder %s11, 3
    %p188 = pnand %p186, %p187
    %p189 = pneg %p188
    // Predicated region
    $region37: #{encoder_forward.5} parent=5 // pred_check
      _
    $region38: #{encoder_forward.5} parent=5 // pred_check_branch
      %191 = sbr.rel (%p188) target = $region40
    $region39: #{encoder_forward.5} parent=5 // pred_region
      %s192 = ssub.s32 %s11, 1
      %p193 = scmp.lt.s32.totalorder %s16, 1
      %s194 = scalar_select %p193, %s16, 1
      %s195 = smul.addr %s194, 20
      %s196 = smul.addr %s195, 4
      %s197 = scalar_lea.vmem %s0, %s196
      %p198 = pneg %p37
      %p199 = pneg %p34
      %p200 = pneg %p58
      %p201 = pneg %p55
      %p202 = pneg %p79
      %p203 = pneg %p76
      %p204 = pneg %p100
      %p205 = pneg %p97
      %p206 = pneg %p121
      %p207 = pneg %p118
      %p208 = pneg %p147
      %p209 = pneg %p144
      %p210 = scmp.lt.s32.totalorder %s16, 1
      %s211 = scalar_select %p210, %s16, 1
      %s212 = smul.addr %s211, 19
      %s213 = smul.addr %s212, 8
      %s214 = scalar_lea.vmem %s5, %s213
      %p215 = scmp.lt.s32.totalorder %s16, 1
      %s216 = scalar_select %p215, %s16, 1
      %s217 = smul.addr %s216, 20
      %s218 = smul.addr %s217, 4
      %s219 = scalar_lea.vmem %s0, %s218
      %p220 = scmp.lt.s32.totalorder %s16, 1
      %s221 = scalar_select %p220, %s16, 1
      %s222 = smul.addr %s221, 19
      %s223 = smul.addr %s222, 8
      %s224 = scalar_lea.vmem %s5, %s223
      %v226 = vld [vmem:[%s219] sm:$0xff]
      %v227 = vld [vmem:[%s219 + $0x8] sm:$0xff]
      %v228 = vld [vmem:[%s219 + $0x10] sm:$0xff]
      %v229 = vld [vmem:[%s219 + $0x18] sm:$0xff]
      %v230 = vld [vmem:[%s219 + $0x20] sm:$0xff]
      %v231 = vld [vmem:[%s219 + $0x28] sm:$0xff]
      %v232 = vld [vmem:[%s219 + $0x30] sm:$0xff]
      %v233 = vld [vmem:[%s219 + $0x38] sm:$0xff]
      %v234 = vld [vmem:[%s219 + $0x40] sm:$0xff]
      %v235 = vld [vmem:[%s219 + $0x48] sm:$0xff]
      %v236 = vld [vmem:[%s3] sm:$0xff]
      %v237 = vld [vmem:[%s3 + $0x8] sm:$0xff]
      %v238 = vld [vmem:[%s3 + $0x10] sm:$0xf]
      %v242 = vperm.slane %v236, 0
      %v243 = vperm.slane %v236, 1
      %v244 = vperm.slane %v236, 2
      %v245 = vperm.slane %v236, 3
      %v246 = vperm.slane %v236, 4
      %v247 = vperm.slane %v236, 5
      %v248 = vperm.slane %v236, 6
      %v249 = vperm.slane %v236, 7
      %v250 = vperm.slane %v237, 0
      %v251 = vperm.slane %v237, 1
      %v252 = vperm.slane %v237, 2
      %v253 = vperm.slane %v237, 3
      %v254 = vperm.slane %v237, 4
      %v255 = vperm.slane %v237, 5
      %v256 = vperm.slane %v237, 6
      %v257 = vperm.slane %v237, 7
      %v258 = vperm.slane %v238, 0
      %v259 = vperm.slane %v238, 1
      %v260 = vperm.slane %v238, 2
      %v261 = vperm.slane %v238, 3
      %v262 = vrot.slane %v243, 4
      %v263 = vrot.slane %v245, 4
      %v264 = vrot.slane %v247, 4
      %v265 = vrot.slane %v249, 4
      %v266 = vrot.slane %v251, 4
      %v267 = vrot.slane %v253, 4
      %v268 = vrot.slane %v255, 4
      %v269 = vrot.slane %v257, 4
      %v270 = vrot.slane %v259, 4
      %v271 = vrot.slane %v261, 4
      %vm272 = vcmask 1043456
      %v273 = vsel %vm272, %v242, %v262
      %v274 = vsel %vm272, %v244, %v263
      %v275 = vsel %vm272, %v246, %v264
      %v276 = vsel %vm272, %v248, %v265
      %v277 = vsel %vm272, %v250, %v266
      %v278 = vsel %vm272, %v252, %v267
      %v279 = vsel %vm272, %v254, %v268
      %v280 = vsel %vm272, %v256, %v269
      %v281 = vsel %vm272, %v258, %v270
      %v282 = vsel %vm272, %v260, %v271
      %v293 = vmul.f32 %v226, %v273
      %v294 = vmul.f32 %v227, %v274
      %v295 = vmul.f32 %v228, %v275
      %v296 = vmul.f32 %v229, %v276
      %v297 = vmul.f32 %v230, %v277
      %v298 = vmul.f32 %v231, %v278
      %v299 = vmul.f32 %v232, %v279
      %v300 = vmul.f32 %v233, %v280
      %v301 = vmul.f32 %v234, %v281
      %v302 = vmul.f32 %v235, %v282
      %313 = vst [vmem:[#allocation1] ss:$2 sm:$0xff] %v293
      %s314 = scalar_lea.vmem [#allocation1], 16
      %315 = vst [vmem:[%s314] ss:$2 sm:$0xff] %v294
      %s316 = scalar_lea.vmem [#allocation1], 32
      %317 = vst [vmem:[%s316] ss:$2 sm:$0xff] %v295
      %s318 = scalar_lea.vmem [#allocation1], 48
      %319 = vst [vmem:[%s318] ss:$2 sm:$0xff] %v296
      %v320 = vld.sshfl [vmem:[#allocation1] sm:$0xff pattern:$0x75316420]
      %v321 = vld.sshfl [vmem:[#allocation1 + $0x8] sm:$0xff pattern:$0x75316420]
      %v322 = vld.sshfl [vmem:[#allocation1 + $0x10] sm:$0xff pattern:$0x75316420]
      %v323 = vld.sshfl [vmem:[#allocation1 + $0x18] sm:$0xff pattern:$0x75316420]
      %v324 = vld.sshfl [vmem:[#allocation1 + $0x20] sm:$0xff pattern:$0x75316420]
      %v325 = vld.sshfl [vmem:[#allocation1 + $0x28] sm:$0xff pattern:$0x75316420]
      %v326 = vld.sshfl [vmem:[#allocation1 + $0x30] sm:$0xff pattern:$0x75316420]
      %v327 = vld.sshfl [vmem:[#allocation1 + $0x38] sm:$0xff pattern:$0x75316420]
      %328 = vst [vmem:[#allocation1] ss:$2 sm:$0xff] %v297
      %329 = vst [vmem:[%s314] ss:$2 sm:$0xff] %v298
      %330 = vst [vmem:[%s316] ss:$2 sm:$0xff] %v299
      %331 = vst [vmem:[%s318] ss:$2 sm:$0xff] %v300
      %v332 = vld.sshfl [vmem:[#allocation1] sm:$0xff pattern:$0x75316420]
      %v333 = vld.sshfl [vmem:[#allocation1 + $0x8] sm:$0xff pattern:$0x75316420]
      %v334 = vld.sshfl [vmem:[#allocation1 + $0x10] sm:$0xff pattern:$0x75316420]
      %v335 = vld.sshfl [vmem:[#allocation1 + $0x18] sm:$0xff pattern:$0x75316420]
      %v336 = vld.sshfl [vmem:[#allocation1 + $0x20] sm:$0xff pattern:$0x75316420]
      %v337 = vld.sshfl [vmem:[#allocation1 + $0x28] sm:$0xff pattern:$0x75316420]
      %v338 = vld.sshfl [vmem:[#allocation1 + $0x30] sm:$0xff pattern:$0x75316420]
      %v339 = vld.sshfl [vmem:[#allocation1 + $0x38] sm:$0xff pattern:$0x75316420]
      %340 = vst [vmem:[#allocation1] ss:$2 sm:$0xff] %v301
      %341 = vst [vmem:[%s314] ss:$2 sm:$0xff] %v302
      %v342 = vld.sshfl [vmem:[#allocation1] sm:$0xff pattern:$0x75316420]
      %v343 = vld.sshfl [vmem:[#allocation1 + $0x8] sm:$0xff pattern:$0x75316420]
      %v344 = vld.sshfl [vmem:[#allocation1 + $0x10] sm:$0xff pattern:$0x75316420]
      %v345 = vld.sshfl [vmem:[#allocation1 + $0x18] sm:$0xff pattern:$0x75316420]
      %v366 = vsel %vm272, %v320, 0.0
      %v367 = vsel %vm272, %v321, 0.0
      %v368 = vadd.f32 %v366, %v367
      %v369 = vsel %vm272, %v322, 0.0
      %v370 = vadd.f32 %v368, %v369
      %v371 = vsel %vm272, %v323, 0.0
      %v372 = vadd.f32 %v370, %v371
      %v373 = vsel %vm272, %v324, 0.0
      %v374 = vadd.f32 %v372, %v373
      %v375 = vsel %vm272, %v325, 0.0
      %v376 = vadd.f32 %v374, %v375
      %v377 = vsel %vm272, %v326, 0.0
      %v378 = vadd.f32 %v376, %v377
      %v379 = vsel %vm272, %v327, 0.0
      %v380 = vadd.f32 %v378, %v379
      %v381 = vsel %vm272, %v332, 0.0
      %v382 = vadd.f32 %v380, %v381
      %v383 = vsel %vm272, %v333, 0.0
      %v384 = vadd.f32 %v382, %v383
      %v385 = vsel %vm272, %v334, 0.0
      %v386 = vadd.f32 %v384, %v385
      %v387 = vsel %vm272, %v335, 0.0
      %v388 = vadd.f32 %v386, %v387
      %v389 = vsel %vm272, %v336, 0.0
      %v390 = vadd.f32 %v388, %v389
      %v391 = vsel %vm272, %v337, 0.0
      %v392 = vadd.f32 %v390, %v391
      %v393 = vsel %vm272, %v338, 0.0
      %v394 = vadd.f32 %v392, %v393
      %v395 = vsel %vm272, %v339, 0.0
      %v396 = vadd.f32 %v394, %v395
      %v397 = vsel %vm272, %v342, 0.0
      %v398 = vadd.f32 %v396, %v397
      %v399 = vsel %vm272, %v343, 0.0
      %v400 = vadd.f32 %v398, %v399
      %v401 = vsel %vm272, %v344, 0.0
      %v402 = vadd.f32 %v400, %v401
      %vm403 = vcmask 568320
      %v404 = vsel %vm403, %v345, 0.0
      %v405 = vadd.f32 %v402, %v404
      %406 = vadd.xlane.f32.xlu0 %v405
      %v407 = vpop.xlane.xlu0 %406
      %v408 = vmul.f32 %v226, %v226
      %v409 = vmul.f32 %v227, %v227
      %v410 = vmul.f32 %v228, %v228
      %v411 = vmul.f32 %v229, %v229
      %v412 = vmul.f32 %v230, %v230
      %v413 = vmul.f32 %v231, %v231
      %v414 = vmul.f32 %v232, %v232
      %v415 = vmul.f32 %v233, %v233
      %v416 = vmul.f32 %v234, %v234
      %v417 = vmul.f32 %v235, %v235
      %v418 = vmul.f32 %v408, %v273
      %v419 = vmul.f32 %v409, %v274
      %v420 = vmul.f32 %v410, %v275
      %v421 = vmul.f32 %v411, %v276
      %v422 = vmul.f32 %v412, %v277
      %v423 = vmul.f32 %v413, %v278
      %v424 = vmul.f32 %v414, %v279
      %v425 = vmul.f32 %v415, %v280
      %v426 = vmul.f32 %v416, %v281
      %v427 = vmul.f32 %v417, %v282
      %438 = vst [vmem:[#allocation1] ss:$2 sm:$0xff] %v418
      %s439 = scalar_lea.vmem [#allocation1], 16
      %440 = vst [vmem:[%s439] ss:$2 sm:$0xff] %v419
      %s441 = scalar_lea.vmem [#allocation1], 32
      %442 = vst [vmem:[%s441] ss:$2 sm:$0xff] %v420
      %s443 = scalar_lea.vmem [#allocation1], 48
      %444 = vst [vmem:[%s443] ss:$2 sm:$0xff] %v421
      %v445 = vld.sshfl [vmem:[#allocation1] sm:$0xff pattern:$0x75316420]
      %v446 = vld.sshfl [vmem:[#allocation1 + $0x8] sm:$0xff pattern:$0x75316420]
      %v447 = vld.sshfl [vmem:[#allocation1 + $0x10] sm:$0xff pattern:$0x75316420]
      %v448 = vld.sshfl [vmem:[#allocation1 + $0x18] sm:$0xff pattern:$0x75316420]
      %v449 = vld.sshfl [vmem:[#allocation1 + $0x20] sm:$0xff pattern:$0x75316420]
      %v450 = vld.sshfl [vmem:[#allocation1 + $0x28] sm:$0xff pattern:$0x75316420]
      %v451 = vld.sshfl [vmem:[#allocation1 + $0x30] sm:$0xff pattern:$0x75316420]
      %v452 = vld.sshfl [vmem:[#allocation1 + $0x38] sm:$0xff pattern:$0x75316420]
      %453 = vst [vmem:[#allocation1] ss:$2 sm:$0xff] %v422
      %454 = vst [vmem:[%s439] ss:$2 sm:$0xff] %v423
      %455 = vst [vmem:[%s441] ss:$2 sm:$0xff] %v424
      %456 = vst [vmem:[%s443] ss:$2 sm:$0xff] %v425
      %v457 = vld.sshfl [vmem:[#allocation1] sm:$0xff pattern:$0x75316420]
      %v458 = vld.sshfl [vmem:[#allocation1 + $0x8] sm:$0xff pattern:$0x75316420]
      %v459 = vld.sshfl [vmem:[#allocation1 + $0x10] sm:$0xff pattern:$0x75316420]
      %v460 = vld.sshfl [vmem:[#allocation1 + $0x18] sm:$0xff pattern:$0x75316420]
      %v461 = vld.sshfl [vmem:[#allocation1 + $0x20] sm:$0xff pattern:$0x75316420]
      %v462 = vld.sshfl [vmem:[#allocation1 + $0x28] sm:$0xff pattern:$0x75316420]
      %v463 = vld.sshfl [vmem:[#allocation1 + $0x30] sm:$0xff pattern:$0x75316420]
      %v464 = vld.sshfl [vmem:[#allocation1 + $0x38] sm:$0xff pattern:$0x75316420]
      %465 = vst [vmem:[#allocation1] ss:$2 sm:$0xff] %v426
      %466 = vst [vmem:[%s439] ss:$2 sm:$0xff] %v427
      %v467 = vld.sshfl [vmem:[#allocation1] sm:$0xff pattern:$0x75316420]
      %v468 = vld.sshfl [vmem:[#allocation1 + $0x8] sm:$0xff pattern:$0x75316420]
      %v469 = vld.sshfl [vmem:[#allocation1 + $0x10] sm:$0xff pattern:$0x75316420]
      %v470 = vld.sshfl [vmem:[#allocation1 + $0x18] sm:$0xff pattern:$0x75316420]
      %v491 = vsel %vm272, %v445, 0.0
      %v492 = vsel %vm272, %v446, 0.0
      %v493 = vadd.f32 %v491, %v492
      %v494 = vsel %vm272, %v447, 0.0
      %v495 = vadd.f32 %v493, %v494
      %v496 = vsel %vm272, %v448, 0.0
      %v497 = vadd.f32 %v495, %v496
      %v498 = vsel %vm272, %v449, 0.0
      %v499 = vadd.f32 %v497, %v498
      %v500 = vsel %vm272, %v450, 0.0
      %v501 = vadd.f32 %v499, %v500
      %v502 = vsel %vm272, %v451, 0.0
      %v503 = vadd.f32 %v501, %v502
      %v504 = vsel %vm272, %v452, 0.0
      %v505 = vadd.f32 %v503, %v504
      %v506 = vsel %vm272, %v457, 0.0
      %v507 = vadd.f32 %v505, %v506
      %v508 = vsel %vm272, %v458, 0.0
      %v509 = vadd.f32 %v507, %v508
      %v510 = vsel %vm272, %v459, 0.0
      %v511 = vadd.f32 %v509, %v510
      %v512 = vsel %vm272, %v460, 0.0
      %v513 = vadd.f32 %v511, %v512
      %v514 = vsel %vm272, %v461, 0.0
      %v515 = vadd.f32 %v513, %v514
      %v516 = vsel %vm272, %v462, 0.0
      %v517 = vadd.f32 %v515, %v516
      %v518 = vsel %vm272, %v463, 0.0
      %v519 = vadd.f32 %v517, %v518
      %v520 = vsel %vm272, %v464, 0.0
      %v521 = vadd.f32 %v519, %v520
      %v522 = vsel %vm272, %v467, 0.0
      %v523 = vadd.f32 %v521, %v522
      %v524 = vsel %vm272, %v468, 0.0
      %v525 = vadd.f32 %v523, %v524
      %v526 = vsel %vm272, %v469, 0.0
      %v527 = vadd.f32 %v525, %v526
      %v528 = vsel %vm403, %v470, 0.0
      %v529 = vadd.f32 %v527, %v528
      %530 = vadd.xlane.f32.xlu0 %v529
      %v531 = vpop.xlane.xlu0 %530
      %v532 = vmul.f32 %v407, 0.0025
      %v533 = vmul.f32 %v531, 0.0025
      %v534 = vmul.f32 %v532, %v532
      %v535 = vsub.f32 %v533, %v534
      %v536 = vmax.f32 %v535, 0.0
      %v539 = vunpack.c.l.s4 839922192
      %v540 = vunpack.c.0.s8 %v539
      %v541 = vperm.slane %v532, %v540
      %v543 = vsub.f32 %v226, %v541
      %v544 = vsub.f32 %v227, %v541
      %v545 = vsub.f32 %v228, %v541
      %v546 = vsub.f32 %v229, %v541
      %v547 = vsub.f32 %v230, %v541
      %v548 = vsub.f32 %v231, %v541
      %v549 = vsub.f32 %v232, %v541
      %v550 = vsub.f32 %v233, %v541
      %v551 = vsub.f32 %v234, %v541
      %v552 = vsub.f32 %v235, %v541
      %v553 = vadd.f32 %v536, 1e-05
      %v554 = vrsqrt.pop %v553
      %v555 = vmul.f32 %v554, %v553
      %v556 = vmul.f32 %v555, %v554
      %v557 = vmul.f32 0.5, %v556
      %v558 = vsub.f32 1.5, %v557
      %v559 = vmul.f32 %v554, %v558
      %vm560 = vweird.f32 %v553
      %vm561 = vweird.f32 %v554
      %vm562 = vmor %vm560, %vm561
      %v563 = vsel %vm562, %v554, %v559
      %v566 = vunpack.c.l.s4 839922192
      %v567 = vunpack.c.0.s8 %v566
      %v568 = vperm.slane %v563, %v567
      %v570 = vmul.f32 %v543, %v568
      %v571 = vmul.f32 %v544, %v568
      %v572 = vmul.f32 %v545, %v568
      %v573 = vmul.f32 %v546, %v568
      %v574 = vmul.f32 %v547, %v568
      %v575 = vmul.f32 %v548, %v568
      %v576 = vmul.f32 %v549, %v568
      %v577 = vmul.f32 %v550, %v568
      %v578 = vmul.f32 %v551, %v568
      %v579 = vmul.f32 %v552, %v568
      %590 = vst [vmem:[#allocation1] ss:$2 sm:$0xff] %v570
      %s591 = scalar_lea.vmem [#allocation1], 16
      %592 = vst [vmem:[%s591] ss:$2 sm:$0xff] %v571
      %s593 = scalar_lea.vmem [#allocation1], 32
      %594 = vst [vmem:[%s593] ss:$2 sm:$0xff] %v572
      %s595 = scalar_lea.vmem [#allocation1], 48
      %596 = vst [vmem:[%s595] ss:$2 sm:$0xff] %v573
      %v597 = vld.sshfl [vmem:[#allocation1] sm:$0xff pattern:$0x75316420]
      %v598 = vld.sshfl [vmem:[#allocation1 + $0x8] sm:$0xff pattern:$0x75316420]
      %v599 = vld.sshfl [vmem:[#allocation1 + $0x10] sm:$0xff pattern:$0x75316420]
      %v600 = vld.sshfl [vmem:[#allocation1 + $0x18] sm:$0xff pattern:$0x75316420]
      %v601 = vld.sshfl [vmem:[#allocation1 + $0x20] sm:$0xff pattern:$0x75316420]
      %v602 = vld.sshfl [vmem:[#allocation1 + $0x28] sm:$0xff pattern:$0x75316420]
      %v603 = vld.sshfl [vmem:[#allocation1 + $0x30] sm:$0xff pattern:$0x75316420]
      %v604 = vld.sshfl [vmem:[#allocation1 + $0x38] sm:$0xff pattern:$0x75316420]
      %605 = vst [vmem:[#allocation1] ss:$2 sm:$0xff] %v574
      %606 = vst [vmem:[%s591] ss:$2 sm:$0xff] %v575
      %607 = vst [vmem:[%s593] ss:$2 sm:$0xff] %v576
      %608 = vst [vmem:[%s595] ss:$2 sm:$0xff] %v577
      %v609 = vld.sshfl [vmem:[#allocation1] sm:$0xff pattern:$0x75316420]
      %v610 = vld.sshfl [vmem:[#allocation1 + $0x8] sm:$0xff pattern:$0x75316420]
      %v611 = vld.sshfl [vmem:[#allocation1 + $0x10] sm:$0xff pattern:$0x75316420]
      %v612 = vld.sshfl [vmem:[#allocation1 + $0x18] sm:$0xff pattern:$0x75316420]
      %v613 = vld.sshfl [vmem:[#allocation1 + $0x20] sm:$0xff pattern:$0x75316420]
      %v614 = vld.sshfl [vmem:[#allocation1 + $0x28] sm:$0xff pattern:$0x75316420]
      %v615 = vld.sshfl [vmem:[#allocation1 + $0x30] sm:$0xff pattern:$0x75316420]
      %v616 = vld.sshfl [vmem:[#allocation1 + $0x38] sm:$0xff pattern:$0x75316420]
      %617 = vst [vmem:[#allocation1] ss:$2 sm:$0xff] %v578
      %618 = vst [vmem:[%s591] ss:$2 sm:$0xff] %v579
      %v619 = vld.sshfl [vmem:[#allocation1] sm:$0xff pattern:$0x75316420]
      %v620 = vld.sshfl [vmem:[#allocation1 + $0x8] sm:$0xff pattern:$0x75316420]
      %v621 = vld.sshfl [vmem:[#allocation1 + $0x10] sm:$0xff pattern:$0x75316420]
      %v622 = vld.sshfl [vmem:[#allocation1 + $0x18] sm:$0xff pattern:$0x75316420]
      %v643 = vpack.c.bf16 %v598, %v597
      %v644 = vpack.c.bf16 %v600, %v599
      %v645 = vpack.c.bf16 %v602, %v601
      %v646 = vpack.c.bf16 %v604, %v603
      %v647 = vpack.c.bf16 %v610, %v609
      %v648 = vpack.c.bf16 %v612, %v611
      %v649 = vpack.c.bf16 %v614, %v613
      %v650 = vpack.c.bf16 %v616, %v615
      %v651 = vpack.c.bf16 %v620, %v619
      %v652 = vpack.c.bf16 %v622, %v621
      %v653 = vld [vmem:[%s1] sm:$0xf]
      %s654 = scalar_lea.vmem %s1, 4
      %v655 = vld [vmem:[%s654] sm:$0xf]
      %v666 = vunpack.c.l.b16 %v643
      %v667 = vunpack.c.h.b16 %v643
      %v668 = vunpack.c.l.b16 %v644
      %v669 = vunpack.c.h.b16 %v644
      %v670 = vunpack.c.l.b16 %v645
      %v671 = vunpack.c.h.b16 %v645
      %v672 = vunpack.c.l.b16 %v646
      %v673 = vunpack.c.h.b16 %v646
      %v674 = vunpack.c.l.b16 %v647
      %v675 = vunpack.c.h.b16 %v647
      %v676 = vunpack.c.l.b16 %v648
      %v677 = vunpack.c.h.b16 %v648
      %v678 = vunpack.c.l.b16 %v649
      %v679 = vunpack.c.h.b16 %v649
      %v680 = vunpack.c.l.b16 %v650
      %v681 = vunpack.c.h.b16 %v650
      %v682 = vunpack.c.l.b16 %v651
      %v683 = vunpack.c.h.b16 %v651
      %v684 = vunpack.c.l.b16 %v652
      %v685 = vpack.c.b16 %v666, %v666
      %v686 = vpack.c.b16 %v667, %v667
      %v687 = vpack.c.b16 %v668, %v668
      %v688 = vpack.c.b16 %v669, %v669
      %v689 = vpack.c.b16 %v670, %v670
      %v690 = vpack.c.b16 %v671, %v671
      %v691 = vpack.c.b16 %v672, %v672
      %v692 = vpack.c.b16 %v673, %v673
      %v693 = vpack.c.b16 %v674, %v674
      %v694 = vpack.c.b16 %v675, %v675
      %v695 = vpack.c.b16 %v676, %v676
      %v696 = vpack.c.b16 %v677, %v677
      %v697 = vpack.c.b16 %v678, %v678
      %v698 = vpack.c.b16 %v679, %v679
      %v699 = vpack.c.b16 %v680, %v680
      %v700 = vpack.c.b16 %v681, %v681
      %v701 = vpack.c.b16 %v682, %v682
      %v702 = vpack.c.b16 %v683, %v683
      %v703 = vpack.c.b16 %v684, %v684
      %704 = vrot.lane.b32.xlu0 %v685, 127
      %v705 = vpop.permute.xlu0 %704
      %706 = vrot.lane.b32.xlu0 %v686, 127
      %v707 = vpop.permute.xlu0 %706
      %708 = vrot.lane.b32.xlu0 %v687, 127
      %v709 = vpop.permute.xlu0 %708
      %710 = vrot.lane.b32.xlu0 %v688, 127
      %v711 = vpop.permute.xlu0 %710
      %712 = vrot.lane.b32.xlu0 %v689, 127
      %v713 = vpop.permute.xlu0 %712
      %714 = vrot.lane.b32.xlu0 %v690, 127
      %v715 = vpop.permute.xlu0 %714
      %716 = vrot.lane.b32.xlu0 %v691, 127
      %v717 = vpop.permute.xlu0 %716
      %718 = vrot.lane.b32.xlu0 %v692, 127
      %v719 = vpop.permute.xlu0 %718
      %720 = vrot.lane.b32.xlu0 %v693, 127
      %v721 = vpop.permute.xlu0 %720
      %722 = vrot.lane.b32.xlu0 %v694, 127
      %v723 = vpop.permute.xlu0 %722
      %724 = vrot.lane.b32.xlu0 %v695, 127
      %v725 = vpop.permute.xlu0 %724
      %726 = vrot.lane.b32.xlu0 %v696, 127
      %v727 = vpop.permute.xlu0 %726
      %728 = vrot.lane.b32.xlu0 %v697, 127
      %v729 = vpop.permute.xlu0 %728
      %730 = vrot.lane.b32.xlu0 %v698, 127
      %v731 = vpop.permute.xlu0 %730
      %732 = vrot.lane.b32.xlu0 %v699, 127
      %v733 = vpop.permute.xlu0 %732
      %734 = vrot.lane.b32.xlu0 %v700, 127
      %v735 = vpop.permute.xlu0 %734
      %736 = vrot.lane.b32.xlu0 %v701, 127
      %v737 = vpop.permute.xlu0 %736
      %738 = vrot.lane.b32.xlu0 %v702, 127
      %v739 = vpop.permute.xlu0 %738
      %740 = vrot.lane.b32.xlu0 %v703, 127
      %v741 = vpop.permute.xlu0 %740
      %vm742 = vcmask 1039360
      %v743 = vsel %vm742, %v705, %v707
      %v744 = vsel %vm742, %v707, %v709
      %v745 = vsel %vm742, %v709, %v711
      %v746 = vsel %vm742, %v711, %v713
      %v747 = vsel %vm742, %v713, %v715
      %v748 = vsel %vm742, %v715, %v717
      %v749 = vsel %vm742, %v717, %v719
      %v750 = vsel %vm742, %v719, %v721
      %v751 = vsel %vm742, %v721, %v723
      %v752 = vsel %vm742, %v723, %v725
      %v753 = vsel %vm742, %v725, %v727
      %v754 = vsel %vm742, %v727, %v729
      %v755 = vsel %vm742, %v729, %v731
      %v756 = vsel %vm742, %v731, %v733
      %v757 = vsel %vm742, %v733, %v735
      %v758 = vsel %vm742, %v735, %v737
      %v759 = vsel %vm742, %v737, %v739
      %v760 = vsel %vm742, %v739, %v741
      %vm761 = vcmask 31744
      %v763 = vsel %vm761, %v655, 0
      %vm765 = vcmask 1041408
      %v767 = vsel %vm765, %v743, 0
      %v770 = vsel %vm765, %v744, 0
      %v773 = vsel %vm765, %v745, 0
      %v776 = vsel %vm765, %v746, 0
      %v779 = vsel %vm765, %v747, 0
      %v782 = vsel %vm765, %v748, 0
      %v785 = vsel %vm765, %v749, 0
      %v788 = vsel %vm765, %v750, 0
      %v791 = vsel %vm765, %v751, 0
      %v794 = vsel %vm765, %v752, 0
      %v797 = vsel %vm765, %v753, 0
      %v800 = vsel %vm765, %v754, 0
      %v803 = vsel %vm765, %v755, 0
      %v806 = vsel %vm765, %v756, 0
      %v809 = vsel %vm765, %v757, 0
      %v812 = vsel %vm765, %v758, 0
      %v815 = vsel %vm765, %v759, 0
      %v818 = vsel %vm765, %v760, 0
      %v821 = vsel %vm765, %v741, 0
      %823 = vmatpush.bf16.msra.mxu0 0
      %824 = vmatpush.bf16.msra.mxu0 0
      %825 = vmatpush.bf16.msra.mxu0 0
      %826 = vmatpush.bf16.msra.mxu0 0
      %827 = vmatpush.bf16.msra.mxu0 0
      %828 = vmatpush.bf16.msra.mxu0 0
      %829 = vmatpush.bf16.msra.mxu0 0
      %830 = vmatpush.bf16.msra.mxu0 %v767
      %831 = vmatmul.bf16.gmra.mxu0 %v763
      %v832 = vpop.f32.mrf.mxu0
      %v833 = vadd.f32 0.0, %v832
      %v834 = vpop.f32.mrf.mxu0
      %835 = vdwg.mxu0
      %836 = vmatpush.bf16.msra.mxu0 0
      %837 = vmatpush.bf16.msra.mxu0 0
      %838 = vmatpush.bf16.msra.mxu0 0
      %839 = vmatpush.bf16.msra.mxu0 0
      %840 = vmatpush.bf16.msra.mxu0 0
      %841 = vmatpush.bf16.msra.mxu0 0
      %842 = vmatpush.bf16.msra.mxu0 0
      %843 = vmatpush.bf16.msra.mxu0 %v770
      %844 = vmatmul.bf16.gmra.mxu0 %v763
      %v845 = vpop.f32.mrf.mxu0
      %v846 = vadd.f32 0.0, %v845
      %v847 = vpop.f32.mrf.mxu0
      %848 = vdwg.mxu0
      %849 = vmatpush.bf16.msra.mxu0 0
      %850 = vmatpush.bf16.msra.mxu0 0
      %851 = vmatpush.bf16.msra.mxu0 0
      %852 = vmatpush.bf16.msra.mxu0 0
      %853 = vmatpush.bf16.msra.mxu0 0
      %854 = vmatpush.bf16.msra.mxu0 0
      %855 = vmatpush.bf16.msra.mxu0 0
      %856 = vmatpush.bf16.msra.mxu0 %v773
      %857 = vmatmul.bf16.gmra.mxu0 %v763
      %v858 = vpop.f32.mrf.mxu0
      %v859 = vadd.f32 0.0, %v858
      %v860 = vpop.f32.mrf.mxu0
      %861 = vdwg.mxu0
      %862 = vmatpush.bf16.msra.mxu0 0
      %863 = vmatpush.bf16.msra.mxu0 0
      %864 = vmatpush.bf16.msra.mxu0 0
      %865 = vmatpush.bf16.msra.mxu0 0
      %866 = vmatpush.bf16.msra.mxu0 0
      %867 = vmatpush.bf16.msra.mxu0 0
      %868 = vmatpush.bf16.msra.mxu0 0
      %869 = vmatpush.bf16.msra.mxu0 %v776
      %870 = vmatmul.bf16.gmra.mxu0 %v763
      %v871 = vpop.f32.mrf.mxu0
      %v872 = vadd.f32 0.0, %v871
      %v873 = vpop.f32.mrf.mxu0
      %874 = vdwg.mxu0
      %875 = vmatpush.bf16.msra.mxu0 0
      %876 = vmatpush.bf16.msra.mxu0 0
      %877 = vmatpush.bf16.msra.mxu0 0
      %878 = vmatpush.bf16.msra.mxu0 0
      %879 = vmatpush.bf16.msra.mxu0 0
      %880 = vmatpush.bf16.msra.mxu0 0
      %881 = vmatpush.bf16.msra.mxu0 0
      %882 = vmatpush.bf16.msra.mxu0 %v779
      %883 = vmatmul.bf16.gmra.mxu0 %v763
      %v884 = vpop.f32.mrf.mxu0
      %v885 = vadd.f32 0.0, %v884
      %v886 = vpop.f32.mrf.mxu0
      %887 = vdwg.mxu0
      %888 = vmatpush.bf16.msra.mxu0 0
      %889 = vmatpush.bf16.msra.mxu0 0
      %890 = vmatpush.bf16.msra.mxu0 0
      %891 = vmatpush.bf16.msra.mxu0 0
      %892 = vmatpush.bf16.msra.mxu0 0
      %893 = vmatpush.bf16.msra.mxu0 0
      %894 = vmatpush.bf16.msra.mxu0 0
      %895 = vmatpush.bf16.msra.mxu0 %v782
      %896 = vmatmul.bf16.gmra.mxu0 %v763
      %v897 = vpop.f32.mrf.mxu0
      %v898 = vadd.f32 0.0, %v897
      %v899 = vpop.f32.mrf.mxu0
      %900 = vdwg.mxu0
      %901 = vmatpush.bf16.msra.mxu0 0
      %902 = vmatpush.bf16.msra.mxu0 0
      %903 = vmatpush.bf16.msra.mxu0 0
      %904 = vmatpush.bf16.msra.mxu0 0
      %905 = vmatpush.bf16.msra.mxu0 0
      %906 = vmatpush.bf16.msra.mxu0 0
      %907 = vmatpush.bf16.msra.mxu0 0
      %908 = vmatpush.bf16.msra.mxu0 %v785
      %909 = vmatmul.bf16.gmra.mxu0 %v763
      %v910 = vpop.f32.mrf.mxu0
      %v911 = vadd.f32 0.0, %v910
      %v912 = vpop.f32.mrf.mxu0
      %913 = vdwg.mxu0
      %914 = vmatpush.bf16.msra.mxu0 0
      %915 = vmatpush.bf16.msra.mxu0 0
      %916 = vmatpush.bf16.msra.mxu0 0
      %917 = vmatpush.bf16.msra.mxu0 0
      %918 = vmatpush.bf16.msra.mxu0 0
      %919 = vmatpush.bf16.msra.mxu0 0
      %920 = vmatpush.bf16.msra.mxu0 0
      %921 = vmatpush.bf16.msra.mxu0 %v788
      %922 = vmatmul.bf16.gmra.mxu0 %v763
      %v923 = vpop.f32.mrf.mxu0
      %v924 = vadd.f32 0.0, %v923
      %v925 = vpop.f32.mrf.mxu0
      %926 = vdwg.mxu0
      %927 = vmatpush.bf16.msra.mxu0 0
      %928 = vmatpush.bf16.msra.mxu0 0
      %929 = vmatpush.bf16.msra.mxu0 0
      %930 = vmatpush.bf16.msra.mxu0 0
      %931 = vmatpush.bf16.msra.mxu0 0
      %932 = vmatpush.bf16.msra.mxu0 0
      %933 = vmatpush.bf16.msra.mxu0 0
      %934 = vmatpush.bf16.msra.mxu0 %v791
      %935 = vmatmul.bf16.gmra.mxu0 %v763
      %v936 = vpop.f32.mrf.mxu0
      %v937 = vadd.f32 0.0, %v936
      %v938 = vpop.f32.mrf.mxu0
      %939 = vdwg.mxu0
      %940 = vmatpush.bf16.msra.mxu0 0
      %941 = vmatpush.bf16.msra.mxu0 0
      %942 = vmatpush.bf16.msra.mxu0 0
      %943 = vmatpush.bf16.msra.mxu0 0
      %944 = vmatpush.bf16.msra.mxu0 0
      %945 = vmatpush.bf16.msra.mxu0 0
      %946 = vmatpush.bf16.msra.mxu0 0
      %947 = vmatpush.bf16.msra.mxu0 %v794
      %948 = vmatmul.bf16.gmra.mxu0 %v763
      %v949 = vpop.f32.mrf.mxu0
      %v950 = vadd.f32 0.0, %v949
      %v951 = vpop.f32.mrf.mxu0
      %952 = vdwg.mxu0
      %953 = vmatpush.bf16.msra.mxu0 0
      %954 = vmatpush.bf16.msra.mxu0 0
      %955 = vmatpush.bf16.msra.mxu0 0
      %956 = vmatpush.bf16.msra.mxu0 0
      %957 = vmatpush.bf16.msra.mxu0 0
      %958 = vmatpush.bf16.msra.mxu0 0
      %959 = vmatpush.bf16.msra.mxu0 0
      %960 = vmatpush.bf16.msra.mxu0 %v797
      %961 = vmatmul.bf16.gmra.mxu0 %v763
      %v962 = vpop.f32.mrf.mxu0
      %v963 = vadd.f32 0.0, %v962
      %v964 = vpop.f32.mrf.mxu0
      %965 = vdwg.mxu0
      %966 = vmatpush.bf16.msra.mxu0 0
      %967 = vmatpush.bf16.msra.mxu0 0
      %968 = vmatpush.bf16.msra.mxu0 0
      %969 = vmatpush.bf16.msra.mxu0 0
      %970 = vmatpush.bf16.msra.mxu0 0
      %971 = vmatpush.bf16.msra.mxu0 0
      %972 = vmatpush.bf16.msra.mxu0 0
      %973 = vmatpush.bf16.msra.mxu0 %v800
      %974 = vmatmul.bf16.gmra.mxu0 %v763
      %v975 = vpop.f32.mrf.mxu0
      %v976 = vadd.f32 0.0, %v975
      %v977 = vpop.f32.mrf.mxu0
      %978 = vdwg.mxu0
      %979 = vmatpush.bf16.msra.mxu0 0
      %980 = vmatpush.bf16.msra.mxu0 0
      %981 = vmatpush.bf16.msra.mxu0 0
      %982 = vmatpush.bf16.msra.mxu0 0
      %983 = vmatpush.bf16.msra.mxu0 0
      %984 = vmatpush.bf16.msra.mxu0 0
      %985 = vmatpush.bf16.msra.mxu0 0
      %986 = vmatpush.bf16.msra.mxu0 %v803
      %987 = vmatmul.bf16.gmra.mxu0 %v763
      %v988 = vpop.f32.mrf.mxu0
      %v989 = vadd.f32 0.0, %v988
      %v990 = vpop.f32.mrf.mxu0
      %991 = vdwg.mxu0
      %992 = vmatpush.bf16.msra.mxu0 0
      %993 = vmatpush.bf16.msra.mxu0 0
      %994 = vmatpush.bf16.msra.mxu0 0
      %995 = vmatpush.bf16.msra.mxu0 0
      %996 = vmatpush.bf16.msra.mxu0 0
      %997 = vmatpush.bf16.msra.mxu0 0
      %998 = vmatpush.bf16.msra.mxu0 0
      %999 = vmatpush.bf16.msra.mxu0 %v806
      %1000 = vmatmul.bf16.gmra.mxu0 %v763
      %v1001 = vpop.f32.mrf.mxu0
      %v1002 = vadd.f32 0.0, %v1001
      %v1003 = vpop.f32.mrf.mxu0
      %1004 = vdwg.mxu0
      %1005 = vmatpush.bf16.msra.mxu0 0
      %1006 = vmatpush.bf16.msra.mxu0 0
      %1007 = vmatpush.bf16.msra.mxu0 0
      %1008 = vmatpush.bf16.msra.mxu0 0
      %1009 = vmatpush.bf16.msra.mxu0 0
      %1010 = vmatpush.bf16.msra.mxu0 0
      %1011 = vmatpush.bf16.msra.mxu0 0
      %1012 = vmatpush.bf16.msra.mxu0 %v809
      %1013 = vmatmul.bf16.gmra.mxu0 %v763
      %v1014 = vpop.f32.mrf.mxu0
      %v1015 = vadd.f32 0.0, %v1014
      %v1016 = vpop.f32.mrf.mxu0
      %1017 = vdwg.mxu0
      %1018 = vmatpush.bf16.msra.mxu0 0
      %1019 = vmatpush.bf16.msra.mxu0 0
      %1020 = vmatpush.bf16.msra.mxu0 0
      %1021 = vmatpush.bf16.msra.mxu0 0
      %1022 = vmatpush.bf16.msra.mxu0 0
      %1023 = vmatpush.bf16.msra.mxu0 0
      %1024 = vmatpush.bf16.msra.mxu0 0
      %1025 = vmatpush.bf16.msra.mxu0 %v812
      %1026 = vmatmul.bf16.gmra.mxu0 %v763
      %v1027 = vpop.f32.mrf.mxu0
      %v1028 = vadd.f32 0.0, %v1027
      %v1029 = vpop.f32.mrf.mxu0
      %1030 = vdwg.mxu0
      %1031 = vmatpush.bf16.msra.mxu0 0
      %1032 = vmatpush.bf16.msra.mxu0 0
      %1033 = vmatpush.bf16.msra.mxu0 0
      %1034 = vmatpush.bf16.msra.mxu0 0
      %1035 = vmatpush.bf16.msra.mxu0 0
      %1036 = vmatpush.bf16.msra.mxu0 0
      %1037 = vmatpush.bf16.msra.mxu0 0
      %1038 = vmatpush.bf16.msra.mxu0 %v815
      %1039 = vmatmul.bf16.gmra.mxu0 %v763
      %v1040 = vpop.f32.mrf.mxu0
      %v1041 = vadd.f32 0.0, %v1040
      %v1042 = vpop.f32.mrf.mxu0
      %1043 = vdwg.mxu0
      %1044 = vmatpush.bf16.msra.mxu0 0
      %1045 = vmatpush.bf16.msra.mxu0 0
      %1046 = vmatpush.bf16.msra.mxu0 0
      %1047 = vmatpush.bf16.msra.mxu0 0
      %1048 = vmatpush.bf16.msra.mxu0 0
      %1049 = vmatpush.bf16.msra.mxu0 0
      %1050 = vmatpush.bf16.msra.mxu0 0
      %1051 = vmatpush.bf16.msra.mxu0 %v818
      %1052 = vmatmul.bf16.gmra.mxu0 %v763
      %v1053 = vpop.f32.mrf.mxu0
      %v1054 = vadd.f32 0.0, %v1053
      %v1055 = vpop.f32.mrf.mxu0
      %1056 = vdwg.mxu0
      %1057 = vmatpush.bf16.msra.mxu0 0
      %1058 = vmatpush.bf16.msra.mxu0 0
      %1059 = vmatpush.bf16.msra.mxu0 0
      %1060 = vmatpush.bf16.msra.mxu0 0
      %1061 = vmatpush.bf16.msra.mxu0 0
      %1062 = vmatpush.bf16.msra.mxu0 0
      %1063 = vmatpush.bf16.msra.mxu0 0
      %1064 = vmatpush.bf16.msra.mxu0 %v821
      %1065 = vmatmul.bf16.gmra.mxu0 %v763
      %v1066 = vpop.f32.mrf.mxu0
      %v1067 = vadd.f32 0.0, %v1066
      %v1068 = vpop.f32.mrf.mxu0
      %1069 = vdwg.mxu0
      %v1071 = vsel %vm761, %v653, 0
      %v1074 = vsel %vm765, %v685, 0
      %v1077 = vsel %vm765, %v686, 0
      %v1080 = vsel %vm765, %v687, 0
      %v1083 = vsel %vm765, %v688, 0
      %v1086 = vsel %vm765, %v689, 0
      %v1089 = vsel %vm765, %v690, 0
      %v1092 = vsel %vm765, %v691, 0
      %v1095 = vsel %vm765, %v692, 0
      %v1098 = vsel %vm765, %v693, 0
      %v1101 = vsel %vm765, %v694, 0
      %v1104 = vsel %vm765, %v695, 0
      %v1107 = vsel %vm765, %v696, 0
      %v1110 = vsel %vm765, %v697, 0
      %v1113 = vsel %vm765, %v698, 0
      %v1116 = vsel %vm765, %v699, 0
      %v1119 = vsel %vm765, %v700, 0
      %v1122 = vsel %vm765, %v701, 0
      %v1125 = vsel %vm765, %v702, 0
      %v1128 = vsel %vm765, %v703, 0
      %1130 = vmatpush.bf16.msra.mxu0 0
      %1131 = vmatpush.bf16.msra.mxu0 0
      %1132 = vmatpush.bf16.msra.mxu0 0
      %1133 = vmatpush.bf16.msra.mxu0 0
      %1134 = vmatpush.bf16.msra.mxu0 0
      %1135 = vmatpush.bf16.msra.mxu0 0
      %1136 = vmatpush.bf16.msra.mxu0 0
      %1137 = vmatpush.bf16.msra.mxu0 %v1074
      %1138 = vmatmul.bf16.gmra.mxu0 %v1071
      %v1139 = vpop.f32.mrf.mxu0
      %v1140 = vadd.f32 %v833, %v1139
      %v1141 = vpop.f32.mrf.mxu0
      %1142 = vdwg.mxu0
      %1143 = vmatpush.bf16.msra.mxu0 0
      %1144 = vmatpush.bf16.msra.mxu0 0
      %1145 = vmatpush.bf16.msra.mxu0 0
      %1146 = vmatpush.bf16.msra.mxu0 0
      %1147 = vmatpush.bf16.msra.mxu0 0
      %1148 = vmatpush.bf16.msra.mxu0 0
      %1149 = vmatpush.bf16.msra.mxu0 0
      %1150 = vmatpush.bf16.msra.mxu0 %v1077
      %1151 = vmatmul.bf16.gmra.mxu0 %v1071
      %v1152 = vpop.f32.mrf.mxu0
      %v1153 = vadd.f32 %v846, %v1152
      %v1154 = vpop.f32.mrf.mxu0
      %1155 = vdwg.mxu0
      %1156 = vmatpush.bf16.msra.mxu0 0
      %1157 = vmatpush.bf16.msra.mxu0 0
      %1158 = vmatpush.bf16.msra.mxu0 0
      %1159 = vmatpush.bf16.msra.mxu0 0
      %1160 = vmatpush.bf16.msra.mxu0 0
      %1161 = vmatpush.bf16.msra.mxu0 0
      %1162 = vmatpush.bf16.msra.mxu0 0
      %1163 = vmatpush.bf16.msra.mxu0 %v1080
      %1164 = vmatmul.bf16.gmra.mxu0 %v1071
      %v1165 = vpop.f32.mrf.mxu0
      %v1166 = vadd.f32 %v859, %v1165
      %v1167 = vpop.f32.mrf.mxu0
      %1168 = vdwg.mxu0
      %1169 = vmatpush.bf16.msra.mxu0 0
      %1170 = vmatpush.bf16.msra.mxu0 0
      %1171 = vmatpush.bf16.msra.mxu0 0
      %1172 = vmatpush.bf16.msra.mxu0 0
      %1173 = vmatpush.bf16.msra.mxu0 0
      %1174 = vmatpush.bf16.msra.mxu0 0
      %1175 = vmatpush.bf16.msra.mxu0 0
      %1176 = vmatpush.bf16.msra.mxu0 %v1083
      %1177 = vmatmul.bf16.gmra.mxu0 %v1071
      %v1178 = vpop.f32.mrf.mxu0
      %v1179 = vadd.f32 %v872, %v1178
      %v1180 = vpop.f32.mrf.mxu0
      %1181 = vdwg.mxu0
      %1182 = vmatpush.bf16.msra.mxu0 0
      %1183 = vmatpush.bf16.msra.mxu0 0
      %1184 = vmatpush.bf16.msra.mxu0 0
      %1185 = vmatpush.bf16.msra.mxu0 0
      %1186 = vmatpush.bf16.msra.mxu0 0
      %1187 = vmatpush.bf16.msra.mxu0 0
      %1188 = vmatpush.bf16.msra.mxu0 0
      %1189 = vmatpush.bf16.msra.mxu0 %v1086
      %1190 = vmatmul.bf16.gmra.mxu0 %v1071
      %v1191 = vpop.f32.mrf.mxu0
      %v1192 = vadd.f32 %v885, %v1191
      %v1193 = vpop.f32.mrf.mxu0
      %1194 = vdwg.mxu0
      %1195 = vmatpush.bf16.msra.mxu0 0
      %1196 = vmatpush.bf16.msra.mxu0 0
      %1197 = vmatpush.bf16.msra.mxu0 0
      %1198 = vmatpush.bf16.msra.mxu0 0
      %1199 = vmatpush.bf16.msra.mxu0 0
      %1200 = vmatpush.bf16.msra.mxu0 0
      %1201 = vmatpush.bf16.msra.mxu0 0
      %1202 = vmatpush.bf16.msra.mxu0 %v1089
      %1203 = vmatmul.bf16.gmra.mxu0 %v1071
      %v1204 = vpop.f32.mrf.mxu0
      %v1205 = vadd.f32 %v898, %v1204
      %v1206 = vpop.f32.mrf.mxu0
      %1207 = vdwg.mxu0
      %1208 = vmatpush.bf16.msra.mxu0 0
      %1209 = vmatpush.bf16.msra.mxu0 0
      %1210 = vmatpush.bf16.msra.mxu0 0
      %1211 = vmatpush.bf16.msra.mxu0 0
      %1212 = vmatpush.bf16.msra.mxu0 0
      %1213 = vmatpush.bf16.msra.mxu0 0
      %1214 = vmatpush.bf16.msra.mxu0 0
      %1215 = vmatpush.bf16.msra.mxu0 %v1092
      %1216 = vmatmul.bf16.gmra.mxu0 %v1071
      %v1217 = vpop.f32.mrf.mxu0
      %v1218 = vadd.f32 %v911, %v1217
      %v1219 = vpop.f32.mrf.mxu0
      %1220 = vdwg.mxu0
      %1221 = vmatpush.bf16.msra.mxu0 0
      %1222 = vmatpush.bf16.msra.mxu0 0
      %1223 = vmatpush.bf16.msra.mxu0 0
      %1224 = vmatpush.bf16.msra.mxu0 0
      %1225 = vmatpush.bf16.msra.mxu0 0
      %1226 = vmatpush.bf16.msra.mxu0 0
      %1227 = vmatpush.bf16.msra.mxu0 0
      %1228 = vmatpush.bf16.msra.mxu0 %v1095
      %1229 = vmatmul.bf16.gmra.mxu0 %v1071
      %v1230 = vpop.f32.mrf.mxu0
      %v1231 = vadd.f32 %v924, %v1230
      %v1232 = vpop.f32.mrf.mxu0
      %1233 = vdwg.mxu0
      %1234 = vmatpush.bf16.msra.mxu0 0
      %1235 = vmatpush.bf16.msra.mxu0 0
      %1236 = vmatpush.bf16.msra.mxu0 0
      %1237 = vmatpush.bf16.msra.mxu0 0
      %1238 = vmatpush.bf16.msra.mxu0 0
      %1239 = vmatpush.bf16.msra.mxu0 0
      %1240 = vmatpush.bf16.msra.mxu0 0
      %1241 = vmatpush.bf16.msra.mxu0 %v1098
      %1242 = vmatmul.bf16.gmra.mxu0 %v1071
      %v1243 = vpop.f32.mrf.mxu0
      %v1244 = vadd.f32 %v937, %v1243
      %v1245 = vpop.f32.mrf.mxu0
      %1246 = vdwg.mxu0
      %1247 = vmatpush.bf16.msra.mxu0 0
      %1248 = vmatpush.bf16.msra.mxu0 0
      %1249 = vmatpush.bf16.msra.mxu0 0
      %1250 = vmatpush.bf16.msra.mxu0 0
      %1251 = vmatpush.bf16.msra.mxu0 0
      %1252 = vmatpush.bf16.msra.mxu0 0
      %1253 = vmatpush.bf16.msra.mxu0 0
      %1254 = vmatpush.bf16.msra.mxu0 %v1101
      %1255 = vmatmul.bf16.gmra.mxu0 %v1071
      %v1256 = vpop.f32.mrf.mxu0
      %v1257 = vadd.f32 %v950, %v1256
      %v1258 = vpop.f32.mrf.mxu0
      %1259 = vdwg.mxu0
      %1260 = vmatpush.bf16.msra.mxu0 0
      %1261 = vmatpush.bf16.msra.mxu0 0
      %1262 = vmatpush.bf16.msra.mxu0 0
      %1263 = vmatpush.bf16.msra.mxu0 0
      %1264 = vmatpush.bf16.msra.mxu0 0
      %1265 = vmatpush.bf16.msra.mxu0 0
      %1266 = vmatpush.bf16.msra.mxu0 0
      %1267 = vmatpush.bf16.msra.mxu0 %v1104
      %1268 = vmatmul.bf16.gmra.mxu0 %v1071
      %v1269 = vpop.f32.mrf.mxu0
      %v1270 = vadd.f32 %v963, %v1269
      %v1271 = vpop.f32.mrf.mxu0
      %1272 = vdwg.mxu0
      %1273 = vmatpush.bf16.msra.mxu0 0
      %1274 = vmatpush.bf16.msra.mxu0 0
      %1275 = vmatpush.bf16.msra.mxu0 0
      %1276 = vmatpush.bf16.msra.mxu0 0
      %1277 = vmatpush.bf16.msra.mxu0 0
      %1278 = vmatpush.bf16.msra.mxu0 0
      %1279 = vmatpush.bf16.msra.mxu0 0
      %1280 = vmatpush.bf16.msra.mxu0 %v1107
      %1281 = vmatmul.bf16.gmra.mxu0 %v1071
      %v1282 = vpop.f32.mrf.mxu0
      %v1283 = vadd.f32 %v976, %v1282
      %v1284 = vpop.f32.mrf.mxu0
      %1285 = vdwg.mxu0
      %1286 = vmatpush.bf16.msra.mxu0 0
      %1287 = vmatpush.bf16.msra.mxu0 0
      %1288 = vmatpush.bf16.msra.mxu0 0
      %1289 = vmatpush.bf16.msra.mxu0 0
      %1290 = vmatpush.bf16.msra.mxu0 0
      %1291 = vmatpush.bf16.msra.mxu0 0
      %1292 = vmatpush.bf16.msra.mxu0 0
      %1293 = vmatpush.bf16.msra.mxu0 %v1110
      %1294 = vmatmul.bf16.gmra.mxu0 %v1071
      %v1295 = vpop.f32.mrf.mxu0
      %v1296 = vadd.f32 %v989, %v1295
      %v1297 = vpop.f32.mrf.mxu0
      %1298 = vdwg.mxu0
      %1299 = vmatpush.bf16.msra.mxu0 0
      %1300 = vmatpush.bf16.msra.mxu0 0
      %1301 = vmatpush.bf16.msra.mxu0 0
      %1302 = vmatpush.bf16.msra.mxu0 0
      %1303 = vmatpush.bf16.msra.mxu0 0
      %1304 = vmatpush.bf16.msra.mxu0 0
      %1305 = vmatpush.bf16.msra.mxu0 0
      %1306 = vmatpush.bf16.msra.mxu0 %v1113
      %1307 = vmatmul.bf16.gmra.mxu0 %v1071
      %v1308 = vpop.f32.mrf.mxu0
      %v1309 = vadd.f32 %v1002, %v1308
      %v1310 = vpop.f32.mrf.mxu0
      %1311 = vdwg.mxu0
      %1312 = vmatpush.bf16.msra.mxu0 0
      %1313 = vmatpush.bf16.msra.mxu0 0
      %1314 = vmatpush.bf16.msra.mxu0 0
      %1315 = vmatpush.bf16.msra.mxu0 0
      %1316 = vmatpush.bf16.msra.mxu0 0
      %1317 = vmatpush.bf16.msra.mxu0 0
      %1318 = vmatpush.bf16.msra.mxu0 0
      %1319 = vmatpush.bf16.msra.mxu0 %v1116
      %1320 = vmatmul.bf16.gmra.mxu0 %v1071
      %v1321 = vpop.f32.mrf.mxu0
      %v1322 = vadd.f32 %v1015, %v1321
      %v1323 = vpop.f32.mrf.mxu0
      %1324 = vdwg.mxu0
      %1325 = vmatpush.bf16.msra.mxu0 0
      %1326 = vmatpush.bf16.msra.mxu0 0
      %1327 = vmatpush.bf16.msra.mxu0 0
      %1328 = vmatpush.bf16.msra.mxu0 0
      %1329 = vmatpush.bf16.msra.mxu0 0
      %1330 = vmatpush.bf16.msra.mxu0 0
      %1331 = vmatpush.bf16.msra.mxu0 0
      %1332 = vmatpush.bf16.msra.mxu0 %v1119
      %1333 = vmatmul.bf16.gmra.mxu0 %v1071
      %v1334 = vpop.f32.mrf.mxu0
      %v1335 = vadd.f32 %v1028, %v1334
      %v1336 = vpop.f32.mrf.mxu0
      %1337 = vdwg.mxu0
      %1338 = vmatpush.bf16.msra.mxu0 0
      %1339 = vmatpush.bf16.msra.mxu0 0
      %1340 = vmatpush.bf16.msra.mxu0 0
      %1341 = vmatpush.bf16.msra.mxu0 0
      %1342 = vmatpush.bf16.msra.mxu0 0
      %1343 = vmatpush.bf16.msra.mxu0 0
      %1344 = vmatpush.bf16.msra.mxu0 0
      %1345 = vmatpush.bf16.msra.mxu0 %v1122
      %1346 = vmatmul.bf16.gmra.mxu0 %v1071
      %v1347 = vpop.f32.mrf.mxu0
      %v1348 = vadd.f32 %v1041, %v1347
      %v1349 = vpop.f32.mrf.mxu0
      %1350 = vdwg.mxu0
      %1351 = vmatpush.bf16.msra.mxu0 0
      %1352 = vmatpush.bf16.msra.mxu0 0
      %1353 = vmatpush.bf16.msra.mxu0 0
      %1354 = vmatpush.bf16.msra.mxu0 0
      %1355 = vmatpush.bf16.msra.mxu0 0
      %1356 = vmatpush.bf16.msra.mxu0 0
      %1357 = vmatpush.bf16.msra.mxu0 0
      %1358 = vmatpush.bf16.msra.mxu0 %v1125
      %1359 = vmatmul.bf16.gmra.mxu0 %v1071
      %v1360 = vpop.f32.mrf.mxu0
      %v1361 = vadd.f32 %v1054, %v1360
      %v1362 = vpop.f32.mrf.mxu0
      %1363 = vdwg.mxu0
      %1364 = vmatpush.bf16.msra.mxu0 0
      %1365 = vmatpush.bf16.msra.mxu0 0
      %1366 = vmatpush.bf16.msra.mxu0 0
      %1367 = vmatpush.bf16.msra.mxu0 0
      %1368 = vmatpush.bf16.msra.mxu0 0
      %1369 = vmatpush.bf16.msra.mxu0 0
      %1370 = vmatpush.bf16.msra.mxu0 0
      %1371 = vmatpush.bf16.msra.mxu0 %v1128
      %1372 = vmatmul.bf16.gmra.mxu0 %v1071
      %v1373 = vpop.f32.mrf.mxu0
      %v1374 = vadd.f32 %v1067, %v1373
      %v1375 = vpop.f32.mrf.mxu0
      %1376 = vdwg.mxu0
      %s1377 = scalar_lea.vmem %s1, 8
      %v1378 = vld [vmem:[%s1377] sm:$0xf]
      %1379 = vrot.lane.b32.xlu0 %v685, 126
      %v1380 = vpop.permute.xlu0 %1379
      %1381 = vrot.lane.b32.xlu0 %v686, 126
      %v1382 = vpop.permute.xlu0 %1381
      %1383 = vrot.lane.b32.xlu0 %v687, 126
      %v1384 = vpop.permute.xlu0 %1383
      %1385 = vrot.lane.b32.xlu0 %v688, 126
      %v1386 = vpop.permute.xlu0 %1385
      %1387 = vrot.lane.b32.xlu0 %v689, 126
      %v1388 = vpop.permute.xlu0 %1387
      %1389 = vrot.lane.b32.xlu0 %v690, 126
      %v1390 = vpop.permute.xlu0 %1389
      %1391 = vrot.lane.b32.xlu0 %v691, 126
      %v1392 = vpop.permute.xlu0 %1391
      %1393 = vrot.lane.b32.xlu0 %v692, 126
      %v1394 = vpop.permute.xlu0 %1393
      %1395 = vrot.lane.b32.xlu0 %v693, 126
      %v1396 = vpop.permute.xlu0 %1395
      %1397 = vrot.lane.b32.xlu0 %v694, 126
      %v1398 = vpop.permute.xlu0 %1397
      %1399 = vrot.lane.b32.xlu0 %v695, 126
      %v1400 = vpop.permute.xlu0 %1399
      %1401 = vrot.lane.b32.xlu0 %v696, 126
      %v1402 = vpop.permute.xlu0 %1401
      %1403 = vrot.lane.b32.xlu0 %v697, 126
      %v1404 = vpop.permute.xlu0 %1403
      %1405 = vrot.lane.b32.xlu0 %v698, 126
      %v1406 = vpop.permute.xlu0 %1405
      %1407 = vrot.lane.b32.xlu0 %v699, 126
      %v1408 = vpop.permute.xlu0 %1407
      %1409 = vrot.lane.b32.xlu0 %v700, 126
      %v1410 = vpop.permute.xlu0 %1409
      %1411 = vrot.lane.b32.xlu0 %v701, 126
      %v1412 = vpop.permute.xlu0 %1411
      %1413 = vrot.lane.b32.xlu0 %v702, 126
      %v1414 = vpop.permute.xlu0 %1413
      %1415 = vrot.lane.b32.xlu0 %v703, 126
      %v1416 = vpop.permute.xlu0 %1415
      %vm1417 = vcmask 1031168
      %v1418 = vsel %vm1417, %v1380, %v1382
      %v1419 = vsel %vm1417, %v1382, %v1384
      %v1420 = vsel %vm1417, %v1384, %v1386
      %v1421 = vsel %vm1417, %v1386, %v1388
      %v1422 = vsel %vm1417, %v1388, %v1390
      %v1423 = vsel %vm1417, %v1390, %v1392
      %v1424 = vsel %vm1417, %v1392, %v1394
      %v1425 = vsel %vm1417, %v1394, %v1396
      %v1426 = vsel %vm1417, %v1396, %v1398
      %v1427 = vsel %vm1417, %v1398, %v1400
      %v1428 = vsel %vm1417, %v1400, %v1402
      %v1429 = vsel %vm1417, %v1402, %v1404
      %v1430 = vsel %vm1417, %v1404, %v1406
      %v1431 = vsel %vm1417, %v1406, %v1408
      %v1432 = vsel %vm1417, %v1408, %v1410
      %v1433 = vsel %vm1417, %v1410, %v1412
      %v1434 = vsel %vm1417, %v1412, %v1414
      %v1435 = vsel %vm1417, %v1414, %v1416
      %v1437 = vsel %vm761, %v1378, 0
      %v1440 = vsel %vm765, %v1418, 0
      %v1443 = vsel %vm765, %v1419, 0
      %v1446 = vsel %vm765, %v1420, 0
      %v1449 = vsel %vm765, %v1421, 0
      %v1452 = vsel %vm765, %v1422, 0
      %v1455 = vsel %vm765, %v1423, 0
      %v1458 = vsel %vm765, %v1424, 0
      %v1461 = vsel %vm765, %v1425, 0
      %v1464 = vsel %vm765, %v1426, 0
      %v1467 = vsel %vm765, %v1427, 0
      %v1470 = vsel %vm765, %v1428, 0
      %v1473 = vsel %vm765, %v1429, 0
      %v1476 = vsel %vm765, %v1430, 0
      %v1479 = vsel %vm765, %v1431, 0
      %v1482 = vsel %vm765, %v1432, 0
      %v1485 = vsel %vm765, %v1433, 0
      %v1488 = vsel %vm765, %v1434, 0
      %v1491 = vsel %vm765, %v1435, 0
      %v1494 = vsel %vm765, %v1416, 0
      %1496 = vmatpush.bf16.msra.mxu0 0
      %1497 = vmatpush.bf16.msra.mxu0 0
      %1498 = vmatpush.bf16.msra.mxu0 0
      %1499 = vmatpush.bf16.msra.mxu0 0
      %1500 = vmatpush.bf16.msra.mxu0 0
      %1501 = vmatpush.bf16.msra.mxu0 0
      %1502 = vmatpush.bf16.msra.mxu0 0
      %1503 = vmatpush.bf16.msra.mxu0 %v1440
      %1504 = vmatmul.bf16.gmra.mxu0 %v1437
      %v1505 = vpop.f32.mrf.mxu0
      %v1506 = vadd.f32 0.0, %v1505
      %v1507 = vpop.f32.mrf.mxu0
      %1508 = vdwg.mxu0
      %1509 = vmatpush.bf16.msra.mxu0 0
      %1510 = vmatpush.bf16.msra.mxu0 0
      %1511 = vmatpush.bf16.msra.mxu0 0
      %1512 = vmatpush.bf16.msra.mxu0 0
      %1513 = vmatpush.bf16.msra.mxu0 0
      %1514 = vmatpush.bf16.msra.mxu0 0
      %1515 = vmatpush.bf16.msra.mxu0 0
      %1516 = vmatpush.bf16.msra.mxu0 %v1443
      %1517 = vmatmul.bf16.gmra.mxu0 %v1437
      %v1518 = vpop.f32.mrf.mxu0
      %v1519 = vadd.f32 0.0, %v1518
      %v1520 = vpop.f32.mrf.mxu0
      %1521 = vdwg.mxu0
      %1522 = vmatpush.bf16.msra.mxu0 0
      %1523 = vmatpush.bf16.msra.mxu0 0
      %1524 = vmatpush.bf16.msra.mxu0 0
      %1525 = vmatpush.bf16.msra.mxu0 0
      %1526 = vmatpush.bf16.msra.mxu0 0
      %1527 = vmatpush.bf16.msra.mxu0 0
      %1528 = vmatpush.bf16.msra.mxu0 0
      %1529 = vmatpush.bf16.msra.mxu0 %v1446
      %1530 = vmatmul.bf16.gmra.mxu0 %v1437
      %v1531 = vpop.f32.mrf.mxu0
      %v1532 = vadd.f32 0.0, %v1531
      %v1533 = vpop.f32.mrf.mxu0
      %1534 = vdwg.mxu0
      %1535 = vmatpush.bf16.msra.mxu0 0
      %1536 = vmatpush.bf16.msra.mxu0 0
      %1537 = vmatpush.bf16.msra.mxu0 0
      %1538 = vmatpush.bf16.msra.mxu0 0
      %1539 = vmatpush.bf16.msra.mxu0 0
      %1540 = vmatpush.bf16.msra.mxu0 0
      %1541 = vmatpush.bf16.msra.mxu0 0
      %1542 = vmatpush.bf16.msra.mxu0 %v1449
      %1543 = vmatmul.bf16.gmra.mxu0 %v1437
      %v1544 = vpop.f32.mrf.mxu0
      %v1545 = vadd.f32 0.0, %v1544
      %v1546 = vpop.f32.mrf.mxu0
      %1547 = vdwg.mxu0
      %1548 = vmatpush.bf16.msra.mxu0 0
      %1549 = vmatpush.bf16.msra.mxu0 0
      %1550 = vmatpush.bf16.msra.mxu0 0
      %1551 = vmatpush.bf16.msra.mxu0 0
      %1552 = vmatpush.bf16.msra.mxu0 0
      %1553 = vmatpush.bf16.msra.mxu0 0
      %1554 = vmatpush.bf16.msra.mxu0 0
      %1555 = vmatpush.bf16.msra.mxu0 %v1452
      %1556 = vmatmul.bf16.gmra.mxu0 %v1437
      %v1557 = vpop.f32.mrf.mxu0
      %v1558 = vadd.f32 0.0, %v1557
      %v1559 = vpop.f32.mrf.mxu0
      %1560 = vdwg.mxu0
      %1561 = vmatpush.bf16.msra.mxu0 0
      %1562 = vmatpush.bf16.msra.mxu0 0
      %1563 = vmatpush.bf16.msra.mxu0 0
      %1564 = vmatpush.bf16.msra.mxu0 0
      %1565 = vmatpush.bf16.msra.mxu0 0
      %1566 = vmatpush.bf16.msra.mxu0 0
      %1567 = vmatpush.bf16.msra.mxu0 0
      %1568 = vmatpush.bf16.msra.mxu0 %v1455
      %1569 = vmatmul.bf16.gmra.mxu0 %v1437
      %v1570 = vpop.f32.mrf.mxu0
      %v1571 = vadd.f32 0.0, %v1570
      %v1572 = vpop.f32.mrf.mxu0
      %1573 = vdwg.mxu0
      %1574 = vmatpush.bf16.msra.mxu0 0
      %1575 = vmatpush.bf16.msra.mxu0 0
      %1576 = vmatpush.bf16.msra.mxu0 0
      %1577 = vmatpush.bf16.msra.mxu0 0
      %1578 = vmatpush.bf16.msra.mxu0 0
      %1579 = vmatpush.bf16.msra.mxu0 0
      %1580 = vmatpush.bf16.msra.mxu0 0
      %1581 = vmatpush.bf16.msra.mxu0 %v1458
      %1582 = vmatmul.bf16.gmra.mxu0 %v1437
      %v1583 = vpop.f32.mrf.mxu0
      %v1584 = vadd.f32 0.0, %v1583
      %v1585 = vpop.f32.mrf.mxu0
      %1586 = vdwg.mxu0
      %1587 = vmatpush.bf16.msra.mxu0 0
      %1588 = vmatpush.bf16.msra.mxu0 0
      %1589 = vmatpush.bf16.msra.mxu0 0
      %1590 = vmatpush.bf16.msra.mxu0 0
      %1591 = vmatpush.bf16.msra.mxu0 0
      %1592 = vmatpush.bf16.msra.mxu0 0
      %1593 = vmatpush.bf16.msra.mxu0 0
      %1594 = vmatpush.bf16.msra.mxu0 %v1461
      %1595 = vmatmul.bf16.gmra.mxu0 %v1437
      %v1596 = vpop.f32.mrf.mxu0
      %v1597 = vadd.f32 0.0, %v1596
      %v1598 = vpop.f32.mrf.mxu0
      %1599 = vdwg.mxu0
      %1600 = vmatpush.bf16.msra.mxu0 0
      %1601 = vmatpush.bf16.msra.mxu0 0
      %1602 = vmatpush.bf16.msra.mxu0 0
      %1603 = vmatpush.bf16.msra.mxu0 0
      %1604 = vmatpush.bf16.msra.mxu0 0
      %1605 = vmatpush.bf16.msra.mxu0 0
      %1606 = vmatpush.bf16.msra.mxu0 0
      %1607 = vmatpush.bf16.msra.mxu0 %v1464
      %1608 = vmatmul.bf16.gmra.mxu0 %v1437
      %v1609 = vpop.f32.mrf.mxu0
      %v1610 = vadd.f32 0.0, %v1609
      %v1611 = vpop.f32.mrf.mxu0
      %1612 = vdwg.mxu0
      %1613 = vmatpush.bf16.msra.mxu0 0
      %1614 = vmatpush.bf16.msra.mxu0 0
      %1615 = vmatpush.bf16.msra.mxu0 0
      %1616 = vmatpush.bf16.msra.mxu0 0
      %1617 = vmatpush.bf16.msra.mxu0 0
      %1618 = vmatpush.bf16.msra.mxu0 0
      %1619 = vmatpush.bf16.msra.mxu0 0
      %1620 = vmatpush.bf16.msra.mxu0 %v1467
      %1621 = vmatmul.bf16.gmra.mxu0 %v1437
      %v1622 = vpop.f32.mrf.mxu0
      %v1623 = vadd.f32 0.0, %v1622
      %v1624 = vpop.f32.mrf.mxu0
      %1625 = vdwg.mxu0
      %1626 = vmatpush.bf16.msra.mxu0 0
      %1627 = vmatpush.bf16.msra.mxu0 0
      %1628 = vmatpush.bf16.msra.mxu0 0
      %1629 = vmatpush.bf16.msra.mxu0 0
      %1630 = vmatpush.bf16.msra.mxu0 0
      %1631 = vmatpush.bf16.msra.mxu0 0
      %1632 = vmatpush.bf16.msra.mxu0 0
      %1633 = vmatpush.bf16.msra.mxu0 %v1470
      %1634 = vmatmul.bf16.gmra.mxu0 %v1437
      %v1635 = vpop.f32.mrf.mxu0
      %v1636 = vadd.f32 0.0, %v1635
      %v1637 = vpop.f32.mrf.mxu0
      %1638 = vdwg.mxu0
      %1639 = vmatpush.bf16.msra.mxu0 0
      %1640 = vmatpush.bf16.msra.mxu0 0
      %1641 = vmatpush.bf16.msra.mxu0 0
      %1642 = vmatpush.bf16.msra.mxu0 0
      %1643 = vmatpush.bf16.msra.mxu0 0
      %1644 = vmatpush.bf16.msra.mxu0 0
      %1645 = vmatpush.bf16.msra.mxu0 0
      %1646 = vmatpush.bf16.msra.mxu0 %v1473
      %1647 = vmatmul.bf16.gmra.mxu0 %v1437
      %v1648 = vpop.f32.mrf.mxu0
      %v1649 = vadd.f32 0.0, %v1648
      %v1650 = vpop.f32.mrf.mxu0
      %1651 = vdwg.mxu0
      %1652 = vmatpush.bf16.msra.mxu0 0
      %1653 = vmatpush.bf16.msra.mxu0 0
      %1654 = vmatpush.bf16.msra.mxu0 0
      %1655 = vmatpush.bf16.msra.mxu0 0
      %1656 = vmatpush.bf16.msra.mxu0 0
      %1657 = vmatpush.bf16.msra.mxu0 0
      %1658 = vmatpush.bf16.msra.mxu0 0
      %1659 = vmatpush.bf16.msra.mxu0 %v1476
      %1660 = vmatmul.bf16.gmra.mxu0 %v1437
      %v1661 = vpop.f32.mrf.mxu0
      %v1662 = vadd.f32 0.0, %v1661
      %v1663 = vpop.f32.mrf.mxu0
      %1664 = vdwg.mxu0
      %1665 = vmatpush.bf16.msra.mxu0 0
      %1666 = vmatpush.bf16.msra.mxu0 0
      %1667 = vmatpush.bf16.msra.mxu0 0
      %1668 = vmatpush.bf16.msra.mxu0 0
      %1669 = vmatpush.bf16.msra.mxu0 0
      %1670 = vmatpush.bf16.msra.mxu0 0
      %1671 = vmatpush.bf16.msra.mxu0 0
      %1672 = vmatpush.bf16.msra.mxu0 %v1479
      %1673 = vmatmul.bf16.gmra.mxu0 %v1437
      %v1674 = vpop.f32.mrf.mxu0
      %v1675 = vadd.f32 0.0, %v1674
      %v1676 = vpop.f32.mrf.mxu0
      %1677 = vdwg.mxu0
      %1678 = vmatpush.bf16.msra.mxu0 0
      %1679 = vmatpush.bf16.msra.mxu0 0
      %1680 = vmatpush.bf16.msra.mxu0 0
      %1681 = vmatpush.bf16.msra.mxu0 0
      %1682 = vmatpush.bf16.msra.mxu0 0
      %1683 = vmatpush.bf16.msra.mxu0 0
      %1684 = vmatpush.bf16.msra.mxu0 0
      %1685 = vmatpush.bf16.msra.mxu0 %v1482
      %1686 = vmatmul.bf16.gmra.mxu0 %v1437
      %v1687 = vpop.f32.mrf.mxu0
      %v1688 = vadd.f32 0.0, %v1687
      %v1689 = vpop.f32.mrf.mxu0
      %1690 = vdwg.mxu0
      %1691 = vmatpush.bf16.msra.mxu0 0
      %1692 = vmatpush.bf16.msra.mxu0 0
      %1693 = vmatpush.bf16.msra.mxu0 0
      %1694 = vmatpush.bf16.msra.mxu0 0
      %1695 = vmatpush.bf16.msra.mxu0 0
      %1696 = vmatpush.bf16.msra.mxu0 0
      %1697 = vmatpush.bf16.msra.mxu0 0
      %1698 = vmatpush.bf16.msra.mxu0 %v1485
      %1699 = vmatmul.bf16.gmra.mxu0 %v1437
      %v1700 = vpop.f32.mrf.mxu0
      %v1701 = vadd.f32 0.0, %v1700
      %v1702 = vpop.f32.mrf.mxu0
      %1703 = vdwg.mxu0
      %1704 = vmatpush.bf16.msra.mxu0 0
      %1705 = vmatpush.bf16.msra.mxu0 0
      %1706 = vmatpush.bf16.msra.mxu0 0
      %1707 = vmatpush.bf16.msra.mxu0 0
      %1708 = vmatpush.bf16.msra.mxu0 0
      %1709 = vmatpush.bf16.msra.mxu0 0
      %1710 = vmatpush.bf16.msra.mxu0 0
      %1711 = vmatpush.bf16.msra.mxu0 %v1488
      %1712 = vmatmul.bf16.gmra.mxu0 %v1437
      %v1713 = vpop.f32.mrf.mxu0
      %v1714 = vadd.f32 0.0, %v1713
      %v1715 = vpop.f32.mrf.mxu0
      %1716 = vdwg.mxu0
      %1717 = vmatpush.bf16.msra.mxu0 0
      %1718 = vmatpush.bf16.msra.mxu0 0
      %1719 = vmatpush.bf16.msra.mxu0 0
      %1720 = vmatpush.bf16.msra.mxu0 0
      %1721 = vmatpush.bf16.msra.mxu0 0
      %1722 = vmatpush.bf16.msra.mxu0 0
      %1723 = vmatpush.bf16.msra.mxu0 0
      %1724 = vmatpush.bf16.msra.mxu0 %v1491
      %1725 = vmatmul.bf16.gmra.mxu0 %v1437
      %v1726 = vpop.f32.mrf.mxu0
      %v1727 = vadd.f32 0.0, %v1726
      %v1728 = vpop.f32.mrf.mxu0
      %1729 = vdwg.mxu0
      %1730 = vmatpush.bf16.msra.mxu0 0
      %1731 = vmatpush.bf16.msra.mxu0 0
      %1732 = vmatpush.bf16.msra.mxu0 0
      %1733 = vmatpush.bf16.msra.mxu0 0
      %1734 = vmatpush.bf16.msra.mxu0 0
      %1735 = vmatpush.bf16.msra.mxu0 0
      %1736 = vmatpush.bf16.msra.mxu0 0
      %1737 = vmatpush.bf16.msra.mxu0 %v1494
      %1738 = vmatmul.bf16.gmra.mxu0 %v1437
      %v1739 = vpop.f32.mrf.mxu0
      %v1740 = vadd.f32 0.0, %v1739
      %v1741 = vpop.f32.mrf.mxu0
      %1742 = vdwg.mxu0
      %v1743 = vadd.f32 %v1140, %v1506
      %v1744 = vadd.f32 %v1153, %v1519
      %v1745 = vadd.f32 %v1166, %v1532
      %v1746 = vadd.f32 %v1179, %v1545
      %v1747 = vadd.f32 %v1192, %v1558
      %v1748 = vadd.f32 %v1205, %v1571
      %v1749 = vadd.f32 %v1218, %v1584
      %v1750 = vadd.f32 %v1231, %v1597
      %v1751 = vadd.f32 %v1244, %v1610
      %v1752 = vadd.f32 %v1257, %v1623
      %v1753 = vadd.f32 %v1270, %v1636
      %v1754 = vadd.f32 %v1283, %v1649
      %v1755 = vadd.f32 %v1296, %v1662
      %v1756 = vadd.f32 %v1309, %v1675
      %v1757 = vadd.f32 %v1322, %v1688
      %v1758 = vadd.f32 %v1335, %v1701
      %v1759 = vadd.f32 %v1348, %v1714
      %v1760 = vadd.f32 %v1361, %v1727
      %v1761 = vadd.f32 %v1374, %v1740
      %s1762 = scalar_lea.vmem %s1, 12
      %v1763 = vld [vmem:[%s1762] sm:$0xf]
      %v1764 = vunpack.c.h.b16 %v652
      %v1765 = vpack.c.b16 %v1764, %v1764
      %1766 = vrot.lane.b32.xlu0 %v685, 78
      %v1767 = vpop.permute.xlu0 %1766
      %1768 = vrot.lane.b32.xlu0 %v686, 78
      %v1769 = vpop.permute.xlu0 %1768
      %1770 = vrot.lane.b32.xlu0 %v687, 78
      %v1771 = vpop.permute.xlu0 %1770
      %1772 = vrot.lane.b32.xlu0 %v688, 78
      %v1773 = vpop.permute.xlu0 %1772
      %1774 = vrot.lane.b32.xlu0 %v689, 78
      %v1775 = vpop.permute.xlu0 %1774
      %1776 = vrot.lane.b32.xlu0 %v690, 78
      %v1777 = vpop.permute.xlu0 %1776
      %1778 = vrot.lane.b32.xlu0 %v691, 78
      %v1779 = vpop.permute.xlu0 %1778
      %1780 = vrot.lane.b32.xlu0 %v692, 78
      %v1781 = vpop.permute.xlu0 %1780
      %1782 = vrot.lane.b32.xlu0 %v693, 78
      %v1783 = vpop.permute.xlu0 %1782
      %1784 = vrot.lane.b32.xlu0 %v694, 78
      %v1785 = vpop.permute.xlu0 %1784
      %1786 = vrot.lane.b32.xlu0 %v695, 78
      %v1787 = vpop.permute.xlu0 %1786
      %1788 = vrot.lane.b32.xlu0 %v696, 78
      %v1789 = vpop.permute.xlu0 %1788
      %1790 = vrot.lane.b32.xlu0 %v697, 78
      %v1791 = vpop.permute.xlu0 %1790
      %1792 = vrot.lane.b32.xlu0 %v698, 78
      %v1793 = vpop.permute.xlu0 %1792
      %1794 = vrot.lane.b32.xlu0 %v699, 78
      %v1795 = vpop.permute.xlu0 %1794
      %1796 = vrot.lane.b32.xlu0 %v700, 78
      %v1797 = vpop.permute.xlu0 %1796
      %1798 = vrot.lane.b32.xlu0 %v701, 78
      %v1799 = vpop.permute.xlu0 %1798
      %1800 = vrot.lane.b32.xlu0 %v702, 78
      %v1801 = vpop.permute.xlu0 %1800
      %1802 = vrot.lane.b32.xlu0 %v703, 78
      %v1803 = vpop.permute.xlu0 %1802
      %1804 = vrot.lane.b32.xlu0 %v1765, 78
      %v1805 = vpop.permute.xlu0 %1804
      %vm1806 = vcmask 637952
      %v1807 = vsel %vm1806, %v1767, %v1769
      %v1808 = vsel %vm1806, %v1769, %v1771
      %v1809 = vsel %vm1806, %v1771, %v1773
      %v1810 = vsel %vm1806, %v1773, %v1775
      %v1811 = vsel %vm1806, %v1775, %v1777
      %v1812 = vsel %vm1806, %v1777, %v1779
      %v1813 = vsel %vm1806, %v1779, %v1781
      %v1814 = vsel %vm1806, %v1781, %v1783
      %v1815 = vsel %vm1806, %v1783, %v1785
      %v1816 = vsel %vm1806, %v1785, %v1787
      %v1817 = vsel %vm1806, %v1787, %v1789
      %v1818 = vsel %vm1806, %v1789, %v1791
      %v1819 = vsel %vm1806, %v1791, %v1793
      %v1820 = vsel %vm1806, %v1793, %v1795
      %v1821 = vsel %vm1806, %v1795, %v1797
      %v1822 = vsel %vm1806, %v1797, %v1799
      %v1823 = vsel %vm1806, %v1799, %v1801
      %v1824 = vsel %vm1806, %v1801, %v1803
      %v1825 = vsel %vm1806, %v1803, %v1805
      %v1827 = vsel %vm761, %v1763, 0
      %v1830 = vsel %vm765, %v1807, 0
      %v1833 = vsel %vm765, %v1808, 0
      %v1836 = vsel %vm765, %v1809, 0
      %v1839 = vsel %vm765, %v1810, 0
      %v1842 = vsel %vm765, %v1811, 0
      %v1845 = vsel %vm765, %v1812, 0
      %v1848 = vsel %vm765, %v1813, 0
      %v1851 = vsel %vm765, %v1814, 0
      %v1854 = vsel %vm765, %v1815, 0
      %v1857 = vsel %vm765, %v1816, 0
      %v1860 = vsel %vm765, %v1817, 0
      %v1863 = vsel %vm765, %v1818, 0
      %v1866 = vsel %vm765, %v1819, 0
      %v1869 = vsel %vm765, %v1820, 0
      %v1872 = vsel %vm765, %v1821, 0
      %v1875 = vsel %vm765, %v1822, 0
      %v1878 = vsel %vm765, %v1823, 0
      %v1881 = vsel %vm765, %v1824, 0
      %v1884 = vsel %vm765, %v1825, 0
      %1886 = vmatpush.bf16.msra.mxu0 0
      %1887 = vmatpush.bf16.msra.mxu0 0
      %1888 = vmatpush.bf16.msra.mxu0 0
      %1889 = vmatpush.bf16.msra.mxu0 0
      %1890 = vmatpush.bf16.msra.mxu0 0
      %1891 = vmatpush.bf16.msra.mxu0 0
      %1892 = vmatpush.bf16.msra.mxu0 0
      %1893 = vmatpush.bf16.msra.mxu0 %v1830
      %1894 = vmatmul.bf16.gmra.mxu0 %v1827
      %v1895 = vpop.f32.mrf.mxu0
      %v1896 = vadd.f32 0.0, %v1895
      %v1897 = vpop.f32.mrf.mxu0
      %1898 = vdwg.mxu0
      %1899 = vmatpush.bf16.msra.mxu0 0
      %1900 = vmatpush.bf16.msra.mxu0 0
      %1901 = vmatpush.bf16.msra.mxu0 0
      %1902 = vmatpush.bf16.msra.mxu0 0
      %1903 = vmatpush.bf16.msra.mxu0 0
      %1904 = vmatpush.bf16.msra.mxu0 0
      %1905 = vmatpush.bf16.msra.mxu0 0
      %1906 = vmatpush.bf16.msra.mxu0 %v1833
      %1907 = vmatmul.bf16.gmra.mxu0 %v1827
      %v1908 = vpop.f32.mrf.mxu0
      %v1909 = vadd.f32 0.0, %v1908
      %v1910 = vpop.f32.mrf.mxu0
      %1911 = vdwg.mxu0
      %1912 = vmatpush.bf16.msra.mxu0 0
      %1913 = vmatpush.bf16.msra.mxu0 0
      %1914 = vmatpush.bf16.msra.mxu0 0
      %1915 = vmatpush.bf16.msra.mxu0 0
      %1916 = vmatpush.bf16.msra.mxu0 0
      %1917 = vmatpush.bf16.msra.mxu0 0
      %1918 = vmatpush.bf16.msra.mxu0 0
      %1919 = vmatpush.bf16.msra.mxu0 %v1836
      %1920 = vmatmul.bf16.gmra.mxu0 %v1827
      %v1921 = vpop.f32.mrf.mxu0
      %v1922 = vadd.f32 0.0, %v1921
      %v1923 = vpop.f32.mrf.mxu0
      %1924 = vdwg.mxu0
      %1925 = vmatpush.bf16.msra.mxu0 0
      %1926 = vmatpush.bf16.msra.mxu0 0
      %1927 = vmatpush.bf16.msra.mxu0 0
      %1928 = vmatpush.bf16.msra.mxu0 0
      %1929 = vmatpush.bf16.msra.mxu0 0
      %1930 = vmatpush.bf16.msra.mxu0 0
      %1931 = vmatpush.bf16.msra.mxu0 0
      %1932 = vmatpush.bf16.msra.mxu0 %v1839
      %1933 = vmatmul.bf16.gmra.mxu0 %v1827
      %v1934 = vpop.f32.mrf.mxu0
      %v1935 = vadd.f32 0.0, %v1934
      %v1936 = vpop.f32.mrf.mxu0
      %1937 = vdwg.mxu0
      %1938 = vmatpush.bf16.msra.mxu0 0
      %1939 = vmatpush.bf16.msra.mxu0 0
      %1940 = vmatpush.bf16.msra.mxu0 0
      %1941 = vmatpush.bf16.msra.mxu0 0
      %1942 = vmatpush.bf16.msra.mxu0 0
      %1943 = vmatpush.bf16.msra.mxu0 0
      %1944 = vmatpush.bf16.msra.mxu0 0
      %1945 = vmatpush.bf16.msra.mxu0 %v1842
      %1946 = vmatmul.bf16.gmra.mxu0 %v1827
      %v1947 = vpop.f32.mrf.mxu0
      %v1948 = vadd.f32 0.0, %v1947
      %v1949 = vpop.f32.mrf.mxu0
      %1950 = vdwg.mxu0
      %1951 = vmatpush.bf16.msra.mxu0 0
      %1952 = vmatpush.bf16.msra.mxu0 0
      %1953 = vmatpush.bf16.msra.mxu0 0
      %1954 = vmatpush.bf16.msra.mxu0 0
      %1955 = vmatpush.bf16.msra.mxu0 0
      %1956 = vmatpush.bf16.msra.mxu0 0
      %1957 = vmatpush.bf16.msra.mxu0 0
      %1958 = vmatpush.bf16.msra.mxu0 %v1845
      %1959 = vmatmul.bf16.gmra.mxu0 %v1827
      %v1960 = vpop.f32.mrf.mxu0
      %v1961 = vadd.f32 0.0, %v1960
      %v1962 = vpop.f32.mrf.mxu0
      %1963 = vdwg.mxu0
      %1964 = vmatpush.bf16.msra.mxu0 0
      %1965 = vmatpush.bf16.msra.mxu0 0
      %1966 = vmatpush.bf16.msra.mxu0 0
      %1967 = vmatpush.bf16.msra.mxu0 0
      %1968 = vmatpush.bf16.msra.mxu0 0
      %1969 = vmatpush.bf16.msra.mxu0 0
      %1970 = vmatpush.bf16.msra.mxu0 0
      %1971 = vmatpush.bf16.msra.mxu0 %v1848
      %1972 = vmatmul.bf16.gmra.mxu0 %v1827
      %v1973 = vpop.f32.mrf.mxu0
      %v1974 = vadd.f32 0.0, %v1973
      %v1975 = vpop.f32.mrf.mxu0
      %1976 = vdwg.mxu0
      %1977 = vmatpush.bf16.msra.mxu0 0
      %1978 = vmatpush.bf16.msra.mxu0 0
      %1979 = vmatpush.bf16.msra.mxu0 0
      %1980 = vmatpush.bf16.msra.mxu0 0
      %1981 = vmatpush.bf16.msra.mxu0 0
      %1982 = vmatpush.bf16.msra.mxu0 0
      %1983 = vmatpush.bf16.msra.mxu0 0
      %1984 = vmatpush.bf16.msra.mxu0 %v1851
      %1985 = vmatmul.bf16.gmra.mxu0 %v1827
      %v1986 = vpop.f32.mrf.mxu0
      %v1987 = vadd.f32 0.0, %v1986
      %v1988 = vpop.f32.mrf.mxu0
      %1989 = vdwg.mxu0
      %1990 = vmatpush.bf16.msra.mxu0 0
      %1991 = vmatpush.bf16.msra.mxu0 0
      %1992 = vmatpush.bf16.msra.mxu0 0
      %1993 = vmatpush.bf16.msra.mxu0 0
      %1994 = vmatpush.bf16.msra.mxu0 0
      %1995 = vmatpush.bf16.msra.mxu0 0
      %1996 = vmatpush.bf16.msra.mxu0 0
      %1997 = vmatpush.bf16.msra.mxu0 %v1854
      %1998 = vmatmul.bf16.gmra.mxu0 %v1827
      %v1999 = vpop.f32.mrf.mxu0
      %v2000 = vadd.f32 0.0, %v1999
      %v2001 = vpop.f32.mrf.mxu0
      %2002 = vdwg.mxu0
      %2003 = vmatpush.bf16.msra.mxu0 0
      %2004 = vmatpush.bf16.msra.mxu0 0
      %2005 = vmatpush.bf16.msra.mxu0 0
      %2006 = vmatpush.bf16.msra.mxu0 0
      %2007 = vmatpush.bf16.msra.mxu0 0
      %2008 = vmatpush.bf16.msra.mxu0 0
      %2009 = vmatpush.bf16.msra.mxu0 0
      %2010 = vmatpush.bf16.msra.mxu0 %v1857
      %2011 = vmatmul.bf16.gmra.mxu0 %v1827
      %v2012 = vpop.f32.mrf.mxu0
      %v2013 = vadd.f32 0.0, %v2012
      %v2014 = vpop.f32.mrf.mxu0
      %2015 = vdwg.mxu0
      %2016 = vmatpush.bf16.msra.mxu0 0
      %2017 = vmatpush.bf16.msra.mxu0 0
      %2018 = vmatpush.bf16.msra.mxu0 0
      %2019 = vmatpush.bf16.msra.mxu0 0
      %2020 = vmatpush.bf16.msra.mxu0 0
      %2021 = vmatpush.bf16.msra.mxu0 0
      %2022 = vmatpush.bf16.msra.mxu0 0
      %2023 = vmatpush.bf16.msra.mxu0 %v1860
      %2024 = vmatmul.bf16.gmra.mxu0 %v1827
      %v2025 = vpop.f32.mrf.mxu0
      %v2026 = vadd.f32 0.0, %v2025
      %v2027 = vpop.f32.mrf.mxu0
      %2028 = vdwg.mxu0
      %2029 = vmatpush.bf16.msra.mxu0 0
      %2030 = vmatpush.bf16.msra.mxu0 0
      %2031 = vmatpush.bf16.msra.mxu0 0
      %2032 = vmatpush.bf16.msra.mxu0 0
      %2033 = vmatpush.bf16.msra.mxu0 0
      %2034 = vmatpush.bf16.msra.mxu0 0
      %2035 = vmatpush.bf16.msra.mxu0 0
      %2036 = vmatpush.bf16.msra.mxu0 %v1863
      %2037 = vmatmul.bf16.gmra.mxu0 %v1827
      %v2038 = vpop.f32.mrf.mxu0
      %v2039 = vadd.f32 0.0, %v2038
      %v2040 = vpop.f32.mrf.mxu0
      %2041 = vdwg.mxu0
      %2042 = vmatpush.bf16.msra.mxu0 0
      %2043 = vmatpush.bf16.msra.mxu0 0
      %2044 = vmatpush.bf16.msra.mxu0 0
      %2045 = vmatpush.bf16.msra.mxu0 0
      %2046 = vmatpush.bf16.msra.mxu0 0
      %2047 = vmatpush.bf16.msra.mxu0 0
      %2048 = vmatpush.bf16.msra.mxu0 0
      %2049 = vmatpush.bf16.msra.mxu0 %v1866
      %2050 = vmatmul.bf16.gmra.mxu0 %v1827
      %v2051 = vpop.f32.mrf.mxu0
      %v2052 = vadd.f32 0.0, %v2051
      %v2053 = vpop.f32.mrf.mxu0
      %2054 = vdwg.mxu0
      %2055 = vmatpush.bf16.msra.mxu0 0
      %2056 = vmatpush.bf16.msra.mxu0 0
      %2057 = vmatpush.bf16.msra.mxu0 0
      %2058 = vmatpush.bf16.msra.mxu0 0
      %2059 = vmatpush.bf16.msra.mxu0 0
      %2060 = vmatpush.bf16.msra.mxu0 0
      %2061 = vmatpush.bf16.msra.mxu0 0
      %2062 = vmatpush.bf16.msra.mxu0 %v1869
      %2063 = vmatmul.bf16.gmra.mxu0 %v1827
      %v2064 = vpop.f32.mrf.mxu0
      %v2065 = vadd.f32 0.0, %v2064
      %v2066 = vpop.f32.mrf.mxu0
      %2067 = vdwg.mxu0
      %2068 = vmatpush.bf16.msra.mxu0 0
      %2069 = vmatpush.bf16.msra.mxu0 0
      %2070 = vmatpush.bf16.msra.mxu0 0
      %2071 = vmatpush.bf16.msra.mxu0 0
      %2072 = vmatpush.bf16.msra.mxu0 0
      %2073 = vmatpush.bf16.msra.mxu0 0
      %2074 = vmatpush.bf16.msra.mxu0 0
      %2075 = vmatpush.bf16.msra.mxu0 %v1872
      %2076 = vmatmul.bf16.gmra.mxu0 %v1827
      %v2077 = vpop.f32.mrf.mxu0
      %v2078 = vadd.f32 0.0, %v2077
      %v2079 = vpop.f32.mrf.mxu0
      %2080 = vdwg.mxu0
      %2081 = vmatpush.bf16.msra.mxu0 0
      %2082 = vmatpush.bf16.msra.mxu0 0
      %2083 = vmatpush.bf16.msra.mxu0 0
      %2084 = vmatpush.bf16.msra.mxu0 0
      %2085 = vmatpush.bf16.msra.mxu0 0
      %2086 = vmatpush.bf16.msra.mxu0 0
      %2087 = vmatpush.bf16.msra.mxu0 0
      %2088 = vmatpush.bf16.msra.mxu0 %v1875
      %2089 = vmatmul.bf16.gmra.mxu0 %v1827
      %v2090 = vpop.f32.mrf.mxu0
      %v2091 = vadd.f32 0.0, %v2090
      %v2092 = vpop.f32.mrf.mxu0
      %2093 = vdwg.mxu0
      %2094 = vmatpush.bf16.msra.mxu0 0
      %2095 = vmatpush.bf16.msra.mxu0 0
      %2096 = vmatpush.bf16.msra.mxu0 0
      %2097 = vmatpush.bf16.msra.mxu0 0
      %2098 = vmatpush.bf16.msra.mxu0 0
      %2099 = vmatpush.bf16.msra.mxu0 0
      %2100 = vmatpush.bf16.msra.mxu0 0
      %2101 = vmatpush.bf16.msra.mxu0 %v1878
      %2102 = vmatmul.bf16.gmra.mxu0 %v1827
      %v2103 = vpop.f32.mrf.mxu0
      %v2104 = vadd.f32 0.0, %v2103
      %v2105 = vpop.f32.mrf.mxu0
      %2106 = vdwg.mxu0
      %2107 = vmatpush.bf16.msra.mxu0 0
      %2108 = vmatpush.bf16.msra.mxu0 0
      %2109 = vmatpush.bf16.msra.mxu0 0
      %2110 = vmatpush.bf16.msra.mxu0 0
      %2111 = vmatpush.bf16.msra.mxu0 0
      %2112 = vmatpush.bf16.msra.mxu0 0
      %2113 = vmatpush.bf16.msra.mxu0 0
      %2114 = vmatpush.bf16.msra.mxu0 %v1881
      %2115 = vmatmul.bf16.gmra.mxu0 %v1827
      %v2116 = vpop.f32.mrf.mxu0
      %v2117 = vadd.f32 0.0, %v2116
      %v2118 = vpop.f32.mrf.mxu0
      %2119 = vdwg.mxu0
      %2120 = vmatpush.bf16.msra.mxu0 0
      %2121 = vmatpush.bf16.msra.mxu0 0
      %2122 = vmatpush.bf16.msra.mxu0 0
      %2123 = vmatpush.bf16.msra.mxu0 0
      %2124 = vmatpush.bf16.msra.mxu0 0
      %2125 = vmatpush.bf16.msra.mxu0 0
      %2126 = vmatpush.bf16.msra.mxu0 0
      %2127 = vmatpush.bf16.msra.mxu0 %v1884
      %2128 = vmatmul.bf16.gmra.mxu0 %v1827
      %v2129 = vpop.f32.mrf.mxu0
      %v2130 = vadd.f32 0.0, %v2129
      %v2131 = vpop.f32.mrf.mxu0
      %2132 = vdwg.mxu0
      %v2133 = vadd.f32 %v1743, %v1896
      %v2134 = vadd.f32 %v1744, %v1909
      %v2135 = vadd.f32 %v1745, %v1922
      %v2136 = vadd.f32 %v1746, %v1935
      %v2137 = vadd.f32 %v1747, %v1948
      %v2138 = vadd.f32 %v1748, %v1961
      %v2139 = vadd.f32 %v1749, %v1974
      %v2140 = vadd.f32 %v1750, %v1987
      %v2141 = vadd.f32 %v1751, %v2000
      %v2142 = vadd.f32 %v1752, %v2013
      %v2143 = vadd.f32 %v1753, %v2026
      %v2144 = vadd.f32 %v1754, %v2039
      %v2145 = vadd.f32 %v1755, %v2052
      %v2146 = vadd.f32 %v1756, %v2065
      %v2147 = vadd.f32 %v1757, %v2078
      %v2148 = vadd.f32 %v1758, %v2091
      %v2149 = vadd.f32 %v1759, %v2104
      %v2150 = vadd.f32 %v1760, %v2117
      %v2151 = vadd.f32 %v1761, %v2130
      %s2152 = scalar_lea.vmem %s1, 16
      %v2153 = vld [vmem:[%s2152] sm:$0xf]
      %2154 = vrot.lane.b32.xlu0 %v685, 77
      %v2155 = vpop.permute.xlu0 %2154
      %2156 = vrot.lane.b32.xlu0 %v686, 77
      %v2157 = vpop.permute.xlu0 %2156
      %2158 = vrot.lane.b32.xlu0 %v687, 77
      %v2159 = vpop.permute.xlu0 %2158
      %2160 = vrot.lane.b32.xlu0 %v688, 77
      %v2161 = vpop.permute.xlu0 %2160
      %2162 = vrot.lane.b32.xlu0 %v689, 77
      %v2163 = vpop.permute.xlu0 %2162
      %2164 = vrot.lane.b32.xlu0 %v690, 77
      %v2165 = vpop.permute.xlu0 %2164
      %2166 = vrot.lane.b32.xlu0 %v691, 77
      %v2167 = vpop.permute.xlu0 %2166
      %2168 = vrot.lane.b32.xlu0 %v692, 77
      %v2169 = vpop.permute.xlu0 %2168
      %2170 = vrot.lane.b32.xlu0 %v693, 77
      %v2171 = vpop.permute.xlu0 %2170
      %2172 = vrot.lane.b32.xlu0 %v694, 77
      %v2173 = vpop.permute.xlu0 %2172
      %2174 = vrot.lane.b32.xlu0 %v695, 77
      %v2175 = vpop.permute.xlu0 %2174
      %2176 = vrot.lane.b32.xlu0 %v696, 77
      %v2177 = vpop.permute.xlu0 %2176
      %2178 = vrot.lane.b32.xlu0 %v697, 77
      %v2179 = vpop.permute.xlu0 %2178
      %2180 = vrot.lane.b32.xlu0 %v698, 77
      %v2181 = vpop.permute.xlu0 %2180
      %2182 = vrot.lane.b32.xlu0 %v699, 77
      %v2183 = vpop.permute.xlu0 %2182
      %2184 = vrot.lane.b32.xlu0 %v700, 77
      %v2185 = vpop.permute.xlu0 %2184
      %2186 = vrot.lane.b32.xlu0 %v701, 77
      %v2187 = vpop.permute.xlu0 %2186
      %2188 = vrot.lane.b32.xlu0 %v702, 77
      %v2189 = vpop.permute.xlu0 %2188
      %2190 = vrot.lane.b32.xlu0 %v703, 77
      %v2191 = vpop.permute.xlu0 %2190
      %2192 = vrot.lane.b32.xlu0 %v1765, 77
      %v2193 = vpop.permute.xlu0 %2192
      %vm2194 = vcmask 629760
      %v2195 = vsel %vm2194, %v2155, %v2157
      %v2196 = vsel %vm2194, %v2157, %v2159
      %v2197 = vsel %vm2194, %v2159, %v2161
      %v2198 = vsel %vm2194, %v2161, %v2163
      %v2199 = vsel %vm2194, %v2163, %v2165
      %v2200 = vsel %vm2194, %v2165, %v2167
      %v2201 = vsel %vm2194, %v2167, %v2169
      %v2202 = vsel %vm2194, %v2169, %v2171
      %v2203 = vsel %vm2194, %v2171, %v2173
      %v2204 = vsel %vm2194, %v2173, %v2175
      %v2205 = vsel %vm2194, %v2175, %v2177
      %v2206 = vsel %vm2194, %v2177, %v2179
      %v2207 = vsel %vm2194, %v2179, %v2181
      %v2208 = vsel %vm2194, %v2181, %v2183
      %v2209 = vsel %vm2194, %v2183, %v2185
      %v2210 = vsel %vm2194, %v2185, %v2187
      %v2211 = vsel %vm2194, %v2187, %v2189
      %v2212 = vsel %vm2194, %v2189, %v2191
      %v2213 = vsel %vm2194, %v2191, %v2193
      %v2215 = vsel %vm761, %v2153, 0
      %v2218 = vsel %vm765, %v2195, 0
      %v2221 = vsel %vm765, %v2196, 0
      %v2224 = vsel %vm765, %v2197, 0
      %v2227 = vsel %vm765, %v2198, 0
      %v2230 = vsel %vm765, %v2199, 0
      %v2233 = vsel %vm765, %v2200, 0
      %v2236 = vsel %vm765, %v2201, 0
      %v2239 = vsel %vm765, %v2202, 0
      %v2242 = vsel %vm765, %v2203, 0
      %v2245 = vsel %vm765, %v2204, 0
      %v2248 = vsel %vm765, %v2205, 0
      %v2251 = vsel %vm765, %v2206, 0
      %v2254 = vsel %vm765, %v2207, 0
      %v2257 = vsel %vm765, %v2208, 0
      %v2260 = vsel %vm765, %v2209, 0
      %v2263 = vsel %vm765, %v2210, 0
      %v2266 = vsel %vm765, %v2211, 0
      %v2269 = vsel %vm765, %v2212, 0
      %v2272 = vsel %vm765, %v2213, 0
      %2274 = vmatpush.bf16.msra.mxu0 0
      %2275 = vmatpush.bf16.msra.mxu0 0
      %2276 = vmatpush.bf16.msra.mxu0 0
      %2277 = vmatpush.bf16.msra.mxu0 0
      %2278 = vmatpush.bf16.msra.mxu0 0
      %2279 = vmatpush.bf16.msra.mxu0 0
      %2280 = vmatpush.bf16.msra.mxu0 0
      %2281 = vmatpush.bf16.msra.mxu0 %v2218
      %2282 = vmatmul.bf16.gmra.mxu0 %v2215
      %v2283 = vpop.f32.mrf.mxu0
      %v2284 = vadd.f32 0.0, %v2283
      %v2285 = vpop.f32.mrf.mxu0
      %2286 = vdwg.mxu0
      %2287 = vmatpush.bf16.msra.mxu0 0
      %2288 = vmatpush.bf16.msra.mxu0 0
      %2289 = vmatpush.bf16.msra.mxu0 0
      %2290 = vmatpush.bf16.msra.mxu0 0
      %2291 = vmatpush.bf16.msra.mxu0 0
      %2292 = vmatpush.bf16.msra.mxu0 0
      %2293 = vmatpush.bf16.msra.mxu0 0
      %2294 = vmatpush.bf16.msra.mxu0 %v2221
      %2295 = vmatmul.bf16.gmra.mxu0 %v2215
      %v2296 = vpop.f32.mrf.mxu0
      %v2297 = vadd.f32 0.0, %v2296
      %v2298 = vpop.f32.mrf.mxu0
      %2299 = vdwg.mxu0
      %2300 = vmatpush.bf16.msra.mxu0 0
      %2301 = vmatpush.bf16.msra.mxu0 0
      %2302 = vmatpush.bf16.msra.mxu0 0
      %2303 = vmatpush.bf16.msra.mxu0 0
      %2304 = vmatpush.bf16.msra.mxu0 0
      %2305 = vmatpush.bf16.msra.mxu0 0
      %2306 = vmatpush.bf16.msra.mxu0 0
      %2307 = vmatpush.bf16.msra.mxu0 %v2224
      %2308 = vmatmul.bf16.gmra.mxu0 %v2215
      %v2309 = vpop.f32.mrf.mxu0
      %v2310 = vadd.f32 0.0, %v2309
      %v2311 = vpop.f32.mrf.mxu0
      %2312 = vdwg.mxu0
      %2313 = vmatpush.bf16.msra.mxu0 0
      %2314 = vmatpush.bf16.msra.mxu0 0
      %2315 = vmatpush.bf16.msra.mxu0 0
      %2316 = vmatpush.bf16.msra.mxu0 0
      %2317 = vmatpush.bf16.msra.mxu0 0
      %2318 = vmatpush.bf16.msra.mxu0 0
      %2319 = vmatpush.bf16.msra.mxu0 0
      %2320 = vmatpush.bf16.msra.mxu0 %v2227
      %2321 = vmatmul.bf16.gmra.mxu0 %v2215
      %v2322 = vpop.f32.mrf.mxu0
      %v2323 = vadd.f32 0.0, %v2322
      %v2324 = vpop.f32.mrf.mxu0
      %2325 = vdwg.mxu0
      %2326 = vmatpush.bf16.msra.mxu0 0
      %2327 = vmatpush.bf16.msra.mxu0 0
      %2328 = vmatpush.bf16.msra.mxu0 0
      %2329 = vmatpush.bf16.msra.mxu0 0
      %2330 = vmatpush.bf16.msra.mxu0 0
      %2331 = vmatpush.bf16.msra.mxu0 0
      %2332 = vmatpush.bf16.msra.mxu0 0
      %2333 = vmatpush.bf16.msra.mxu0 %v2230
      %2334 = vmatmul.bf16.gmra.mxu0 %v2215
      %v2335 = vpop.f32.mrf.mxu0
      %v2336 = vadd.f32 0.0, %v2335
      %v2337 = vpop.f32.mrf.mxu0
      %2338 = vdwg.mxu0
      %2339 = vmatpush.bf16.msra.mxu0 0
      %2340 = vmatpush.bf16.msra.mxu0 0
      %2341 = vmatpush.bf16.msra.mxu0 0
      %2342 = vmatpush.bf16.msra.mxu0 0
      %2343 = vmatpush.bf16.msra.mxu0 0
      %2344 = vmatpush.bf16.msra.mxu0 0
      %2345 = vmatpush.bf16.msra.mxu0 0
      %2346 = vmatpush.bf16.msra.mxu0 %v2233
      %2347 = vmatmul.bf16.gmra.mxu0 %v2215
      %v2348 = vpop.f32.mrf.mxu0
      %v2349 = vadd.f32 0.0, %v2348
      %v2350 = vpop.f32.mrf.mxu0
      %2351 = vdwg.mxu0
      %2352 = vmatpush.bf16.msra.mxu0 0
      %2353 = vmatpush.bf16.msra.mxu0 0
      %2354 = vmatpush.bf16.msra.mxu0 0
      %2355 = vmatpush.bf16.msra.mxu0 0
      %2356 = vmatpush.bf16.msra.mxu0 0
      %2357 = vmatpush.bf16.msra.mxu0 0
      %2358 = vmatpush.bf16.msra.mxu0 0
      %2359 = vmatpush.bf16.msra.mxu0 %v2236
      %2360 = vmatmul.bf16.gmra.mxu0 %v2215
      %v2361 = vpop.f32.mrf.mxu0
      %v2362 = vadd.f32 0.0, %v2361
      %v2363 = vpop.f32.mrf.mxu0
      %2364 = vdwg.mxu0
      %2365 = vmatpush.bf16.msra.mxu0 0
      %2366 = vmatpush.bf16.msra.mxu0 0
      %2367 = vmatpush.bf16.msra.mxu0 0
      %2368 = vmatpush.bf16.msra.mxu0 0
      %2369 = vmatpush.bf16.msra.mxu0 0
      %2370 = vmatpush.bf16.msra.mxu0 0
      %2371 = vmatpush.bf16.msra.mxu0 0
      %2372 = vmatpush.bf16.msra.mxu0 %v2239
      %2373 = vmatmul.bf16.gmra.mxu0 %v2215
      %v2374 = vpop.f32.mrf.mxu0
      %v2375 = vadd.f32 0.0, %v2374
      %v2376 = vpop.f32.mrf.mxu0
      %2377 = vdwg.mxu0
      %2378 = vmatpush.bf16.msra.mxu0 0
      %2379 = vmatpush.bf16.msra.mxu0 0
      %2380 = vmatpush.bf16.msra.mxu0 0
      %2381 = vmatpush.bf16.msra.mxu0 0
      %2382 = vmatpush.bf16.msra.mxu0 0
      %2383 = vmatpush.bf16.msra.mxu0 0
      %2384 = vmatpush.bf16.msra.mxu0 0
      %2385 = vmatpush.bf16.msra.mxu0 %v2242
      %2386 = vmatmul.bf16.gmra.mxu0 %v2215
      %v2387 = vpop.f32.mrf.mxu0
      %v2388 = vadd.f32 0.0, %v2387
      %v2389 = vpop.f32.mrf.mxu0
      %2390 = vdwg.mxu0
      %2391 = vmatpush.bf16.msra.mxu0 0
      %2392 = vmatpush.bf16.msra.mxu0 0
      %2393 = vmatpush.bf16.msra.mxu0 0
      %2394 = vmatpush.bf16.msra.mxu0 0
      %2395 = vmatpush.bf16.msra.mxu0 0
      %2396 = vmatpush.bf16.msra.mxu0 0
      %2397 = vmatpush.bf16.msra.mxu0 0
      %2398 = vmatpush.bf16.msra.mxu0 %v2245
      %2399 = vmatmul.bf16.gmra.mxu0 %v2215
      %v2400 = vpop.f32.mrf.mxu0
      %v2401 = vadd.f32 0.0, %v2400
      %v2402 = vpop.f32.mrf.mxu0
      %2403 = vdwg.mxu0
      %2404 = vmatpush.bf16.msra.mxu0 0
      %2405 = vmatpush.bf16.msra.mxu0 0
      %2406 = vmatpush.bf16.msra.mxu0 0
      %2407 = vmatpush.bf16.msra.mxu0 0
      %2408 = vmatpush.bf16.msra.mxu0 0
      %2409 = vmatpush.bf16.msra.mxu0 0
      %2410 = vmatpush.bf16.msra.mxu0 0
      %2411 = vmatpush.bf16.msra.mxu0 %v2248
      %2412 = vmatmul.bf16.gmra.mxu0 %v2215
      %v2413 = vpop.f32.mrf.mxu0
      %v2414 = vadd.f32 0.0, %v2413
      %v2415 = vpop.f32.mrf.mxu0
      %2416 = vdwg.mxu0
      %2417 = vmatpush.bf16.msra.mxu0 0
      %2418 = vmatpush.bf16.msra.mxu0 0
      %2419 = vmatpush.bf16.msra.mxu0 0
      %2420 = vmatpush.bf16.msra.mxu0 0
      %2421 = vmatpush.bf16.msra.mxu0 0
      %2422 = vmatpush.bf16.msra.mxu0 0
      %2423 = vmatpush.bf16.msra.mxu0 0
      %2424 = vmatpush.bf16.msra.mxu0 %v2251
      %2425 = vmatmul.bf16.gmra.mxu0 %v2215
      %v2426 = vpop.f32.mrf.mxu0
      %v2427 = vadd.f32 0.0, %v2426
      %v2428 = vpop.f32.mrf.mxu0
      %2429 = vdwg.mxu0
      %2430 = vmatpush.bf16.msra.mxu0 0
      %2431 = vmatpush.bf16.msra.mxu0 0
      %2432 = vmatpush.bf16.msra.mxu0 0
      %2433 = vmatpush.bf16.msra.mxu0 0
      %2434 = vmatpush.bf16.msra.mxu0 0
      %2435 = vmatpush.bf16.msra.mxu0 0
      %2436 = vmatpush.bf16.msra.mxu0 0
      %2437 = vmatpush.bf16.msra.mxu0 %v2254
      %2438 = vmatmul.bf16.gmra.mxu0 %v2215
      %v2439 = vpop.f32.mrf.mxu0
      %v2440 = vadd.f32 0.0, %v2439
      %v2441 = vpop.f32.mrf.mxu0
      %2442 = vdwg.mxu0
      %2443 = vmatpush.bf16.msra.mxu0 0
      %2444 = vmatpush.bf16.msra.mxu0 0
      %2445 = vmatpush.bf16.msra.mxu0 0
      %2446 = vmatpush.bf16.msra.mxu0 0
      %2447 = vmatpush.bf16.msra.mxu0 0
      %2448 = vmatpush.bf16.msra.mxu0 0
      %2449 = vmatpush.bf16.msra.mxu0 0
      %2450 = vmatpush.bf16.msra.mxu0 %v2257
      %2451 = vmatmul.bf16.gmra.mxu0 %v2215
      %v2452 = vpop.f32.mrf.mxu0
      %v2453 = vadd.f32 0.0, %v2452
      %v2454 = vpop.f32.mrf.mxu0
      %2455 = vdwg.mxu0
      %2456 = vmatpush.bf16.msra.mxu0 0
      %2457 = vmatpush.bf16.msra.mxu0 0
      %2458 = vmatpush.bf16.msra.mxu0 0
      %2459 = vmatpush.bf16.msra.mxu0 0
      %2460 = vmatpush.bf16.msra.mxu0 0
      %2461 = vmatpush.bf16.msra.mxu0 0
      %2462 = vmatpush.bf16.msra.mxu0 0
      %2463 = vmatpush.bf16.msra.mxu0 %v2260
      %2464 = vmatmul.bf16.gmra.mxu0 %v2215
      %v2465 = vpop.f32.mrf.mxu0
      %v2466 = vadd.f32 0.0, %v2465
      %v2467 = vpop.f32.mrf.mxu0
      %2468 = vdwg.mxu0
      %2469 = vmatpush.bf16.msra.mxu0 0
      %2470 = vmatpush.bf16.msra.mxu0 0
      %2471 = vmatpush.bf16.msra.mxu0 0
      %2472 = vmatpush.bf16.msra.mxu0 0
      %2473 = vmatpush.bf16.msra.mxu0 0
      %2474 = vmatpush.bf16.msra.mxu0 0
      %2475 = vmatpush.bf16.msra.mxu0 0
      %2476 = vmatpush.bf16.msra.mxu0 %v2263
      %2477 = vmatmul.bf16.gmra.mxu0 %v2215
      %v2478 = vpop.f32.mrf.mxu0
      %v2479 = vadd.f32 0.0, %v2478
      %v2480 = vpop.f32.mrf.mxu0
      %2481 = vdwg.mxu0
      %2482 = vmatpush.bf16.msra.mxu0 0
      %2483 = vmatpush.bf16.msra.mxu0 0
      %2484 = vmatpush.bf16.msra.mxu0 0
      %2485 = vmatpush.bf16.msra.mxu0 0
      %2486 = vmatpush.bf16.msra.mxu0 0
      %2487 = vmatpush.bf16.msra.mxu0 0
      %2488 = vmatpush.bf16.msra.mxu0 0
      %2489 = vmatpush.bf16.msra.mxu0 %v2266
      %2490 = vmatmul.bf16.gmra.mxu0 %v2215
      %v2491 = vpop.f32.mrf.mxu0
      %v2492 = vadd.f32 0.0, %v2491
      %v2493 = vpop.f32.mrf.mxu0
      %2494 = vdwg.mxu0
      %2495 = vmatpush.bf16.msra.mxu0 0
      %2496 = vmatpush.bf16.msra.mxu0 0
      %2497 = vmatpush.bf16.msra.mxu0 0
      %2498 = vmatpush.bf16.msra.mxu0 0
      %2499 = vmatpush.bf16.msra.mxu0 0
      %2500 = vmatpush.bf16.msra.mxu0 0
      %2501 = vmatpush.bf16.msra.mxu0 0
      %2502 = vmatpush.bf16.msra.mxu0 %v2269
      %2503 = vmatmul.bf16.gmra.mxu0 %v2215
      %v2504 = vpop.f32.mrf.mxu0
      %v2505 = vadd.f32 0.0, %v2504
      %v2506 = vpop.f32.mrf.mxu0
      %2507 = vdwg.mxu0
      %2508 = vmatpush.bf16.msra.mxu0 0
      %2509 = vmatpush.bf16.msra.mxu0 0
      %2510 = vmatpush.bf16.msra.mxu0 0
      %2511 = vmatpush.bf16.msra.mxu0 0
      %2512 = vmatpush.bf16.msra.mxu0 0
      %2513 = vmatpush.bf16.msra.mxu0 0
      %2514 = vmatpush.bf16.msra.mxu0 0
      %2515 = vmatpush.bf16.msra.mxu0 %v2272
      %2516 = vmatmul.bf16.gmra.mxu0 %v2215
      %v2517 = vpop.f32.mrf.mxu0
      %v2518 = vadd.f32 0.0, %v2517
      %v2519 = vpop.f32.mrf.mxu0
      %2520 = vdwg.mxu0
      %v2521 = vadd.f32 %v2133, %v2284
      %v2522 = vadd.f32 %v2134, %v2297
      %v2523 = vadd.f32 %v2135, %v2310
      %v2524 = vadd.f32 %v2136, %v2323
      %v2525 = vadd.f32 %v2137, %v2336
      %v2526 = vadd.f32 %v2138, %v2349
      %v2527 = vadd.f32 %v2139, %v2362
      %v2528 = vadd.f32 %v2140, %v2375
      %v2529 = vadd.f32 %v2141, %v2388
      %v2530 = vadd.f32 %v2142, %v2401
      %v2531 = vadd.f32 %v2143, %v2414
      %v2532 = vadd.f32 %v2144, %v2427
      %v2533 = vadd.f32 %v2145, %v2440
      %v2534 = vadd.f32 %v2146, %v2453
      %v2535 = vadd.f32 %v2147, %v2466
      %v2536 = vadd.f32 %v2148, %v2479
      %v2537 = vadd.f32 %v2149, %v2492
      %v2538 = vadd.f32 %v2150, %v2505
      %v2539 = vadd.f32 %v2151, %v2518
      %s2540 = scalar_lea.vmem %s1, 20
      %v2541 = vld [vmem:[%s2540] sm:$0xf]
      %2542 = vrot.lane.b32.xlu0 %v685, 76
      %v2543 = vpop.permute.xlu0 %2542
      %2544 = vrot.lane.b32.xlu0 %v686, 76
      %v2545 = vpop.permute.xlu0 %2544
      %2546 = vrot.lane.b32.xlu0 %v687, 76
      %v2547 = vpop.permute.xlu0 %2546
      %2548 = vrot.lane.b32.xlu0 %v688, 76
      %v2549 = vpop.permute.xlu0 %2548
      %2550 = vrot.lane.b32.xlu0 %v689, 76
      %v2551 = vpop.permute.xlu0 %2550
      %2552 = vrot.lane.b32.xlu0 %v690, 76
      %v2553 = vpop.permute.xlu0 %2552
      %2554 = vrot.lane.b32.xlu0 %v691, 76
      %v2555 = vpop.permute.xlu0 %2554
      %2556 = vrot.lane.b32.xlu0 %v692, 76
      %v2557 = vpop.permute.xlu0 %2556
      %2558 = vrot.lane.b32.xlu0 %v693, 76
      %v2559 = vpop.permute.xlu0 %2558
      %2560 = vrot.lane.b32.xlu0 %v694, 76
      %v2561 = vpop.permute.xlu0 %2560
      %2562 = vrot.lane.b32.xlu0 %v695, 76
      %v2563 = vpop.permute.xlu0 %2562
      %2564 = vrot.lane.b32.xlu0 %v696, 76
      %v2565 = vpop.permute.xlu0 %2564
      %2566 = vrot.lane.b32.xlu0 %v697, 76
      %v2567 = vpop.permute.xlu0 %2566
      %2568 = vrot.lane.b32.xlu0 %v698, 76
      %v2569 = vpop.permute.xlu0 %2568
      %2570 = vrot.lane.b32.xlu0 %v699, 76
      %v2571 = vpop.permute.xlu0 %2570
      %2572 = vrot.lane.b32.xlu0 %v700, 76
      %v2573 = vpop.permute.xlu0 %2572
      %2574 = vrot.lane.b32.xlu0 %v701, 76
      %v2575 = vpop.permute.xlu0 %2574
      %2576 = vrot.lane.b32.xlu0 %v702, 76
      %v2577 = vpop.permute.xlu0 %2576
      %2578 = vrot.lane.b32.xlu0 %v703, 76
      %v2579 = vpop.permute.xlu0 %2578
      %2580 = vrot.lane.b32.xlu0 %v1765, 76
      %v2581 = vpop.permute.xlu0 %2580
      %vm2582 = vcmask 621568
      %v2583 = vsel %vm2582, %v2543, %v2545
      %v2584 = vsel %vm2582, %v2545, %v2547
      %v2585 = vsel %vm2582, %v2547, %v2549
      %v2586 = vsel %vm2582, %v2549, %v2551
      %v2587 = vsel %vm2582, %v2551, %v2553
      %v2588 = vsel %vm2582, %v2553, %v2555
      %v2589 = vsel %vm2582, %v2555, %v2557
      %v2590 = vsel %vm2582, %v2557, %v2559
      %v2591 = vsel %vm2582, %v2559, %v2561
      %v2592 = vsel %vm2582, %v2561, %v2563
      %v2593 = vsel %vm2582, %v2563, %v2565
      %v2594 = vsel %vm2582, %v2565, %v2567
      %v2595 = vsel %vm2582, %v2567, %v2569
      %v2596 = vsel %vm2582, %v2569, %v2571
      %v2597 = vsel %vm2582, %v2571, %v2573
      %v2598 = vsel %vm2582, %v2573, %v2575
      %v2599 = vsel %vm2582, %v2575, %v2577
      %v2600 = vsel %vm2582, %v2577, %v2579
      %v2601 = vsel %vm2582, %v2579, %v2581
      %v2603 = vsel %vm761, %v2541, 0
      %v2606 = vsel %vm765, %v2583, 0
      %v2609 = vsel %vm765, %v2584, 0
      %v2612 = vsel %vm765, %v2585, 0
      %v2615 = vsel %vm765, %v2586, 0
      %v2618 = vsel %vm765, %v2587, 0
      %v2621 = vsel %vm765, %v2588, 0
      %v2624 = vsel %vm765, %v2589, 0
      %v2627 = vsel %vm765, %v2590, 0
      %v2630 = vsel %vm765, %v2591, 0
      %v2633 = vsel %vm765, %v2592, 0
      %v2636 = vsel %vm765, %v2593, 0
      %v2639 = vsel %vm765, %v2594, 0
      %v2642 = vsel %vm765, %v2595, 0
      %v2645 = vsel %vm765, %v2596, 0
      %v2648 = vsel %vm765, %v2597, 0
      %v2651 = vsel %vm765, %v2598, 0
      %v2654 = vsel %vm765, %v2599, 0
      %v2657 = vsel %vm765, %v2600, 0
      %v2660 = vsel %vm765, %v2601, 0
      %2662 = vmatpush.bf16.msra.mxu0 0
      %2663 = vmatpush.bf16.msra.mxu0 0
      %2664 = vmatpush.bf16.msra.mxu0 0
      %2665 = vmatpush.bf16.msra.mxu0 0
      %2666 = vmatpush.bf16.msra.mxu0 0
      %2667 = vmatpush.bf16.msra.mxu0 0
      %2668 = vmatpush.bf16.msra.mxu0 0
      %2669 = vmatpush.bf16.msra.mxu0 %v2606
      %2670 = vmatmul.bf16.gmra.mxu0 %v2603
      %v2671 = vpop.f32.mrf.mxu0
      %v2672 = vadd.f32 0.0, %v2671
      %v2673 = vpop.f32.mrf.mxu0
      %2674 = vdwg.mxu0
      %2675 = vmatpush.bf16.msra.mxu0 0
      %2676 = vmatpush.bf16.msra.mxu0 0
      %2677 = vmatpush.bf16.msra.mxu0 0
      %2678 = vmatpush.bf16.msra.mxu0 0
      %2679 = vmatpush.bf16.msra.mxu0 0
      %2680 = vmatpush.bf16.msra.mxu0 0
      %2681 = vmatpush.bf16.msra.mxu0 0
      %2682 = vmatpush.bf16.msra.mxu0 %v2609
      %2683 = vmatmul.bf16.gmra.mxu0 %v2603
      %v2684 = vpop.f32.mrf.mxu0
      %v2685 = vadd.f32 0.0, %v2684
      %v2686 = vpop.f32.mrf.mxu0
      %2687 = vdwg.mxu0
      %2688 = vmatpush.bf16.msra.mxu0 0
      %2689 = vmatpush.bf16.msra.mxu0 0
      %2690 = vmatpush.bf16.msra.mxu0 0
      %2691 = vmatpush.bf16.msra.mxu0 0
      %2692 = vmatpush.bf16.msra.mxu0 0
      %2693 = vmatpush.bf16.msra.mxu0 0
      %2694 = vmatpush.bf16.msra.mxu0 0
      %2695 = vmatpush.bf16.msra.mxu0 %v2612
      %2696 = vmatmul.bf16.gmra.mxu0 %v2603
      %v2697 = vpop.f32.mrf.mxu0
      %v2698 = vadd.f32 0.0, %v2697
      %v2699 = vpop.f32.mrf.mxu0
      %2700 = vdwg.mxu0
      %2701 = vmatpush.bf16.msra.mxu0 0
      %2702 = vmatpush.bf16.msra.mxu0 0
      %2703 = vmatpush.bf16.msra.mxu0 0
      %2704 = vmatpush.bf16.msra.mxu0 0
      %2705 = vmatpush.bf16.msra.mxu0 0
      %2706 = vmatpush.bf16.msra.mxu0 0
      %2707 = vmatpush.bf16.msra.mxu0 0
      %2708 = vmatpush.bf16.msra.mxu0 %v2615
      %2709 = vmatmul.bf16.gmra.mxu0 %v2603
      %v2710 = vpop.f32.mrf.mxu0
      %v2711 = vadd.f32 0.0, %v2710
      %v2712 = vpop.f32.mrf.mxu0
      %2713 = vdwg.mxu0
      %2714 = vmatpush.bf16.msra.mxu0 0
      %2715 = vmatpush.bf16.msra.mxu0 0
      %2716 = vmatpush.bf16.msra.mxu0 0
      %2717 = vmatpush.bf16.msra.mxu0 0
      %2718 = vmatpush.bf16.msra.mxu0 0
      %2719 = vmatpush.bf16.msra.mxu0 0
      %2720 = vmatpush.bf16.msra.mxu0 0
      %2721 = vmatpush.bf16.msra.mxu0 %v2618
      %2722 = vmatmul.bf16.gmra.mxu0 %v2603
      %v2723 = vpop.f32.mrf.mxu0
      %v2724 = vadd.f32 0.0, %v2723
      %v2725 = vpop.f32.mrf.mxu0
      %2726 = vdwg.mxu0
      %2727 = vmatpush.bf16.msra.mxu0 0
      %2728 = vmatpush.bf16.msra.mxu0 0
      %2729 = vmatpush.bf16.msra.mxu0 0
      %2730 = vmatpush.bf16.msra.mxu0 0
      %2731 = vmatpush.bf16.msra.mxu0 0
      %2732 = vmatpush.bf16.msra.mxu0 0
      %2733 = vmatpush.bf16.msra.mxu0 0
      %2734 = vmatpush.bf16.msra.mxu0 %v2621
      %2735 = vmatmul.bf16.gmra.mxu0 %v2603
      %v2736 = vpop.f32.mrf.mxu0
      %v2737 = vadd.f32 0.0, %v2736
      %v2738 = vpop.f32.mrf.mxu0
      %2739 = vdwg.mxu0
      %2740 = vmatpush.bf16.msra.mxu0 0
      %2741 = vmatpush.bf16.msra.mxu0 0
      %2742 = vmatpush.bf16.msra.mxu0 0
      %2743 = vmatpush.bf16.msra.mxu0 0
      %2744 = vmatpush.bf16.msra.mxu0 0
      %2745 = vmatpush.bf16.msra.mxu0 0
      %2746 = vmatpush.bf16.msra.mxu0 0
      %2747 = vmatpush.bf16.msra.mxu0 %v2624
      %2748 = vmatmul.bf16.gmra.mxu0 %v2603
      %v2749 = vpop.f32.mrf.mxu0
      %v2750 = vadd.f32 0.0, %v2749
      %v2751 = vpop.f32.mrf.mxu0
      %2752 = vdwg.mxu0
      %2753 = vmatpush.bf16.msra.mxu0 0
      %2754 = vmatpush.bf16.msra.mxu0 0
      %2755 = vmatpush.bf16.msra.mxu0 0
      %2756 = vmatpush.bf16.msra.mxu0 0
      %2757 = vmatpush.bf16.msra.mxu0 0
      %2758 = vmatpush.bf16.msra.mxu0 0
      %2759 = vmatpush.bf16.msra.mxu0 0
      %2760 = vmatpush.bf16.msra.mxu0 %v2627
      %2761 = vmatmul.bf16.gmra.mxu0 %v2603
      %v2762 = vpop.f32.mrf.mxu0
      %v2763 = vadd.f32 0.0, %v2762
      %v2764 = vpop.f32.mrf.mxu0
      %2765 = vdwg.mxu0
      %2766 = vmatpush.bf16.msra.mxu0 0
      %2767 = vmatpush.bf16.msra.mxu0 0
      %2768 = vmatpush.bf16.msra.mxu0 0
      %2769 = vmatpush.bf16.msra.mxu0 0
      %2770 = vmatpush.bf16.msra.mxu0 0
      %2771 = vmatpush.bf16.msra.mxu0 0
      %2772 = vmatpush.bf16.msra.mxu0 0
      %2773 = vmatpush.bf16.msra.mxu0 %v2630
      %2774 = vmatmul.bf16.gmra.mxu0 %v2603
      %v2775 = vpop.f32.mrf.mxu0
      %v2776 = vadd.f32 0.0, %v2775
      %v2777 = vpop.f32.mrf.mxu0
      %2778 = vdwg.mxu0
      %2779 = vmatpush.bf16.msra.mxu0 0
      %2780 = vmatpush.bf16.msra.mxu0 0
      %2781 = vmatpush.bf16.msra.mxu0 0
      %2782 = vmatpush.bf16.msra.mxu0 0
      %2783 = vmatpush.bf16.msra.mxu0 0
      %2784 = vmatpush.bf16.msra.mxu0 0
      %2785 = vmatpush.bf16.msra.mxu0 0
      %2786 = vmatpush.bf16.msra.mxu0 %v2633
      %2787 = vmatmul.bf16.gmra.mxu0 %v2603
      %v2788 = vpop.f32.mrf.mxu0
      %v2789 = vadd.f32 0.0, %v2788
      %v2790 = vpop.f32.mrf.mxu0
      %2791 = vdwg.mxu0
      %2792 = vmatpush.bf16.msra.mxu0 0
      %2793 = vmatpush.bf16.msra.mxu0 0
      %2794 = vmatpush.bf16.msra.mxu0 0
      %2795 = vmatpush.bf16.msra.mxu0 0
      %2796 = vmatpush.bf16.msra.mxu0 0
      %2797 = vmatpush.bf16.msra.mxu0 0
      %2798 = vmatpush.bf16.msra.mxu0 0
      %2799 = vmatpush.bf16.msra.mxu0 %v2636
      %2800 = vmatmul.bf16.gmra.mxu0 %v2603
      %v2801 = vpop.f32.mrf.mxu0
      %v2802 = vadd.f32 0.0, %v2801
      %v2803 = vpop.f32.mrf.mxu0
      %2804 = vdwg.mxu0
      %2805 = vmatpush.bf16.msra.mxu0 0
      %2806 = vmatpush.bf16.msra.mxu0 0
      %2807 = vmatpush.bf16.msra.mxu0 0
      %2808 = vmatpush.bf16.msra.mxu0 0
      %2809 = vmatpush.bf16.msra.mxu0 0
      %2810 = vmatpush.bf16.msra.mxu0 0
      %2811 = vmatpush.bf16.msra.mxu0 0
      %2812 = vmatpush.bf16.msra.mxu0 %v2639
      %2813 = vmatmul.bf16.gmra.mxu0 %v2603
      %v2814 = vpop.f32.mrf.mxu0
      %v2815 = vadd.f32 0.0, %v2814
      %v2816 = vpop.f32.mrf.mxu0
      %2817 = vdwg.mxu0
      %2818 = vmatpush.bf16.msra.mxu0 0
      %2819 = vmatpush.bf16.msra.mxu0 0
      %2820 = vmatpush.bf16.msra.mxu0 0
      %2821 = vmatpush.bf16.msra.mxu0 0
      %2822 = vmatpush.bf16.msra.mxu0 0
      %2823 = vmatpush.bf16.msra.mxu0 0
      %2824 = vmatpush.bf16.msra.mxu0 0
      %2825 = vmatpush.bf16.msra.mxu0 %v2642
      %2826 = vmatmul.bf16.gmra.mxu0 %v2603
      %v2827 = vpop.f32.mrf.mxu0
      %v2828 = vadd.f32 0.0, %v2827
      %v2829 = vpop.f32.mrf.mxu0
      %2830 = vdwg.mxu0
      %2831 = vmatpush.bf16.msra.mxu0 0
      %2832 = vmatpush.bf16.msra.mxu0 0
      %2833 = vmatpush.bf16.msra.mxu0 0
      %2834 = vmatpush.bf16.msra.mxu0 0
      %2835 = vmatpush.bf16.msra.mxu0 0
      %2836 = vmatpush.bf16.msra.mxu0 0
      %2837 = vmatpush.bf16.msra.mxu0 0
      %2838 = vmatpush.bf16.msra.mxu0 %v2645
      %2839 = vmatmul.bf16.gmra.mxu0 %v2603
      %v2840 = vpop.f32.mrf.mxu0
      %v2841 = vadd.f32 0.0, %v2840
      %v2842 = vpop.f32.mrf.mxu0
      %2843 = vdwg.mxu0
      %2844 = vmatpush.bf16.msra.mxu0 0
      %2845 = vmatpush.bf16.msra.mxu0 0
      %2846 = vmatpush.bf16.msra.mxu0 0
      %2847 = vmatpush.bf16.msra.mxu0 0
      %2848 = vmatpush.bf16.msra.mxu0 0
      %2849 = vmatpush.bf16.msra.mxu0 0
      %2850 = vmatpush.bf16.msra.mxu0 0
      %2851 = vmatpush.bf16.msra.mxu0 %v2648
      %2852 = vmatmul.bf16.gmra.mxu0 %v2603
      %v2853 = vpop.f32.mrf.mxu0
      %v2854 = vadd.f32 0.0, %v2853
      %v2855 = vpop.f32.mrf.mxu0
      %2856 = vdwg.mxu0
      %2857 = vmatpush.bf16.msra.mxu0 0
      %2858 = vmatpush.bf16.msra.mxu0 0
      %2859 = vmatpush.bf16.msra.mxu0 0
      %2860 = vmatpush.bf16.msra.mxu0 0
      %2861 = vmatpush.bf16.msra.mxu0 0
      %2862 = vmatpush.bf16.msra.mxu0 0
      %2863 = vmatpush.bf16.msra.mxu0 0
      %2864 = vmatpush.bf16.msra.mxu0 %v2651
      %2865 = vmatmul.bf16.gmra.mxu0 %v2603
      %v2866 = vpop.f32.mrf.mxu0
      %v2867 = vadd.f32 0.0, %v2866
      %v2868 = vpop.f32.mrf.mxu0
      %2869 = vdwg.mxu0
      %2870 = vmatpush.bf16.msra.mxu0 0
      %2871 = vmatpush.bf16.msra.mxu0 0
      %2872 = vmatpush.bf16.msra.mxu0 0
      %2873 = vmatpush.bf16.msra.mxu0 0
      %2874 = vmatpush.bf16.msra.mxu0 0
      %2875 = vmatpush.bf16.msra.mxu0 0
      %2876 = vmatpush.bf16.msra.mxu0 0
      %2877 = vmatpush.bf16.msra.mxu0 %v2654
      %2878 = vmatmul.bf16.gmra.mxu0 %v2603
      %v2879 = vpop.f32.mrf.mxu0
      %v2880 = vadd.f32 0.0, %v2879
      %v2881 = vpop.f32.mrf.mxu0
      %2882 = vdwg.mxu0
      %2883 = vmatpush.bf16.msra.mxu0 0
      %2884 = vmatpush.bf16.msra.mxu0 0
      %2885 = vmatpush.bf16.msra.mxu0 0
      %2886 = vmatpush.bf16.msra.mxu0 0
      %2887 = vmatpush.bf16.msra.mxu0 0
      %2888 = vmatpush.bf16.msra.mxu0 0
      %2889 = vmatpush.bf16.msra.mxu0 0
      %2890 = vmatpush.bf16.msra.mxu0 %v2657
      %2891 = vmatmul.bf16.gmra.mxu0 %v2603
      %v2892 = vpop.f32.mrf.mxu0
      %v2893 = vadd.f32 0.0, %v2892
      %v2894 = vpop.f32.mrf.mxu0
      %2895 = vdwg.mxu0
      %2896 = vmatpush.bf16.msra.mxu0 0
      %2897 = vmatpush.bf16.msra.mxu0 0
      %2898 = vmatpush.bf16.msra.mxu0 0
      %2899 = vmatpush.bf16.msra.mxu0 0
      %2900 = vmatpush.bf16.msra.mxu0 0
      %2901 = vmatpush.bf16.msra.mxu0 0
      %2902 = vmatpush.bf16.msra.mxu0 0
      %2903 = vmatpush.bf16.msra.mxu0 %v2660
      %2904 = vmatmul.bf16.gmra.mxu0 %v2603
      %v2905 = vpop.f32.mrf.mxu0
      %v2906 = vadd.f32 0.0, %v2905
      %v2907 = vpop.f32.mrf.mxu0
      %2908 = vdwg.mxu0
      %v2909 = vadd.f32 %v2521, %v2672
      %v2910 = vadd.f32 %v2522, %v2685
      %v2911 = vadd.f32 %v2523, %v2698
      %v2912 = vadd.f32 %v2524, %v2711
      %v2913 = vadd.f32 %v2525, %v2724
      %v2914 = vadd.f32 %v2526, %v2737
      %v2915 = vadd.f32 %v2527, %v2750
      %v2916 = vadd.f32 %v2528, %v2763
      %v2917 = vadd.f32 %v2529, %v2776
      %v2918 = vadd.f32 %v2530, %v2789
      %v2919 = vadd.f32 %v2531, %v2802
      %v2920 = vadd.f32 %v2532, %v2815
      %v2921 = vadd.f32 %v2533, %v2828
      %v2922 = vadd.f32 %v2534, %v2841
      %v2923 = vadd.f32 %v2535, %v2854
      %v2924 = vadd.f32 %v2536, %v2867
      %v2925 = vadd.f32 %v2537, %v2880
      %v2926 = vadd.f32 %v2538, %v2893
      %v2927 = vadd.f32 %v2539, %v2906
      %s2928 = scalar_lea.vmem %s1, 24
      %v2929 = vld [vmem:[%s2928] sm:$0xf]
      %2930 = vrot.lane.b32.xlu0 %v685, 28
      %v2931 = vpop.permute.xlu0 %2930
      %2932 = vrot.lane.b32.xlu0 %v686, 28
      %v2933 = vpop.permute.xlu0 %2932
      %2934 = vrot.lane.b32.xlu0 %v687, 28
      %v2935 = vpop.permute.xlu0 %2934
      %2936 = vrot.lane.b32.xlu0 %v688, 28
      %v2937 = vpop.permute.xlu0 %2936
      %2938 = vrot.lane.b32.xlu0 %v689, 28
      %v2939 = vpop.permute.xlu0 %2938
      %2940 = vrot.lane.b32.xlu0 %v690, 28
      %v2941 = vpop.permute.xlu0 %2940
      %2942 = vrot.lane.b32.xlu0 %v691, 28
      %v2943 = vpop.permute.xlu0 %2942
      %2944 = vrot.lane.b32.xlu0 %v692, 28
      %v2945 = vpop.permute.xlu0 %2944
      %2946 = vrot.lane.b32.xlu0 %v693, 28
      %v2947 = vpop.permute.xlu0 %2946
      %2948 = vrot.lane.b32.xlu0 %v694, 28
      %v2949 = vpop.permute.xlu0 %2948
      %2950 = vrot.lane.b32.xlu0 %v695, 28
      %v2951 = vpop.permute.xlu0 %2950
      %2952 = vrot.lane.b32.xlu0 %v696, 28
      %v2953 = vpop.permute.xlu0 %2952
      %2954 = vrot.lane.b32.xlu0 %v697, 28
      %v2955 = vpop.permute.xlu0 %2954
      %2956 = vrot.lane.b32.xlu0 %v698, 28
      %v2957 = vpop.permute.xlu0 %2956
      %2958 = vrot.lane.b32.xlu0 %v699, 28
      %v2959 = vpop.permute.xlu0 %2958
      %2960 = vrot.lane.b32.xlu0 %v700, 28
      %v2961 = vpop.permute.xlu0 %2960
      %2962 = vrot.lane.b32.xlu0 %v701, 28
      %v2963 = vpop.permute.xlu0 %2962
      %2964 = vrot.lane.b32.xlu0 %v702, 28
      %v2965 = vpop.permute.xlu0 %2964
      %2966 = vrot.lane.b32.xlu0 %v703, 28
      %v2967 = vpop.permute.xlu0 %2966
      %2968 = vrot.lane.b32.xlu0 %v1765, 28
      %v2969 = vpop.permute.xlu0 %2968
      %vm2970 = vcmask 228352
      %v2971 = vsel %vm2970, %v2931, %v2933
      %v2972 = vsel %vm2970, %v2933, %v2935
      %v2973 = vsel %vm2970, %v2935, %v2937
      %v2974 = vsel %vm2970, %v2937, %v2939
      %v2975 = vsel %vm2970, %v2939, %v2941
      %v2976 = vsel %vm2970, %v2941, %v2943
      %v2977 = vsel %vm2970, %v2943, %v2945
      %v2978 = vsel %vm2970, %v2945, %v2947
      %v2979 = vsel %vm2970, %v2947, %v2949
      %v2980 = vsel %vm2970, %v2949, %v2951
      %v2981 = vsel %vm2970, %v2951, %v2953
      %v2982 = vsel %vm2970, %v2953, %v2955
      %v2983 = vsel %vm2970, %v2955, %v2957
      %v2984 = vsel %vm2970, %v2957, %v2959
      %v2985 = vsel %vm2970, %v2959, %v2961
      %v2986 = vsel %vm2970, %v2961, %v2963
      %v2987 = vsel %vm2970, %v2963, %v2965
      %v2988 = vsel %vm2970, %v2965, %v2967
      %v2989 = vsel %vm2970, %v2967, %v2969
      %v2991 = vsel %vm761, %v2929, 0
      %v2994 = vsel %vm765, %v2971, 0
      %v2997 = vsel %vm765, %v2972, 0
      %v3000 = vsel %vm765, %v2973, 0
      %v3003 = vsel %vm765, %v2974, 0
      %v3006 = vsel %vm765, %v2975, 0
      %v3009 = vsel %vm765, %v2976, 0
      %v3012 = vsel %vm765, %v2977, 0
      %v3015 = vsel %vm765, %v2978, 0
      %v3018 = vsel %vm765, %v2979, 0
      %v3021 = vsel %vm765, %v2980, 0
      %v3024 = vsel %vm765, %v2981, 0
      %v3027 = vsel %vm765, %v2982, 0
      %v3030 = vsel %vm765, %v2983, 0
      %v3033 = vsel %vm765, %v2984, 0
      %v3036 = vsel %vm765, %v2985, 0
      %v3039 = vsel %vm765, %v2986, 0
      %v3042 = vsel %vm765, %v2987, 0
      %v3045 = vsel %vm765, %v2988, 0
      %v3048 = vsel %vm765, %v2989, 0
      %3050 = vmatpush.bf16.msra.mxu0 0
      %3051 = vmatpush.bf16.msra.mxu0 0
      %3052 = vmatpush.bf16.msra.mxu0 0
      %3053 = vmatpush.bf16.msra.mxu0 0
      %3054 = vmatpush.bf16.msra.mxu0 0
      %3055 = vmatpush.bf16.msra.mxu0 0
      %3056 = vmatpush.bf16.msra.mxu0 0
      %3057 = vmatpush.bf16.msra.mxu0 %v2994
      %3058 = vmatmul.bf16.gmra.mxu0 %v2991
      %v3059 = vpop.f32.mrf.mxu0
      %v3060 = vadd.f32 0.0, %v3059
      %v3061 = vpop.f32.mrf.mxu0
      %3062 = vdwg.mxu0
      %3063 = vmatpush.bf16.msra.mxu0 0
      %3064 = vmatpush.bf16.msra.mxu0 0
      %3065 = vmatpush.bf16.msra.mxu0 0
      %3066 = vmatpush.bf16.msra.mxu0 0
      %3067 = vmatpush.bf16.msra.mxu0 0
      %3068 = vmatpush.bf16.msra.mxu0 0
      %3069 = vmatpush.bf16.msra.mxu0 0
      %3070 = vmatpush.bf16.msra.mxu0 %v2997
      %3071 = vmatmul.bf16.gmra.mxu0 %v2991
      %v3072 = vpop.f32.mrf.mxu0
      %v3073 = vadd.f32 0.0, %v3072
      %v3074 = vpop.f32.mrf.mxu0
      %3075 = vdwg.mxu0
      %3076 = vmatpush.bf16.msra.mxu0 0
      %3077 = vmatpush.bf16.msra.mxu0 0
      %3078 = vmatpush.bf16.msra.mxu0 0
      %3079 = vmatpush.bf16.msra.mxu0 0
      %3080 = vmatpush.bf16.msra.mxu0 0
      %3081 = vmatpush.bf16.msra.mxu0 0
      %3082 = vmatpush.bf16.msra.mxu0 0
      %3083 = vmatpush.bf16.msra.mxu0 %v3000
      %3084 = vmatmul.bf16.gmra.mxu0 %v2991
      %v3085 = vpop.f32.mrf.mxu0
      %v3086 = vadd.f32 0.0, %v3085
      %v3087 = vpop.f32.mrf.mxu0
      %3088 = vdwg.mxu0
      %3089 = vmatpush.bf16.msra.mxu0 0
      %3090 = vmatpush.bf16.msra.mxu0 0
      %3091 = vmatpush.bf16.msra.mxu0 0
      %3092 = vmatpush.bf16.msra.mxu0 0
      %3093 = vmatpush.bf16.msra.mxu0 0
      %3094 = vmatpush.bf16.msra.mxu0 0
      %3095 = vmatpush.bf16.msra.mxu0 0
      %3096 = vmatpush.bf16.msra.mxu0 %v3003
      %3097 = vmatmul.bf16.gmra.mxu0 %v2991
      %v3098 = vpop.f32.mrf.mxu0
      %v3099 = vadd.f32 0.0, %v3098
      %v3100 = vpop.f32.mrf.mxu0
      %3101 = vdwg.mxu0
      %3102 = vmatpush.bf16.msra.mxu0 0
      %3103 = vmatpush.bf16.msra.mxu0 0
      %3104 = vmatpush.bf16.msra.mxu0 0
      %3105 = vmatpush.bf16.msra.mxu0 0
      %3106 = vmatpush.bf16.msra.mxu0 0
      %3107 = vmatpush.bf16.msra.mxu0 0
      %3108 = vmatpush.bf16.msra.mxu0 0
      %3109 = vmatpush.bf16.msra.mxu0 %v3006
      %3110 = vmatmul.bf16.gmra.mxu0 %v2991
      %v3111 = vpop.f32.mrf.mxu0
      %v3112 = vadd.f32 0.0, %v3111
      %v3113 = vpop.f32.mrf.mxu0
      %3114 = vdwg.mxu0
      %3115 = vmatpush.bf16.msra.mxu0 0
      %3116 = vmatpush.bf16.msra.mxu0 0
      %3117 = vmatpush.bf16.msra.mxu0 0
      %3118 = vmatpush.bf16.msra.mxu0 0
      %3119 = vmatpush.bf16.msra.mxu0 0
      %3120 = vmatpush.bf16.msra.mxu0 0
      %3121 = vmatpush.bf16.msra.mxu0 0
      %3122 = vmatpush.bf16.msra.mxu0 %v3009
      %3123 = vmatmul.bf16.gmra.mxu0 %v2991
      %v3124 = vpop.f32.mrf.mxu0
      %v3125 = vadd.f32 0.0, %v3124
      %v3126 = vpop.f32.mrf.mxu0
      %3127 = vdwg.mxu0
      %3128 = vmatpush.bf16.msra.mxu0 0
      %3129 = vmatpush.bf16.msra.mxu0 0
      %3130 = vmatpush.bf16.msra.mxu0 0
      %3131 = vmatpush.bf16.msra.mxu0 0
      %3132 = vmatpush.bf16.msra.mxu0 0
      %3133 = vmatpush.bf16.msra.mxu0 0
      %3134 = vmatpush.bf16.msra.mxu0 0
      %3135 = vmatpush.bf16.msra.mxu0 %v3012
      %3136 = vmatmul.bf16.gmra.mxu0 %v2991
      %v3137 = vpop.f32.mrf.mxu0
      %v3138 = vadd.f32 0.0, %v3137
      %v3139 = vpop.f32.mrf.mxu0
      %3140 = vdwg.mxu0
      %3141 = vmatpush.bf16.msra.mxu0 0
      %3142 = vmatpush.bf16.msra.mxu0 0
      %3143 = vmatpush.bf16.msra.mxu0 0
      %3144 = vmatpush.bf16.msra.mxu0 0
      %3145 = vmatpush.bf16.msra.mxu0 0
      %3146 = vmatpush.bf16.msra.mxu0 0
      %3147 = vmatpush.bf16.msra.mxu0 0
      %3148 = vmatpush.bf16.msra.mxu0 %v3015
      %3149 = vmatmul.bf16.gmra.mxu0 %v2991
      %v3150 = vpop.f32.mrf.mxu0
      %v3151 = vadd.f32 0.0, %v3150
      %v3152 = vpop.f32.mrf.mxu0
      %3153 = vdwg.mxu0
      %3154 = vmatpush.bf16.msra.mxu0 0
      %3155 = vmatpush.bf16.msra.mxu0 0
      %3156 = vmatpush.bf16.msra.mxu0 0
      %3157 = vmatpush.bf16.msra.mxu0 0
      %3158 = vmatpush.bf16.msra.mxu0 0
      %3159 = vmatpush.bf16.msra.mxu0 0
      %3160 = vmatpush.bf16.msra.mxu0 0
      %3161 = vmatpush.bf16.msra.mxu0 %v3018
      %3162 = vmatmul.bf16.gmra.mxu0 %v2991
      %v3163 = vpop.f32.mrf.mxu0
      %v3164 = vadd.f32 0.0, %v3163
      %v3165 = vpop.f32.mrf.mxu0
      %3166 = vdwg.mxu0
      %3167 = vmatpush.bf16.msra.mxu0 0
      %3168 = vmatpush.bf16.msra.mxu0 0
      %3169 = vmatpush.bf16.msra.mxu0 0
      %3170 = vmatpush.bf16.msra.mxu0 0
      %3171 = vmatpush.bf16.msra.mxu0 0
      %3172 = vmatpush.bf16.msra.mxu0 0
      %3173 = vmatpush.bf16.msra.mxu0 0
      %3174 = vmatpush.bf16.msra.mxu0 %v3021
      %3175 = vmatmul.bf16.gmra.mxu0 %v2991
      %v3176 = vpop.f32.mrf.mxu0
      %v3177 = vadd.f32 0.0, %v3176
      %v3178 = vpop.f32.mrf.mxu0
      %3179 = vdwg.mxu0
      %3180 = vmatpush.bf16.msra.mxu0 0
      %3181 = vmatpush.bf16.msra.mxu0 0
      %3182 = vmatpush.bf16.msra.mxu0 0
      %3183 = vmatpush.bf16.msra.mxu0 0
      %3184 = vmatpush.bf16.msra.mxu0 0
      %3185 = vmatpush.bf16.msra.mxu0 0
      %3186 = vmatpush.bf16.msra.mxu0 0
      %3187 = vmatpush.bf16.msra.mxu0 %v3024
      %3188 = vmatmul.bf16.gmra.mxu0 %v2991
      %v3189 = vpop.f32.mrf.mxu0
      %v3190 = vadd.f32 0.0, %v3189
      %v3191 = vpop.f32.mrf.mxu0
      %3192 = vdwg.mxu0
      %3193 = vmatpush.bf16.msra.mxu0 0
      %3194 = vmatpush.bf16.msra.mxu0 0
      %3195 = vmatpush.bf16.msra.mxu0 0
      %3196 = vmatpush.bf16.msra.mxu0 0
      %3197 = vmatpush.bf16.msra.mxu0 0
      %3198 = vmatpush.bf16.msra.mxu0 0
      %3199 = vmatpush.bf16.msra.mxu0 0
      %3200 = vmatpush.bf16.msra.mxu0 %v3027
      %3201 = vmatmul.bf16.gmra.mxu0 %v2991
      %v3202 = vpop.f32.mrf.mxu0
      %v3203 = vadd.f32 0.0, %v3202
      %v3204 = vpop.f32.mrf.mxu0
      %3205 = vdwg.mxu0
      %3206 = vmatpush.bf16.msra.mxu0 0
      %3207 = vmatpush.bf16.msra.mxu0 0
      %3208 = vmatpush.bf16.msra.mxu0 0
      %3209 = vmatpush.bf16.msra.mxu0 0
      %3210 = vmatpush.bf16.msra.mxu0 0
      %3211 = vmatpush.bf16.msra.mxu0 0
      %3212 = vmatpush.bf16.msra.mxu0 0
      %3213 = vmatpush.bf16.msra.mxu0 %v3030
      %3214 = vmatmul.bf16.gmra.mxu0 %v2991
      %v3215 = vpop.f32.mrf.mxu0
      %v3216 = vadd.f32 0.0, %v3215
      %v3217 = vpop.f32.mrf.mxu0
      %3218 = vdwg.mxu0
      %3219 = vmatpush.bf16.msra.mxu0 0
      %3220 = vmatpush.bf16.msra.mxu0 0
      %3221 = vmatpush.bf16.msra.mxu0 0
      %3222 = vmatpush.bf16.msra.mxu0 0
      %3223 = vmatpush.bf16.msra.mxu0 0
      %3224 = vmatpush.bf16.msra.mxu0 0
      %3225 = vmatpush.bf16.msra.mxu0 0
      %3226 = vmatpush.bf16.msra.mxu0 %v3033
      %3227 = vmatmul.bf16.gmra.mxu0 %v2991
      %v3228 = vpop.f32.mrf.mxu0
      %v3229 = vadd.f32 0.0, %v3228
      %v3230 = vpop.f32.mrf.mxu0
      %3231 = vdwg.mxu0
      %3232 = vmatpush.bf16.msra.mxu0 0
      %3233 = vmatpush.bf16.msra.mxu0 0
      %3234 = vmatpush.bf16.msra.mxu0 0
      %3235 = vmatpush.bf16.msra.mxu0 0
      %3236 = vmatpush.bf16.msra.mxu0 0
      %3237 = vmatpush.bf16.msra.mxu0 0
      %3238 = vmatpush.bf16.msra.mxu0 0
      %3239 = vmatpush.bf16.msra.mxu0 %v3036
      %3240 = vmatmul.bf16.gmra.mxu0 %v2991
      %v3241 = vpop.f32.mrf.mxu0
      %v3242 = vadd.f32 0.0, %v3241
      %v3243 = vpop.f32.mrf.mxu0
      %3244 = vdwg.mxu0
      %3245 = vmatpush.bf16.msra.mxu0 0
      %3246 = vmatpush.bf16.msra.mxu0 0
      %3247 = vmatpush.bf16.msra.mxu0 0
      %3248 = vmatpush.bf16.msra.mxu0 0
      %3249 = vmatpush.bf16.msra.mxu0 0
      %3250 = vmatpush.bf16.msra.mxu0 0
      %3251 = vmatpush.bf16.msra.mxu0 0
      %3252 = vmatpush.bf16.msra.mxu0 %v3039
      %3253 = vmatmul.bf16.gmra.mxu0 %v2991
      %v3254 = vpop.f32.mrf.mxu0
      %v3255 = vadd.f32 0.0, %v3254
      %v3256 = vpop.f32.mrf.mxu0
      %3257 = vdwg.mxu0
      %3258 = vmatpush.bf16.msra.mxu0 0
      %3259 = vmatpush.bf16.msra.mxu0 0
      %3260 = vmatpush.bf16.msra.mxu0 0
      %3261 = vmatpush.bf16.msra.mxu0 0
      %3262 = vmatpush.bf16.msra.mxu0 0
      %3263 = vmatpush.bf16.msra.mxu0 0
      %3264 = vmatpush.bf16.msra.mxu0 0
      %3265 = vmatpush.bf16.msra.mxu0 %v3042
      %3266 = vmatmul.bf16.gmra.mxu0 %v2991
      %v3267 = vpop.f32.mrf.mxu0
      %v3268 = vadd.f32 0.0, %v3267
      %v3269 = vpop.f32.mrf.mxu0
      %3270 = vdwg.mxu0
      %3271 = vmatpush.bf16.msra.mxu0 0
      %3272 = vmatpush.bf16.msra.mxu0 0
      %3273 = vmatpush.bf16.msra.mxu0 0
      %3274 = vmatpush.bf16.msra.mxu0 0
      %3275 = vmatpush.bf16.msra.mxu0 0
      %3276 = vmatpush.bf16.msra.mxu0 0
      %3277 = vmatpush.bf16.msra.mxu0 0
      %3278 = vmatpush.bf16.msra.mxu0 %v3045
      %3279 = vmatmul.bf16.gmra.mxu0 %v2991
      %v3280 = vpop.f32.mrf.mxu0
      %v3281 = vadd.f32 0.0, %v3280
      %v3282 = vpop.f32.mrf.mxu0
      %3283 = vdwg.mxu0
      %3284 = vmatpush.bf16.msra.mxu0 0
      %3285 = vmatpush.bf16.msra.mxu0 0
      %3286 = vmatpush.bf16.msra.mxu0 0
      %3287 = vmatpush.bf16.msra.mxu0 0
      %3288 = vmatpush.bf16.msra.mxu0 0
      %3289 = vmatpush.bf16.msra.mxu0 0
      %3290 = vmatpush.bf16.msra.mxu0 0
      %3291 = vmatpush.bf16.msra.mxu0 %v3048
      %3292 = vmatmul.bf16.gmra.mxu0 %v2991
      %v3293 = vpop.f32.mrf.mxu0
      %v3294 = vadd.f32 0.0, %v3293
      %v3295 = vpop.f32.mrf.mxu0
      %3296 = vdwg.mxu0
      %v3297 = vadd.f32 %v2909, %v3060
      %v3298 = vadd.f32 %v2910, %v3073
      %v3299 = vadd.f32 %v2911, %v3086
      %v3300 = vadd.f32 %v2912, %v3099
      %v3301 = vadd.f32 %v2913, %v3112
      %v3302 = vadd.f32 %v2914, %v3125
      %v3303 = vadd.f32 %v2915, %v3138
      %v3304 = vadd.f32 %v2916, %v3151
      %v3305 = vadd.f32 %v2917, %v3164
      %v3306 = vadd.f32 %v2918, %v3177
      %v3307 = vadd.f32 %v2919, %v3190
      %v3308 = vadd.f32 %v2920, %v3203
      %v3309 = vadd.f32 %v2921, %v3216
      %v3310 = vadd.f32 %v2922, %v3229
      %v3311 = vadd.f32 %v2923, %v3242
      %v3312 = vadd.f32 %v2924, %v3255
      %v3313 = vadd.f32 %v2925, %v3268
      %v3314 = vadd.f32 %v2926, %v3281
      %v3315 = vadd.f32 %v2927, %v3294
      %s3316 = scalar_lea.vmem %s1, 28
      %v3317 = vld [vmem:[%s3316] sm:$0xf]
      %3318 = vrot.lane.b32.xlu0 %v685, 27
      %v3319 = vpop.permute.xlu0 %3318
      %3320 = vrot.lane.b32.xlu0 %v686, 27
      %v3321 = vpop.permute.xlu0 %3320
      %3322 = vrot.lane.b32.xlu0 %v687, 27
      %v3323 = vpop.permute.xlu0 %3322
      %3324 = vrot.lane.b32.xlu0 %v688, 27
      %v3325 = vpop.permute.xlu0 %3324
      %3326 = vrot.lane.b32.xlu0 %v689, 27
      %v3327 = vpop.permute.xlu0 %3326
      %3328 = vrot.lane.b32.xlu0 %v690, 27
      %v3329 = vpop.permute.xlu0 %3328
      %3330 = vrot.lane.b32.xlu0 %v691, 27
      %v3331 = vpop.permute.xlu0 %3330
      %3332 = vrot.lane.b32.xlu0 %v692, 27
      %v3333 = vpop.permute.xlu0 %3332
      %3334 = vrot.lane.b32.xlu0 %v693, 27
      %v3335 = vpop.permute.xlu0 %3334
      %3336 = vrot.lane.b32.xlu0 %v694, 27
      %v3337 = vpop.permute.xlu0 %3336
      %3338 = vrot.lane.b32.xlu0 %v695, 27
      %v3339 = vpop.permute.xlu0 %3338
      %3340 = vrot.lane.b32.xlu0 %v696, 27
      %v3341 = vpop.permute.xlu0 %3340
      %3342 = vrot.lane.b32.xlu0 %v697, 27
      %v3343 = vpop.permute.xlu0 %3342
      %3344 = vrot.lane.b32.xlu0 %v698, 27
      %v3345 = vpop.permute.xlu0 %3344
      %3346 = vrot.lane.b32.xlu0 %v699, 27
      %v3347 = vpop.permute.xlu0 %3346
      %3348 = vrot.lane.b32.xlu0 %v700, 27
      %v3349 = vpop.permute.xlu0 %3348
      %3350 = vrot.lane.b32.xlu0 %v701, 27
      %v3351 = vpop.permute.xlu0 %3350
      %3352 = vrot.lane.b32.xlu0 %v702, 27
      %v3353 = vpop.permute.xlu0 %3352
      %3354 = vrot.lane.b32.xlu0 %v703, 27
      %v3355 = vpop.permute.xlu0 %3354
      %3356 = vrot.lane.b32.xlu0 %v1765, 27
      %v3357 = vpop.permute.xlu0 %3356
      %vm3358 = vcmask 220160
      %v3359 = vsel %vm3358, %v3319, %v3321
      %v3360 = vsel %vm3358, %v3321, %v3323
      %v3361 = vsel %vm3358, %v3323, %v3325
      %v3362 = vsel %vm3358, %v3325, %v3327
      %v3363 = vsel %vm3358, %v3327, %v3329
      %v3364 = vsel %vm3358, %v3329, %v3331
      %v3365 = vsel %vm3358, %v3331, %v3333
      %v3366 = vsel %vm3358, %v3333, %v3335
      %v3367 = vsel %vm3358, %v3335, %v3337
      %v3368 = vsel %vm3358, %v3337, %v3339
      %v3369 = vsel %vm3358, %v3339, %v3341
      %v3370 = vsel %vm3358, %v3341, %v3343
      %v3371 = vsel %vm3358, %v3343, %v3345
      %v3372 = vsel %vm3358, %v3345, %v3347
      %v3373 = vsel %vm3358, %v3347, %v3349
      %v3374 = vsel %vm3358, %v3349, %v3351
      %v3375 = vsel %vm3358, %v3351, %v3353
      %v3376 = vsel %vm3358, %v3353, %v3355
      %v3377 = vsel %vm3358, %v3355, %v3357
      %v3379 = vsel %vm761, %v3317, 0
      %v3382 = vsel %vm765, %v3359, 0
      %v3385 = vsel %vm765, %v3360, 0
      %v3388 = vsel %vm765, %v3361, 0
      %v3391 = vsel %vm765, %v3362, 0
      %v3394 = vsel %vm765, %v3363, 0
      %v3397 = vsel %vm765, %v3364, 0
      %v3400 = vsel %vm765, %v3365, 0
      %v3403 = vsel %vm765, %v3366, 0
      %v3406 = vsel %vm765, %v3367, 0
      %v3409 = vsel %vm765, %v3368, 0
      %v3412 = vsel %vm765, %v3369, 0
      %v3415 = vsel %vm765, %v3370, 0
      %v3418 = vsel %vm765, %v3371, 0
      %v3421 = vsel %vm765, %v3372, 0
      %v3424 = vsel %vm765, %v3373, 0
      %v3427 = vsel %vm765, %v3374, 0
      %v3430 = vsel %vm765, %v3375, 0
      %v3433 = vsel %vm765, %v3376, 0
      %v3436 = vsel %vm765, %v3377, 0
      %3438 = vmatpush.bf16.msra.mxu0 0
      %3439 = vmatpush.bf16.msra.mxu0 0
      %3440 = vmatpush.bf16.msra.mxu0 0
      %3441 = vmatpush.bf16.msra.mxu0 0
      %3442 = vmatpush.bf16.msra.mxu0 0
      %3443 = vmatpush.bf16.msra.mxu0 0
      %3444 = vmatpush.bf16.msra.mxu0 0
      %3445 = vmatpush.bf16.msra.mxu0 %v3382
      %3446 = vmatmul.bf16.gmra.mxu0 %v3379
      %v3447 = vpop.f32.mrf.mxu0
      %v3448 = vadd.f32 0.0, %v3447
      %v3449 = vpop.f32.mrf.mxu0
      %3450 = vdwg.mxu0
      %3451 = vmatpush.bf16.msra.mxu0 0
      %3452 = vmatpush.bf16.msra.mxu0 0
      %3453 = vmatpush.bf16.msra.mxu0 0
      %3454 = vmatpush.bf16.msra.mxu0 0
      %3455 = vmatpush.bf16.msra.mxu0 0
      %3456 = vmatpush.bf16.msra.mxu0 0
      %3457 = vmatpush.bf16.msra.mxu0 0
      %3458 = vmatpush.bf16.msra.mxu0 %v3385
      %3459 = vmatmul.bf16.gmra.mxu0 %v3379
      %v3460 = vpop.f32.mrf.mxu0
      %v3461 = vadd.f32 0.0, %v3460
      %v3462 = vpop.f32.mrf.mxu0
      %3463 = vdwg.mxu0
      %3464 = vmatpush.bf16.msra.mxu0 0
      %3465 = vmatpush.bf16.msra.mxu0 0
      %3466 = vmatpush.bf16.msra.mxu0 0
      %3467 = vmatpush.bf16.msra.mxu0 0
      %3468 = vmatpush.bf16.msra.mxu0 0
      %3469 = vmatpush.bf16.msra.mxu0 0
      %3470 = vmatpush.bf16.msra.mxu0 0
      %3471 = vmatpush.bf16.msra.mxu0 %v3388
      %3472 = vmatmul.bf16.gmra.mxu0 %v3379
      %v3473 = vpop.f32.mrf.mxu0
      %v3474 = vadd.f32 0.0, %v3473
      %v3475 = vpop.f32.mrf.mxu0
      %3476 = vdwg.mxu0
      %3477 = vmatpush.bf16.msra.mxu0 0
      %3478 = vmatpush.bf16.msra.mxu0 0
      %3479 = vmatpush.bf16.msra.mxu0 0
      %3480 = vmatpush.bf16.msra.mxu0 0
      %3481 = vmatpush.bf16.msra.mxu0 0
      %3482 = vmatpush.bf16.msra.mxu0 0
      %3483 = vmatpush.bf16.msra.mxu0 0
      %3484 = vmatpush.bf16.msra.mxu0 %v3391
      %3485 = vmatmul.bf16.gmra.mxu0 %v3379
      %v3486 = vpop.f32.mrf.mxu0
      %v3487 = vadd.f32 0.0, %v3486
      %v3488 = vpop.f32.mrf.mxu0
      %3489 = vdwg.mxu0
      %3490 = vmatpush.bf16.msra.mxu0 0
      %3491 = vmatpush.bf16.msra.mxu0 0
      %3492 = vmatpush.bf16.msra.mxu0 0
      %3493 = vmatpush.bf16.msra.mxu0 0
      %3494 = vmatpush.bf16.msra.mxu0 0
      %3495 = vmatpush.bf16.msra.mxu0 0
      %3496 = vmatpush.bf16.msra.mxu0 0
      %3497 = vmatpush.bf16.msra.mxu0 %v3394
      %3498 = vmatmul.bf16.gmra.mxu0 %v3379
      %v3499 = vpop.f32.mrf.mxu0
      %v3500 = vadd.f32 0.0, %v3499
      %v3501 = vpop.f32.mrf.mxu0
      %3502 = vdwg.mxu0
      %3503 = vmatpush.bf16.msra.mxu0 0
      %3504 = vmatpush.bf16.msra.mxu0 0
      %3505 = vmatpush.bf16.msra.mxu0 0
      %3506 = vmatpush.bf16.msra.mxu0 0
      %3507 = vmatpush.bf16.msra.mxu0 0
      %3508 = vmatpush.bf16.msra.mxu0 0
      %3509 = vmatpush.bf16.msra.mxu0 0
      %3510 = vmatpush.bf16.msra.mxu0 %v3397
      %3511 = vmatmul.bf16.gmra.mxu0 %v3379
      %v3512 = vpop.f32.mrf.mxu0
      %v3513 = vadd.f32 0.0, %v3512
      %v3514 = vpop.f32.mrf.mxu0
      %3515 = vdwg.mxu0
      %3516 = vmatpush.bf16.msra.mxu0 0
      %3517 = vmatpush.bf16.msra.mxu0 0
      %3518 = vmatpush.bf16.msra.mxu0 0
      %3519 = vmatpush.bf16.msra.mxu0 0
      %3520 = vmatpush.bf16.msra.mxu0 0
      %3521 = vmatpush.bf16.msra.mxu0 0
      %3522 = vmatpush.bf16.msra.mxu0 0
      %3523 = vmatpush.bf16.msra.mxu0 %v3400
      %3524 = vmatmul.bf16.gmra.mxu0 %v3379
      %v3525 = vpop.f32.mrf.mxu0
      %v3526 = vadd.f32 0.0, %v3525
      %v3527 = vpop.f32.mrf.mxu0
      %3528 = vdwg.mxu0
      %3529 = vmatpush.bf16.msra.mxu0 0
      %3530 = vmatpush.bf16.msra.mxu0 0
      %3531 = vmatpush.bf16.msra.mxu0 0
      %3532 = vmatpush.bf16.msra.mxu0 0
      %3533 = vmatpush.bf16.msra.mxu0 0
      %3534 = vmatpush.bf16.msra.mxu0 0
      %3535 = vmatpush.bf16.msra.mxu0 0
      %3536 = vmatpush.bf16.msra.mxu0 %v3403
      %3537 = vmatmul.bf16.gmra.mxu0 %v3379
      %v3538 = vpop.f32.mrf.mxu0
      %v3539 = vadd.f32 0.0, %v3538
      %v3540 = vpop.f32.mrf.mxu0
      %3541 = vdwg.mxu0
      %3542 = vmatpush.bf16.msra.mxu0 0
      %3543 = vmatpush.bf16.msra.mxu0 0
      %3544 = vmatpush.bf16.msra.mxu0 0
      %3545 = vmatpush.bf16.msra.mxu0 0
      %3546 = vmatpush.bf16.msra.mxu0 0
      %3547 = vmatpush.bf16.msra.mxu0 0
      %3548 = vmatpush.bf16.msra.mxu0 0
      %3549 = vmatpush.bf16.msra.mxu0 %v3406
      %3550 = vmatmul.bf16.gmra.mxu0 %v3379
      %v3551 = vpop.f32.mrf.mxu0
      %v3552 = vadd.f32 0.0, %v3551
      %v3553 = vpop.f32.mrf.mxu0
      %3554 = vdwg.mxu0
      %3555 = vmatpush.bf16.msra.mxu0 0
      %3556 = vmatpush.bf16.msra.mxu0 0
      %3557 = vmatpush.bf16.msra.mxu0 0
      %3558 = vmatpush.bf16.msra.mxu0 0
      %3559 = vmatpush.bf16.msra.mxu0 0
      %3560 = vmatpush.bf16.msra.mxu0 0
      %3561 = vmatpush.bf16.msra.mxu0 0
      %3562 = vmatpush.bf16.msra.mxu0 %v3409
      %3563 = vmatmul.bf16.gmra.mxu0 %v3379
      %v3564 = vpop.f32.mrf.mxu0
      %v3565 = vadd.f32 0.0, %v3564
      %v3566 = vpop.f32.mrf.mxu0
      %3567 = vdwg.mxu0
      %3568 = vmatpush.bf16.msra.mxu0 0
      %3569 = vmatpush.bf16.msra.mxu0 0
      %3570 = vmatpush.bf16.msra.mxu0 0
      %3571 = vmatpush.bf16.msra.mxu0 0
      %3572 = vmatpush.bf16.msra.mxu0 0
      %3573 = vmatpush.bf16.msra.mxu0 0
      %3574 = vmatpush.bf16.msra.mxu0 0
      %3575 = vmatpush.bf16.msra.mxu0 %v3412
      %3576 = vmatmul.bf16.gmra.mxu0 %v3379
      %v3577 = vpop.f32.mrf.mxu0
      %v3578 = vadd.f32 0.0, %v3577
      %v3579 = vpop.f32.mrf.mxu0
      %3580 = vdwg.mxu0
      %3581 = vmatpush.bf16.msra.mxu0 0
      %3582 = vmatpush.bf16.msra.mxu0 0
      %3583 = vmatpush.bf16.msra.mxu0 0
      %3584 = vmatpush.bf16.msra.mxu0 0
      %3585 = vmatpush.bf16.msra.mxu0 0
      %3586 = vmatpush.bf16.msra.mxu0 0
      %3587 = vmatpush.bf16.msra.mxu0 0
      %3588 = vmatpush.bf16.msra.mxu0 %v3415
      %3589 = vmatmul.bf16.gmra.mxu0 %v3379
      %v3590 = vpop.f32.mrf.mxu0
      %v3591 = vadd.f32 0.0, %v3590
      %v3592 = vpop.f32.mrf.mxu0
      %3593 = vdwg.mxu0
      %3594 = vmatpush.bf16.msra.mxu0 0
      %3595 = vmatpush.bf16.msra.mxu0 0
      %3596 = vmatpush.bf16.msra.mxu0 0
      %3597 = vmatpush.bf16.msra.mxu0 0
      %3598 = vmatpush.bf16.msra.mxu0 0
      %3599 = vmatpush.bf16.msra.mxu0 0
      %3600 = vmatpush.bf16.msra.mxu0 0
      %3601 = vmatpush.bf16.msra.mxu0 %v3418
      %3602 = vmatmul.bf16.gmra.mxu0 %v3379
      %v3603 = vpop.f32.mrf.mxu0
      %v3604 = vadd.f32 0.0, %v3603
      %v3605 = vpop.f32.mrf.mxu0
      %3606 = vdwg.mxu0
      %3607 = vmatpush.bf16.msra.mxu0 0
      %3608 = vmatpush.bf16.msra.mxu0 0
      %3609 = vmatpush.bf16.msra.mxu0 0
      %3610 = vmatpush.bf16.msra.mxu0 0
      %3611 = vmatpush.bf16.msra.mxu0 0
      %3612 = vmatpush.bf16.msra.mxu0 0
      %3613 = vmatpush.bf16.msra.mxu0 0
      %3614 = vmatpush.bf16.msra.mxu0 %v3421
      %3615 = vmatmul.bf16.gmra.mxu0 %v3379
      %v3616 = vpop.f32.mrf.mxu0
      %v3617 = vadd.f32 0.0, %v3616
      %v3618 = vpop.f32.mrf.mxu0
      %3619 = vdwg.mxu0
      %3620 = vmatpush.bf16.msra.mxu0 0
      %3621 = vmatpush.bf16.msra.mxu0 0
      %3622 = vmatpush.bf16.msra.mxu0 0
      %3623 = vmatpush.bf16.msra.mxu0 0
      %3624 = vmatpush.bf16.msra.mxu0 0
      %3625 = vmatpush.bf16.msra.mxu0 0
      %3626 = vmatpush.bf16.msra.mxu0 0
      %3627 = vmatpush.bf16.msra.mxu0 %v3424
      %3628 = vmatmul.bf16.gmra.mxu0 %v3379
      %v3629 = vpop.f32.mrf.mxu0
      %v3630 = vadd.f32 0.0, %v3629
      %v3631 = vpop.f32.mrf.mxu0
      %3632 = vdwg.mxu0
      %3633 = vmatpush.bf16.msra.mxu0 0
      %3634 = vmatpush.bf16.msra.mxu0 0
      %3635 = vmatpush.bf16.msra.mxu0 0
      %3636 = vmatpush.bf16.msra.mxu0 0
      %3637 = vmatpush.bf16.msra.mxu0 0
      %3638 = vmatpush.bf16.msra.mxu0 0
      %3639 = vmatpush.bf16.msra.mxu0 0
      %3640 = vmatpush.bf16.msra.mxu0 %v3427
      %3641 = vmatmul.bf16.gmra.mxu0 %v3379
      %v3642 = vpop.f32.mrf.mxu0
      %v3643 = vadd.f32 0.0, %v3642
      %v3644 = vpop.f32.mrf.mxu0
      %3645 = vdwg.mxu0
      %3646 = vmatpush.bf16.msra.mxu0 0
      %3647 = vmatpush.bf16.msra.mxu0 0
      %3648 = vmatpush.bf16.msra.mxu0 0
      %3649 = vmatpush.bf16.msra.mxu0 0
      %3650 = vmatpush.bf16.msra.mxu0 0
      %3651 = vmatpush.bf16.msra.mxu0 0
      %3652 = vmatpush.bf16.msra.mxu0 0
      %3653 = vmatpush.bf16.msra.mxu0 %v3430
      %3654 = vmatmul.bf16.gmra.mxu0 %v3379
      %v3655 = vpop.f32.mrf.mxu0
      %v3656 = vadd.f32 0.0, %v3655
      %v3657 = vpop.f32.mrf.mxu0
      %3658 = vdwg.mxu0
      %3659 = vmatpush.bf16.msra.mxu0 0
      %3660 = vmatpush.bf16.msra.mxu0 0
      %3661 = vmatpush.bf16.msra.mxu0 0
      %3662 = vmatpush.bf16.msra.mxu0 0
      %3663 = vmatpush.bf16.msra.mxu0 0
      %3664 = vmatpush.bf16.msra.mxu0 0
      %3665 = vmatpush.bf16.msra.mxu0 0
      %3666 = vmatpush.bf16.msra.mxu0 %v3433
      %3667 = vmatmul.bf16.gmra.mxu0 %v3379
      %v3668 = vpop.f32.mrf.mxu0
      %v3669 = vadd.f32 0.0, %v3668
      %v3670 = vpop.f32.mrf.mxu0
      %3671 = vdwg.mxu0
      %3672 = vmatpush.bf16.msra.mxu0 0
      %3673 = vmatpush.bf16.msra.mxu0 0
      %3674 = vmatpush.bf16.msra.mxu0 0
      %3675 = vmatpush.bf16.msra.mxu0 0
      %3676 = vmatpush.bf16.msra.mxu0 0
      %3677 = vmatpush.bf16.msra.mxu0 0
      %3678 = vmatpush.bf16.msra.mxu0 0
      %3679 = vmatpush.bf16.msra.mxu0 %v3436
      %3680 = vmatmul.bf16.gmra.mxu0 %v3379
      %v3681 = vpop.f32.mrf.mxu0
      %v3682 = vadd.f32 0.0, %v3681
      %v3683 = vpop.f32.mrf.mxu0
      %3684 = vdwg.mxu0
      %v3685 = vadd.f32 %v3297, %v3448
      %v3686 = vadd.f32 %v3298, %v3461
      %v3687 = vadd.f32 %v3299, %v3474
      %v3688 = vadd.f32 %v3300, %v3487
      %v3689 = vadd.f32 %v3301, %v3500
      %v3690 = vadd.f32 %v3302, %v3513
      %v3691 = vadd.f32 %v3303, %v3526
      %v3692 = vadd.f32 %v3304, %v3539
      %v3693 = vadd.f32 %v3305, %v3552
      %v3694 = vadd.f32 %v3306, %v3565
      %v3695 = vadd.f32 %v3307, %v3578
      %v3696 = vadd.f32 %v3308, %v3591
      %v3697 = vadd.f32 %v3309, %v3604
      %v3698 = vadd.f32 %v3310, %v3617
      %v3699 = vadd.f32 %v3311, %v3630
      %v3700 = vadd.f32 %v3312, %v3643
      %v3701 = vadd.f32 %v3313, %v3656
      %v3702 = vadd.f32 %v3314, %v3669
      %v3703 = vadd.f32 %v3315, %v3682
      %s3704 = scalar_lea.vmem %s1, 32
      %v3705 = vld [vmem:[%s3704] sm:$0xf]
      %3706 = vrot.lane.b32.xlu0 %v685, 26
      %v3707 = vpop.permute.xlu0 %3706
      %3708 = vrot.lane.b32.xlu0 %v686, 26
      %v3709 = vpop.permute.xlu0 %3708
      %3710 = vrot.lane.b32.xlu0 %v687, 26
      %v3711 = vpop.permute.xlu0 %3710
      %3712 = vrot.lane.b32.xlu0 %v688, 26
      %v3713 = vpop.permute.xlu0 %3712
      %3714 = vrot.lane.b32.xlu0 %v689, 26
      %v3715 = vpop.permute.xlu0 %3714
      %3716 = vrot.lane.b32.xlu0 %v690, 26
      %v3717 = vpop.permute.xlu0 %3716
      %3718 = vrot.lane.b32.xlu0 %v691, 26
      %v3719 = vpop.permute.xlu0 %3718
      %3720 = vrot.lane.b32.xlu0 %v692, 26
      %v3721 = vpop.permute.xlu0 %3720
      %3722 = vrot.lane.b32.xlu0 %v693, 26
      %v3723 = vpop.permute.xlu0 %3722
      %3724 = vrot.lane.b32.xlu0 %v694, 26
      %v3725 = vpop.permute.xlu0 %3724
      %3726 = vrot.lane.b32.xlu0 %v695, 26
      %v3727 = vpop.permute.xlu0 %3726
      %3728 = vrot.lane.b32.xlu0 %v696, 26
      %v3729 = vpop.permute.xlu0 %3728
      %3730 = vrot.lane.b32.xlu0 %v697, 26
      %v3731 = vpop.permute.xlu0 %3730
      %3732 = vrot.lane.b32.xlu0 %v698, 26
      %v3733 = vpop.permute.xlu0 %3732
      %3734 = vrot.lane.b32.xlu0 %v699, 26
      %v3735 = vpop.permute.xlu0 %3734
      %3736 = vrot.lane.b32.xlu0 %v700, 26
      %v3737 = vpop.permute.xlu0 %3736
      %3738 = vrot.lane.b32.xlu0 %v701, 26
      %v3739 = vpop.permute.xlu0 %3738
      %3740 = vrot.lane.b32.xlu0 %v702, 26
      %v3741 = vpop.permute.xlu0 %3740
      %3742 = vrot.lane.b32.xlu0 %v703, 26
      %v3743 = vpop.permute.xlu0 %3742
      %3744 = vrot.lane.b32.xlu0 %v1765, 26
      %v3745 = vpop.permute.xlu0 %3744
      %vm3746 = vcmask 211968
      %v3747 = vsel %vm3746, %v3707, %v3709
      %v3748 = vsel %vm3746, %v3709, %v3711
      %v3749 = vsel %vm3746, %v3711, %v3713
      %v3750 = vsel %vm3746, %v3713, %v3715
      %v3751 = vsel %vm3746, %v3715, %v3717
      %v3752 = vsel %vm3746, %v3717, %v3719
      %v3753 = vsel %vm3746, %v3719, %v3721
      %v3754 = vsel %vm3746, %v3721, %v3723
      %v3755 = vsel %vm3746, %v3723, %v3725
      %v3756 = vsel %vm3746, %v3725, %v3727
      %v3757 = vsel %vm3746, %v3727, %v3729
      %v3758 = vsel %vm3746, %v3729, %v3731
      %v3759 = vsel %vm3746, %v3731, %v3733
      %v3760 = vsel %vm3746, %v3733, %v3735
      %v3761 = vsel %vm3746, %v3735, %v3737
      %v3762 = vsel %vm3746, %v3737, %v3739
      %v3763 = vsel %vm3746, %v3739, %v3741
      %v3764 = vsel %vm3746, %v3741, %v3743
      %v3765 = vsel %vm3746, %v3743, %v3745
      %v3767 = vsel %vm761, %v3705, 0
      %v3770 = vsel %vm765, %v3747, 0
      %v3773 = vsel %vm765, %v3748, 0
      %v3776 = vsel %vm765, %v3749, 0
      %v3779 = vsel %vm765, %v3750, 0
      %v3782 = vsel %vm765, %v3751, 0
      %v3785 = vsel %vm765, %v3752, 0
      %v3788 = vsel %vm765, %v3753, 0
      %v3791 = vsel %vm765, %v3754, 0
      %v3794 = vsel %vm765, %v3755, 0
      %v3797 = vsel %vm765, %v3756, 0
      %v3800 = vsel %vm765, %v3757, 0
      %v3803 = vsel %vm765, %v3758, 0
      %v3806 = vsel %vm765, %v3759, 0
      %v3809 = vsel %vm765, %v3760, 0
      %v3812 = vsel %vm765, %v3761, 0
      %v3815 = vsel %vm765, %v3762, 0
      %v3818 = vsel %vm765, %v3763, 0
      %v3821 = vsel %vm765, %v3764, 0
      %v3824 = vsel %vm765, %v3765, 0
      %3826 = vmatpush.bf16.msra.mxu0 0
      %3827 = vmatpush.bf16.msra.mxu0 0
      %3828 = vmatpush.bf16.msra.mxu0 0
      %3829 = vmatpush.bf16.msra.mxu0 0
      %3830 = vmatpush.bf16.msra.mxu0 0
      %3831 = vmatpush.bf16.msra.mxu0 0
      %3832 = vmatpush.bf16.msra.mxu0 0
      %3833 = vmatpush.bf16.msra.mxu0 %v3770
      %3834 = vmatmul.bf16.gmra.mxu0 %v3767
      %v3835 = vpop.f32.mrf.mxu0
      %v3836 = vadd.f32 0.0, %v3835
      %v3837 = vpop.f32.mrf.mxu0
      %3838 = vdwg.mxu0
      %3839 = vmatpush.bf16.msra.mxu0 0
      %3840 = vmatpush.bf16.msra.mxu0 0
      %3841 = vmatpush.bf16.msra.mxu0 0
      %3842 = vmatpush.bf16.msra.mxu0 0
      %3843 = vmatpush.bf16.msra.mxu0 0
      %3844 = vmatpush.bf16.msra.mxu0 0
      %3845 = vmatpush.bf16.msra.mxu0 0
      %3846 = vmatpush.bf16.msra.mxu0 %v3773
      %3847 = vmatmul.bf16.gmra.mxu0 %v3767
      %v3848 = vpop.f32.mrf.mxu0
      %v3849 = vadd.f32 0.0, %v3848
      %v3850 = vpop.f32.mrf.mxu0
      %3851 = vdwg.mxu0
      %3852 = vmatpush.bf16.msra.mxu0 0
      %3853 = vmatpush.bf16.msra.mxu0 0
      %3854 = vmatpush.bf16.msra.mxu0 0
      %3855 = vmatpush.bf16.msra.mxu0 0
      %3856 = vmatpush.bf16.msra.mxu0 0
      %3857 = vmatpush.bf16.msra.mxu0 0
      %3858 = vmatpush.bf16.msra.mxu0 0
      %3859 = vmatpush.bf16.msra.mxu0 %v3776
      %3860 = vmatmul.bf16.gmra.mxu0 %v3767
      %v3861 = vpop.f32.mrf.mxu0
      %v3862 = vadd.f32 0.0, %v3861
      %v3863 = vpop.f32.mrf.mxu0
      %3864 = vdwg.mxu0
      %3865 = vmatpush.bf16.msra.mxu0 0
      %3866 = vmatpush.bf16.msra.mxu0 0
      %3867 = vmatpush.bf16.msra.mxu0 0
      %3868 = vmatpush.bf16.msra.mxu0 0
      %3869 = vmatpush.bf16.msra.mxu0 0
      %3870 = vmatpush.bf16.msra.mxu0 0
      %3871 = vmatpush.bf16.msra.mxu0 0
      %3872 = vmatpush.bf16.msra.mxu0 %v3779
      %3873 = vmatmul.bf16.gmra.mxu0 %v3767
      %v3874 = vpop.f32.mrf.mxu0
      %v3875 = vadd.f32 0.0, %v3874
      %v3876 = vpop.f32.mrf.mxu0
      %3877 = vdwg.mxu0
      %3878 = vmatpush.bf16.msra.mxu0 0
      %3879 = vmatpush.bf16.msra.mxu0 0
      %3880 = vmatpush.bf16.msra.mxu0 0
      %3881 = vmatpush.bf16.msra.mxu0 0
      %3882 = vmatpush.bf16.msra.mxu0 0
      %3883 = vmatpush.bf16.msra.mxu0 0
      %3884 = vmatpush.bf16.msra.mxu0 0
      %3885 = vmatpush.bf16.msra.mxu0 %v3782
      %3886 = vmatmul.bf16.gmra.mxu0 %v3767
      %v3887 = vpop.f32.mrf.mxu0
      %v3888 = vadd.f32 0.0, %v3887
      %v3889 = vpop.f32.mrf.mxu0
      %3890 = vdwg.mxu0
      %3891 = vmatpush.bf16.msra.mxu0 0
      %3892 = vmatpush.bf16.msra.mxu0 0
      %3893 = vmatpush.bf16.msra.mxu0 0
      %3894 = vmatpush.bf16.msra.mxu0 0
      %3895 = vmatpush.bf16.msra.mxu0 0
      %3896 = vmatpush.bf16.msra.mxu0 0
      %3897 = vmatpush.bf16.msra.mxu0 0
      %3898 = vmatpush.bf16.msra.mxu0 %v3785
      %3899 = vmatmul.bf16.gmra.mxu0 %v3767
      %v3900 = vpop.f32.mrf.mxu0
      %v3901 = vadd.f32 0.0, %v3900
      %v3902 = vpop.f32.mrf.mxu0
      %3903 = vdwg.mxu0
      %3904 = vmatpush.bf16.msra.mxu0 0
      %3905 = vmatpush.bf16.msra.mxu0 0
      %3906 = vmatpush.bf16.msra.mxu0 0
      %3907 = vmatpush.bf16.msra.mxu0 0
      %3908 = vmatpush.bf16.msra.mxu0 0
      %3909 = vmatpush.bf16.msra.mxu0 0
      %3910 = vmatpush.bf16.msra.mxu0 0
      %3911 = vmatpush.bf16.msra.mxu0 %v3788
      %3912 = vmatmul.bf16.gmra.mxu0 %v3767
      %v3913 = vpop.f32.mrf.mxu0
      %v3914 = vadd.f32 0.0, %v3913
      %v3915 = vpop.f32.mrf.mxu0
      %3916 = vdwg.mxu0
      %3917 = vmatpush.bf16.msra.mxu0 0
      %3918 = vmatpush.bf16.msra.mxu0 0
      %3919 = vmatpush.bf16.msra.mxu0 0
      %3920 = vmatpush.bf16.msra.mxu0 0
      %3921 = vmatpush.bf16.msra.mxu0 0
      %3922 = vmatpush.bf16.msra.mxu0 0
      %3923 = vmatpush.bf16.msra.mxu0 0
      %3924 = vmatpush.bf16.msra.mxu0 %v3791
      %3925 = vmatmul.bf16.gmra.mxu0 %v3767
      %v3926 = vpop.f32.mrf.mxu0
      %v3927 = vadd.f32 0.0, %v3926
      %v3928 = vpop.f32.mrf.mxu0
      %3929 = vdwg.mxu0
      %3930 = vmatpush.bf16.msra.mxu0 0
      %3931 = vmatpush.bf16.msra.mxu0 0
      %3932 = vmatpush.bf16.msra.mxu0 0
      %3933 = vmatpush.bf16.msra.mxu0 0
      %3934 = vmatpush.bf16.msra.mxu0 0
      %3935 = vmatpush.bf16.msra.mxu0 0
      %3936 = vmatpush.bf16.msra.mxu0 0
      %3937 = vmatpush.bf16.msra.mxu0 %v3794
      %3938 = vmatmul.bf16.gmra.mxu0 %v3767
      %v3939 = vpop.f32.mrf.mxu0
      %v3940 = vadd.f32 0.0, %v3939
      %v3941 = vpop.f32.mrf.mxu0
      %3942 = vdwg.mxu0
      %3943 = vmatpush.bf16.msra.mxu0 0
      %3944 = vmatpush.bf16.msra.mxu0 0
      %3945 = vmatpush.bf16.msra.mxu0 0
      %3946 = vmatpush.bf16.msra.mxu0 0
      %3947 = vmatpush.bf16.msra.mxu0 0
      %3948 = vmatpush.bf16.msra.mxu0 0
      %3949 = vmatpush.bf16.msra.mxu0 0
      %3950 = vmatpush.bf16.msra.mxu0 %v3797
      %3951 = vmatmul.bf16.gmra.mxu0 %v3767
      %v3952 = vpop.f32.mrf.mxu0
      %v3953 = vadd.f32 0.0, %v3952
      %v3954 = vpop.f32.mrf.mxu0
      %3955 = vdwg.mxu0
      %3956 = vmatpush.bf16.msra.mxu0 0
      %3957 = vmatpush.bf16.msra.mxu0 0
      %3958 = vmatpush.bf16.msra.mxu0 0
      %3959 = vmatpush.bf16.msra.mxu0 0
      %3960 = vmatpush.bf16.msra.mxu0 0
      %3961 = vmatpush.bf16.msra.mxu0 0
      %3962 = vmatpush.bf16.msra.mxu0 0
      %3963 = vmatpush.bf16.msra.mxu0 %v3800
      %3964 = vmatmul.bf16.gmra.mxu0 %v3767
      %v3965 = vpop.f32.mrf.mxu0
      %v3966 = vadd.f32 0.0, %v3965
      %v3967 = vpop.f32.mrf.mxu0
      %3968 = vdwg.mxu0
      %3969 = vmatpush.bf16.msra.mxu0 0
      %3970 = vmatpush.bf16.msra.mxu0 0
      %3971 = vmatpush.bf16.msra.mxu0 0
      %3972 = vmatpush.bf16.msra.mxu0 0
      %3973 = vmatpush.bf16.msra.mxu0 0
      %3974 = vmatpush.bf16.msra.mxu0 0
      %3975 = vmatpush.bf16.msra.mxu0 0
      %3976 = vmatpush.bf16.msra.mxu0 %v3803
      %3977 = vmatmul.bf16.gmra.mxu0 %v3767
      %v3978 = vpop.f32.mrf.mxu0
      %v3979 = vadd.f32 0.0, %v3978
      %v3980 = vpop.f32.mrf.mxu0
      %3981 = vdwg.mxu0
      %3982 = vmatpush.bf16.msra.mxu0 0
      %3983 = vmatpush.bf16.msra.mxu0 0
      %3984 = vmatpush.bf16.msra.mxu0 0
      %3985 = vmatpush.bf16.msra.mxu0 0
      %3986 = vmatpush.bf16.msra.mxu0 0
      %3987 = vmatpush.bf16.msra.mxu0 0
      %3988 = vmatpush.bf16.msra.mxu0 0
      %3989 = vmatpush.bf16.msra.mxu0 %v3806
      %3990 = vmatmul.bf16.gmra.mxu0 %v3767
      %v3991 = vpop.f32.mrf.mxu0
      %v3992 = vadd.f32 0.0, %v3991
      %v3993 = vpop.f32.mrf.mxu0
      %3994 = vdwg.mxu0
      %3995 = vmatpush.bf16.msra.mxu0 0
      %3996 = vmatpush.bf16.msra.mxu0 0
      %3997 = vmatpush.bf16.msra.mxu0 0
      %3998 = vmatpush.bf16.msra.mxu0 0
      %3999 = vmatpush.bf16.msra.mxu0 0
      %4000 = vmatpush.bf16.msra.mxu0 0
      %4001 = vmatpush.bf16.msra.mxu0 0
      %4002 = vmatpush.bf16.msra.mxu0 %v3809
      %4003 = vmatmul.bf16.gmra.mxu0 %v3767
      %v4004 = vpop.f32.mrf.mxu0
      %v4005 = vadd.f32 0.0, %v4004
      %v4006 = vpop.f32.mrf.mxu0
      %4007 = vdwg.mxu0
      %4008 = vmatpush.bf16.msra.mxu0 0
      %4009 = vmatpush.bf16.msra.mxu0 0
      %4010 = vmatpush.bf16.msra.mxu0 0
      %4011 = vmatpush.bf16.msra.mxu0 0
      %4012 = vmatpush.bf16.msra.mxu0 0
      %4013 = vmatpush.bf16.msra.mxu0 0
      %4014 = vmatpush.bf16.msra.mxu0 0
      %4015 = vmatpush.bf16.msra.mxu0 %v3812
      %4016 = vmatmul.bf16.gmra.mxu0 %v3767
      %v4017 = vpop.f32.mrf.mxu0
      %v4018 = vadd.f32 0.0, %v4017
      %v4019 = vpop.f32.mrf.mxu0
      %4020 = vdwg.mxu0
      %4021 = vmatpush.bf16.msra.mxu0 0
      %4022 = vmatpush.bf16.msra.mxu0 0
      %4023 = vmatpush.bf16.msra.mxu0 0
      %4024 = vmatpush.bf16.msra.mxu0 0
      %4025 = vmatpush.bf16.msra.mxu0 0
      %4026 = vmatpush.bf16.msra.mxu0 0
      %4027 = vmatpush.bf16.msra.mxu0 0
      %4028 = vmatpush.bf16.msra.mxu0 %v3815
      %4029 = vmatmul.bf16.gmra.mxu0 %v3767
      %v4030 = vpop.f32.mrf.mxu0
      %v4031 = vadd.f32 0.0, %v4030
      %v4032 = vpop.f32.mrf.mxu0
      %4033 = vdwg.mxu0
      %4034 = vmatpush.bf16.msra.mxu0 0
      %4035 = vmatpush.bf16.msra.mxu0 0
      %4036 = vmatpush.bf16.msra.mxu0 0
      %4037 = vmatpush.bf16.msra.mxu0 0
      %4038 = vmatpush.bf16.msra.mxu0 0
      %4039 = vmatpush.bf16.msra.mxu0 0
      %4040 = vmatpush.bf16.msra.mxu0 0
      %4041 = vmatpush.bf16.msra.mxu0 %v3818
      %4042 = vmatmul.bf16.gmra.mxu0 %v3767
      %v4043 = vpop.f32.mrf.mxu0
      %v4044 = vadd.f32 0.0, %v4043
      %v4045 = vpop.f32.mrf.mxu0
      %4046 = vdwg.mxu0
      %4047 = vmatpush.bf16.msra.mxu0 0
      %4048 = vmatpush.bf16.msra.mxu0 0
      %4049 = vmatpush.bf16.msra.mxu0 0
      %4050 = vmatpush.bf16.msra.mxu0 0
      %4051 = vmatpush.bf16.msra.mxu0 0
      %4052 = vmatpush.bf16.msra.mxu0 0
      %4053 = vmatpush.bf16.msra.mxu0 0
      %4054 = vmatpush.bf16.msra.mxu0 %v3821
      %4055 = vmatmul.bf16.gmra.mxu0 %v3767
      %v4056 = vpop.f32.mrf.mxu0
      %v4057 = vadd.f32 0.0, %v4056
      %v4058 = vpop.f32.mrf.mxu0
      %4059 = vdwg.mxu0
      %4060 = vmatpush.bf16.msra.mxu0 0
      %4061 = vmatpush.bf16.msra.mxu0 0
      %4062 = vmatpush.bf16.msra.mxu0 0
      %4063 = vmatpush.bf16.msra.mxu0 0
      %4064 = vmatpush.bf16.msra.mxu0 0
      %4065 = vmatpush.bf16.msra.mxu0 0
      %4066 = vmatpush.bf16.msra.mxu0 0
      %4067 = vmatpush.bf16.msra.mxu0 %v3824
      %4068 = vmatmul.bf16.gmra.mxu0 %v3767
      %v4069 = vpop.f32.mrf.mxu0
      %v4070 = vadd.f32 0.0, %v4069
      %v4071 = vpop.f32.mrf.mxu0
      %4072 = vdwg.mxu0
      %v4073 = vadd.f32 %v3685, %v3836
      %v4074 = vadd.f32 %v3686, %v3849
      %v4075 = vadd.f32 %v3687, %v3862
      %v4076 = vadd.f32 %v3688, %v3875
      %v4077 = vadd.f32 %v3689, %v3888
      %v4078 = vadd.f32 %v3690, %v3901
      %v4079 = vadd.f32 %v3691, %v3914
      %v4080 = vadd.f32 %v3692, %v3927
      %v4081 = vadd.f32 %v3693, %v3940
      %v4082 = vadd.f32 %v3694, %v3953
      %v4083 = vadd.f32 %v3695, %v3966
      %v4084 = vadd.f32 %v3696, %v3979
      %v4085 = vadd.f32 %v3697, %v3992
      %v4086 = vadd.f32 %v3698, %v4005
      %v4087 = vadd.f32 %v3699, %v4018
      %v4088 = vadd.f32 %v3700, %v4031
      %v4089 = vadd.f32 %v3701, %v4044
      %v4090 = vadd.f32 %v3702, %v4057
      %v4091 = vadd.f32 %v3703, %v4070
      %v4092 = vld [vmem:[%s2] sm:$0xff]
      %4094 = vset.pattern.permute.xlu0 0
      %4095 = vperm.xlu0 %4094, %v4092
      %v4096 = vpop.permute.xlu0 %4095
      %v4098 = vadd.f32 %v4073, %v4096
      %v4099 = vadd.f32 %v4074, %v4096
      %v4100 = vadd.f32 %v4075, %v4096
      %v4101 = vadd.f32 %v4076, %v4096
      %v4102 = vadd.f32 %v4077, %v4096
      %v4103 = vadd.f32 %v4078, %v4096
      %v4104 = vadd.f32 %v4079, %v4096
      %v4105 = vadd.f32 %v4080, %v4096
      %v4106 = vadd.f32 %v4081, %v4096
      %v4107 = vadd.f32 %v4082, %v4096
      %v4108 = vadd.f32 %v4083, %v4096
      %v4109 = vadd.f32 %v4084, %v4096
      %v4110 = vadd.f32 %v4085, %v4096
      %v4111 = vadd.f32 %v4086, %v4096
      %v4112 = vadd.f32 %v4087, %v4096
      %v4113 = vadd.f32 %v4088, %v4096
      %v4114 = vadd.f32 %v4089, %v4096
      %v4115 = vadd.f32 %v4090, %v4096
      %v4116 = vadd.f32 %v4091, %v4096
      %v4117 = vld [vmem:[%s4] sm:$0xff]
      %v4118 = vld [vmem:[%s4 + $0x8] sm:$0xff]
      %v4119 = vld [vmem:[%s4 + $0x10] sm:$0x7]
      %v4123 = vperm.slane %v4117, 0
      %v4124 = vperm.slane %v4117, 1
      %v4125 = vperm.slane %v4117, 2
      %v4126 = vperm.slane %v4117, 3
      %v4127 = vperm.slane %v4117, 4
      %v4128 = vperm.slane %v4117, 5
      %v4129 = vperm.slane %v4117, 6
      %v4130 = vperm.slane %v4117, 7
      %v4131 = vperm.slane %v4118, 0
      %v4132 = vperm.slane %v4118, 1
      %v4133 = vperm.slane %v4118, 2
      %v4134 = vperm.slane %v4118, 3
      %v4135 = vperm.slane %v4118, 4
      %v4136 = vperm.slane %v4118, 5
      %v4137 = vperm.slane %v4118, 6
      %v4138 = vperm.slane %v4118, 7
      %v4139 = vperm.slane %v4119, 0
      %v4140 = vperm.slane %v4119, 1
      %v4141 = vperm.slane %v4119, 2
      %v4161 = vmul.f32 %v4098, %v4123
      %v4162 = vmul.f32 %v4099, %v4124
      %v4163 = vmul.f32 %v4100, %v4125
      %v4164 = vmul.f32 %v4101, %v4126
      %v4165 = vmul.f32 %v4102, %v4127
      %v4166 = vmul.f32 %v4103, %v4128
      %v4167 = vmul.f32 %v4104, %v4129
      %v4168 = vmul.f32 %v4105, %v4130
      %v4169 = vmul.f32 %v4106, %v4131
      %v4170 = vmul.f32 %v4107, %v4132
      %v4171 = vmul.f32 %v4108, %v4133
      %v4172 = vmul.f32 %v4109, %v4134
      %v4173 = vmul.f32 %v4110, %v4135
      %v4174 = vmul.f32 %v4111, %v4136
      %v4175 = vmul.f32 %v4112, %v4137
      %v4176 = vmul.f32 %v4113, %v4138
      %v4177 = vmul.f32 %v4114, %v4139
      %v4178 = vmul.f32 %v4115, %v4140
      %v4179 = vmul.f32 %v4116, %v4141
      %v4180 = vadd.f32 %v4161, %v4162
      %v4181 = vadd.f32 %v4180, %v4163
      %v4182 = vadd.f32 %v4181, %v4164
      %v4183 = vadd.f32 %v4182, %v4165
      %v4184 = vadd.f32 %v4183, %v4166
      %v4185 = vadd.f32 %v4184, %v4167
      %v4186 = vadd.f32 %v4185, %v4168
      %v4187 = vadd.f32 %v4186, %v4169
      %v4188 = vadd.f32 %v4187, %v4170
      %v4189 = vadd.f32 %v4188, %v4171
      %v4190 = vadd.f32 %v4189, %v4172
      %v4191 = vadd.f32 %v4190, %v4173
      %v4192 = vadd.f32 %v4191, %v4174
      %v4193 = vadd.f32 %v4192, %v4175
      %v4194 = vadd.f32 %v4193, %v4176
      %v4195 = vadd.f32 %v4194, %v4177
      %v4196 = vadd.f32 %v4195, %v4178
      %vm4197 = vcmask 785408
      %v4198 = vsel %vm4197, %v4179, 0.0
      %v4199 = vadd.f32 %v4196, %v4198
      %4200 = vadd.xlane.f32.xlu0 %v4199
      %v4201 = vpop.xlane.xlu0 %4200
      %v4202 = vmul.f32 %v4098, %v4098
      %v4203 = vmul.f32 %v4099, %v4099
      %v4204 = vmul.f32 %v4100, %v4100
      %v4205 = vmul.f32 %v4101, %v4101
      %v4206 = vmul.f32 %v4102, %v4102
      %v4207 = vmul.f32 %v4103, %v4103
      %v4208 = vmul.f32 %v4104, %v4104
      %v4209 = vmul.f32 %v4105, %v4105
      %v4210 = vmul.f32 %v4106, %v4106
      %v4211 = vmul.f32 %v4107, %v4107
      %v4212 = vmul.f32 %v4108, %v4108
      %v4213 = vmul.f32 %v4109, %v4109
      %v4214 = vmul.f32 %v4110, %v4110
      %v4215 = vmul.f32 %v4111, %v4111
      %v4216 = vmul.f32 %v4112, %v4112
      %v4217 = vmul.f32 %v4113, %v4113
      %v4218 = vmul.f32 %v4114, %v4114
      %v4219 = vmul.f32 %v4115, %v4115
      %v4220 = vmul.f32 %v4116, %v4116
      %v4221 = vmul.f32 %v4202, %v4123
      %v4222 = vmul.f32 %v4203, %v4124
      %v4223 = vmul.f32 %v4204, %v4125
      %v4224 = vmul.f32 %v4205, %v4126
      %v4225 = vmul.f32 %v4206, %v4127
      %v4226 = vmul.f32 %v4207, %v4128
      %v4227 = vmul.f32 %v4208, %v4129
      %v4228 = vmul.f32 %v4209, %v4130
      %v4229 = vmul.f32 %v4210, %v4131
      %v4230 = vmul.f32 %v4211, %v4132
      %v4231 = vmul.f32 %v4212, %v4133
      %v4232 = vmul.f32 %v4213, %v4134
      %v4233 = vmul.f32 %v4214, %v4135
      %v4234 = vmul.f32 %v4215, %v4136
      %v4235 = vmul.f32 %v4216, %v4137
      %v4236 = vmul.f32 %v4217, %v4138
      %v4237 = vmul.f32 %v4218, %v4139
      %v4238 = vmul.f32 %v4219, %v4140
      %v4239 = vmul.f32 %v4220, %v4141
      %v4240 = vadd.f32 %v4221, %v4222
      %v4241 = vadd.f32 %v4240, %v4223
      %v4242 = vadd.f32 %v4241, %v4224
      %v4243 = vadd.f32 %v4242, %v4225
      %v4244 = vadd.f32 %v4243, %v4226
      %v4245 = vadd.f32 %v4244, %v4227
      %v4246 = vadd.f32 %v4245, %v4228
      %v4247 = vadd.f32 %v4246, %v4229
      %v4248 = vadd.f32 %v4247, %v4230
      %v4249 = vadd.f32 %v4248, %v4231
      %v4250 = vadd.f32 %v4249, %v4232
      %v4251 = vadd.f32 %v4250, %v4233
      %v4252 = vadd.f32 %v4251, %v4234
      %v4253 = vadd.f32 %v4252, %v4235
      %v4254 = vadd.f32 %v4253, %v4236
      %v4255 = vadd.f32 %v4254, %v4237
      %v4256 = vadd.f32 %v4255, %v4238
      %v4257 = vsel %vm4197, %v4239, 0.0
      %v4258 = vadd.f32 %v4256, %v4257
      %4259 = vadd.xlane.f32.xlu0 %v4258
      %v4260 = vpop.xlane.xlu0 %4259
      %v4261 = vmul.f32 %v4201, 0.00043402778
      %v4262 = vmul.f32 %v4260, 0.00043402778
      %v4263 = vmul.f32 %v4261, %v4261
      %v4264 = vsub.f32 %v4262, %v4263
      %v4265 = vmax.f32 %v4264, 0.0
      %v4266 = vsub.f32 %v4098, %v4261
      %v4267 = vsub.f32 %v4099, %v4261
      %v4268 = vsub.f32 %v4100, %v4261
      %v4269 = vsub.f32 %v4101, %v4261
      %v4270 = vsub.f32 %v4102, %v4261
      %v4271 = vsub.f32 %v4103, %v4261
      %v4272 = vsub.f32 %v4104, %v4261
      %v4273 = vsub.f32 %v4105, %v4261
      %v4274 = vsub.f32 %v4106, %v4261
      %v4275 = vsub.f32 %v4107, %v4261
      %v4276 = vsub.f32 %v4108, %v4261
      %v4277 = vsub.f32 %v4109, %v4261
      %v4278 = vsub.f32 %v4110, %v4261
      %v4279 = vsub.f32 %v4111, %v4261
      %v4280 = vsub.f32 %v4112, %v4261
      %v4281 = vsub.f32 %v4113, %v4261
      %v4282 = vsub.f32 %v4114, %v4261
      %v4283 = vsub.f32 %v4115, %v4261
      %v4284 = vsub.f32 %v4116, %v4261
      %v4285 = vadd.f32 %v4265, 1e-05
      %v4286 = vrsqrt.pop %v4285
      %v4287 = vmul.f32 %v4286, %v4285
      %v4288 = vmul.f32 %v4287, %v4286
      %v4289 = vmul.f32 0.5, %v4288
      %v4290 = vsub.f32 1.5, %v4289
      %v4291 = vmul.f32 %v4286, %v4290
      %vm4292 = vweird.f32 %v4285
      %vm4293 = vweird.f32 %v4286
      %vm4294 = vmor %vm4292, %vm4293
      %v4295 = vsel %vm4294, %v4286, %v4291
      %v4296 = vmul.f32 %v4266, %v4295
      %v4297 = vmul.f32 %v4267, %v4295
      %v4298 = vmul.f32 %v4268, %v4295
      %v4299 = vmul.f32 %v4269, %v4295
      %v4300 = vmul.f32 %v4270, %v4295
      %v4301 = vmul.f32 %v4271, %v4295
      %v4302 = vmul.f32 %v4272, %v4295
      %v4303 = vmul.f32 %v4273, %v4295
      %v4304 = vmul.f32 %v4274, %v4295
      %v4305 = vmul.f32 %v4275, %v4295
      %v4306 = vmul.f32 %v4276, %v4295
      %v4307 = vmul.f32 %v4277, %v4295
      %v4308 = vmul.f32 %v4278, %v4295
      %v4309 = vmul.f32 %v4279, %v4295
      %v4310 = vmul.f32 %v4280, %v4295
      %v4311 = vmul.f32 %v4281, %v4295
      %v4312 = vmul.f32 %v4282, %v4295
      %v4313 = vmul.f32 %v4283, %v4295
      %v4314 = vmul.f32 %v4284, %v4295
      %v4315 = vmax.f32 %v4296, 0.0
      %v4316 = vmax.f32 %v4297, 0.0
      %v4317 = vmax.f32 %v4298, 0.0
      %v4318 = vmax.f32 %v4299, 0.0
      %v4319 = vmax.f32 %v4300, 0.0
      %v4320 = vmax.f32 %v4301, 0.0
      %v4321 = vmax.f32 %v4302, 0.0
      %v4322 = vmax.f32 %v4303, 0.0
      %v4323 = vmax.f32 %v4304, 0.0
      %v4324 = vmax.f32 %v4305, 0.0
      %v4325 = vmax.f32 %v4306, 0.0
      %v4326 = vmax.f32 %v4307, 0.0
      %v4327 = vmax.f32 %v4308, 0.0
      %v4328 = vmax.f32 %v4309, 0.0
      %v4329 = vmax.f32 %v4310, 0.0
      %v4330 = vmax.f32 %v4311, 0.0
      %v4331 = vmax.f32 %v4312, 0.0
      %v4332 = vmax.f32 %v4313, 0.0
      %v4333 = vmax.f32 %v4314, 0.0
      %4334 = vst [vmem:[%s224] sm:$0xff] %v4315
      %4335 = vst [vmem:[%s224 + $0x8] sm:$0xff] %v4316
      %4336 = vst [vmem:[%s224 + $0x10] sm:$0xff] %v4317
      %4337 = vst [vmem:[%s224 + $0x18] sm:$0xff] %v4318
      %4338 = vst [vmem:[%s224 + $0x20] sm:$0xff] %v4319
      %4339 = vst [vmem:[%s224 + $0x28] sm:$0xff] %v4320
      %4340 = vst [vmem:[%s224 + $0x30] sm:$0xff] %v4321
      %4341 = vst [vmem:[%s224 + $0x38] sm:$0xff] %v4322
      %4342 = vst [vmem:[%s224 + $0x40] sm:$0xff] %v4323
      %4343 = vst [vmem:[%s224 + $0x48] sm:$0xff] %v4324
      %4344 = vst [vmem:[%s224 + $0x50] sm:$0xff] %v4325
      %4345 = vst [vmem:[%s224 + $0x58] sm:$0xff] %v4326
      %4346 = vst [vmem:[%s224 + $0x60] sm:$0xff] %v4327
      %4347 = vst [vmem:[%s224 + $0x68] sm:$0xff] %v4328
      %4348 = vst [vmem:[%s224 + $0x70] sm:$0xff] %v4329
      %4349 = vst [vmem:[%s224 + $0x78] sm:$0xff] %v4330
      %4350 = vst [vmem:[%s224 + $0x80] sm:$0xff] %v4331
      %4351 = vst [vmem:[%s224 + $0x88] sm:$0xff] %v4332
      %4352 = vst.msk [vmem:[%s224 + $0x90] sm:$0xff] %vm4197, %v4333
      %p4353 = scmp.lt.s32.totalorder %s16, 1
      %s4354 = scalar_select %p4353, %s16, 1
      %s4355 = smul.addr %s4354, 19
      %s4356 = smul.addr %s4355, 8
      %s4357 = scalar_lea.vmem %s5, %s4356
      // Predicated region
      $region41: #{encoder_forward.5} parent=39 // pred_check
        %p4358 = pneg %p144
      $region42: #{encoder_forward.5} parent=39 // pred_check_branch
        %4360 = sbr.rel (%p4358) target = $region44
      $region43: #{encoder_forward.5} parent=39 // pred_region
        _
      $region44: #{encoder_forward.5} parent=39 // pred_fallthru
        _
    $region40: #{encoder_forward.5} parent=5 // pred_fallthru
      _
    %p4361 = scmp.le.s32.totalorder 2, %s11
    // Predicated region
    $region45: #{encoder_forward.5} parent=5 // pred_check
      %p4362 = pneg %p4361
    $region46: #{encoder_forward.5} parent=5 // pred_check_branch
      %4364 = sbr.rel (%p4362) target = $region48
    $region47: #{encoder_forward.5} parent=5 // pred_region
      %s4365 = ssub.s32 %s11, 2
      // Predicated region
      $region49: #{encoder_forward.5} parent=47 // pred_check
        %p4366 = pneg %p150
      $region50: #{encoder_forward.5} parent=47 // pred_check_branch
        %4368 = sbr.rel (%p4366) target = $region52
      $region51: #{encoder_forward.5} parent=47 // pred_region
        %p4369 = scmp.lt.s32.totalorder %s17, 1
        %s4370 = scalar_select %p4369, %s17, 1
        %s4371 = smul.addr %s4370, 19
        %s4372 = smul.addr %s4371, 8
        %s4373 = scalar_lea.vmem %s5, %s4372
      $region52: #{encoder_forward.5} parent=47 // pred_fallthru
        _
    $region48: #{encoder_forward.5} parent=5 // pred_fallthru
      _
  $region6: #{encoder_forward.5} parent=0 // loop_footer
    %s15 = sadd.s32 1, %s11
  $region7: #{encoder_forward.5} parent=0 // loop_footer_branch
    %10 = sbr.rel target = $region3
  $region8: #{encoder_forward.5} parent=0 // loop_exit
    _

// kernel: encoder_forward.6
$region0: #{encoder_forward.6}
  #allocation0 [shape = 'u32[]', space=smem, size = 0x4, offset = 0x4, fixed_abs, tag = 'smem constant byte address 0x4 - core index']
  #allocation1 [shape = 'u32[72,128]{1,0:T(1,128)}', space=vmem, size = 0x9000, scoped, tag = 'internal scratch']
  %s0 = inlined_call_operand.vmem [shape: f32[2,4,8,577], index: 0, kind: input, shape index: {}]
  %s1 = inlined_call_operand.vmem [shape: bf16[9,8,8], index: 1, kind: input, shape index: {}]
  %s2 = inlined_call_operand.vmem [shape: f32[8,1], index: 2, kind: input, shape index: {}]
  %s3 = inlined_call_operand.vmem [shape: f32[1,552], index: 3, kind: input, shape index: {}]
  %s4 = inlined_call_operand.vmem [shape: f32[2,8,552], index: 4, kind: output, shape index: {}]
  %s5 = sld [smem:[#allocation0]]
  $region49: #{encoder_forward.6} parent=0
    _
  %s7 = ssub.s32 1, %s5
  %s8 = scalar_select 0, %s7, %s5
  loop: start=0, step=1, limit=4
  $region2: #{encoder_forward.6} parent=0 // loop_pre_header
    _
  $region3: #{encoder_forward.6} parent=0 // loop_header
    %s10 = sphi 0, %s14
    %p11 = scmp.ge.s32.totalorder %s10, 4
    %s20 = sphi 0, %s22
    %s23 = sphi 0, %s20
    %s24 = sphi 0, %s23
    %s40 = sphi 0, %s24
    %s44 = sphi 0, %s44
    %s46 = sphi 0, %s44
    %s47 = sphi 0, %s46
    %s61 = sphi 0, %s47
    %s65 = sphi 0, %s65
    %s67 = sphi 0, %s65
    %s68 = sphi 0, %s67
    %s82 = sphi 0, %s68
    %s86 = sphi 0, %s86
    %s88 = sphi 0, %s86
    %s89 = sphi 0, %s88
    %s103 = sphi 0, %s89
    %s109 = sphi 0, %s111
    %s112 = sphi 0, %s109
    %s113 = sphi 0, %s112
    %s129 = sphi 0, %s113
  $region4: #{encoder_forward.6} parent=0 // loop_header_branch
    %13 = sbr.rel (%p11) target = $region8
  $region5: #{encoder_forward.6} parent=0 // loop_body
    %s15 = ssub.s32 %s10, 1
    %s16 = ssub.s32 %s10, 2
    %s17 = sadd.s32 %s10, 1
    %s18 = ssub.s32 %s10, %s17
    %p19 = scmp.eq.s32.totalorder %s18, 0
    %s21 = sadd.s32 %s20, 1
    %s22 = scalar_select %p19, %s20, %s21
    %p25 = pneg %p19
    %p26 = scmp.eq.s32.totalorder %s10, 1
    %p27 = por %p25, %p26
    %p28 = scmp.ne.s32.totalorder %s20, %s23
    %p29 = scmp.eq.s32.totalorder %s10, 0
    %p30 = por %p28, %p29
    %p31 = scmp.ne.s32.totalorder %s20, %s23
    %p32 = scmp.eq.s32.totalorder %s15, 1
    %p33 = por %p31, %p32
    %p34 = scmp.ne.s32.totalorder %s23, %s24
    %p35 = scmp.eq.s32.totalorder %s15, 0
    %p36 = por %p34, %p35
    %p37 = scmp.ne.s32.totalorder %s23, %s24
    %p38 = scmp.eq.s32.totalorder %s16, 1
    %p39 = por %p37, %p38
    %p41 = scmp.ne.s32.totalorder %s24, %s40
    %p42 = scmp.eq.s32.totalorder %s16, 0
    %p43 = por %p41, %p42
    %s45 = sadd.s32 %s44, 1
    %p48 = scmp.eq.s32.totalorder %s10, 1
    %p49 = scmp.ne.s32.totalorder %s44, %s46
    %p50 = scmp.eq.s32.totalorder %s10, 0
    %p51 = por %p49, %p50
    %p52 = scmp.ne.s32.totalorder %s44, %s46
    %p53 = scmp.eq.s32.totalorder %s15, 1
    %p54 = por %p52, %p53
    %p55 = scmp.ne.s32.totalorder %s46, %s47
    %p56 = scmp.eq.s32.totalorder %s15, 0
    %p57 = por %p55, %p56
    %p58 = scmp.ne.s32.totalorder %s46, %s47
    %p59 = scmp.eq.s32.totalorder %s16, 1
    %p60 = por %p58, %p59
    %p62 = scmp.ne.s32.totalorder %s47, %s61
    %p63 = scmp.eq.s32.totalorder %s16, 0
    %p64 = por %p62, %p63
    %s66 = sadd.s32 %s65, 1
    %p69 = scmp.eq.s32.totalorder %s10, 1
    %p70 = scmp.ne.s32.totalorder %s65, %s67
    %p71 = scmp.eq.s32.totalorder %s10, 0
    %p72 = por %p70, %p71
    %p73 = scmp.ne.s32.totalorder %s65, %s67
    %p74 = scmp.eq.s32.totalorder %s15, 1
    %p75 = por %p73, %p74
    %p76 = scmp.ne.s32.totalorder %s67, %s68
    %p77 = scmp.eq.s32.totalorder %s15, 0
    %p78 = por %p76, %p77
    %p79 = scmp.ne.s32.totalorder %s67, %s68
    %p80 = scmp.eq.s32.totalorder %s16, 1
    %p81 = por %p79, %p80
    %p83 = scmp.ne.s32.totalorder %s68, %s82
    %p84 = scmp.eq.s32.totalorder %s16, 0
    %p85 = por %p83, %p84
    %s87 = sadd.s32 %s86, 1
    %p90 = scmp.eq.s32.totalorder %s10, 1
    %p91 = scmp.ne.s32.totalorder %s86, %s88
    %p92 = scmp.eq.s32.totalorder %s10, 0
    %p93 = por %p91, %p92
    %p94 = scmp.ne.s32.totalorder %s86, %s88
    %p95 = scmp.eq.s32.totalorder %s15, 1
    %p96 = por %p94, %p95
    %p97 = scmp.ne.s32.totalorder %s88, %s89
    %p98 = scmp.eq.s32.totalorder %s15, 0
    %p99 = por %p97, %p98
    %p100 = scmp.ne.s32.totalorder %s88, %s89
    %p101 = scmp.eq.s32.totalorder %s16, 1
    %p102 = por %p100, %p101
    %p104 = scmp.ne.s32.totalorder %s89, %s103
    %p105 = scmp.eq.s32.totalorder %s16, 0
    %p106 = por %p104, %p105
    %s107 = ssub.s32 %s10, %s17
    %p108 = scmp.eq.s32.totalorder %s107, 0
    %s110 = sadd.s32 %s109, 1
    %s111 = scalar_select %p108, %s109, %s110
    %p114 = pneg %p108
    %p115 = scmp.eq.s32.totalorder %s10, 1
    %p116 = por %p114, %p115
    %p117 = scmp.ne.s32.totalorder %s109, %s112
    %p118 = scmp.eq.s32.totalorder %s10, 0
    %p119 = por %p117, %p118
    %p120 = scmp.ne.s32.totalorder %s109, %s112
    %p121 = scmp.eq.s32.totalorder %s15, 1
    %p122 = por %p120, %p121
    %p123 = scmp.ne.s32.totalorder %s112, %s113
    %p124 = scmp.eq.s32.totalorder %s15, 0
    %p125 = por %p123, %p124
    %p126 = scmp.ne.s32.totalorder %s112, %s113
    %p127 = scmp.eq.s32.totalorder %s16, 1
    %p128 = por %p126, %p127
    %p130 = scmp.ne.s32.totalorder %s113, %s129
    %p131 = scmp.eq.s32.totalorder %s16, 0
    %p132 = por %p130, %p131
    %p133 = scmp.le.s32.totalorder 1, %s10
    %p134 = scmp.lt.s32.totalorder %s10, 3
    %p135 = pnand %p133, %p134
    %p136 = pneg %p135
    // Predicated region
    $region9: #{encoder_forward.6} parent=5 // pred_check
      _
    $region10: #{encoder_forward.6} parent=5 // pred_check_branch
      %138 = sbr.rel (%p135) target = $region12
    $region11: #{encoder_forward.6} parent=5 // pred_region
      %s139 = ssub.s32 %s10, 1
      // Predicated region
      $region13: #{encoder_forward.6} parent=11 // pred_check
        %p140 = pneg %p57
      $region14: #{encoder_forward.6} parent=11 // pred_check_branch
        %142 = sbr.rel (%p140) target = $region16
      $region15: #{encoder_forward.6} parent=11 // pred_region
        _
      $region16: #{encoder_forward.6} parent=11 // pred_fallthru
        _
      // Predicated region
      $region17: #{encoder_forward.6} parent=11 // pred_check
        %p143 = pneg %p78
      $region18: #{encoder_forward.6} parent=11 // pred_check_branch
        %145 = sbr.rel (%p143) target = $region20
      $region19: #{encoder_forward.6} parent=11 // pred_region
        _
      $region20: #{encoder_forward.6} parent=11 // pred_fallthru
        _
      // Predicated region
      $region21: #{encoder_forward.6} parent=11 // pred_check
        %p146 = pneg %p99
      $region22: #{encoder_forward.6} parent=11 // pred_check_branch
        %148 = sbr.rel (%p146) target = $region24
      $region23: #{encoder_forward.6} parent=11 // pred_region
        _
      $region24: #{encoder_forward.6} parent=11 // pred_fallthru
        _
    $region12: #{encoder_forward.6} parent=5 // pred_fallthru
      _
    %p149 = scmp.lt.s32.totalorder %s10, 2
    // Predicated region
    $region25: #{encoder_forward.6} parent=5 // pred_check
      %p150 = pneg %p149
    $region26: #{encoder_forward.6} parent=5 // pred_check_branch
      %152 = sbr.rel (%p150) target = $region28
    $region27: #{encoder_forward.6} parent=5 // pred_region
      // Predicated region
      $region29: #{encoder_forward.6} parent=27 // pred_check
        %p153 = pneg %p30
      $region30: #{encoder_forward.6} parent=27 // pred_check_branch
        %155 = sbr.rel (%p153) target = $region32
      $region31: #{encoder_forward.6} parent=27 // pred_region
        %p156 = scmp.lt.s32.totalorder %s10, 1
        %s157 = scalar_select %p156, %s10, 1
        %s158 = smul.addr %s157, 20
        %s159 = smul.addr %s158, 8
        %s160 = scalar_lea.vmem %s0, %s159
      $region32: #{encoder_forward.6} parent=27 // pred_fallthru
        _
    $region28: #{encoder_forward.6} parent=5 // pred_fallthru
      _
    %p161 = scmp.le.s32.totalorder 1, %s10
    %p162 = scmp.lt.s32.totalorder %s10, 3
    %p163 = pnand %p161, %p162
    %p164 = pneg %p163
    // Predicated region
    $region33: #{encoder_forward.6} parent=5 // pred_check
      _
    $region34: #{encoder_forward.6} parent=5 // pred_check_branch
      %166 = sbr.rel (%p163) target = $region36
    $region35: #{encoder_forward.6} parent=5 // pred_region
      %s167 = ssub.s32 %s10, 1
      %p168 = scmp.lt.s32.totalorder %s15, 1
      %s169 = scalar_select %p168, %s15, 1
      %s170 = smul.addr %s169, 20
      %s171 = smul.addr %s170, 8
      %s172 = scalar_lea.vmem %s0, %s171
      %p173 = pneg %p36
      %p174 = pneg %p33
      %p175 = pneg %p57
      %p176 = pneg %p54
      %p177 = pneg %p78
      %p178 = pneg %p75
      %p179 = pneg %p99
      %p180 = pneg %p96
      %p181 = pneg %p125
      %p182 = pneg %p122
      %p183 = scmp.lt.s32.totalorder %s15, 1
      %s184 = scalar_select %p183, %s15, 1
      %s185 = smul.addr %s184, 5
      %s186 = smul.addr %s185, 8
      %s187 = scalar_lea.vmem %s4, %s186
      %p188 = scmp.lt.s32.totalorder %s15, 1
      %s189 = scalar_select %p188, %s15, 1
      %s190 = smul.addr %s189, 20
      %s191 = smul.addr %s190, 8
      %s192 = scalar_lea.vmem %s0, %s191
      %p193 = scmp.lt.s32.totalorder %s15, 1
      %s194 = scalar_select %p193, %s15, 1
      %s195 = smul.addr %s194, 5
      %s196 = smul.addr %s195, 8
      %s197 = scalar_lea.vmem %s4, %s196
      %v199 = vld [vmem:[%s192] sm:$0xff]
      %v200 = vld [vmem:[%s192 + $0x8] sm:$0xff]
      %v201 = vld [vmem:[%s192 + $0x10] sm:$0xff]
      %v202 = vld [vmem:[%s192 + $0x18] sm:$0xff]
      %v203 = vld [vmem:[%s192 + $0x20] sm:$0xff]
      %v204 = vpack.c.bf16 %v200, %v199
      %v205 = vpack.c.bf16 %v202, %v201
      %v206 = vpack.c.bf16 %v203, %v203
      %s207 = scalar_lea.vmem %s192, 40
      %v208 = vld [vmem:[%s207] sm:$0xff]
      %v209 = vld [vmem:[%s207 + $0x8] sm:$0xff]
      %v210 = vld [vmem:[%s207 + $0x10] sm:$0xff]
      %v211 = vld [vmem:[%s207 + $0x18] sm:$0xff]
      %v212 = vld [vmem:[%s207 + $0x20] sm:$0xff]
      %v213 = vpack.c.bf16 %v209, %v208
      %v214 = vpack.c.bf16 %v211, %v210
      %v215 = vpack.c.bf16 %v212, %v212
      %s216 = scalar_lea.vmem %s192, 80
      %v217 = vld [vmem:[%s216] sm:$0xff]
      %v218 = vld [vmem:[%s216 + $0x8] sm:$0xff]
      %v219 = vld [vmem:[%s216 + $0x10] sm:$0xff]
      %v220 = vld [vmem:[%s216 + $0x18] sm:$0xff]
      %v221 = vld [vmem:[%s216 + $0x20] sm:$0xff]
      %v222 = vpack.c.bf16 %v218, %v217
      %v223 = vpack.c.bf16 %v220, %v219
      %v224 = vpack.c.bf16 %v221, %v221
      %s225 = scalar_lea.vmem %s192, 120
      %v226 = vld [vmem:[%s225] sm:$0xff]
      %v227 = vld [vmem:[%s225 + $0x8] sm:$0xff]
      %v228 = vld [vmem:[%s225 + $0x10] sm:$0xff]
      %v229 = vld [vmem:[%s225 + $0x18] sm:$0xff]
      %v230 = vld [vmem:[%s225 + $0x20] sm:$0xff]
      %v231 = vpack.c.bf16 %v227, %v226
      %v232 = vpack.c.bf16 %v229, %v228
      %v233 = vpack.c.bf16 %v230, %v230
      %v234 = vld [vmem:[%s1] sm:$0xf]
      %s235 = scalar_lea.vmem %s1, 4
      %v236 = vld [vmem:[%s235] sm:$0xf]
      %v240 = vunpack.c.l.b16 %v213
      %v241 = vunpack.c.h.b16 %v213
      %v242 = vunpack.c.l.b16 %v214
      %v243 = vunpack.c.h.b16 %v214
      %v244 = vunpack.c.l.b16 %v215
      %v245 = vpack.c.b16 %v240, %v240
      %v246 = vpack.c.b16 %v241, %v241
      %v247 = vpack.c.b16 %v242, %v242
      %v248 = vpack.c.b16 %v243, %v243
      %v249 = vpack.c.b16 %v244, %v244
      %vm250 = vcmask 64512
      %v252 = vsel %vm250, %v236, 0
      %vm254 = vcmask 1043456
      %v256 = vsel %vm254, %v245, 0
      %v259 = vsel %vm254, %v246, 0
      %v262 = vsel %vm254, %v247, 0
      %v265 = vsel %vm254, %v248, 0
      %v268 = vsel %vm254, %v249, 0
      %270 = vmatpush.bf16.msra.mxu0 0
      %271 = vmatpush.bf16.msra.mxu0 0
      %272 = vmatpush.bf16.msra.mxu0 0
      %273 = vmatpush.bf16.msra.mxu0 0
      %274 = vmatpush.bf16.msra.mxu0 0
      %275 = vmatpush.bf16.msra.mxu0 0
      %276 = vmatpush.bf16.msra.mxu0 0
      %277 = vmatpush.bf16.msra.mxu0 %v256
      %278 = vmatmul.bf16.gmra.mxu0 %v252
      %v279 = vpop.f32.mrf.mxu0
      %v280 = vadd.f32 0.0, %v279
      %v281 = vpop.f32.mrf.mxu0
      %282 = vdwg.mxu0
      %283 = vmatpush.bf16.msra.mxu0 0
      %284 = vmatpush.bf16.msra.mxu0 0
      %285 = vmatpush.bf16.msra.mxu0 0
      %286 = vmatpush.bf16.msra.mxu0 0
      %287 = vmatpush.bf16.msra.mxu0 0
      %288 = vmatpush.bf16.msra.mxu0 0
      %289 = vmatpush.bf16.msra.mxu0 0
      %290 = vmatpush.bf16.msra.mxu0 %v259
      %291 = vmatmul.bf16.gmra.mxu0 %v252
      %v292 = vpop.f32.mrf.mxu0
      %v293 = vadd.f32 0.0, %v292
      %v294 = vpop.f32.mrf.mxu0
      %295 = vdwg.mxu0
      %296 = vmatpush.bf16.msra.mxu0 0
      %297 = vmatpush.bf16.msra.mxu0 0
      %298 = vmatpush.bf16.msra.mxu0 0
      %299 = vmatpush.bf16.msra.mxu0 0
      %300 = vmatpush.bf16.msra.mxu0 0
      %301 = vmatpush.bf16.msra.mxu0 0
      %302 = vmatpush.bf16.msra.mxu0 0
      %303 = vmatpush.bf16.msra.mxu0 %v262
      %304 = vmatmul.bf16.gmra.mxu0 %v252
      %v305 = vpop.f32.mrf.mxu0
      %v306 = vadd.f32 0.0, %v305
      %v307 = vpop.f32.mrf.mxu0
      %308 = vdwg.mxu0
      %309 = vmatpush.bf16.msra.mxu0 0
      %310 = vmatpush.bf16.msra.mxu0 0
      %311 = vmatpush.bf16.msra.mxu0 0
      %312 = vmatpush.bf16.msra.mxu0 0
      %313 = vmatpush.bf16.msra.mxu0 0
      %314 = vmatpush.bf16.msra.mxu0 0
      %315 = vmatpush.bf16.msra.mxu0 0
      %316 = vmatpush.bf16.msra.mxu0 %v265
      %317 = vmatmul.bf16.gmra.mxu0 %v252
      %v318 = vpop.f32.mrf.mxu0
      %v319 = vadd.f32 0.0, %v318
      %v320 = vpop.f32.mrf.mxu0
      %321 = vdwg.mxu0
      %322 = vmatpush.bf16.msra.mxu0 0
      %323 = vmatpush.bf16.msra.mxu0 0
      %324 = vmatpush.bf16.msra.mxu0 0
      %325 = vmatpush.bf16.msra.mxu0 0
      %326 = vmatpush.bf16.msra.mxu0 0
      %327 = vmatpush.bf16.msra.mxu0 0
      %328 = vmatpush.bf16.msra.mxu0 0
      %329 = vmatpush.bf16.msra.mxu0 %v268
      %330 = vmatmul.bf16.gmra.mxu0 %v252
      %v331 = vpop.f32.mrf.mxu0
      %v332 = vadd.f32 0.0, %v331
      %v333 = vpop.f32.mrf.mxu0
      %334 = vdwg.mxu0
      %v338 = vunpack.c.l.b16 %v204
      %v339 = vunpack.c.h.b16 %v204
      %v340 = vunpack.c.l.b16 %v205
      %v341 = vunpack.c.h.b16 %v205
      %v342 = vunpack.c.l.b16 %v206
      %v343 = vpack.c.b16 %v338, %v338
      %v344 = vpack.c.b16 %v339, %v339
      %v345 = vpack.c.b16 %v340, %v340
      %v346 = vpack.c.b16 %v341, %v341
      %v347 = vpack.c.b16 %v342, %v342
      %v349 = vsel %vm250, %v234, 0
      %v352 = vsel %vm254, %v343, 0
      %v355 = vsel %vm254, %v344, 0
      %v358 = vsel %vm254, %v345, 0
      %v361 = vsel %vm254, %v346, 0
      %v364 = vsel %vm254, %v347, 0
      %366 = vmatpush.bf16.msra.mxu0 0
      %367 = vmatpush.bf16.msra.mxu0 0
      %368 = vmatpush.bf16.msra.mxu0 0
      %369 = vmatpush.bf16.msra.mxu0 0
      %370 = vmatpush.bf16.msra.mxu0 0
      %371 = vmatpush.bf16.msra.mxu0 0
      %372 = vmatpush.bf16.msra.mxu0 0
      %373 = vmatpush.bf16.msra.mxu0 %v352
      %374 = vmatmul.bf16.gmra.mxu0 %v349
      %v375 = vpop.f32.mrf.mxu0
      %v376 = vadd.f32 %v280, %v375
      %v377 = vpop.f32.mrf.mxu0
      %378 = vdwg.mxu0
      %379 = vmatpush.bf16.msra.mxu0 0
      %380 = vmatpush.bf16.msra.mxu0 0
      %381 = vmatpush.bf16.msra.mxu0 0
      %382 = vmatpush.bf16.msra.mxu0 0
      %383 = vmatpush.bf16.msra.mxu0 0
      %384 = vmatpush.bf16.msra.mxu0 0
      %385 = vmatpush.bf16.msra.mxu0 0
      %386 = vmatpush.bf16.msra.mxu0 %v355
      %387 = vmatmul.bf16.gmra.mxu0 %v349
      %v388 = vpop.f32.mrf.mxu0
      %v389 = vadd.f32 %v293, %v388
      %v390 = vpop.f32.mrf.mxu0
      %391 = vdwg.mxu0
      %392 = vmatpush.bf16.msra.mxu0 0
      %393 = vmatpush.bf16.msra.mxu0 0
      %394 = vmatpush.bf16.msra.mxu0 0
      %395 = vmatpush.bf16.msra.mxu0 0
      %396 = vmatpush.bf16.msra.mxu0 0
      %397 = vmatpush.bf16.msra.mxu0 0
      %398 = vmatpush.bf16.msra.mxu0 0
      %399 = vmatpush.bf16.msra.mxu0 %v358
      %400 = vmatmul.bf16.gmra.mxu0 %v349
      %v401 = vpop.f32.mrf.mxu0
      %v402 = vadd.f32 %v306, %v401
      %v403 = vpop.f32.mrf.mxu0
      %404 = vdwg.mxu0
      %405 = vmatpush.bf16.msra.mxu0 0
      %406 = vmatpush.bf16.msra.mxu0 0
      %407 = vmatpush.bf16.msra.mxu0 0
      %408 = vmatpush.bf16.msra.mxu0 0
      %409 = vmatpush.bf16.msra.mxu0 0
      %410 = vmatpush.bf16.msra.mxu0 0
      %411 = vmatpush.bf16.msra.mxu0 0
      %412 = vmatpush.bf16.msra.mxu0 %v361
      %413 = vmatmul.bf16.gmra.mxu0 %v349
      %v414 = vpop.f32.mrf.mxu0
      %v415 = vadd.f32 %v319, %v414
      %v416 = vpop.f32.mrf.mxu0
      %417 = vdwg.mxu0
      %418 = vmatpush.bf16.msra.mxu0 0
      %419 = vmatpush.bf16.msra.mxu0 0
      %420 = vmatpush.bf16.msra.mxu0 0
      %421 = vmatpush.bf16.msra.mxu0 0
      %422 = vmatpush.bf16.msra.mxu0 0
      %423 = vmatpush.bf16.msra.mxu0 0
      %424 = vmatpush.bf16.msra.mxu0 0
      %425 = vmatpush.bf16.msra.mxu0 %v364
      %426 = vmatmul.bf16.gmra.mxu0 %v349
      %v427 = vpop.f32.mrf.mxu0
      %v428 = vadd.f32 %v332, %v427
      %v429 = vpop.f32.mrf.mxu0
      %430 = vdwg.mxu0
      %s431 = scalar_lea.vmem %s1, 8
      %v432 = vld [vmem:[%s431] sm:$0xf]
      %433 = vrot.lane.b32.xlu0 %v343, 127
      %v434 = vpop.permute.xlu0 %433
      %435 = vrot.lane.b32.xlu0 %v344, 127
      %v436 = vpop.permute.xlu0 %435
      %437 = vrot.lane.b32.xlu0 %v345, 127
      %v438 = vpop.permute.xlu0 %437
      %439 = vrot.lane.b32.xlu0 %v346, 127
      %v440 = vpop.permute.xlu0 %439
      %441 = vrot.lane.b32.xlu0 %v347, 127
      %v442 = vpop.permute.xlu0 %441
      %vm443 = vcmask 1039360
      %v444 = vsel %vm443, %v434, %v436
      %v445 = vsel %vm443, %v436, %v438
      %v446 = vsel %vm443, %v438, %v440
      %v447 = vsel %vm443, %v440, %v442
      %v449 = vsel %vm250, %v432, 0
      %v452 = vsel %vm254, %v444, 0
      %v455 = vsel %vm254, %v445, 0
      %v458 = vsel %vm254, %v446, 0
      %v461 = vsel %vm254, %v447, 0
      %v464 = vsel %vm254, %v442, 0
      %466 = vmatpush.bf16.msra.mxu0 0
      %467 = vmatpush.bf16.msra.mxu0 0
      %468 = vmatpush.bf16.msra.mxu0 0
      %469 = vmatpush.bf16.msra.mxu0 0
      %470 = vmatpush.bf16.msra.mxu0 0
      %471 = vmatpush.bf16.msra.mxu0 0
      %472 = vmatpush.bf16.msra.mxu0 0
      %473 = vmatpush.bf16.msra.mxu0 %v452
      %474 = vmatmul.bf16.gmra.mxu0 %v449
      %v475 = vpop.f32.mrf.mxu0
      %v476 = vadd.f32 0.0, %v475
      %v477 = vpop.f32.mrf.mxu0
      %478 = vdwg.mxu0
      %479 = vmatpush.bf16.msra.mxu0 0
      %480 = vmatpush.bf16.msra.mxu0 0
      %481 = vmatpush.bf16.msra.mxu0 0
      %482 = vmatpush.bf16.msra.mxu0 0
      %483 = vmatpush.bf16.msra.mxu0 0
      %484 = vmatpush.bf16.msra.mxu0 0
      %485 = vmatpush.bf16.msra.mxu0 0
      %486 = vmatpush.bf16.msra.mxu0 %v455
      %487 = vmatmul.bf16.gmra.mxu0 %v449
      %v488 = vpop.f32.mrf.mxu0
      %v489 = vadd.f32 0.0, %v488
      %v490 = vpop.f32.mrf.mxu0
      %491 = vdwg.mxu0
      %492 = vmatpush.bf16.msra.mxu0 0
      %493 = vmatpush.bf16.msra.mxu0 0
      %494 = vmatpush.bf16.msra.mxu0 0
      %495 = vmatpush.bf16.msra.mxu0 0
      %496 = vmatpush.bf16.msra.mxu0 0
      %497 = vmatpush.bf16.msra.mxu0 0
      %498 = vmatpush.bf16.msra.mxu0 0
      %499 = vmatpush.bf16.msra.mxu0 %v458
      %500 = vmatmul.bf16.gmra.mxu0 %v449
      %v501 = vpop.f32.mrf.mxu0
      %v502 = vadd.f32 0.0, %v501
      %v503 = vpop.f32.mrf.mxu0
      %504 = vdwg.mxu0
      %505 = vmatpush.bf16.msra.mxu0 0
      %506 = vmatpush.bf16.msra.mxu0 0
      %507 = vmatpush.bf16.msra.mxu0 0
      %508 = vmatpush.bf16.msra.mxu0 0
      %509 = vmatpush.bf16.msra.mxu0 0
      %510 = vmatpush.bf16.msra.mxu0 0
      %511 = vmatpush.bf16.msra.mxu0 0
      %512 = vmatpush.bf16.msra.mxu0 %v461
      %513 = vmatmul.bf16.gmra.mxu0 %v449
      %v514 = vpop.f32.mrf.mxu0
      %v515 = vadd.f32 0.0, %v514
      %v516 = vpop.f32.mrf.mxu0
      %517 = vdwg.mxu0
      %518 = vmatpush.bf16.msra.mxu0 0
      %519 = vmatpush.bf16.msra.mxu0 0
      %520 = vmatpush.bf16.msra.mxu0 0
      %521 = vmatpush.bf16.msra.mxu0 0
      %522 = vmatpush.bf16.msra.mxu0 0
      %523 = vmatpush.bf16.msra.mxu0 0
      %524 = vmatpush.bf16.msra.mxu0 0
      %525 = vmatpush.bf16.msra.mxu0 %v464
      %526 = vmatmul.bf16.gmra.mxu0 %v449
      %v527 = vpop.f32.mrf.mxu0
      %v528 = vadd.f32 0.0, %v527
      %v529 = vpop.f32.mrf.mxu0
      %530 = vdwg.mxu0
      %v531 = vadd.f32 %v376, %v476
      %v532 = vadd.f32 %v389, %v489
      %v533 = vadd.f32 %v402, %v502
      %v534 = vadd.f32 %v415, %v515
      %v535 = vadd.f32 %v428, %v528
      %s536 = scalar_lea.vmem %s1, 12
      %v537 = vld [vmem:[%s536] sm:$0xf]
      %v541 = vunpack.c.l.b16 %v222
      %v542 = vunpack.c.h.b16 %v222
      %v543 = vunpack.c.l.b16 %v223
      %v544 = vunpack.c.h.b16 %v223
      %v545 = vunpack.c.l.b16 %v224
      %v546 = vpack.c.b16 %v541, %v541
      %v547 = vpack.c.b16 %v542, %v542
      %v548 = vpack.c.b16 %v543, %v543
      %v549 = vpack.c.b16 %v544, %v544
      %v550 = vpack.c.b16 %v545, %v545
      %v552 = vsel %vm250, %v537, 0
      %v555 = vsel %vm254, %v546, 0
      %v558 = vsel %vm254, %v547, 0
      %v561 = vsel %vm254, %v548, 0
      %v564 = vsel %vm254, %v549, 0
      %v567 = vsel %vm254, %v550, 0
      %569 = vmatpush.bf16.msra.mxu0 0
      %570 = vmatpush.bf16.msra.mxu0 0
      %571 = vmatpush.bf16.msra.mxu0 0
      %572 = vmatpush.bf16.msra.mxu0 0
      %573 = vmatpush.bf16.msra.mxu0 0
      %574 = vmatpush.bf16.msra.mxu0 0
      %575 = vmatpush.bf16.msra.mxu0 0
      %576 = vmatpush.bf16.msra.mxu0 %v555
      %577 = vmatmul.bf16.gmra.mxu0 %v552
      %v578 = vpop.f32.mrf.mxu0
      %v579 = vadd.f32 0.0, %v578
      %v580 = vpop.f32.mrf.mxu0
      %581 = vdwg.mxu0
      %582 = vmatpush.bf16.msra.mxu0 0
      %583 = vmatpush.bf16.msra.mxu0 0
      %584 = vmatpush.bf16.msra.mxu0 0
      %585 = vmatpush.bf16.msra.mxu0 0
      %586 = vmatpush.bf16.msra.mxu0 0
      %587 = vmatpush.bf16.msra.mxu0 0
      %588 = vmatpush.bf16.msra.mxu0 0
      %589 = vmatpush.bf16.msra.mxu0 %v558
      %590 = vmatmul.bf16.gmra.mxu0 %v552
      %v591 = vpop.f32.mrf.mxu0
      %v592 = vadd.f32 0.0, %v591
      %v593 = vpop.f32.mrf.mxu0
      %594 = vdwg.mxu0
      %595 = vmatpush.bf16.msra.mxu0 0
      %596 = vmatpush.bf16.msra.mxu0 0
      %597 = vmatpush.bf16.msra.mxu0 0
      %598 = vmatpush.bf16.msra.mxu0 0
      %599 = vmatpush.bf16.msra.mxu0 0
      %600 = vmatpush.bf16.msra.mxu0 0
      %601 = vmatpush.bf16.msra.mxu0 0
      %602 = vmatpush.bf16.msra.mxu0 %v561
      %603 = vmatmul.bf16.gmra.mxu0 %v552
      %v604 = vpop.f32.mrf.mxu0
      %v605 = vadd.f32 0.0, %v604
      %v606 = vpop.f32.mrf.mxu0
      %607 = vdwg.mxu0
      %608 = vmatpush.bf16.msra.mxu0 0
      %609 = vmatpush.bf16.msra.mxu0 0
      %610 = vmatpush.bf16.msra.mxu0 0
      %611 = vmatpush.bf16.msra.mxu0 0
      %612 = vmatpush.bf16.msra.mxu0 0
      %613 = vmatpush.bf16.msra.mxu0 0
      %614 = vmatpush.bf16.msra.mxu0 0
      %615 = vmatpush.bf16.msra.mxu0 %v564
      %616 = vmatmul.bf16.gmra.mxu0 %v552
      %v617 = vpop.f32.mrf.mxu0
      %v618 = vadd.f32 0.0, %v617
      %v619 = vpop.f32.mrf.mxu0
      %620 = vdwg.mxu0
      %621 = vmatpush.bf16.msra.mxu0 0
      %622 = vmatpush.bf16.msra.mxu0 0
      %623 = vmatpush.bf16.msra.mxu0 0
      %624 = vmatpush.bf16.msra.mxu0 0
      %625 = vmatpush.bf16.msra.mxu0 0
      %626 = vmatpush.bf16.msra.mxu0 0
      %627 = vmatpush.bf16.msra.mxu0 0
      %628 = vmatpush.bf16.msra.mxu0 %v567
      %629 = vmatmul.bf16.gmra.mxu0 %v552
      %v630 = vpop.f32.mrf.mxu0
      %v631 = vadd.f32 0.0, %v630
      %v632 = vpop.f32.mrf.mxu0
      %633 = vdwg.mxu0
      %v634 = vadd.f32 %v531, %v579
      %v635 = vadd.f32 %v532, %v592
      %v636 = vadd.f32 %v533, %v605
      %v637 = vadd.f32 %v534, %v618
      %v638 = vadd.f32 %v535, %v631
      %s639 = scalar_lea.vmem %s1, 16
      %v640 = vld [vmem:[%s639] sm:$0xf]
      %v644 = vunpack.c.l.b16 %v231
      %v645 = vunpack.c.h.b16 %v231
      %v646 = vunpack.c.l.b16 %v232
      %v647 = vunpack.c.h.b16 %v232
      %v648 = vunpack.c.l.b16 %v233
      %v649 = vpack.c.b16 %v644, %v644
      %v650 = vpack.c.b16 %v645, %v645
      %v651 = vpack.c.b16 %v646, %v646
      %v652 = vpack.c.b16 %v647, %v647
      %v653 = vpack.c.b16 %v648, %v648
      %v655 = vsel %vm250, %v640, 0
      %v658 = vsel %vm254, %v649, 0
      %v661 = vsel %vm254, %v650, 0
      %v664 = vsel %vm254, %v651, 0
      %v667 = vsel %vm254, %v652, 0
      %v670 = vsel %vm254, %v653, 0
      %672 = vmatpush.bf16.msra.mxu0 0
      %673 = vmatpush.bf16.msra.mxu0 0
      %674 = vmatpush.bf16.msra.mxu0 0
      %675 = vmatpush.bf16.msra.mxu0 0
      %676 = vmatpush.bf16.msra.mxu0 0
      %677 = vmatpush.bf16.msra.mxu0 0
      %678 = vmatpush.bf16.msra.mxu0 0
      %679 = vmatpush.bf16.msra.mxu0 %v658
      %680 = vmatmul.bf16.gmra.mxu0 %v655
      %v681 = vpop.f32.mrf.mxu0
      %v682 = vadd.f32 0.0, %v681
      %v683 = vpop.f32.mrf.mxu0
      %684 = vdwg.mxu0
      %685 = vmatpush.bf16.msra.mxu0 0
      %686 = vmatpush.bf16.msra.mxu0 0
      %687 = vmatpush.bf16.msra.mxu0 0
      %688 = vmatpush.bf16.msra.mxu0 0
      %689 = vmatpush.bf16.msra.mxu0 0
      %690 = vmatpush.bf16.msra.mxu0 0
      %691 = vmatpush.bf16.msra.mxu0 0
      %692 = vmatpush.bf16.msra.mxu0 %v661
      %693 = vmatmul.bf16.gmra.mxu0 %v655
      %v694 = vpop.f32.mrf.mxu0
      %v695 = vadd.f32 0.0, %v694
      %v696 = vpop.f32.mrf.mxu0
      %697 = vdwg.mxu0
      %698 = vmatpush.bf16.msra.mxu0 0
      %699 = vmatpush.bf16.msra.mxu0 0
      %700 = vmatpush.bf16.msra.mxu0 0
      %701 = vmatpush.bf16.msra.mxu0 0
      %702 = vmatpush.bf16.msra.mxu0 0
      %703 = vmatpush.bf16.msra.mxu0 0
      %704 = vmatpush.bf16.msra.mxu0 0
      %705 = vmatpush.bf16.msra.mxu0 %v664
      %706 = vmatmul.bf16.gmra.mxu0 %v655
      %v707 = vpop.f32.mrf.mxu0
      %v708 = vadd.f32 0.0, %v707
      %v709 = vpop.f32.mrf.mxu0
      %710 = vdwg.mxu0
      %711 = vmatpush.bf16.msra.mxu0 0
      %712 = vmatpush.bf16.msra.mxu0 0
      %713 = vmatpush.bf16.msra.mxu0 0
      %714 = vmatpush.bf16.msra.mxu0 0
      %715 = vmatpush.bf16.msra.mxu0 0
      %716 = vmatpush.bf16.msra.mxu0 0
      %717 = vmatpush.bf16.msra.mxu0 0
      %718 = vmatpush.bf16.msra.mxu0 %v667
      %719 = vmatmul.bf16.gmra.mxu0 %v655
      %v720 = vpop.f32.mrf.mxu0
      %v721 = vadd.f32 0.0, %v720
      %v722 = vpop.f32.mrf.mxu0
      %723 = vdwg.mxu0
      %724 = vmatpush.bf16.msra.mxu0 0
      %725 = vmatpush.bf16.msra.mxu0 0
      %726 = vmatpush.bf16.msra.mxu0 0
      %727 = vmatpush.bf16.msra.mxu0 0
      %728 = vmatpush.bf16.msra.mxu0 0
      %729 = vmatpush.bf16.msra.mxu0 0
      %730 = vmatpush.bf16.msra.mxu0 0
      %731 = vmatpush.bf16.msra.mxu0 %v670
      %732 = vmatmul.bf16.gmra.mxu0 %v655
      %v733 = vpop.f32.mrf.mxu0
      %v734 = vadd.f32 0.0, %v733
      %v735 = vpop.f32.mrf.mxu0
      %736 = vdwg.mxu0
      %v737 = vadd.f32 %v634, %v682
      %v738 = vadd.f32 %v635, %v695
      %v739 = vadd.f32 %v636, %v708
      %v740 = vadd.f32 %v637, %v721
      %v741 = vadd.f32 %v638, %v734
      %s742 = scalar_lea.vmem %s1, 20
      %v743 = vld [vmem:[%s742] sm:$0xf]
      %744 = vrot.lane.b32.xlu0 %v546, 127
      %v745 = vpop.permute.xlu0 %744
      %746 = vrot.lane.b32.xlu0 %v547, 127
      %v747 = vpop.permute.xlu0 %746
      %748 = vrot.lane.b32.xlu0 %v548, 127
      %v749 = vpop.permute.xlu0 %748
      %750 = vrot.lane.b32.xlu0 %v549, 127
      %v751 = vpop.permute.xlu0 %750
      %752 = vrot.lane.b32.xlu0 %v550, 127
      %v753 = vpop.permute.xlu0 %752
      %v754 = vsel %vm443, %v745, %v747
      %v755 = vsel %vm443, %v747, %v749
      %v756 = vsel %vm443, %v749, %v751
      %v757 = vsel %vm443, %v751, %v753
      %v759 = vsel %vm250, %v743, 0
      %v762 = vsel %vm254, %v754, 0
      %v765 = vsel %vm254, %v755, 0
      %v768 = vsel %vm254, %v756, 0
      %v771 = vsel %vm254, %v757, 0
      %v774 = vsel %vm254, %v753, 0
      %776 = vmatpush.bf16.msra.mxu0 0
      %777 = vmatpush.bf16.msra.mxu0 0
      %778 = vmatpush.bf16.msra.mxu0 0
      %779 = vmatpush.bf16.msra.mxu0 0
      %780 = vmatpush.bf16.msra.mxu0 0
      %781 = vmatpush.bf16.msra.mxu0 0
      %782 = vmatpush.bf16.msra.mxu0 0
      %783 = vmatpush.bf16.msra.mxu0 %v762
      %784 = vmatmul.bf16.gmra.mxu0 %v759
      %v785 = vpop.f32.mrf.mxu0
      %v786 = vadd.f32 0.0, %v785
      %v787 = vpop.f32.mrf.mxu0
      %788 = vdwg.mxu0
      %789 = vmatpush.bf16.msra.mxu0 0
      %790 = vmatpush.bf16.msra.mxu0 0
      %791 = vmatpush.bf16.msra.mxu0 0
      %792 = vmatpush.bf16.msra.mxu0 0
      %793 = vmatpush.bf16.msra.mxu0 0
      %794 = vmatpush.bf16.msra.mxu0 0
      %795 = vmatpush.bf16.msra.mxu0 0
      %796 = vmatpush.bf16.msra.mxu0 %v765
      %797 = vmatmul.bf16.gmra.mxu0 %v759
      %v798 = vpop.f32.mrf.mxu0
      %v799 = vadd.f32 0.0, %v798
      %v800 = vpop.f32.mrf.mxu0
      %801 = vdwg.mxu0
      %802 = vmatpush.bf16.msra.mxu0 0
      %803 = vmatpush.bf16.msra.mxu0 0
      %804 = vmatpush.bf16.msra.mxu0 0
      %805 = vmatpush.bf16.msra.mxu0 0
      %806 = vmatpush.bf16.msra.mxu0 0
      %807 = vmatpush.bf16.msra.mxu0 0
      %808 = vmatpush.bf16.msra.mxu0 0
      %809 = vmatpush.bf16.msra.mxu0 %v768
      %810 = vmatmul.bf16.gmra.mxu0 %v759
      %v811 = vpop.f32.mrf.mxu0
      %v812 = vadd.f32 0.0, %v811
      %v813 = vpop.f32.mrf.mxu0
      %814 = vdwg.mxu0
      %815 = vmatpush.bf16.msra.mxu0 0
      %816 = vmatpush.bf16.msra.mxu0 0
      %817 = vmatpush.bf16.msra.mxu0 0
      %818 = vmatpush.bf16.msra.mxu0 0
      %819 = vmatpush.bf16.msra.mxu0 0
      %820 = vmatpush.bf16.msra.mxu0 0
      %821 = vmatpush.bf16.msra.mxu0 0
      %822 = vmatpush.bf16.msra.mxu0 %v771
      %823 = vmatmul.bf16.gmra.mxu0 %v759
      %v824 = vpop.f32.mrf.mxu0
      %v825 = vadd.f32 0.0, %v824
      %v826 = vpop.f32.mrf.mxu0
      %827 = vdwg.mxu0
      %828 = vmatpush.bf16.msra.mxu0 0
      %829 = vmatpush.bf16.msra.mxu0 0
      %830 = vmatpush.bf16.msra.mxu0 0
      %831 = vmatpush.bf16.msra.mxu0 0
      %832 = vmatpush.bf16.msra.mxu0 0
      %833 = vmatpush.bf16.msra.mxu0 0
      %834 = vmatpush.bf16.msra.mxu0 0
      %835 = vmatpush.bf16.msra.mxu0 %v774
      %836 = vmatmul.bf16.gmra.mxu0 %v759
      %v837 = vpop.f32.mrf.mxu0
      %v838 = vadd.f32 0.0, %v837
      %v839 = vpop.f32.mrf.mxu0
      %840 = vdwg.mxu0
      %v841 = vadd.f32 %v737, %v786
      %v842 = vadd.f32 %v738, %v799
      %v843 = vadd.f32 %v739, %v812
      %v844 = vadd.f32 %v740, %v825
      %v845 = vadd.f32 %v741, %v838
      %s846 = scalar_lea.vmem %s1, 24
      %v847 = vld [vmem:[%s846] sm:$0xf]
      %848 = vrot.lane.b32.xlu0 %v343, 104
      %v849 = vpop.permute.xlu0 %848
      %850 = vrot.lane.b32.xlu0 %v344, 104
      %v851 = vpop.permute.xlu0 %850
      %852 = vrot.lane.b32.xlu0 %v345, 104
      %v853 = vpop.permute.xlu0 %852
      %854 = vrot.lane.b32.xlu0 %v346, 104
      %v855 = vpop.permute.xlu0 %854
      %856 = vrot.lane.b32.xlu0 %v347, 104
      %v857 = vpop.permute.xlu0 %856
      %vm858 = vcmask 850944
      %v859 = vsel %vm858, %v849, %v851
      %v860 = vsel %vm858, %v851, %v853
      %v861 = vsel %vm858, %v853, %v855
      %v862 = vsel %vm858, %v855, %v857
      %v864 = vsel %vm250, %v847, 0
      %v867 = vsel %vm254, %v859, 0
      %v870 = vsel %vm254, %v860, 0
      %v873 = vsel %vm254, %v861, 0
      %v876 = vsel %vm254, %v862, 0
      %v879 = vsel %vm254, %v857, 0
      %881 = vmatpush.bf16.msra.mxu0 0
      %882 = vmatpush.bf16.msra.mxu0 0
      %883 = vmatpush.bf16.msra.mxu0 0
      %884 = vmatpush.bf16.msra.mxu0 0
      %885 = vmatpush.bf16.msra.mxu0 0
      %886 = vmatpush.bf16.msra.mxu0 0
      %887 = vmatpush.bf16.msra.mxu0 0
      %888 = vmatpush.bf16.msra.mxu0 %v867
      %889 = vmatmul.bf16.gmra.mxu0 %v864
      %v890 = vpop.f32.mrf.mxu0
      %v891 = vadd.f32 0.0, %v890
      %v892 = vpop.f32.mrf.mxu0
      %893 = vdwg.mxu0
      %894 = vmatpush.bf16.msra.mxu0 0
      %895 = vmatpush.bf16.msra.mxu0 0
      %896 = vmatpush.bf16.msra.mxu0 0
      %897 = vmatpush.bf16.msra.mxu0 0
      %898 = vmatpush.bf16.msra.mxu0 0
      %899 = vmatpush.bf16.msra.mxu0 0
      %900 = vmatpush.bf16.msra.mxu0 0
      %901 = vmatpush.bf16.msra.mxu0 %v870
      %902 = vmatmul.bf16.gmra.mxu0 %v864
      %v903 = vpop.f32.mrf.mxu0
      %v904 = vadd.f32 0.0, %v903
      %v905 = vpop.f32.mrf.mxu0
      %906 = vdwg.mxu0
      %907 = vmatpush.bf16.msra.mxu0 0
      %908 = vmatpush.bf16.msra.mxu0 0
      %909 = vmatpush.bf16.msra.mxu0 0
      %910 = vmatpush.bf16.msra.mxu0 0
      %911 = vmatpush.bf16.msra.mxu0 0
      %912 = vmatpush.bf16.msra.mxu0 0
      %913 = vmatpush.bf16.msra.mxu0 0
      %914 = vmatpush.bf16.msra.mxu0 %v873
      %915 = vmatmul.bf16.gmra.mxu0 %v864
      %v916 = vpop.f32.mrf.mxu0
      %v917 = vadd.f32 0.0, %v916
      %v918 = vpop.f32.mrf.mxu0
      %919 = vdwg.mxu0
      %920 = vmatpush.bf16.msra.mxu0 0
      %921 = vmatpush.bf16.msra.mxu0 0
      %922 = vmatpush.bf16.msra.mxu0 0
      %923 = vmatpush.bf16.msra.mxu0 0
      %924 = vmatpush.bf16.msra.mxu0 0
      %925 = vmatpush.bf16.msra.mxu0 0
      %926 = vmatpush.bf16.msra.mxu0 0
      %927 = vmatpush.bf16.msra.mxu0 %v876
      %928 = vmatmul.bf16.gmra.mxu0 %v864
      %v929 = vpop.f32.mrf.mxu0
      %v930 = vadd.f32 0.0, %v929
      %v931 = vpop.f32.mrf.mxu0
      %932 = vdwg.mxu0
      %933 = vmatpush.bf16.msra.mxu0 0
      %934 = vmatpush.bf16.msra.mxu0 0
      %935 = vmatpush.bf16.msra.mxu0 0
      %936 = vmatpush.bf16.msra.mxu0 0
      %937 = vmatpush.bf16.msra.mxu0 0
      %938 = vmatpush.bf16.msra.mxu0 0
      %939 = vmatpush.bf16.msra.mxu0 0
      %940 = vmatpush.bf16.msra.mxu0 %v879
      %941 = vmatmul.bf16.gmra.mxu0 %v864
      %v942 = vpop.f32.mrf.mxu0
      %v943 = vadd.f32 0.0, %v942
      %v944 = vpop.f32.mrf.mxu0
      %945 = vdwg.mxu0
      %v946 = vadd.f32 %v841, %v891
      %v947 = vadd.f32 %v842, %v904
      %v948 = vadd.f32 %v843, %v917
      %v949 = vadd.f32 %v844, %v930
      %v950 = vadd.f32 %v845, %v943
      %s951 = scalar_lea.vmem %s1, 28
      %v952 = vld [vmem:[%s951] sm:$0xf]
      %953 = vrot.lane.b32.xlu0 %v245, 104
      %v954 = vpop.permute.xlu0 %953
      %955 = vrot.lane.b32.xlu0 %v246, 104
      %v956 = vpop.permute.xlu0 %955
      %957 = vrot.lane.b32.xlu0 %v247, 104
      %v958 = vpop.permute.xlu0 %957
      %959 = vrot.lane.b32.xlu0 %v248, 104
      %v960 = vpop.permute.xlu0 %959
      %961 = vrot.lane.b32.xlu0 %v249, 104
      %v962 = vpop.permute.xlu0 %961
      %v963 = vsel %vm858, %v954, %v956
      %v964 = vsel %vm858, %v956, %v958
      %v965 = vsel %vm858, %v958, %v960
      %v966 = vsel %vm858, %v960, %v962
      %v968 = vsel %vm250, %v952, 0
      %v971 = vsel %vm254, %v963, 0
      %v974 = vsel %vm254, %v964, 0
      %v977 = vsel %vm254, %v965, 0
      %v980 = vsel %vm254, %v966, 0
      %v983 = vsel %vm254, %v962, 0
      %985 = vmatpush.bf16.msra.mxu0 0
      %986 = vmatpush.bf16.msra.mxu0 0
      %987 = vmatpush.bf16.msra.mxu0 0
      %988 = vmatpush.bf16.msra.mxu0 0
      %989 = vmatpush.bf16.msra.mxu0 0
      %990 = vmatpush.bf16.msra.mxu0 0
      %991 = vmatpush.bf16.msra.mxu0 0
      %992 = vmatpush.bf16.msra.mxu0 %v971
      %993 = vmatmul.bf16.gmra.mxu0 %v968
      %v994 = vpop.f32.mrf.mxu0
      %v995 = vadd.f32 0.0, %v994
      %v996 = vpop.f32.mrf.mxu0
      %997 = vdwg.mxu0
      %998 = vmatpush.bf16.msra.mxu0 0
      %999 = vmatpush.bf16.msra.mxu0 0
      %1000 = vmatpush.bf16.msra.mxu0 0
      %1001 = vmatpush.bf16.msra.mxu0 0
      %1002 = vmatpush.bf16.msra.mxu0 0
      %1003 = vmatpush.bf16.msra.mxu0 0
      %1004 = vmatpush.bf16.msra.mxu0 0
      %1005 = vmatpush.bf16.msra.mxu0 %v974
      %1006 = vmatmul.bf16.gmra.mxu0 %v968
      %v1007 = vpop.f32.mrf.mxu0
      %v1008 = vadd.f32 0.0, %v1007
      %v1009 = vpop.f32.mrf.mxu0
      %1010 = vdwg.mxu0
      %1011 = vmatpush.bf16.msra.mxu0 0
      %1012 = vmatpush.bf16.msra.mxu0 0
      %1013 = vmatpush.bf16.msra.mxu0 0
      %1014 = vmatpush.bf16.msra.mxu0 0
      %1015 = vmatpush.bf16.msra.mxu0 0
      %1016 = vmatpush.bf16.msra.mxu0 0
      %1017 = vmatpush.bf16.msra.mxu0 0
      %1018 = vmatpush.bf16.msra.mxu0 %v977
      %1019 = vmatmul.bf16.gmra.mxu0 %v968
      %v1020 = vpop.f32.mrf.mxu0
      %v1021 = vadd.f32 0.0, %v1020
      %v1022 = vpop.f32.mrf.mxu0
      %1023 = vdwg.mxu0
      %1024 = vmatpush.bf16.msra.mxu0 0
      %1025 = vmatpush.bf16.msra.mxu0 0
      %1026 = vmatpush.bf16.msra.mxu0 0
      %1027 = vmatpush.bf16.msra.mxu0 0
      %1028 = vmatpush.bf16.msra.mxu0 0
      %1029 = vmatpush.bf16.msra.mxu0 0
      %1030 = vmatpush.bf16.msra.mxu0 0
      %1031 = vmatpush.bf16.msra.mxu0 %v980
      %1032 = vmatmul.bf16.gmra.mxu0 %v968
      %v1033 = vpop.f32.mrf.mxu0
      %v1034 = vadd.f32 0.0, %v1033
      %v1035 = vpop.f32.mrf.mxu0
      %1036 = vdwg.mxu0
      %1037 = vmatpush.bf16.msra.mxu0 0
      %1038 = vmatpush.bf16.msra.mxu0 0
      %1039 = vmatpush.bf16.msra.mxu0 0
      %1040 = vmatpush.bf16.msra.mxu0 0
      %1041 = vmatpush.bf16.msra.mxu0 0
      %1042 = vmatpush.bf16.msra.mxu0 0
      %1043 = vmatpush.bf16.msra.mxu0 0
      %1044 = vmatpush.bf16.msra.mxu0 %v983
      %1045 = vmatmul.bf16.gmra.mxu0 %v968
      %v1046 = vpop.f32.mrf.mxu0
      %v1047 = vadd.f32 0.0, %v1046
      %v1048 = vpop.f32.mrf.mxu0
      %1049 = vdwg.mxu0
      %v1050 = vadd.f32 %v946, %v995
      %v1051 = vadd.f32 %v947, %v1008
      %v1052 = vadd.f32 %v948, %v1021
      %v1053 = vadd.f32 %v949, %v1034
      %v1054 = vadd.f32 %v950, %v1047
      %s1055 = scalar_lea.vmem %s1, 32
      %v1056 = vld [vmem:[%s1055] sm:$0xf]
      %1057 = vrot.lane.b32.xlu0 %v343, 103
      %v1058 = vpop.permute.xlu0 %1057
      %1059 = vrot.lane.b32.xlu0 %v344, 103
      %v1060 = vpop.permute.xlu0 %1059
      %1061 = vrot.lane.b32.xlu0 %v345, 103
      %v1062 = vpop.permute.xlu0 %1061
      %1063 = vrot.lane.b32.xlu0 %v346, 103
      %v1064 = vpop.permute.xlu0 %1063
      %1065 = vrot.lane.b32.xlu0 %v347, 103
      %v1066 = vpop.permute.xlu0 %1065
      %vm1067 = vcmask 842752
      %v1068 = vsel %vm1067, %v1058, %v1060
      %v1069 = vsel %vm1067, %v1060, %v1062
      %v1070 = vsel %vm1067, %v1062, %v1064
      %v1071 = vsel %vm1067, %v1064, %v1066
      %v1073 = vsel %vm250, %v1056, 0
      %v1076 = vsel %vm254, %v1068, 0
      %v1079 = vsel %vm254, %v1069, 0
      %v1082 = vsel %vm254, %v1070, 0
      %v1085 = vsel %vm254, %v1071, 0
      %v1088 = vsel %vm254, %v1066, 0
      %1090 = vmatpush.bf16.msra.mxu0 0
      %1091 = vmatpush.bf16.msra.mxu0 0
      %1092 = vmatpush.bf16.msra.mxu0 0
      %1093 = vmatpush.bf16.msra.mxu0 0
      %1094 = vmatpush.bf16.msra.mxu0 0
      %1095 = vmatpush.bf16.msra.mxu0 0
      %1096 = vmatpush.bf16.msra.mxu0 0
      %1097 = vmatpush.bf16.msra.mxu0 %v1076
      %1098 = vmatmul.bf16.gmra.mxu0 %v1073
      %v1099 = vpop.f32.mrf.mxu0
      %v1100 = vadd.f32 0.0, %v1099
      %v1101 = vpop.f32.mrf.mxu0
      %1102 = vdwg.mxu0
      %1103 = vmatpush.bf16.msra.mxu0 0
      %1104 = vmatpush.bf16.msra.mxu0 0
      %1105 = vmatpush.bf16.msra.mxu0 0
      %1106 = vmatpush.bf16.msra.mxu0 0
      %1107 = vmatpush.bf16.msra.mxu0 0
      %1108 = vmatpush.bf16.msra.mxu0 0
      %1109 = vmatpush.bf16.msra.mxu0 0
      %1110 = vmatpush.bf16.msra.mxu0 %v1079
      %1111 = vmatmul.bf16.gmra.mxu0 %v1073
      %v1112 = vpop.f32.mrf.mxu0
      %v1113 = vadd.f32 0.0, %v1112
      %v1114 = vpop.f32.mrf.mxu0
      %1115 = vdwg.mxu0
      %1116 = vmatpush.bf16.msra.mxu0 0
      %1117 = vmatpush.bf16.msra.mxu0 0
      %1118 = vmatpush.bf16.msra.mxu0 0
      %1119 = vmatpush.bf16.msra.mxu0 0
      %1120 = vmatpush.bf16.msra.mxu0 0
      %1121 = vmatpush.bf16.msra.mxu0 0
      %1122 = vmatpush.bf16.msra.mxu0 0
      %1123 = vmatpush.bf16.msra.mxu0 %v1082
      %1124 = vmatmul.bf16.gmra.mxu0 %v1073
      %v1125 = vpop.f32.mrf.mxu0
      %v1126 = vadd.f32 0.0, %v1125
      %v1127 = vpop.f32.mrf.mxu0
      %1128 = vdwg.mxu0
      %1129 = vmatpush.bf16.msra.mxu0 0
      %1130 = vmatpush.bf16.msra.mxu0 0
      %1131 = vmatpush.bf16.msra.mxu0 0
      %1132 = vmatpush.bf16.msra.mxu0 0
      %1133 = vmatpush.bf16.msra.mxu0 0
      %1134 = vmatpush.bf16.msra.mxu0 0
      %1135 = vmatpush.bf16.msra.mxu0 0
      %1136 = vmatpush.bf16.msra.mxu0 %v1085
      %1137 = vmatmul.bf16.gmra.mxu0 %v1073
      %v1138 = vpop.f32.mrf.mxu0
      %v1139 = vadd.f32 0.0, %v1138
      %v1140 = vpop.f32.mrf.mxu0
      %1141 = vdwg.mxu0
      %1142 = vmatpush.bf16.msra.mxu0 0
      %1143 = vmatpush.bf16.msra.mxu0 0
      %1144 = vmatpush.bf16.msra.mxu0 0
      %1145 = vmatpush.bf16.msra.mxu0 0
      %1146 = vmatpush.bf16.msra.mxu0 0
      %1147 = vmatpush.bf16.msra.mxu0 0
      %1148 = vmatpush.bf16.msra.mxu0 0
      %1149 = vmatpush.bf16.msra.mxu0 %v1088
      %1150 = vmatmul.bf16.gmra.mxu0 %v1073
      %v1151 = vpop.f32.mrf.mxu0
      %v1152 = vadd.f32 0.0, %v1151
      %v1153 = vpop.f32.mrf.mxu0
      %1154 = vdwg.mxu0
      %v1155 = vadd.f32 %v1050, %v1100
      %v1156 = vadd.f32 %v1051, %v1113
      %v1157 = vadd.f32 %v1052, %v1126
      %v1158 = vadd.f32 %v1053, %v1139
      %v1159 = vadd.f32 %v1054, %v1152
      %v1160 = vld [vmem:[%s2] sm:$0xff]
      %1162 = vset.pattern.permute.xlu0 0
      %1163 = vperm.xlu0 %1162, %v1160
      %v1164 = vpop.permute.xlu0 %1163
      %v1166 = vadd.f32 %v1155, %v1164
      %v1167 = vadd.f32 %v1156, %v1164
      %v1168 = vadd.f32 %v1157, %v1164
      %v1169 = vadd.f32 %v1158, %v1164
      %v1170 = vadd.f32 %v1159, %v1164
      %v1171 = vld [vmem:[%s3] sm:$0x1f]
      %v1173 = vperm.slane %v1171, 0
      %v1174 = vperm.slane %v1171, 1
      %v1175 = vperm.slane %v1171, 2
      %v1176 = vperm.slane %v1171, 3
      %v1177 = vperm.slane %v1171, 4
      %v1183 = vmul.f32 %v1166, %v1173
      %v1184 = vmul.f32 %v1167, %v1174
      %v1185 = vmul.f32 %v1168, %v1175
      %v1186 = vmul.f32 %v1169, %v1176
      %v1187 = vmul.f32 %v1170, %v1177
      %v1188 = vadd.f32 %v1183, %v1184
      %v1189 = vadd.f32 %v1188, %v1185
      %v1190 = vadd.f32 %v1189, %v1186
      %vm1191 = vcmask 326656
      %v1192 = vsel %vm1191, %v1187, 0.0
      %v1193 = vadd.f32 %v1190, %v1192
      %1194 = vadd.xlane.f32.xlu0 %v1193
      %v1195 = vpop.xlane.xlu0 %1194
      %v1196 = vmul.f32 %v1166, %v1166
      %v1197 = vmul.f32 %v1167, %v1167
      %v1198 = vmul.f32 %v1168, %v1168
      %v1199 = vmul.f32 %v1169, %v1169
      %v1200 = vmul.f32 %v1170, %v1170
      %v1201 = vmul.f32 %v1196, %v1173
      %v1202 = vmul.f32 %v1197, %v1174
      %v1203 = vmul.f32 %v1198, %v1175
      %v1204 = vmul.f32 %v1199, %v1176
      %v1205 = vmul.f32 %v1200, %v1177
      %v1206 = vadd.f32 %v1201, %v1202
      %v1207 = vadd.f32 %v1206, %v1203
      %v1208 = vadd.f32 %v1207, %v1204
      %v1209 = vsel %vm1191, %v1205, 0.0
      %v1210 = vadd.f32 %v1208, %v1209
      %1211 = vadd.xlane.f32.xlu0 %v1210
      %v1212 = vpop.xlane.xlu0 %1211
      %v1213 = vmul.f32 %v1195, 0.0018903592
      %v1214 = vmul.f32 %v1212, 0.0018903592
      %v1215 = vmul.f32 %v1213, %v1213
      %v1216 = vsub.f32 %v1214, %v1215
      %v1217 = vmax.f32 %v1216, 0.0
      %v1218 = vsub.f32 %v1166, %v1213
      %v1219 = vsub.f32 %v1167, %v1213
      %v1220 = vsub.f32 %v1168, %v1213
      %v1221 = vsub.f32 %v1169, %v1213
      %v1222 = vsub.f32 %v1170, %v1213
      %v1223 = vadd.f32 %v1217, 1e-05
      %v1224 = vrsqrt.pop %v1223
      %v1225 = vmul.f32 %v1224, %v1223
      %v1226 = vmul.f32 %v1225, %v1224
      %v1227 = vmul.f32 0.5, %v1226
      %v1228 = vsub.f32 1.5, %v1227
      %v1229 = vmul.f32 %v1224, %v1228
      %vm1230 = vweird.f32 %v1223
      %vm1231 = vweird.f32 %v1224
      %vm1232 = vmor %vm1230, %vm1231
      %v1233 = vsel %vm1232, %v1224, %v1229
      %v1234 = vmul.f32 %v1218, %v1233
      %v1235 = vmul.f32 %v1219, %v1233
      %v1236 = vmul.f32 %v1220, %v1233
      %v1237 = vmul.f32 %v1221, %v1233
      %v1238 = vmul.f32 %v1222, %v1233
      %v1239 = vmax.f32 %v1234, 0.0
      %v1240 = vmax.f32 %v1235, 0.0
      %v1241 = vmax.f32 %v1236, 0.0
      %v1242 = vmax.f32 %v1237, 0.0
      %v1243 = vmax.f32 %v1238, 0.0
      %1244 = vst [vmem:[%s197] sm:$0xff] %v1239
      %1245 = vst [vmem:[%s197 + $0x8] sm:$0xff] %v1240
      %1246 = vst [vmem:[%s197 + $0x10] sm:$0xff] %v1241
      %1247 = vst [vmem:[%s197 + $0x18] sm:$0xff] %v1242
      %1248 = vst.msk [vmem:[%s197 + $0x20] sm:$0xff] %vm1191, %v1243
      %p1249 = scmp.lt.s32.totalorder %s15, 1
      %s1250 = scalar_select %p1249, %s15, 1
      %s1251 = smul.addr %s1250, 5
      %s1252 = smul.addr %s1251, 8
      %s1253 = scalar_lea.vmem %s4, %s1252
      // Predicated region
      $region37: #{encoder_forward.6} parent=35 // pred_check
        %p1254 = pneg %p122
      $region38: #{encoder_forward.6} parent=35 // pred_check_branch
        %1256 = sbr.rel (%p1254) target = $region40
      $region39: #{encoder_forward.6} parent=35 // pred_region
        _
      $region40: #{encoder_forward.6} parent=35 // pred_fallthru
        _
    $region36: #{encoder_forward.6} parent=5 // pred_fallthru
      _
    %p1257 = scmp.le.s32.totalorder 2, %s10
    // Predicated region
    $region41: #{encoder_forward.6} parent=5 // pred_check
      %p1258 = pneg %p1257
    $region42: #{encoder_forward.6} parent=5 // pred_check_branch
      %1260 = sbr.rel (%p1258) target = $region44
    $region43: #{encoder_forward.6} parent=5 // pred_region
      %s1261 = ssub.s32 %s10, 2
      // Predicated region
      $region45: #{encoder_forward.6} parent=43 // pred_check
        %p1262 = pneg %p128
      $region46: #{encoder_forward.6} parent=43 // pred_check_branch
        %1264 = sbr.rel (%p1262) target = $region48
      $region47: #{encoder_forward.6} parent=43 // pred_region
        %p1265 = scmp.lt.s32.totalorder %s16, 1
        %s1266 = scalar_select %p1265, %s16, 1
        %s1267 = smul.addr %s1266, 5
        %s1268 = smul.addr %s1267, 8
        %s1269 = scalar_lea.vmem %s4, %s1268
      $region48: #{encoder_forward.6} parent=43 // pred_fallthru
        _
    $region44: #{encoder_forward.6} parent=5 // pred_fallthru
      _
  $region6: #{encoder_forward.6} parent=0 // loop_footer
    %s14 = sadd.s32 1, %s10
  $region7: #{encoder_forward.6} parent=0 // loop_footer_branch
    %9 = sbr.rel target = $region3
  $region8: #{encoder_forward.6} parent=0 // loop_exit
    _

// kernel: encoder_forward.7
$region0: #{encoder_forward.7}
  #allocation0 [shape = 'u32[]', space=smem, size = 0x4, offset = 0x4, fixed_abs, tag = 'smem constant byte address 0x4 - core index']
  #allocation1 [shape = 'u32[72,128]{1,0:T(1,128)}', space=vmem, size = 0x9000, scoped, tag = 'internal scratch']
  %s0 = inlined_call_operand.vmem [shape: f32[2,4,8,145], index: 0, kind: input, shape index: {}]
  %s1 = inlined_call_operand.vmem [shape: bf16[9,16,8], index: 1, kind: input, shape index: {}]
  %s2 = inlined_call_operand.vmem [shape: f32[16,1], index: 2, kind: input, shape index: {}]
  %s3 = inlined_call_operand.vmem [shape: f32[1,132], index: 3, kind: input, shape index: {}]
  %s4 = inlined_call_operand.vmem [shape: f32[2,16,132], index: 4, kind: output, shape index: {}]
  %s5 = sld [smem:[#allocation0]]
  $region49: #{encoder_forward.7} parent=0
    _
  %s7 = ssub.s32 1, %s5
  %s8 = scalar_select 0, %s7, %s5
  loop: start=0, step=1, limit=4
  $region2: #{encoder_forward.7} parent=0 // loop_pre_header
    _
  $region3: #{encoder_forward.7} parent=0 // loop_header
    %s10 = sphi 0, %s14
    %p11 = scmp.ge.s32.totalorder %s10, 4
    %s20 = sphi 0, %s22
    %s23 = sphi 0, %s20
    %s24 = sphi 0, %s23
    %s40 = sphi 0, %s24
    %s44 = sphi 0, %s44
    %s46 = sphi 0, %s44
    %s47 = sphi 0, %s46
    %s61 = sphi 0, %s47
    %s65 = sphi 0, %s65
    %s67 = sphi 0, %s65
    %s68 = sphi 0, %s67
    %s82 = sphi 0, %s68
    %s86 = sphi 0, %s86
    %s88 = sphi 0, %s86
    %s89 = sphi 0, %s88
    %s103 = sphi 0, %s89
    %s109 = sphi 0, %s111
    %s112 = sphi 0, %s109
    %s113 = sphi 0, %s112
    %s129 = sphi 0, %s113
  $region4: #{encoder_forward.7} parent=0 // loop_header_branch
    %13 = sbr.rel (%p11) target = $region8
  $region5: #{encoder_forward.7} parent=0 // loop_body
    %s15 = ssub.s32 %s10, 1
    %s16 = ssub.s32 %s10, 2
    %s17 = sadd.s32 %s10, 1
    %s18 = ssub.s32 %s10, %s17
    %p19 = scmp.eq.s32.totalorder %s18, 0
    %s21 = sadd.s32 %s20, 1
    %s22 = scalar_select %p19, %s20, %s21
    %p25 = pneg %p19
    %p26 = scmp.eq.s32.totalorder %s10, 1
    %p27 = por %p25, %p26
    %p28 = scmp.ne.s32.totalorder %s20, %s23
    %p29 = scmp.eq.s32.totalorder %s10, 0
    %p30 = por %p28, %p29
    %p31 = scmp.ne.s32.totalorder %s20, %s23
    %p32 = scmp.eq.s32.totalorder %s15, 1
    %p33 = por %p31, %p32
    %p34 = scmp.ne.s32.totalorder %s23, %s24
    %p35 = scmp.eq.s32.totalorder %s15, 0
    %p36 = por %p34, %p35
    %p37 = scmp.ne.s32.totalorder %s23, %s24
    %p38 = scmp.eq.s32.totalorder %s16, 1
    %p39 = por %p37, %p38
    %p41 = scmp.ne.s32.totalorder %s24, %s40
    %p42 = scmp.eq.s32.totalorder %s16, 0
    %p43 = por %p41, %p42
    %s45 = sadd.s32 %s44, 1
    %p48 = scmp.eq.s32.totalorder %s10, 1
    %p49 = scmp.ne.s32.totalorder %s44, %s46
    %p50 = scmp.eq.s32.totalorder %s10, 0
    %p51 = por %p49, %p50
    %p52 = scmp.ne.s32.totalorder %s44, %s46
    %p53 = scmp.eq.s32.totalorder %s15, 1
    %p54 = por %p52, %p53
    %p55 = scmp.ne.s32.totalorder %s46, %s47
    %p56 = scmp.eq.s32.totalorder %s15, 0
    %p57 = por %p55, %p56
    %p58 = scmp.ne.s32.totalorder %s46, %s47
    %p59 = scmp.eq.s32.totalorder %s16, 1
    %p60 = por %p58, %p59
    %p62 = scmp.ne.s32.totalorder %s47, %s61
    %p63 = scmp.eq.s32.totalorder %s16, 0
    %p64 = por %p62, %p63
    %s66 = sadd.s32 %s65, 1
    %p69 = scmp.eq.s32.totalorder %s10, 1
    %p70 = scmp.ne.s32.totalorder %s65, %s67
    %p71 = scmp.eq.s32.totalorder %s10, 0
    %p72 = por %p70, %p71
    %p73 = scmp.ne.s32.totalorder %s65, %s67
    %p74 = scmp.eq.s32.totalorder %s15, 1
    %p75 = por %p73, %p74
    %p76 = scmp.ne.s32.totalorder %s67, %s68
    %p77 = scmp.eq.s32.totalorder %s15, 0
    %p78 = por %p76, %p77
    %p79 = scmp.ne.s32.totalorder %s67, %s68
    %p80 = scmp.eq.s32.totalorder %s16, 1
    %p81 = por %p79, %p80
    %p83 = scmp.ne.s32.totalorder %s68, %s82
    %p84 = scmp.eq.s32.totalorder %s16, 0
    %p85 = por %p83, %p84
    %s87 = sadd.s32 %s86, 1
    %p90 = scmp.eq.s32.totalorder %s10, 1
    %p91 = scmp.ne.s32.totalorder %s86, %s88
    %p92 = scmp.eq.s32.totalorder %s10, 0
    %p93 = por %p91, %p92
    %p94 = scmp.ne.s32.totalorder %s86, %s88
    %p95 = scmp.eq.s32.totalorder %s15, 1
    %p96 = por %p94, %p95
    %p97 = scmp.ne.s32.totalorder %s88, %s89
    %p98 = scmp.eq.s32.totalorder %s15, 0
    %p99 = por %p97, %p98
    %p100 = scmp.ne.s32.totalorder %s88, %s89
    %p101 = scmp.eq.s32.totalorder %s16, 1
    %p102 = por %p100, %p101
    %p104 = scmp.ne.s32.totalorder %s89, %s103
    %p105 = scmp.eq.s32.totalorder %s16, 0
    %p106 = por %p104, %p105
    %s107 = ssub.s32 %s10, %s17
    %p108 = scmp.eq.s32.totalorder %s107, 0
    %s110 = sadd.s32 %s109, 1
    %s111 = scalar_select %p108, %s109, %s110
    %p114 = pneg %p108
    %p115 = scmp.eq.s32.totalorder %s10, 1
    %p116 = por %p114, %p115
    %p117 = scmp.ne.s32.totalorder %s109, %s112
    %p118 = scmp.eq.s32.totalorder %s10, 0
    %p119 = por %p117, %p118
    %p120 = scmp.ne.s32.totalorder %s109, %s112
    %p121 = scmp.eq.s32.totalorder %s15, 1
    %p122 = por %p120, %p121
    %p123 = scmp.ne.s32.totalorder %s112, %s113
    %p124 = scmp.eq.s32.totalorder %s15, 0
    %p125 = por %p123, %p124
    %p126 = scmp.ne.s32.totalorder %s112, %s113
    %p127 = scmp.eq.s32.totalorder %s16, 1
    %p128 = por %p126, %p127
    %p130 = scmp.ne.s32.totalorder %s113, %s129
    %p131 = scmp.eq.s32.totalorder %s16, 0
    %p132 = por %p130, %p131
    %p133 = scmp.le.s32.totalorder 1, %s10
    %p134 = scmp.lt.s32.totalorder %s10, 3
    %p135 = pnand %p133, %p134
    %p136 = pneg %p135
    // Predicated region
    $region9: #{encoder_forward.7} parent=5 // pred_check
      _
    $region10: #{encoder_forward.7} parent=5 // pred_check_branch
      %138 = sbr.rel (%p135) target = $region12
    $region11: #{encoder_forward.7} parent=5 // pred_region
      %s139 = ssub.s32 %s10, 1
      // Predicated region
      $region13: #{encoder_forward.7} parent=11 // pred_check
        %p140 = pneg %p57
      $region14: #{encoder_forward.7} parent=11 // pred_check_branch
        %142 = sbr.rel (%p140) target = $region16
      $region15: #{encoder_forward.7} parent=11 // pred_region
        _
      $region16: #{encoder_forward.7} parent=11 // pred_fallthru
        _
      // Predicated region
      $region17: #{encoder_forward.7} parent=11 // pred_check
        %p143 = pneg %p78
      $region18: #{encoder_forward.7} parent=11 // pred_check_branch
        %145 = sbr.rel (%p143) target = $region20
      $region19: #{encoder_forward.7} parent=11 // pred_region
        _
      $region20: #{encoder_forward.7} parent=11 // pred_fallthru
        _
      // Predicated region
      $region21: #{encoder_forward.7} parent=11 // pred_check
        %p146 = pneg %p99
      $region22: #{encoder_forward.7} parent=11 // pred_check_branch
        %148 = sbr.rel (%p146) target = $region24
      $region23: #{encoder_forward.7} parent=11 // pred_region
        _
      $region24: #{encoder_forward.7} parent=11 // pred_fallthru
        _
    $region12: #{encoder_forward.7} parent=5 // pred_fallthru
      _
    %p149 = scmp.lt.s32.totalorder %s10, 2
    // Predicated region
    $region25: #{encoder_forward.7} parent=5 // pred_check
      %p150 = pneg %p149
    $region26: #{encoder_forward.7} parent=5 // pred_check_branch
      %152 = sbr.rel (%p150) target = $region28
    $region27: #{encoder_forward.7} parent=5 // pred_region
      // Predicated region
      $region29: #{encoder_forward.7} parent=27 // pred_check
        %p153 = pneg %p30
      $region30: #{encoder_forward.7} parent=27 // pred_check_branch
        %155 = sbr.rel (%p153) target = $region32
      $region31: #{encoder_forward.7} parent=27 // pred_region
        %p156 = scmp.lt.s32.totalorder %s10, 1
        %s157 = scalar_select %p156, %s10, 1
        %s158 = smul.addr %s157, 8
        %s159 = smul.addr %s158, 8
        %s160 = scalar_lea.vmem %s0, %s159
      $region32: #{encoder_forward.7} parent=27 // pred_fallthru
        _
    $region28: #{encoder_forward.7} parent=5 // pred_fallthru
      _
    %p161 = scmp.le.s32.totalorder 1, %s10
    %p162 = scmp.lt.s32.totalorder %s10, 3
    %p163 = pnand %p161, %p162
    %p164 = pneg %p163
    // Predicated region
    $region33: #{encoder_forward.7} parent=5 // pred_check
      _
    $region34: #{encoder_forward.7} parent=5 // pred_check_branch
      %166 = sbr.rel (%p163) target = $region36
    $region35: #{encoder_forward.7} parent=5 // pred_region
      %s167 = ssub.s32 %s10, 1
      %p168 = scmp.lt.s32.totalorder %s15, 1
      %s169 = scalar_select %p168, %s15, 1
      %s170 = smul.addr %s169, 8
      %s171 = smul.addr %s170, 8
      %s172 = scalar_lea.vmem %s0, %s171
      %p173 = pneg %p36
      %p174 = pneg %p33
      %p175 = pneg %p57
      %p176 = pneg %p54
      %p177 = pneg %p78
      %p178 = pneg %p75
      %p179 = pneg %p99
      %p180 = pneg %p96
      %p181 = pneg %p125
      %p182 = pneg %p122
      %p183 = scmp.lt.s32.totalorder %s15, 1
      %s184 = scalar_select %p183, %s15, 1
      %s185 = smul.addr %s184, 4
      %s186 = smul.addr %s185, 8
      %s187 = scalar_lea.vmem %s4, %s186
      %p188 = scmp.lt.s32.totalorder %s15, 1
      %s189 = scalar_select %p188, %s15, 1
      %s190 = smul.addr %s189, 8
      %s191 = smul.addr %s190, 8
      %s192 = scalar_lea.vmem %s0, %s191
      %p193 = scmp.lt.s32.totalorder %s15, 1
      %s194 = scalar_select %p193, %s15, 1
      %s195 = smul.addr %s194, 4
      %s196 = smul.addr %s195, 8
      %s197 = scalar_lea.vmem %s4, %s196
      %v199 = vld [vmem:[%s192] sm:$0xff]
      %v200 = vld [vmem:[%s192 + $0x8] sm:$0xff]
      %v201 = vpack.c.bf16 %v200, %v199
      %s202 = scalar_lea.vmem %s192, 16
      %v203 = vld [vmem:[%s202] sm:$0xff]
      %v204 = vld [vmem:[%s202 + $0x8] sm:$0xff]
      %v205 = vpack.c.bf16 %v204, %v203
      %s206 = scalar_lea.vmem %s192, 32
      %v207 = vld [vmem:[%s206] sm:$0xff]
      %v208 = vld [vmem:[%s206 + $0x8] sm:$0xff]
      %v209 = vpack.c.bf16 %v208, %v207
      %s210 = scalar_lea.vmem %s192, 48
      %v211 = vld [vmem:[%s210] sm:$0xff]
      %v212 = vld [vmem:[%s210 + $0x8] sm:$0xff]
      %v213 = vpack.c.bf16 %v212, %v211
      %v214 = vld [vmem:[%s1] sm:$0xf]
      %v215 = vld [vmem:[%s1 + $0x4] sm:$0xf]
      %s216 = scalar_lea.vmem %s1, 8
      %v217 = vld [vmem:[%s216] sm:$0xf]
      %v218 = vld [vmem:[%s216 + $0x4] sm:$0xf]
      %v221 = vunpack.c.l.b16 %v217
      %v222 = vunpack.c.l.b16 %v218
      %v223 = vpack.c.b16 %v222, %v221
      %v225 = vunpack.c.l.b16 %v205
      %v226 = vunpack.c.h.b16 %v205
      %v227 = vpack.c.b16 %v225, %v225
      %v228 = vpack.c.b16 %v226, %v226
      %vm229 = vcmask 64512
      %v231 = vsel %vm229, %v223, 0
      %vm233 = vcmask 1043456
      %v235 = vsel %vm233, %v227, 0
      %v238 = vsel %vm233, %v228, 0
      %240 = vmatpush.bf16.msra.mxu0 0
      %241 = vmatpush.bf16.msra.mxu0 0
      %242 = vmatpush.bf16.msra.mxu0 0
      %243 = vmatpush.bf16.msra.mxu0 0
      %244 = vmatpush.bf16.msra.mxu0 0
      %245 = vmatpush.bf16.msra.mxu0 0
      %246 = vmatpush.bf16.msra.mxu0 0
      %247 = vmatpush.bf16.msra.mxu0 %v235
      %248 = vmatmul.bf16.gmra.mxu0 %v231
      %v249 = vpop.f32.mrf.mxu0
      %v250 = vadd.f32 0.0, %v249
      %v251 = vpop.f32.mrf.mxu0
      %v252 = vadd.f32 0.0, %v251
      %253 = vdwg.mxu0
      %254 = vmatpush.bf16.msra.mxu0 0
      %255 = vmatpush.bf16.msra.mxu0 0
      %256 = vmatpush.bf16.msra.mxu0 0
      %257 = vmatpush.bf16.msra.mxu0 0
      %258 = vmatpush.bf16.msra.mxu0 0
      %259 = vmatpush.bf16.msra.mxu0 0
      %260 = vmatpush.bf16.msra.mxu0 0
      %261 = vmatpush.bf16.msra.mxu0 %v238
      %262 = vmatmul.bf16.gmra.mxu0 %v231
      %v263 = vpop.f32.mrf.mxu0
      %v264 = vadd.f32 0.0, %v263
      %v265 = vpop.f32.mrf.mxu0
      %v266 = vadd.f32 0.0, %v265
      %267 = vdwg.mxu0
      %v270 = vunpack.c.l.b16 %v214
      %v271 = vunpack.c.l.b16 %v215
      %v272 = vpack.c.b16 %v271, %v270
      %v274 = vunpack.c.l.b16 %v201
      %v275 = vunpack.c.h.b16 %v201
      %v276 = vpack.c.b16 %v274, %v274
      %v277 = vpack.c.b16 %v275, %v275
      %v279 = vsel %vm229, %v272, 0
      %v282 = vsel %vm233, %v276, 0
      %v285 = vsel %vm233, %v277, 0
      %287 = vmatpush.bf16.msra.mxu0 0
      %288 = vmatpush.bf16.msra.mxu0 0
      %289 = vmatpush.bf16.msra.mxu0 0
      %290 = vmatpush.bf16.msra.mxu0 0
      %291 = vmatpush.bf16.msra.mxu0 0
      %292 = vmatpush.bf16.msra.mxu0 0
      %293 = vmatpush.bf16.msra.mxu0 0
      %294 = vmatpush.bf16.msra.mxu0 %v282
      %295 = vmatmul.bf16.gmra.mxu0 %v279
      %v296 = vpop.f32.mrf.mxu0
      %v297 = vadd.f32 %v250, %v296
      %v298 = vpop.f32.mrf.mxu0
      %v299 = vadd.f32 %v252, %v298
      %300 = vdwg.mxu0
      %301 = vmatpush.bf16.msra.mxu0 0
      %302 = vmatpush.bf16.msra.mxu0 0
      %303 = vmatpush.bf16.msra.mxu0 0
      %304 = vmatpush.bf16.msra.mxu0 0
      %305 = vmatpush.bf16.msra.mxu0 0
      %306 = vmatpush.bf16.msra.mxu0 0
      %307 = vmatpush.bf16.msra.mxu0 0
      %308 = vmatpush.bf16.msra.mxu0 %v285
      %309 = vmatmul.bf16.gmra.mxu0 %v279
      %v310 = vpop.f32.mrf.mxu0
      %v311 = vadd.f32 %v264, %v310
      %v312 = vpop.f32.mrf.mxu0
      %v313 = vadd.f32 %v266, %v312
      %314 = vdwg.mxu0
      %s315 = scalar_lea.vmem %s1, 16
      %v316 = vld [vmem:[%s315] sm:$0xf]
      %v317 = vld [vmem:[%s315 + $0x4] sm:$0xf]
      %v320 = vunpack.c.l.b16 %v316
      %v321 = vunpack.c.l.b16 %v317
      %v322 = vpack.c.b16 %v321, %v320
      %323 = vrot.lane.b32.xlu0 %v276, 127
      %v324 = vpop.permute.xlu0 %323
      %325 = vrot.lane.b32.xlu0 %v277, 127
      %v326 = vpop.permute.xlu0 %325
      %vm327 = vcmask 1039360
      %v328 = vsel %vm327, %v324, %v326
      %v330 = vsel %vm229, %v322, 0
      %v333 = vsel %vm233, %v328, 0
      %v336 = vsel %vm233, %v326, 0
      %338 = vmatpush.bf16.msra.mxu0 0
      %339 = vmatpush.bf16.msra.mxu0 0
      %340 = vmatpush.bf16.msra.mxu0 0
      %341 = vmatpush.bf16.msra.mxu0 0
      %342 = vmatpush.bf16.msra.mxu0 0
      %343 = vmatpush.bf16.msra.mxu0 0
      %344 = vmatpush.bf16.msra.mxu0 0
      %345 = vmatpush.bf16.msra.mxu0 %v333
      %346 = vmatmul.bf16.gmra.mxu0 %v330
      %v347 = vpop.f32.mrf.mxu0
      %v348 = vadd.f32 0.0, %v347
      %v349 = vpop.f32.mrf.mxu0
      %v350 = vadd.f32 0.0, %v349
      %351 = vdwg.mxu0
      %352 = vmatpush.bf16.msra.mxu0 0
      %353 = vmatpush.bf16.msra.mxu0 0
      %354 = vmatpush.bf16.msra.mxu0 0
      %355 = vmatpush.bf16.msra.mxu0 0
      %356 = vmatpush.bf16.msra.mxu0 0
      %357 = vmatpush.bf16.msra.mxu0 0
      %358 = vmatpush.bf16.msra.mxu0 0
      %359 = vmatpush.bf16.msra.mxu0 %v336
      %360 = vmatmul.bf16.gmra.mxu0 %v330
      %v361 = vpop.f32.mrf.mxu0
      %v362 = vadd.f32 0.0, %v361
      %v363 = vpop.f32.mrf.mxu0
      %v364 = vadd.f32 0.0, %v363
      %365 = vdwg.mxu0
      %v366 = vadd.f32 %v297, %v348
      %v367 = vadd.f32 %v311, %v362
      %v368 = vadd.f32 %v299, %v350
      %v369 = vadd.f32 %v313, %v364
      %s370 = scalar_lea.vmem %s1, 24
      %v371 = vld [vmem:[%s370] sm:$0xf]
      %v372 = vld [vmem:[%s370 + $0x4] sm:$0xf]
      %v375 = vunpack.c.l.b16 %v371
      %v376 = vunpack.c.l.b16 %v372
      %v377 = vpack.c.b16 %v376, %v375
      %v379 = vunpack.c.l.b16 %v209
      %v380 = vunpack.c.h.b16 %v209
      %v381 = vpack.c.b16 %v379, %v379
      %v382 = vpack.c.b16 %v380, %v380
      %v384 = vsel %vm229, %v377, 0
      %v387 = vsel %vm233, %v381, 0
      %v390 = vsel %vm233, %v382, 0
      %392 = vmatpush.bf16.msra.mxu0 0
      %393 = vmatpush.bf16.msra.mxu0 0
      %394 = vmatpush.bf16.msra.mxu0 0
      %395 = vmatpush.bf16.msra.mxu0 0
      %396 = vmatpush.bf16.msra.mxu0 0
      %397 = vmatpush.bf16.msra.mxu0 0
      %398 = vmatpush.bf16.msra.mxu0 0
      %399 = vmatpush.bf16.msra.mxu0 %v387
      %400 = vmatmul.bf16.gmra.mxu0 %v384
      %v401 = vpop.f32.mrf.mxu0
      %v402 = vadd.f32 0.0, %v401
      %v403 = vpop.f32.mrf.mxu0
      %v404 = vadd.f32 0.0, %v403
      %405 = vdwg.mxu0
      %406 = vmatpush.bf16.msra.mxu0 0
      %407 = vmatpush.bf16.msra.mxu0 0
      %408 = vmatpush.bf16.msra.mxu0 0
      %409 = vmatpush.bf16.msra.mxu0 0
      %410 = vmatpush.bf16.msra.mxu0 0
      %411 = vmatpush.bf16.msra.mxu0 0
      %412 = vmatpush.bf16.msra.mxu0 0
      %413 = vmatpush.bf16.msra.mxu0 %v390
      %414 = vmatmul.bf16.gmra.mxu0 %v384
      %v415 = vpop.f32.mrf.mxu0
      %v416 = vadd.f32 0.0, %v415
      %v417 = vpop.f32.mrf.mxu0
      %v418 = vadd.f32 0.0, %v417
      %419 = vdwg.mxu0
      %v420 = vadd.f32 %v366, %v402
      %v421 = vadd.f32 %v367, %v416
      %v422 = vadd.f32 %v368, %v404
      %v423 = vadd.f32 %v369, %v418
      %s424 = scalar_lea.vmem %s1, 32
      %v425 = vld [vmem:[%s424] sm:$0xf]
      %v426 = vld [vmem:[%s424 + $0x4] sm:$0xf]
      %v429 = vunpack.c.l.b16 %v425
      %v430 = vunpack.c.l.b16 %v426
      %v431 = vpack.c.b16 %v430, %v429
      %v433 = vunpack.c.l.b16 %v213
      %v434 = vunpack.c.h.b16 %v213
      %v435 = vpack.c.b16 %v433, %v433
      %v436 = vpack.c.b16 %v434, %v434
      %v438 = vsel %vm229, %v431, 0
      %v441 = vsel %vm233, %v435, 0
      %v444 = vsel %vm233, %v436, 0
      %446 = vmatpush.bf16.msra.mxu0 0
      %447 = vmatpush.bf16.msra.mxu0 0
      %448 = vmatpush.bf16.msra.mxu0 0
      %449 = vmatpush.bf16.msra.mxu0 0
      %450 = vmatpush.bf16.msra.mxu0 0
      %451 = vmatpush.bf16.msra.mxu0 0
      %452 = vmatpush.bf16.msra.mxu0 0
      %453 = vmatpush.bf16.msra.mxu0 %v441
      %454 = vmatmul.bf16.gmra.mxu0 %v438
      %v455 = vpop.f32.mrf.mxu0
      %v456 = vadd.f32 0.0, %v455
      %v457 = vpop.f32.mrf.mxu0
      %v458 = vadd.f32 0.0, %v457
      %459 = vdwg.mxu0
      %460 = vmatpush.bf16.msra.mxu0 0
      %461 = vmatpush.bf16.msra.mxu0 0
      %462 = vmatpush.bf16.msra.mxu0 0
      %463 = vmatpush.bf16.msra.mxu0 0
      %464 = vmatpush.bf16.msra.mxu0 0
      %465 = vmatpush.bf16.msra.mxu0 0
      %466 = vmatpush.bf16.msra.mxu0 0
      %467 = vmatpush.bf16.msra.mxu0 %v444
      %468 = vmatmul.bf16.gmra.mxu0 %v438
      %v469 = vpop.f32.mrf.mxu0
      %v470 = vadd.f32 0.0, %v469
      %v471 = vpop.f32.mrf.mxu0
      %v472 = vadd.f32 0.0, %v471
      %473 = vdwg.mxu0
      %v474 = vadd.f32 %v420, %v456
      %v475 = vadd.f32 %v421, %v470
      %v476 = vadd.f32 %v422, %v458
      %v477 = vadd.f32 %v423, %v472
      %s478 = scalar_lea.vmem %s1, 40
      %v479 = vld [vmem:[%s478] sm:$0xf]
      %v480 = vld [vmem:[%s478 + $0x4] sm:$0xf]
      %v483 = vunpack.c.l.b16 %v479
      %v484 = vunpack.c.l.b16 %v480
      %v485 = vpack.c.b16 %v484, %v483
      %486 = vrot.lane.b32.xlu0 %v381, 127
      %v487 = vpop.permute.xlu0 %486
      %488 = vrot.lane.b32.xlu0 %v382, 127
      %v489 = vpop.permute.xlu0 %488
      %v490 = vsel %vm327, %v487, %v489
      %v492 = vsel %vm229, %v485, 0
      %v495 = vsel %vm233, %v490, 0
      %v498 = vsel %vm233, %v489, 0
      %500 = vmatpush.bf16.msra.mxu0 0
      %501 = vmatpush.bf16.msra.mxu0 0
      %502 = vmatpush.bf16.msra.mxu0 0
      %503 = vmatpush.bf16.msra.mxu0 0
      %504 = vmatpush.bf16.msra.mxu0 0
      %505 = vmatpush.bf16.msra.mxu0 0
      %506 = vmatpush.bf16.msra.mxu0 0
      %507 = vmatpush.bf16.msra.mxu0 %v495
      %508 = vmatmul.bf16.gmra.mxu0 %v492
      %v509 = vpop.f32.mrf.mxu0
      %v510 = vadd.f32 0.0, %v509
      %v511 = vpop.f32.mrf.mxu0
      %v512 = vadd.f32 0.0, %v511
      %513 = vdwg.mxu0
      %514 = vmatpush.bf16.msra.mxu0 0
      %515 = vmatpush.bf16.msra.mxu0 0
      %516 = vmatpush.bf16.msra.mxu0 0
      %517 = vmatpush.bf16.msra.mxu0 0
      %518 = vmatpush.bf16.msra.mxu0 0
      %519 = vmatpush.bf16.msra.mxu0 0
      %520 = vmatpush.bf16.msra.mxu0 0
      %521 = vmatpush.bf16.msra.mxu0 %v498
      %522 = vmatmul.bf16.gmra.mxu0 %v492
      %v523 = vpop.f32.mrf.mxu0
      %v524 = vadd.f32 0.0, %v523
      %v525 = vpop.f32.mrf.mxu0
      %v526 = vadd.f32 0.0, %v525
      %527 = vdwg.mxu0
      %v528 = vadd.f32 %v474, %v510
      %v529 = vadd.f32 %v475, %v524
      %v530 = vadd.f32 %v476, %v512
      %v531 = vadd.f32 %v477, %v526
      %s532 = scalar_lea.vmem %s1, 48
      %v533 = vld [vmem:[%s532] sm:$0xf]
      %v534 = vld [vmem:[%s532 + $0x4] sm:$0xf]
      %v537 = vunpack.c.l.b16 %v533
      %v538 = vunpack.c.l.b16 %v534
      %v539 = vpack.c.b16 %v538, %v537
      %540 = vrot.lane.b32.xlu0 %v276, 116
      %v541 = vpop.permute.xlu0 %540
      %542 = vrot.lane.b32.xlu0 %v277, 116
      %v543 = vpop.permute.xlu0 %542
      %vm544 = vcmask 949248
      %v545 = vsel %vm544, %v541, %v543
      %v547 = vsel %vm229, %v539, 0
      %v550 = vsel %vm233, %v545, 0
      %v553 = vsel %vm233, %v543, 0
      %555 = vmatpush.bf16.msra.mxu0 0
      %556 = vmatpush.bf16.msra.mxu0 0
      %557 = vmatpush.bf16.msra.mxu0 0
      %558 = vmatpush.bf16.msra.mxu0 0
      %559 = vmatpush.bf16.msra.mxu0 0
      %560 = vmatpush.bf16.msra.mxu0 0
      %561 = vmatpush.bf16.msra.mxu0 0
      %562 = vmatpush.bf16.msra.mxu0 %v550
      %563 = vmatmul.bf16.gmra.mxu0 %v547
      %v564 = vpop.f32.mrf.mxu0
      %v565 = vadd.f32 0.0, %v564
      %v566 = vpop.f32.mrf.mxu0
      %v567 = vadd.f32 0.0, %v566
      %568 = vdwg.mxu0
      %569 = vmatpush.bf16.msra.mxu0 0
      %570 = vmatpush.bf16.msra.mxu0 0
      %571 = vmatpush.bf16.msra.mxu0 0
      %572 = vmatpush.bf16.msra.mxu0 0
      %573 = vmatpush.bf16.msra.mxu0 0
      %574 = vmatpush.bf16.msra.mxu0 0
      %575 = vmatpush.bf16.msra.mxu0 0
      %576 = vmatpush.bf16.msra.mxu0 %v553
      %577 = vmatmul.bf16.gmra.mxu0 %v547
      %v578 = vpop.f32.mrf.mxu0
      %v579 = vadd.f32 0.0, %v578
      %v580 = vpop.f32.mrf.mxu0
      %v581 = vadd.f32 0.0, %v580
      %582 = vdwg.mxu0
      %v583 = vadd.f32 %v528, %v565
      %v584 = vadd.f32 %v529, %v579
      %v585 = vadd.f32 %v530, %v567
      %v586 = vadd.f32 %v531, %v581
      %s587 = scalar_lea.vmem %s1, 56
      %v588 = vld [vmem:[%s587] sm:$0xf]
      %v589 = vld [vmem:[%s587 + $0x4] sm:$0xf]
      %v592 = vunpack.c.l.b16 %v588
      %v593 = vunpack.c.l.b16 %v589
      %v594 = vpack.c.b16 %v593, %v592
      %595 = vrot.lane.b32.xlu0 %v227, 116
      %v596 = vpop.permute.xlu0 %595
      %597 = vrot.lane.b32.xlu0 %v228, 116
      %v598 = vpop.permute.xlu0 %597
      %v599 = vsel %vm544, %v596, %v598
      %v601 = vsel %vm229, %v594, 0
      %v604 = vsel %vm233, %v599, 0
      %v607 = vsel %vm233, %v598, 0
      %609 = vmatpush.bf16.msra.mxu0 0
      %610 = vmatpush.bf16.msra.mxu0 0
      %611 = vmatpush.bf16.msra.mxu0 0
      %612 = vmatpush.bf16.msra.mxu0 0
      %613 = vmatpush.bf16.msra.mxu0 0
      %614 = vmatpush.bf16.msra.mxu0 0
      %615 = vmatpush.bf16.msra.mxu0 0
      %616 = vmatpush.bf16.msra.mxu0 %v604
      %617 = vmatmul.bf16.gmra.mxu0 %v601
      %v618 = vpop.f32.mrf.mxu0
      %v619 = vadd.f32 0.0, %v618
      %v620 = vpop.f32.mrf.mxu0
      %v621 = vadd.f32 0.0, %v620
      %622 = vdwg.mxu0
      %623 = vmatpush.bf16.msra.mxu0 0
      %624 = vmatpush.bf16.msra.mxu0 0
      %625 = vmatpush.bf16.msra.mxu0 0
      %626 = vmatpush.bf16.msra.mxu0 0
      %627 = vmatpush.bf16.msra.mxu0 0
      %628 = vmatpush.bf16.msra.mxu0 0
      %629 = vmatpush.bf16.msra.mxu0 0
      %630 = vmatpush.bf16.msra.mxu0 %v607
      %631 = vmatmul.bf16.gmra.mxu0 %v601
      %v632 = vpop.f32.mrf.mxu0
      %v633 = vadd.f32 0.0, %v632
      %v634 = vpop.f32.mrf.mxu0
      %v635 = vadd.f32 0.0, %v634
      %636 = vdwg.mxu0
      %v637 = vadd.f32 %v583, %v619
      %v638 = vadd.f32 %v584, %v633
      %v639 = vadd.f32 %v585, %v621
      %v640 = vadd.f32 %v586, %v635
      %s641 = scalar_lea.vmem %s1, 64
      %v642 = vld [vmem:[%s641] sm:$0xf]
      %v643 = vld [vmem:[%s641 + $0x4] sm:$0xf]
      %v646 = vunpack.c.l.b16 %v642
      %v647 = vunpack.c.l.b16 %v643
      %v648 = vpack.c.b16 %v647, %v646
      %649 = vrot.lane.b32.xlu0 %v276, 115
      %v650 = vpop.permute.xlu0 %649
      %651 = vrot.lane.b32.xlu0 %v277, 115
      %v652 = vpop.permute.xlu0 %651
      %vm653 = vcmask 941056
      %v654 = vsel %vm653, %v650, %v652
      %v656 = vsel %vm229, %v648, 0
      %v659 = vsel %vm233, %v654, 0
      %v662 = vsel %vm233, %v652, 0
      %664 = vmatpush.bf16.msra.mxu0 0
      %665 = vmatpush.bf16.msra.mxu0 0
      %666 = vmatpush.bf16.msra.mxu0 0
      %667 = vmatpush.bf16.msra.mxu0 0
      %668 = vmatpush.bf16.msra.mxu0 0
      %669 = vmatpush.bf16.msra.mxu0 0
      %670 = vmatpush.bf16.msra.mxu0 0
      %671 = vmatpush.bf16.msra.mxu0 %v659
      %672 = vmatmul.bf16.gmra.mxu0 %v656
      %v673 = vpop.f32.mrf.mxu0
      %v674 = vadd.f32 0.0, %v673
      %v675 = vpop.f32.mrf.mxu0
      %v676 = vadd.f32 0.0, %v675
      %677 = vdwg.mxu0
      %678 = vmatpush.bf16.msra.mxu0 0
      %679 = vmatpush.bf16.msra.mxu0 0
      %680 = vmatpush.bf16.msra.mxu0 0
      %681 = vmatpush.bf16.msra.mxu0 0
      %682 = vmatpush.bf16.msra.mxu0 0
      %683 = vmatpush.bf16.msra.mxu0 0
      %684 = vmatpush.bf16.msra.mxu0 0
      %685 = vmatpush.bf16.msra.mxu0 %v662
      %686 = vmatmul.bf16.gmra.mxu0 %v656
      %v687 = vpop.f32.mrf.mxu0
      %v688 = vadd.f32 0.0, %v687
      %v689 = vpop.f32.mrf.mxu0
      %v690 = vadd.f32 0.0, %v689
      %691 = vdwg.mxu0
      %v692 = vadd.f32 %v637, %v674
      %v693 = vadd.f32 %v638, %v688
      %v694 = vadd.f32 %v639, %v676
      %v695 = vadd.f32 %v640, %v690
      %v696 = vld [vmem:[%s2] sm:$0xff]
      %v697 = vld [vmem:[%s2 + $0x8] sm:$0xff]
      %699 = vset.pattern.permute.xlu0 0
      %700 = vperm.xlu0 %699, %v696
      %v701 = vpop.permute.xlu0 %700
      %704 = vset.pattern.permute.xlu0 0
      %705 = vperm.xlu0 %704, %v697
      %v706 = vpop.permute.xlu0 %705
      %v708 = vadd.f32 %v692, %v701
      %v709 = vadd.f32 %v693, %v701
      %v710 = vadd.f32 %v694, %v706
      %v711 = vadd.f32 %v695, %v706
      %v712 = vld [vmem:[%s3] sm:$0x3]
      %v714 = vperm.slane %v712, 0
      %v715 = vperm.slane %v712, 1
      %v718 = vmul.f32 %v708, %v714
      %v719 = vmul.f32 %v709, %v715
      %v720 = vmul.f32 %v710, %v714
      %v721 = vmul.f32 %v711, %v715
      %vm722 = vcmask 31744
      %v723 = vsel %vm722, %v719, 0.0
      %v724 = vadd.f32 %v718, %v723
      %725 = vadd.xlane.f32.xlu0 %v724
      %v726 = vpop.xlane.xlu0 %725
      %v727 = vsel %vm722, %v721, 0.0
      %v728 = vadd.f32 %v720, %v727
      %729 = vadd.xlane.f32.xlu0 %v728
      %v730 = vpop.xlane.xlu0 %729
      %v731 = vmul.f32 %v708, %v708
      %v732 = vmul.f32 %v709, %v709
      %v733 = vmul.f32 %v710, %v710
      %v734 = vmul.f32 %v711, %v711
      %v735 = vmul.f32 %v731, %v714
      %v736 = vmul.f32 %v732, %v715
      %v737 = vmul.f32 %v733, %v714
      %v738 = vmul.f32 %v734, %v715
      %v739 = vsel %vm722, %v736, 0.0
      %v740 = vadd.f32 %v735, %v739
      %741 = vadd.xlane.f32.xlu0 %v740
      %v742 = vpop.xlane.xlu0 %741
      %v743 = vsel %vm722, %v738, 0.0
      %v744 = vadd.f32 %v737, %v743
      %745 = vadd.xlane.f32.xlu0 %v744
      %v746 = vpop.xlane.xlu0 %745
      %v747 = vmul.f32 %v726, 0.008264462
      %v748 = vmul.f32 %v730, 0.008264462
      %v749 = vmul.f32 %v742, 0.008264462
      %v750 = vmul.f32 %v746, 0.008264462
      %v751 = vmul.f32 %v747, %v747
      %v752 = vmul.f32 %v748, %v748
      %v753 = vsub.f32 %v749, %v751
      %v754 = vsub.f32 %v750, %v752
      %v755 = vmax.f32 %v753, 0.0
      %v756 = vmax.f32 %v754, 0.0
      %v757 = vsub.f32 %v708, %v747
      %v758 = vsub.f32 %v709, %v747
      %v759 = vsub.f32 %v710, %v748
      %v760 = vsub.f32 %v711, %v748
      %v761 = vadd.f32 %v755, 1e-05
      %v762 = vadd.f32 %v756, 1e-05
      %v763 = vrsqrt.pop %v761
      %v764 = vmul.f32 %v763, %v761
      %v765 = vmul.f32 %v764, %v763
      %v766 = vmul.f32 0.5, %v765
      %v767 = vsub.f32 1.5, %v766
      %v768 = vmul.f32 %v763, %v767
      %vm769 = vweird.f32 %v761
      %vm770 = vweird.f32 %v763
      %vm771 = vmor %vm769, %vm770
      %v772 = vsel %vm771, %v763, %v768
      %v773 = vrsqrt.pop %v762
      %v774 = vmul.f32 %v773, %v762
      %v775 = vmul.f32 %v774, %v773
      %v776 = vmul.f32 0.5, %v775
      %v777 = vsub.f32 1.5, %v776
      %v778 = vmul.f32 %v773, %v777
      %vm779 = vweird.f32 %v762
      %vm780 = vweird.f32 %v773
      %vm781 = vmor %vm779, %vm780
      %v782 = vsel %vm781, %v773, %v778
      %v783 = vmul.f32 %v757, %v772
      %v784 = vmul.f32 %v758, %v772
      %v785 = vmul.f32 %v759, %v782
      %v786 = vmul.f32 %v760, %v782
      %v787 = vmax.f32 %v783, 0.0
      %v788 = vmax.f32 %v784, 0.0
      %v789 = vmax.f32 %v785, 0.0
      %v790 = vmax.f32 %v786, 0.0
      %791 = vst [vmem:[%s197] sm:$0xff] %v787
      %792 = vst.msk [vmem:[%s197 + $0x8] sm:$0xff] %vm722, %v788
      %793 = vst [vmem:[%s197 + $0x10] sm:$0xff] %v789
      %794 = vst.msk [vmem:[%s197 + $0x18] sm:$0xff] %vm722, %v790
      %p795 = scmp.lt.s32.totalorder %s15, 1
      %s796 = scalar_select %p795, %s15, 1
      %s797 = smul.addr %s796, 4
      %s798 = smul.addr %s797, 8
      %s799 = scalar_lea.vmem %s4, %s798
      // Predicated region
      $region37: #{encoder_forward.7} parent=35 // pred_check
        %p800 = pneg %p122
      $region38: #{encoder_forward.7} parent=35 // pred_check_branch
        %802 = sbr.rel (%p800) target = $region40
      $region39: #{encoder_forward.7} parent=35 // pred_region
        _
      $region40: #{encoder_forward.7} parent=35 // pred_fallthru
        _
    $region36: #{encoder_forward.7} parent=5 // pred_fallthru
      _
    %p803 = scmp.le.s32.totalorder 2, %s10
    // Predicated region
    $region41: #{encoder_forward.7} parent=5 // pred_check
      %p804 = pneg %p803
    $region42: #{encoder_forward.7} parent=5 // pred_check_branch
      %806 = sbr.rel (%p804) target = $region44
    $region43: #{encoder_forward.7} parent=5 // pred_region
      %s807 = ssub.s32 %s10, 2
      // Predicated region
      $region45: #{encoder_forward.7} parent=43 // pred_check
        %p808 = pneg %p128
      $region46: #{encoder_forward.7} parent=43 // pred_check_branch
        %810 = sbr.rel (%p808) target = $region48
      $region47: #{encoder_forward.7} parent=43 // pred_region
        %p811 = scmp.lt.s32.totalorder %s16, 1
        %s812 = scalar_select %p811, %s16, 1
        %s813 = smul.addr %s812, 4
        %s814 = smul.addr %s813, 8
        %s815 = scalar_lea.vmem %s4, %s814
      $region48: #{encoder_forward.7} parent=43 // pred_fallthru
        _
    $region44: #{encoder_forward.7} parent=5 // pred_fallthru
      _
  $region6: #{encoder_forward.7} parent=0 // loop_footer
    %s14 = sadd.s32 1, %s10
  $region7: #{encoder_forward.7} parent=0 // loop_footer_branch
    %9 = sbr.rel target = $region3
  $region8: #{encoder_forward.7} parent=0 // loop_exit
    _

// kernel: encoder_forward.8
$region0: #{encoder_forward.8}
  #allocation0 [shape = 'u32[]', space=smem, size = 0x4, offset = 0x4, fixed_abs, tag = 'smem constant byte address 0x4 - core index']
  #allocation1 [shape = 'u32[72,128]{1,0:T(1,128)}', space=vmem, size = 0x9000, scoped, tag = 'internal scratch']
  %s0 = inlined_call_operand.vmem [shape: f32[2,4,16,37], index: 0, kind: input, shape index: {}]
  %s1 = inlined_call_operand.vmem [shape: bf16[9,32,16], index: 1, kind: input, shape index: {}]
  %s2 = inlined_call_operand.vmem [shape: f32[32,1], index: 2, kind: input, shape index: {}]
  %s3 = inlined_call_operand.vmem [shape: f32[1,30], index: 3, kind: input, shape index: {}]
  %s4 = inlined_call_operand.vmem [shape: f32[2,32,30], index: 4, kind: output, shape index: {}]
  %s5 = sld [smem:[#allocation0]]
  $region49: #{encoder_forward.8} parent=0
    _
  %s7 = ssub.s32 1, %s5
  %s8 = scalar_select 0, %s7, %s5
  loop: start=0, step=1, limit=4
  $region2: #{encoder_forward.8} parent=0 // loop_pre_header
    _
  $region3: #{encoder_forward.8} parent=0 // loop_header
    %s10 = sphi 0, %s14
    %p11 = scmp.ge.s32.totalorder %s10, 4
    %s20 = sphi 0, %s22
    %s23 = sphi 0, %s20
    %s24 = sphi 0, %s23
    %s40 = sphi 0, %s24
    %s44 = sphi 0, %s44
    %s46 = sphi 0, %s44
    %s47 = sphi 0, %s46
    %s61 = sphi 0, %s47
    %s65 = sphi 0, %s65
    %s67 = sphi 0, %s65
    %s68 = sphi 0, %s67
    %s82 = sphi 0, %s68
    %s86 = sphi 0, %s86
    %s88 = sphi 0, %s86
    %s89 = sphi 0, %s88
    %s103 = sphi 0, %s89
    %s109 = sphi 0, %s111
    %s112 = sphi 0, %s109
    %s113 = sphi 0, %s112
    %s129 = sphi 0, %s113
  $region4: #{encoder_forward.8} parent=0 // loop_header_branch
    %13 = sbr.rel (%p11) target = $region8
  $region5: #{encoder_forward.8} parent=0 // loop_body
    %s15 = ssub.s32 %s10, 1
    %s16 = ssub.s32 %s10, 2
    %s17 = sadd.s32 %s10, 1
    %s18 = ssub.s32 %s10, %s17
    %p19 = scmp.eq.s32.totalorder %s18, 0
    %s21 = sadd.s32 %s20, 1
    %s22 = scalar_select %p19, %s20, %s21
    %p25 = pneg %p19
    %p26 = scmp.eq.s32.totalorder %s10, 1
    %p27 = por %p25, %p26
    %p28 = scmp.ne.s32.totalorder %s20, %s23
    %p29 = scmp.eq.s32.totalorder %s10, 0
    %p30 = por %p28, %p29
    %p31 = scmp.ne.s32.totalorder %s20, %s23
    %p32 = scmp.eq.s32.totalorder %s15, 1
    %p33 = por %p31, %p32
    %p34 = scmp.ne.s32.totalorder %s23, %s24
    %p35 = scmp.eq.s32.totalorder %s15, 0
    %p36 = por %p34, %p35
    %p37 = scmp.ne.s32.totalorder %s23, %s24
    %p38 = scmp.eq.s32.totalorder %s16, 1
    %p39 = por %p37, %p38
    %p41 = scmp.ne.s32.totalorder %s24, %s40
    %p42 = scmp.eq.s32.totalorder %s16, 0
    %p43 = por %p41, %p42
    %s45 = sadd.s32 %s44, 1
    %p48 = scmp.eq.s32.totalorder %s10, 1
    %p49 = scmp.ne.s32.totalorder %s44, %s46
    %p50 = scmp.eq.s32.totalorder %s10, 0
    %p51 = por %p49, %p50
    %p52 = scmp.ne.s32.totalorder %s44, %s46
    %p53 = scmp.eq.s32.totalorder %s15, 1
    %p54 = por %p52, %p53
    %p55 = scmp.ne.s32.totalorder %s46, %s47
    %p56 = scmp.eq.s32.totalorder %s15, 0
    %p57 = por %p55, %p56
    %p58 = scmp.ne.s32.totalorder %s46, %s47
    %p59 = scmp.eq.s32.totalorder %s16, 1
    %p60 = por %p58, %p59
    %p62 = scmp.ne.s32.totalorder %s47, %s61
    %p63 = scmp.eq.s32.totalorder %s16, 0
    %p64 = por %p62, %p63
    %s66 = sadd.s32 %s65, 1
    %p69 = scmp.eq.s32.totalorder %s10, 1
    %p70 = scmp.ne.s32.totalorder %s65, %s67
    %p71 = scmp.eq.s32.totalorder %s10, 0
    %p72 = por %p70, %p71
    %p73 = scmp.ne.s32.totalorder %s65, %s67
    %p74 = scmp.eq.s32.totalorder %s15, 1
    %p75 = por %p73, %p74
    %p76 = scmp.ne.s32.totalorder %s67, %s68
    %p77 = scmp.eq.s32.totalorder %s15, 0
    %p78 = por %p76, %p77
    %p79 = scmp.ne.s32.totalorder %s67, %s68
    %p80 = scmp.eq.s32.totalorder %s16, 1
    %p81 = por %p79, %p80
    %p83 = scmp.ne.s32.totalorder %s68, %s82
    %p84 = scmp.eq.s32.totalorder %s16, 0
    %p85 = por %p83, %p84
    %s87 = sadd.s32 %s86, 1
    %p90 = scmp.eq.s32.totalorder %s10, 1
    %p91 = scmp.ne.s32.totalorder %s86, %s88
    %p92 = scmp.eq.s32.totalorder %s10, 0
    %p93 = por %p91, %p92
    %p94 = scmp.ne.s32.totalorder %s86, %s88
    %p95 = scmp.eq.s32.totalorder %s15, 1
    %p96 = por %p94, %p95
    %p97 = scmp.ne.s32.totalorder %s88, %s89
    %p98 = scmp.eq.s32.totalorder %s15, 0
    %p99 = por %p97, %p98
    %p100 = scmp.ne.s32.totalorder %s88, %s89
    %p101 = scmp.eq.s32.totalorder %s16, 1
    %p102 = por %p100, %p101
    %p104 = scmp.ne.s32.totalorder %s89, %s103
    %p105 = scmp.eq.s32.totalorder %s16, 0
    %p106 = por %p104, %p105
    %s107 = ssub.s32 %s10, %s17
    %p108 = scmp.eq.s32.totalorder %s107, 0
    %s110 = sadd.s32 %s109, 1
    %s111 = scalar_select %p108, %s109, %s110
    %p114 = pneg %p108
    %p115 = scmp.eq.s32.totalorder %s10, 1
    %p116 = por %p114, %p115
    %p117 = scmp.ne.s32.totalorder %s109, %s112
    %p118 = scmp.eq.s32.totalorder %s10, 0
    %p119 = por %p117, %p118
    %p120 = scmp.ne.s32.totalorder %s109, %s112
    %p121 = scmp.eq.s32.totalorder %s15, 1
    %p122 = por %p120, %p121
    %p123 = scmp.ne.s32.totalorder %s112, %s113
    %p124 = scmp.eq.s32.totalorder %s15, 0
    %p125 = por %p123, %p124
    %p126 = scmp.ne.s32.totalorder %s112, %s113
    %p127 = scmp.eq.s32.totalorder %s16, 1
    %p128 = por %p126, %p127
    %p130 = scmp.ne.s32.totalorder %s113, %s129
    %p131 = scmp.eq.s32.totalorder %s16, 0
    %p132 = por %p130, %p131
    %p133 = scmp.le.s32.totalorder 1, %s10
    %p134 = scmp.lt.s32.totalorder %s10, 3
    %p135 = pnand %p133, %p134
    %p136 = pneg %p135
    // Predicated region
    $region9: #{encoder_forward.8} parent=5 // pred_check
      _
    $region10: #{encoder_forward.8} parent=5 // pred_check_branch
      %138 = sbr.rel (%p135) target = $region12
    $region11: #{encoder_forward.8} parent=5 // pred_region
      %s139 = ssub.s32 %s10, 1
      // Predicated region
      $region13: #{encoder_forward.8} parent=11 // pred_check
        %p140 = pneg %p57
      $region14: #{encoder_forward.8} parent=11 // pred_check_branch
        %142 = sbr.rel (%p140) target = $region16
      $region15: #{encoder_forward.8} parent=11 // pred_region
        _
      $region16: #{encoder_forward.8} parent=11 // pred_fallthru
        _
      // Predicated region
      $region17: #{encoder_forward.8} parent=11 // pred_check
        %p143 = pneg %p78
      $region18: #{encoder_forward.8} parent=11 // pred_check_branch
        %145 = sbr.rel (%p143) target = $region20
      $region19: #{encoder_forward.8} parent=11 // pred_region
        _
      $region20: #{encoder_forward.8} parent=11 // pred_fallthru
        _
      // Predicated region
      $region21: #{encoder_forward.8} parent=11 // pred_check
        %p146 = pneg %p99
      $region22: #{encoder_forward.8} parent=11 // pred_check_branch
        %148 = sbr.rel (%p146) target = $region24
      $region23: #{encoder_forward.8} parent=11 // pred_region
        _
      $region24: #{encoder_forward.8} parent=11 // pred_fallthru
        _
    $region12: #{encoder_forward.8} parent=5 // pred_fallthru
      _
    %p149 = scmp.lt.s32.totalorder %s10, 2
    // Predicated region
    $region25: #{encoder_forward.8} parent=5 // pred_check
      %p150 = pneg %p149
    $region26: #{encoder_forward.8} parent=5 // pred_check_branch
      %152 = sbr.rel (%p150) target = $region28
    $region27: #{encoder_forward.8} parent=5 // pred_region
      // Predicated region
      $region29: #{encoder_forward.8} parent=27 // pred_check
        %p153 = pneg %p30
      $region30: #{encoder_forward.8} parent=27 // pred_check_branch
        %155 = sbr.rel (%p153) target = $region32
      $region31: #{encoder_forward.8} parent=27 // pred_region
        %p156 = scmp.lt.s32.totalorder %s10, 1
        %s157 = scalar_select %p156, %s10, 1
        %s158 = smul.addr %s157, 8
        %s159 = smul.addr %s158, 8
        %s160 = scalar_lea.vmem %s0, %s159
      $region32: #{encoder_forward.8} parent=27 // pred_fallthru
        _
    $region28: #{encoder_forward.8} parent=5 // pred_fallthru
      _
    %p161 = scmp.le.s32.totalorder 1, %s10
    %p162 = scmp.lt.s32.totalorder %s10, 3
    %p163 = pnand %p161, %p162
    %p164 = pneg %p163
    // Predicated region
    $region33: #{encoder_forward.8} parent=5 // pred_check
      _
    $region34: #{encoder_forward.8} parent=5 // pred_check_branch
      %166 = sbr.rel (%p163) target = $region36
    $region35: #{encoder_forward.8} parent=5 // pred_region
      %s167 = ssub.s32 %s10, 1
      %p168 = scmp.lt.s32.totalorder %s15, 1
      %s169 = scalar_select %p168, %s15, 1
      %s170 = smul.addr %s169, 8
      %s171 = smul.addr %s170, 8
      %s172 = scalar_lea.vmem %s0, %s171
      %p173 = pneg %p36
      %p174 = pneg %p33
      %p175 = pneg %p57
      %p176 = pneg %p54
      %p177 = pneg %p78
      %p178 = pneg %p75
      %p179 = pneg %p99
      %p180 = pneg %p96
      %p181 = pneg %p125
      %p182 = pneg %p122
      %p183 = scmp.lt.s32.totalorder %s15, 1
      %s184 = scalar_select %p183, %s15, 1
      %s185 = smul.addr %s184, 4
      %s186 = smul.addr %s185, 8
      %s187 = scalar_lea.vmem %s4, %s186
      %p188 = scmp.lt.s32.totalorder %s15, 1
      %s189 = scalar_select %p188, %s15, 1
      %s190 = smul.addr %s189, 8
      %s191 = smul.addr %s190, 8
      %s192 = scalar_lea.vmem %s0, %s191
      %p193 = scmp.lt.s32.totalorder %s15, 1
      %s194 = scalar_select %p193, %s15, 1
      %s195 = smul.addr %s194, 4
      %s196 = smul.addr %s195, 8
      %s197 = scalar_lea.vmem %s4, %s196
      %v199 = vld [vmem:[%s192] sm:$0xff]
      %v200 = vld [vmem:[%s192 + $0x8] sm:$0xff]
      %v201 = vpack.c.bf16 %v199, %v199
      %v202 = vpack.c.bf16 %v200, %v200
      %s203 = scalar_lea.vmem %s192, 16
      %v204 = vld [vmem:[%s203] sm:$0xff]
      %v205 = vld [vmem:[%s203 + $0x8] sm:$0xff]
      %v206 = vpack.c.bf16 %v204, %v204
      %v207 = vpack.c.bf16 %v205, %v205
      %s208 = scalar_lea.vmem %s192, 32
      %v209 = vld [vmem:[%s208] sm:$0xff]
      %v210 = vld [vmem:[%s208 + $0x8] sm:$0xff]
      %v211 = vpack.c.bf16 %v209, %v209
      %v212 = vpack.c.bf16 %v210, %v210
      %s213 = scalar_lea.vmem %s192, 48
      %v214 = vld [vmem:[%s213] sm:$0xff]
      %v215 = vld [vmem:[%s213 + $0x8] sm:$0xff]
      %v216 = vpack.c.bf16 %v214, %v214
      %v217 = vpack.c.bf16 %v215, %v215
      %v218 = vld [vmem:[%s1] sm:$0xf]
      %v219 = vld [vmem:[%s1 + $0x4] sm:$0xf]
      %v220 = vld [vmem:[%s1 + $0x8] sm:$0xf]
      %v221 = vld [vmem:[%s1 + $0xc] sm:$0xf]
      %s222 = scalar_lea.vmem %s1, 16
      %v223 = vld [vmem:[%s222] sm:$0xf]
      %v224 = vld [vmem:[%s222 + $0x4] sm:$0xf]
      %v225 = vld [vmem:[%s222 + $0x8] sm:$0xf]
      %v226 = vld [vmem:[%s222 + $0xc] sm:$0xf]
      %v231 = vunpack.c.l.b16 %v223
      %v232 = vunpack.c.l.b16 %v224
      %v233 = vunpack.c.l.b16 %v225
      %v234 = vunpack.c.l.b16 %v226
      %v235 = vpack.c.b16 %v232, %v231
      %v236 = vpack.c.b16 %v234, %v233
      %v239 = vunpack.c.l.b16 %v206
      %v240 = vunpack.c.l.b16 %v207
      %v241 = vpack.c.b16 %v240, %v239
      %vm243 = vcmask 130048
      %v245 = vsel %vm243, %v235, 0
      %v248 = vsel %vm243, %v236, 0
      %250 = vmatpush.bf16.msra.mxu0 0
      %251 = vmatpush.bf16.msra.mxu0 0
      %252 = vmatpush.bf16.msra.mxu0 0
      %253 = vmatpush.bf16.msra.mxu0 0
      %254 = vmatpush.bf16.msra.mxu0 0
      %255 = vmatpush.bf16.msra.mxu0 0
      %256 = vmatpush.bf16.msra.mxu0 0
      %257 = vmatpush.bf16.msra.mxu0 %v241
      %258 = vmatmul.bf16.gmra.mxu0 %v245
      %v259 = vpop.f32.mrf.mxu0
      %v260 = vadd.f32 0.0, %v259
      %v261 = vpop.f32.mrf.mxu0
      %v262 = vadd.f32 0.0, %v261
      %263 = vmatmul.bf16.gmra.mxu0 %v248
      %v264 = vpop.f32.mrf.mxu0
      %v265 = vadd.f32 0.0, %v264
      %v266 = vpop.f32.mrf.mxu0
      %v267 = vadd.f32 0.0, %v266
      %268 = vdwg.mxu0
      %v273 = vunpack.c.l.b16 %v218
      %v274 = vunpack.c.l.b16 %v219
      %v275 = vunpack.c.l.b16 %v220
      %v276 = vunpack.c.l.b16 %v221
      %v277 = vpack.c.b16 %v274, %v273
      %v278 = vpack.c.b16 %v276, %v275
      %v281 = vunpack.c.l.b16 %v201
      %v282 = vunpack.c.l.b16 %v202
      %v283 = vpack.c.b16 %v282, %v281
      %v286 = vsel %vm243, %v277, 0
      %v289 = vsel %vm243, %v278, 0
      %291 = vmatpush.bf16.msra.mxu0 0
      %292 = vmatpush.bf16.msra.mxu0 0
      %293 = vmatpush.bf16.msra.mxu0 0
      %294 = vmatpush.bf16.msra.mxu0 0
      %295 = vmatpush.bf16.msra.mxu0 0
      %296 = vmatpush.bf16.msra.mxu0 0
      %297 = vmatpush.bf16.msra.mxu0 0
      %298 = vmatpush.bf16.msra.mxu0 %v283
      %299 = vmatmul.bf16.gmra.mxu0 %v286
      %v300 = vpop.f32.mrf.mxu0
      %v301 = vadd.f32 %v260, %v300
      %v302 = vpop.f32.mrf.mxu0
      %v303 = vadd.f32 %v262, %v302
      %304 = vmatmul.bf16.gmra.mxu0 %v289
      %v305 = vpop.f32.mrf.mxu0
      %v306 = vadd.f32 %v265, %v305
      %v307 = vpop.f32.mrf.mxu0
      %v308 = vadd.f32 %v267, %v307
      %309 = vdwg.mxu0
      %s310 = scalar_lea.vmem %s1, 32
      %v311 = vld [vmem:[%s310] sm:$0xf]
      %v312 = vld [vmem:[%s310 + $0x4] sm:$0xf]
      %v313 = vld [vmem:[%s310 + $0x8] sm:$0xf]
      %v314 = vld [vmem:[%s310 + $0xc] sm:$0xf]
      %v319 = vunpack.c.l.b16 %v311
      %v320 = vunpack.c.l.b16 %v312
      %v321 = vunpack.c.l.b16 %v313
      %v322 = vunpack.c.l.b16 %v314
      %v323 = vpack.c.b16 %v320, %v319
      %v324 = vpack.c.b16 %v322, %v321
      %325 = vrot.lane.b32.xlu0 %v283, 127
      %v326 = vpop.permute.xlu0 %325
      %v329 = vsel %vm243, %v323, 0
      %v332 = vsel %vm243, %v324, 0
      %334 = vmatpush.bf16.msra.mxu0 0
      %335 = vmatpush.bf16.msra.mxu0 0
      %336 = vmatpush.bf16.msra.mxu0 0
      %337 = vmatpush.bf16.msra.mxu0 0
      %338 = vmatpush.bf16.msra.mxu0 0
      %339 = vmatpush.bf16.msra.mxu0 0
      %340 = vmatpush.bf16.msra.mxu0 0
      %341 = vmatpush.bf16.msra.mxu0 %v326
      %342 = vmatmul.bf16.gmra.mxu0 %v329
      %v343 = vpop.f32.mrf.mxu0
      %v344 = vadd.f32 0.0, %v343
      %v345 = vpop.f32.mrf.mxu0
      %v346 = vadd.f32 0.0, %v345
      %347 = vmatmul.bf16.gmra.mxu0 %v332
      %v348 = vpop.f32.mrf.mxu0
      %v349 = vadd.f32 0.0, %v348
      %v350 = vpop.f32.mrf.mxu0
      %v351 = vadd.f32 0.0, %v350
      %352 = vdwg.mxu0
      %v353 = vadd.f32 %v301, %v344
      %v354 = vadd.f32 %v303, %v346
      %v355 = vadd.f32 %v306, %v349
      %v356 = vadd.f32 %v308, %v351
      %s357 = scalar_lea.vmem %s1, 48
      %v358 = vld [vmem:[%s357] sm:$0xf]
      %v359 = vld [vmem:[%s357 + $0x4] sm:$0xf]
      %v360 = vld [vmem:[%s357 + $0x8] sm:$0xf]
      %v361 = vld [vmem:[%s357 + $0xc] sm:$0xf]
      %v366 = vunpack.c.l.b16 %v358
      %v367 = vunpack.c.l.b16 %v359
      %v368 = vunpack.c.l.b16 %v360
      %v369 = vunpack.c.l.b16 %v361
      %v370 = vpack.c.b16 %v367, %v366
      %v371 = vpack.c.b16 %v369, %v368
      %v374 = vunpack.c.l.b16 %v211
      %v375 = vunpack.c.l.b16 %v212
      %v376 = vpack.c.b16 %v375, %v374
      %v379 = vsel %vm243, %v370, 0
      %v382 = vsel %vm243, %v371, 0
      %384 = vmatpush.bf16.msra.mxu0 0
      %385 = vmatpush.bf16.msra.mxu0 0
      %386 = vmatpush.bf16.msra.mxu0 0
      %387 = vmatpush.bf16.msra.mxu0 0
      %388 = vmatpush.bf16.msra.mxu0 0
      %389 = vmatpush.bf16.msra.mxu0 0
      %390 = vmatpush.bf16.msra.mxu0 0
      %391 = vmatpush.bf16.msra.mxu0 %v376
      %392 = vmatmul.bf16.gmra.mxu0 %v379
      %v393 = vpop.f32.mrf.mxu0
      %v394 = vadd.f32 0.0, %v393
      %v395 = vpop.f32.mrf.mxu0
      %v396 = vadd.f32 0.0, %v395
      %397 = vmatmul.bf16.gmra.mxu0 %v382
      %v398 = vpop.f32.mrf.mxu0
      %v399 = vadd.f32 0.0, %v398
      %v400 = vpop.f32.mrf.mxu0
      %v401 = vadd.f32 0.0, %v400
      %402 = vdwg.mxu0
      %v403 = vadd.f32 %v353, %v394
      %v404 = vadd.f32 %v354, %v396
      %v405 = vadd.f32 %v355, %v399
      %v406 = vadd.f32 %v356, %v401
      %s407 = scalar_lea.vmem %s1, 64
      %v408 = vld [vmem:[%s407] sm:$0xf]
      %v409 = vld [vmem:[%s407 + $0x4] sm:$0xf]
      %v410 = vld [vmem:[%s407 + $0x8] sm:$0xf]
      %v411 = vld [vmem:[%s407 + $0xc] sm:$0xf]
      %v416 = vunpack.c.l.b16 %v408
      %v417 = vunpack.c.l.b16 %v409
      %v418 = vunpack.c.l.b16 %v410
      %v419 = vunpack.c.l.b16 %v411
      %v420 = vpack.c.b16 %v417, %v416
      %v421 = vpack.c.b16 %v419, %v418
      %v424 = vunpack.c.l.b16 %v216
      %v425 = vunpack.c.l.b16 %v217
      %v426 = vpack.c.b16 %v425, %v424
      %v429 = vsel %vm243, %v420, 0
      %v432 = vsel %vm243, %v421, 0
      %434 = vmatpush.bf16.msra.mxu0 0
      %435 = vmatpush.bf16.msra.mxu0 0
      %436 = vmatpush.bf16.msra.mxu0 0
      %437 = vmatpush.bf16.msra.mxu0 0
      %438 = vmatpush.bf16.msra.mxu0 0
      %439 = vmatpush.bf16.msra.mxu0 0
      %440 = vmatpush.bf16.msra.mxu0 0
      %441 = vmatpush.bf16.msra.mxu0 %v426
      %442 = vmatmul.bf16.gmra.mxu0 %v429
      %v443 = vpop.f32.mrf.mxu0
      %v444 = vadd.f32 0.0, %v443
      %v445 = vpop.f32.mrf.mxu0
      %v446 = vadd.f32 0.0, %v445
      %447 = vmatmul.bf16.gmra.mxu0 %v432
      %v448 = vpop.f32.mrf.mxu0
      %v449 = vadd.f32 0.0, %v448
      %v450 = vpop.f32.mrf.mxu0
      %v451 = vadd.f32 0.0, %v450
      %452 = vdwg.mxu0
      %v453 = vadd.f32 %v403, %v444
      %v454 = vadd.f32 %v404, %v446
      %v455 = vadd.f32 %v405, %v449
      %v456 = vadd.f32 %v406, %v451
      %s457 = scalar_lea.vmem %s1, 80
      %v458 = vld [vmem:[%s457] sm:$0xf]
      %v459 = vld [vmem:[%s457 + $0x4] sm:$0xf]
      %v460 = vld [vmem:[%s457 + $0x8] sm:$0xf]
      %v461 = vld [vmem:[%s457 + $0xc] sm:$0xf]
      %v466 = vunpack.c.l.b16 %v458
      %v467 = vunpack.c.l.b16 %v459
      %v468 = vunpack.c.l.b16 %v460
      %v469 = vunpack.c.l.b16 %v461
      %v470 = vpack.c.b16 %v467, %v466
      %v471 = vpack.c.b16 %v469, %v468
      %472 = vrot.lane.b32.xlu0 %v376, 127
      %v473 = vpop.permute.xlu0 %472
      %v476 = vsel %vm243, %v470, 0
      %v479 = vsel %vm243, %v471, 0
      %481 = vmatpush.bf16.msra.mxu0 0
      %482 = vmatpush.bf16.msra.mxu0 0
      %483 = vmatpush.bf16.msra.mxu0 0
      %484 = vmatpush.bf16.msra.mxu0 0
      %485 = vmatpush.bf16.msra.mxu0 0
      %486 = vmatpush.bf16.msra.mxu0 0
      %487 = vmatpush.bf16.msra.mxu0 0
      %488 = vmatpush.bf16.msra.mxu0 %v473
      %489 = vmatmul.bf16.gmra.mxu0 %v476
      %v490 = vpop.f32.mrf.mxu0
      %v491 = vadd.f32 0.0, %v490
      %v492 = vpop.f32.mrf.mxu0
      %v493 = vadd.f32 0.0, %v492
      %494 = vmatmul.bf16.gmra.mxu0 %v479
      %v495 = vpop.f32.mrf.mxu0
      %v496 = vadd.f32 0.0, %v495
      %v497 = vpop.f32.mrf.mxu0
      %v498 = vadd.f32 0.0, %v497
      %499 = vdwg.mxu0
      %v500 = vadd.f32 %v453, %v491
      %v501 = vadd.f32 %v454, %v493
      %v502 = vadd.f32 %v455, %v496
      %v503 = vadd.f32 %v456, %v498
      %s504 = scalar_lea.vmem %s1, 96
      %v505 = vld [vmem:[%s504] sm:$0xf]
      %v506 = vld [vmem:[%s504 + $0x4] sm:$0xf]
      %v507 = vld [vmem:[%s504 + $0x8] sm:$0xf]
      %v508 = vld [vmem:[%s504 + $0xc] sm:$0xf]
      %v513 = vunpack.c.l.b16 %v505
      %v514 = vunpack.c.l.b16 %v506
      %v515 = vunpack.c.l.b16 %v507
      %v516 = vunpack.c.l.b16 %v508
      %v517 = vpack.c.b16 %v514, %v513
      %v518 = vpack.c.b16 %v516, %v515
      %519 = vrot.lane.b32.xlu0 %v283, 122
      %v520 = vpop.permute.xlu0 %519
      %v523 = vsel %vm243, %v517, 0
      %v526 = vsel %vm243, %v518, 0
      %528 = vmatpush.bf16.msra.mxu0 0
      %529 = vmatpush.bf16.msra.mxu0 0
      %530 = vmatpush.bf16.msra.mxu0 0
      %531 = vmatpush.bf16.msra.mxu0 0
      %532 = vmatpush.bf16.msra.mxu0 0
      %533 = vmatpush.bf16.msra.mxu0 0
      %534 = vmatpush.bf16.msra.mxu0 0
      %535 = vmatpush.bf16.msra.mxu0 %v520
      %536 = vmatmul.bf16.gmra.mxu0 %v523
      %v537 = vpop.f32.mrf.mxu0
      %v538 = vadd.f32 0.0, %v537
      %v539 = vpop.f32.mrf.mxu0
      %v540 = vadd.f32 0.0, %v539
      %541 = vmatmul.bf16.gmra.mxu0 %v526
      %v542 = vpop.f32.mrf.mxu0
      %v543 = vadd.f32 0.0, %v542
      %v544 = vpop.f32.mrf.mxu0
      %v545 = vadd.f32 0.0, %v544
      %546 = vdwg.mxu0
      %v547 = vadd.f32 %v500, %v538
      %v548 = vadd.f32 %v501, %v540
      %v549 = vadd.f32 %v502, %v543
      %v550 = vadd.f32 %v503, %v545
      %s551 = scalar_lea.vmem %s1, 112
      %v552 = vld [vmem:[%s551] sm:$0xf]
      %v553 = vld [vmem:[%s551 + $0x4] sm:$0xf]
      %v554 = vld [vmem:[%s551 + $0x8] sm:$0xf]
      %v555 = vld [vmem:[%s551 + $0xc] sm:$0xf]
      %v560 = vunpack.c.l.b16 %v552
      %v561 = vunpack.c.l.b16 %v553
      %v562 = vunpack.c.l.b16 %v554
      %v563 = vunpack.c.l.b16 %v555
      %v564 = vpack.c.b16 %v561, %v560
      %v565 = vpack.c.b16 %v563, %v562
      %566 = vrot.lane.b32.xlu0 %v241, 122
      %v567 = vpop.permute.xlu0 %566
      %v570 = vsel %vm243, %v564, 0
      %v573 = vsel %vm243, %v565, 0
      %575 = vmatpush.bf16.msra.mxu0 0
      %576 = vmatpush.bf16.msra.mxu0 0
      %577 = vmatpush.bf16.msra.mxu0 0
      %578 = vmatpush.bf16.msra.mxu0 0
      %579 = vmatpush.bf16.msra.mxu0 0
      %580 = vmatpush.bf16.msra.mxu0 0
      %581 = vmatpush.bf16.msra.mxu0 0
      %582 = vmatpush.bf16.msra.mxu0 %v567
      %583 = vmatmul.bf16.gmra.mxu0 %v570
      %v584 = vpop.f32.mrf.mxu0
      %v585 = vadd.f32 0.0, %v584
      %v586 = vpop.f32.mrf.mxu0
      %v587 = vadd.f32 0.0, %v586
      %588 = vmatmul.bf16.gmra.mxu0 %v573
      %v589 = vpop.f32.mrf.mxu0
      %v590 = vadd.f32 0.0, %v589
      %v591 = vpop.f32.mrf.mxu0
      %v592 = vadd.f32 0.0, %v591
      %593 = vdwg.mxu0
      %v594 = vadd.f32 %v547, %v585
      %v595 = vadd.f32 %v548, %v587
      %v596 = vadd.f32 %v549, %v590
      %v597 = vadd.f32 %v550, %v592
      %s598 = scalar_lea.vmem %s1, 128
      %v599 = vld [vmem:[%s598] sm:$0xf]
      %v600 = vld [vmem:[%s598 + $0x4] sm:$0xf]
      %v601 = vld [vmem:[%s598 + $0x8] sm:$0xf]
      %v602 = vld [vmem:[%s598 + $0xc] sm:$0xf]
      %v607 = vunpack.c.l.b16 %v599
      %v608 = vunpack.c.l.b16 %v600
      %v609 = vunpack.c.l.b16 %v601
      %v610 = vunpack.c.l.b16 %v602
      %v611 = vpack.c.b16 %v608, %v607
      %v612 = vpack.c.b16 %v610, %v609
      %613 = vrot.lane.b32.xlu0 %v283, 121
      %v614 = vpop.permute.xlu0 %613
      %v617 = vsel %vm243, %v611, 0
      %v620 = vsel %vm243, %v612, 0
      %622 = vmatpush.bf16.msra.mxu0 0
      %623 = vmatpush.bf16.msra.mxu0 0
      %624 = vmatpush.bf16.msra.mxu0 0
      %625 = vmatpush.bf16.msra.mxu0 0
      %626 = vmatpush.bf16.msra.mxu0 0
      %627 = vmatpush.bf16.msra.mxu0 0
      %628 = vmatpush.bf16.msra.mxu0 0
      %629 = vmatpush.bf16.msra.mxu0 %v614
      %630 = vmatmul.bf16.gmra.mxu0 %v617
      %v631 = vpop.f32.mrf.mxu0
      %v632 = vadd.f32 0.0, %v631
      %v633 = vpop.f32.mrf.mxu0
      %v634 = vadd.f32 0.0, %v633
      %635 = vmatmul.bf16.gmra.mxu0 %v620
      %v636 = vpop.f32.mrf.mxu0
      %v637 = vadd.f32 0.0, %v636
      %v638 = vpop.f32.mrf.mxu0
      %v639 = vadd.f32 0.0, %v638
      %640 = vdwg.mxu0
      %v641 = vadd.f32 %v594, %v632
      %v642 = vadd.f32 %v595, %v634
      %v643 = vadd.f32 %v596, %v637
      %v644 = vadd.f32 %v597, %v639
      %v645 = vld [vmem:[%s2] sm:$0xff]
      %v646 = vld [vmem:[%s2 + $0x8] sm:$0xff]
      %v647 = vld [vmem:[%s2 + $0x10] sm:$0xff]
      %v648 = vld [vmem:[%s2 + $0x18] sm:$0xff]
      %650 = vset.pattern.permute.xlu0 0
      %651 = vperm.xlu0 %650, %v645
      %v652 = vpop.permute.xlu0 %651
      %655 = vset.pattern.permute.xlu0 0
      %656 = vperm.xlu0 %655, %v646
      %v657 = vpop.permute.xlu0 %656
      %660 = vset.pattern.permute.xlu0 0
      %661 = vperm.xlu0 %660, %v647
      %v662 = vpop.permute.xlu0 %661
      %665 = vset.pattern.permute.xlu0 0
      %666 = vperm.xlu0 %665, %v648
      %v667 = vpop.permute.xlu0 %666
      %v669 = vadd.f32 %v641, %v652
      %v670 = vadd.f32 %v642, %v657
      %v671 = vadd.f32 %v643, %v662
      %v672 = vadd.f32 %v644, %v667
      %v673 = vld [vmem:[%s3] sm:$0x1]
      %v675 = vperm.slane %v673, 0
      %v677 = vmul.f32 %v669, %v675
      %v678 = vmul.f32 %v670, %v675
      %v679 = vmul.f32 %v671, %v675
      %v680 = vmul.f32 %v672, %v675
      %vm681 = vcmask 244736
      %v682 = vsel %vm681, %v677, 0.0
      %683 = vadd.xlane.f32.xlu0 %v682
      %v684 = vpop.xlane.xlu0 %683
      %v685 = vsel %vm681, %v678, 0.0
      %686 = vadd.xlane.f32.xlu0 %v685
      %v687 = vpop.xlane.xlu0 %686
      %v688 = vsel %vm681, %v679, 0.0
      %689 = vadd.xlane.f32.xlu0 %v688
      %v690 = vpop.xlane.xlu0 %689
      %v691 = vsel %vm681, %v680, 0.0
      %692 = vadd.xlane.f32.xlu0 %v691
      %v693 = vpop.xlane.xlu0 %692
      %v694 = vmul.f32 %v669, %v669
      %v695 = vmul.f32 %v670, %v670
      %v696 = vmul.f32 %v671, %v671
      %v697 = vmul.f32 %v672, %v672
      %v698 = vmul.f32 %v694, %v675
      %v699 = vmul.f32 %v695, %v675
      %v700 = vmul.f32 %v696, %v675
      %v701 = vmul.f32 %v697, %v675
      %v702 = vsel %vm681, %v698, 0.0
      %703 = vadd.xlane.f32.xlu0 %v702
      %v704 = vpop.xlane.xlu0 %703
      %v705 = vsel %vm681, %v699, 0.0
      %706 = vadd.xlane.f32.xlu0 %v705
      %v707 = vpop.xlane.xlu0 %706
      %v708 = vsel %vm681, %v700, 0.0
      %709 = vadd.xlane.f32.xlu0 %v708
      %v710 = vpop.xlane.xlu0 %709
      %v711 = vsel %vm681, %v701, 0.0
      %712 = vadd.xlane.f32.xlu0 %v711
      %v713 = vpop.xlane.xlu0 %712
      %v714 = vmul.f32 %v684, 0.04
      %v715 = vmul.f32 %v687, 0.04
      %v716 = vmul.f32 %v690, 0.04
      %v717 = vmul.f32 %v693, 0.04
      %v718 = vmul.f32 %v704, 0.04
      %v719 = vmul.f32 %v707, 0.04
      %v720 = vmul.f32 %v710, 0.04
      %v721 = vmul.f32 %v713, 0.04
      %v722 = vmul.f32 %v714, %v714
      %v723 = vmul.f32 %v715, %v715
      %v724 = vmul.f32 %v716, %v716
      %v725 = vmul.f32 %v717, %v717
      %v726 = vsub.f32 %v718, %v722
      %v727 = vsub.f32 %v719, %v723
      %v728 = vsub.f32 %v720, %v724
      %v729 = vsub.f32 %v721, %v725
      %v730 = vmax.f32 %v726, 0.0
      %v731 = vmax.f32 %v727, 0.0
      %v732 = vmax.f32 %v728, 0.0
      %v733 = vmax.f32 %v729, 0.0
      %v734 = vsub.f32 %v669, %v714
      %v735 = vsub.f32 %v670, %v715
      %v736 = vsub.f32 %v671, %v716
      %v737 = vsub.f32 %v672, %v717
      %v738 = vadd.f32 %v730, 1e-05
      %v739 = vadd.f32 %v731, 1e-05
      %v740 = vadd.f32 %v732, 1e-05
      %v741 = vadd.f32 %v733, 1e-05
      %v742 = vrsqrt.pop %v738
      %v743 = vmul.f32 %v742, %v738
      %v744 = vmul.f32 %v743, %v742
      %v745 = vmul.f32 0.5, %v744
      %v746 = vsub.f32 1.5, %v745
      %v747 = vmul.f32 %v742, %v746
      %vm748 = vweird.f32 %v738
      %vm749 = vweird.f32 %v742
      %vm750 = vmor %vm748, %vm749
      %v751 = vsel %vm750, %v742, %v747
      %v752 = vrsqrt.pop %v739
      %v753 = vmul.f32 %v752, %v739
      %v754 = vmul.f32 %v753, %v752
      %v755 = vmul.f32 0.5, %v754
      %v756 = vsub.f32 1.5, %v755
      %v757 = vmul.f32 %v752, %v756
      %vm758 = vweird.f32 %v739
      %vm759 = vweird.f32 %v752
      %vm760 = vmor %vm758, %vm759
      %v761 = vsel %vm760, %v752, %v757
      %v762 = vrsqrt.pop %v740
      %v763 = vmul.f32 %v762, %v740
      %v764 = vmul.f32 %v763, %v762
      %v765 = vmul.f32 0.5, %v764
      %v766 = vsub.f32 1.5, %v765
      %v767 = vmul.f32 %v762, %v766
      %vm768 = vweird.f32 %v740
      %vm769 = vweird.f32 %v762
      %vm770 = vmor %vm768, %vm769
      %v771 = vsel %vm770, %v762, %v767
      %v772 = vrsqrt.pop %v741
      %v773 = vmul.f32 %v772, %v741
      %v774 = vmul.f32 %v773, %v772
      %v775 = vmul.f32 0.5, %v774
      %v776 = vsub.f32 1.5, %v775
      %v777 = vmul.f32 %v772, %v776
      %vm778 = vweird.f32 %v741
      %vm779 = vweird.f32 %v772
      %vm780 = vmor %vm778, %vm779
      %v781 = vsel %vm780, %v772, %v777
      %v782 = vmul.f32 %v734, %v751
      %v783 = vmul.f32 %v735, %v761
      %v784 = vmul.f32 %v736, %v771
      %v785 = vmul.f32 %v737, %v781
      %v786 = vmax.f32 %v782, 0.0
      %v787 = vmax.f32 %v783, 0.0
      %v788 = vmax.f32 %v784, 0.0
      %v789 = vmax.f32 %v785, 0.0
      %790 = vst.msk [vmem:[%s197] sm:$0xff] %vm681, %v786
      %791 = vst.msk [vmem:[%s197 + $0x8] sm:$0xff] %vm681, %v787
      %792 = vst.msk [vmem:[%s197 + $0x10] sm:$0xff] %vm681, %v788
      %793 = vst.msk [vmem:[%s197 + $0x18] sm:$0xff] %vm681, %v789
      %p794 = scmp.lt.s32.totalorder %s15, 1
      %s795 = scalar_select %p794, %s15, 1
      %s796 = smul.addr %s795, 4
      %s797 = smul.addr %s796, 8
      %s798 = scalar_lea.vmem %s4, %s797
      // Predicated region
      $region37: #{encoder_forward.8} parent=35 // pred_check
        %p799 = pneg %p122
      $region38: #{encoder_forward.8} parent=35 // pred_check_branch
        %801 = sbr.rel (%p799) target = $region40
      $region39: #{encoder_forward.8} parent=35 // pred_region
        _
      $region40: #{encoder_forward.8} parent=35 // pred_fallthru
        _
    $region36: #{encoder_forward.8} parent=5 // pred_fallthru
      _
    %p802 = scmp.le.s32.totalorder 2, %s10
    // Predicated region
    $region41: #{encoder_forward.8} parent=5 // pred_check
      %p803 = pneg %p802
    $region42: #{encoder_forward.8} parent=5 // pred_check_branch
      %805 = sbr.rel (%p803) target = $region44
    $region43: #{encoder_forward.8} parent=5 // pred_region
      %s806 = ssub.s32 %s10, 2
      // Predicated region
      $region45: #{encoder_forward.8} parent=43 // pred_check
        %p807 = pneg %p128
      $region46: #{encoder_forward.8} parent=43 // pred_check_branch
        %809 = sbr.rel (%p807) target = $region48
      $region47: #{encoder_forward.8} parent=43 // pred_region
        %p810 = scmp.lt.s32.totalorder %s16, 1
        %s811 = scalar_select %p810, %s16, 1
        %s812 = smul.addr %s811, 4
        %s813 = smul.addr %s812, 8
        %s814 = scalar_lea.vmem %s4, %s813
      $region48: #{encoder_forward.8} parent=43 // pred_fallthru
        _
    $region44: #{encoder_forward.8} parent=5 // pred_fallthru
      _
  $region6: #{encoder_forward.8} parent=0 // loop_footer
    %s14 = sadd.s32 1, %s10
  $region7: #{encoder_forward.8} parent=0 // loop_footer_branch
    %9 = sbr.rel target = $region3
  $region8: #{encoder_forward.8} parent=0 // loop_exit
    _

// kernel: encoder_forward.9
$region0: #{encoder_forward.9}
  #allocation0 [shape = 'u32[]', space=smem, size = 0x4, offset = 0x4, fixed_abs, tag = 'smem constant byte address 0x4 - core index']
  #allocation1 [shape = 'u32[72,128]{1,0:T(1,128)}', space=vmem, size = 0x9000, scoped, tag = 'internal scratch']
  %s0 = inlined_call_operand.vmem [shape: f32[2,4,32,10], index: 0, kind: input, shape index: {}]
  %s1 = inlined_call_operand.vmem [shape: bf16[9,64,32], index: 1, kind: input, shape index: {}]
  %s2 = inlined_call_operand.vmem [shape: f32[64,1], index: 2, kind: input, shape index: {}]
  %s3 = inlined_call_operand.vmem [shape: f32[1,6], index: 3, kind: input, shape index: {}]
  %s4 = inlined_call_operand.vmem [shape: f32[2,64,6], index: 4, kind: output, shape index: {}]
  %s5 = sld [smem:[#allocation0]]
  $region49: #{encoder_forward.9} parent=0
    _
  %s7 = ssub.s32 1, %s5
  %s8 = scalar_select 0, %s7, %s5
  loop: start=0, step=1, limit=4
  $region2: #{encoder_forward.9} parent=0 // loop_pre_header
    _
  $region3: #{encoder_forward.9} parent=0 // loop_header
    %s10 = sphi 0, %s14
    %p11 = scmp.ge.s32.totalorder %s10, 4
    %s20 = sphi 0, %s22
    %s23 = sphi 0, %s20
    %s24 = sphi 0, %s23
    %s40 = sphi 0, %s24
    %s44 = sphi 0, %s44
    %s46 = sphi 0, %s44
    %s47 = sphi 0, %s46
    %s61 = sphi 0, %s47
    %s65 = sphi 0, %s65
    %s67 = sphi 0, %s65
    %s68 = sphi 0, %s67
    %s82 = sphi 0, %s68
    %s86 = sphi 0, %s86
    %s88 = sphi 0, %s86
    %s89 = sphi 0, %s88
    %s103 = sphi 0, %s89
    %s109 = sphi 0, %s111
    %s112 = sphi 0, %s109
    %s113 = sphi 0, %s112
    %s129 = sphi 0, %s113
  $region4: #{encoder_forward.9} parent=0 // loop_header_branch
    %13 = sbr.rel (%p11) target = $region8
  $region5: #{encoder_forward.9} parent=0 // loop_body
    %s15 = ssub.s32 %s10, 1
    %s16 = ssub.s32 %s10, 2
    %s17 = sadd.s32 %s10, 1
    %s18 = ssub.s32 %s10, %s17
    %p19 = scmp.eq.s32.totalorder %s18, 0
    %s21 = sadd.s32 %s20, 1
    %s22 = scalar_select %p19, %s20, %s21
    %p25 = pneg %p19
    %p26 = scmp.eq.s32.totalorder %s10, 1
    %p27 = por %p25, %p26
    %p28 = scmp.ne.s32.totalorder %s20, %s23
    %p29 = scmp.eq.s32.totalorder %s10, 0
    %p30 = por %p28, %p29
    %p31 = scmp.ne.s32.totalorder %s20, %s23
    %p32 = scmp.eq.s32.totalorder %s15, 1
    %p33 = por %p31, %p32
    %p34 = scmp.ne.s32.totalorder %s23, %s24
    %p35 = scmp.eq.s32.totalorder %s15, 0
    %p36 = por %p34, %p35
    %p37 = scmp.ne.s32.totalorder %s23, %s24
    %p38 = scmp.eq.s32.totalorder %s16, 1
    %p39 = por %p37, %p38
    %p41 = scmp.ne.s32.totalorder %s24, %s40
    %p42 = scmp.eq.s32.totalorder %s16, 0
    %p43 = por %p41, %p42
    %s45 = sadd.s32 %s44, 1
    %p48 = scmp.eq.s32.totalorder %s10, 1
    %p49 = scmp.ne.s32.totalorder %s44, %s46
    %p50 = scmp.eq.s32.totalorder %s10, 0
    %p51 = por %p49, %p50
    %p52 = scmp.ne.s32.totalorder %s44, %s46
    %p53 = scmp.eq.s32.totalorder %s15, 1
    %p54 = por %p52, %p53
    %p55 = scmp.ne.s32.totalorder %s46, %s47
    %p56 = scmp.eq.s32.totalorder %s15, 0
    %p57 = por %p55, %p56
    %p58 = scmp.ne.s32.totalorder %s46, %s47
    %p59 = scmp.eq.s32.totalorder %s16, 1
    %p60 = por %p58, %p59
    %p62 = scmp.ne.s32.totalorder %s47, %s61
    %p63 = scmp.eq.s32.totalorder %s16, 0
    %p64 = por %p62, %p63
    %s66 = sadd.s32 %s65, 1
    %p69 = scmp.eq.s32.totalorder %s10, 1
    %p70 = scmp.ne.s32.totalorder %s65, %s67
    %p71 = scmp.eq.s32.totalorder %s10, 0
    %p72 = por %p70, %p71
    %p73 = scmp.ne.s32.totalorder %s65, %s67
    %p74 = scmp.eq.s32.totalorder %s15, 1
    %p75 = por %p73, %p74
    %p76 = scmp.ne.s32.totalorder %s67, %s68
    %p77 = scmp.eq.s32.totalorder %s15, 0
    %p78 = por %p76, %p77
    %p79 = scmp.ne.s32.totalorder %s67, %s68
    %p80 = scmp.eq.s32.totalorder %s16, 1
    %p81 = por %p79, %p80
    %p83 = scmp.ne.s32.totalorder %s68, %s82
    %p84 = scmp.eq.s32.totalorder %s16, 0
    %p85 = por %p83, %p84
    %s87 = sadd.s32 %s86, 1
    %p90 = scmp.eq.s32.totalorder %s10, 1
    %p91 = scmp.ne.s32.totalorder %s86, %s88
    %p92 = scmp.eq.s32.totalorder %s10, 0
    %p93 = por %p91, %p92
    %p94 = scmp.ne.s32.totalorder %s86, %s88
    %p95 = scmp.eq.s32.totalorder %s15, 1
    %p96 = por %p94, %p95
    %p97 = scmp.ne.s32.totalorder %s88, %s89
    %p98 = scmp.eq.s32.totalorder %s15, 0
    %p99 = por %p97, %p98
    %p100 = scmp.ne.s32.totalorder %s88, %s89
    %p101 = scmp.eq.s32.totalorder %s16, 1
    %p102 = por %p100, %p101
    %p104 = scmp.ne.s32.totalorder %s89, %s103
    %p105 = scmp.eq.s32.totalorder %s16, 0
    %p106 = por %p104, %p105
    %s107 = ssub.s32 %s10, %s17
    %p108 = scmp.eq.s32.totalorder %s107, 0
    %s110 = sadd.s32 %s109, 1
    %s111 = scalar_select %p108, %s109, %s110
    %p114 = pneg %p108
    %p115 = scmp.eq.s32.totalorder %s10, 1
    %p116 = por %p114, %p115
    %p117 = scmp.ne.s32.totalorder %s109, %s112
    %p118 = scmp.eq.s32.totalorder %s10, 0
    %p119 = por %p117, %p118
    %p120 = scmp.ne.s32.totalorder %s109, %s112
    %p121 = scmp.eq.s32.totalorder %s15, 1
    %p122 = por %p120, %p121
    %p123 = scmp.ne.s32.totalorder %s112, %s113
    %p124 = scmp.eq.s32.totalorder %s15, 0
    %p125 = por %p123, %p124
    %p126 = scmp.ne.s32.totalorder %s112, %s113
    %p127 = scmp.eq.s32.totalorder %s16, 1
    %p128 = por %p126, %p127
    %p130 = scmp.ne.s32.totalorder %s113, %s129
    %p131 = scmp.eq.s32.totalorder %s16, 0
    %p132 = por %p130, %p131
    %p133 = scmp.le.s32.totalorder 1, %s10
    %p134 = scmp.lt.s32.totalorder %s10, 3
    %p135 = pnand %p133, %p134
    %p136 = pneg %p135
    // Predicated region
    $region9: #{encoder_forward.9} parent=5 // pred_check
      _
    $region10: #{encoder_forward.9} parent=5 // pred_check_branch
      %138 = sbr.rel (%p135) target = $region12
    $region11: #{encoder_forward.9} parent=5 // pred_region
      %s139 = ssub.s32 %s10, 1
      // Predicated region
      $region13: #{encoder_forward.9} parent=11 // pred_check
        %p140 = pneg %p57
      $region14: #{encoder_forward.9} parent=11 // pred_check_branch
        %142 = sbr.rel (%p140) target = $region16
      $region15: #{encoder_forward.9} parent=11 // pred_region
        _
      $region16: #{encoder_forward.9} parent=11 // pred_fallthru
        _
      // Predicated region
      $region17: #{encoder_forward.9} parent=11 // pred_check
        %p143 = pneg %p78
      $region18: #{encoder_forward.9} parent=11 // pred_check_branch
        %145 = sbr.rel (%p143) target = $region20
      $region19: #{encoder_forward.9} parent=11 // pred_region
        _
      $region20: #{encoder_forward.9} parent=11 // pred_fallthru
        _
      // Predicated region
      $region21: #{encoder_forward.9} parent=11 // pred_check
        %p146 = pneg %p99
      $region22: #{encoder_forward.9} parent=11 // pred_check_branch
        %148 = sbr.rel (%p146) target = $region24
      $region23: #{encoder_forward.9} parent=11 // pred_region
        _
      $region24: #{encoder_forward.9} parent=11 // pred_fallthru
        _
    $region12: #{encoder_forward.9} parent=5 // pred_fallthru
      _
    %p149 = scmp.lt.s32.totalorder %s10, 2
    // Predicated region
    $region25: #{encoder_forward.9} parent=5 // pred_check
      %p150 = pneg %p149
    $region26: #{encoder_forward.9} parent=5 // pred_check_branch
      %152 = sbr.rel (%p150) target = $region28
    $region27: #{encoder_forward.9} parent=5 // pred_region
      // Predicated region
      $region29: #{encoder_forward.9} parent=27 // pred_check
        %p153 = pneg %p30
      $region30: #{encoder_forward.9} parent=27 // pred_check_branch
        %155 = sbr.rel (%p153) target = $region32
      $region31: #{encoder_forward.9} parent=27 // pred_region
        %p156 = scmp.lt.s32.totalorder %s10, 1
        %s157 = scalar_select %p156, %s10, 1
        %s158 = smul.addr %s157, 16
        %s159 = smul.addr %s158, 8
        %s160 = scalar_lea.vmem %s0, %s159
      $region32: #{encoder_forward.9} parent=27 // pred_fallthru
        _
    $region28: #{encoder_forward.9} parent=5 // pred_fallthru
      _
    %p161 = scmp.le.s32.totalorder 1, %s10
    %p162 = scmp.lt.s32.totalorder %s10, 3
    %p163 = pnand %p161, %p162
    %p164 = pneg %p163
    // Predicated region
    $region33: #{encoder_forward.9} parent=5 // pred_check
      _
    $region34: #{encoder_forward.9} parent=5 // pred_check_branch
      %166 = sbr.rel (%p163) target = $region36
    $region35: #{encoder_forward.9} parent=5 // pred_region
      %s167 = ssub.s32 %s10, 1
      %p168 = scmp.lt.s32.totalorder %s15, 1
      %s169 = scalar_select %p168, %s15, 1
      %s170 = smul.addr %s169, 16
      %s171 = smul.addr %s170, 8
      %s172 = scalar_lea.vmem %s0, %s171
      %p173 = pneg %p36
      %p174 = pneg %p33
      %p175 = pneg %p57
      %p176 = pneg %p54
      %p177 = pneg %p78
      %p178 = pneg %p75
      %p179 = pneg %p99
      %p180 = pneg %p96
      %p181 = pneg %p125
      %p182 = pneg %p122
      %p183 = scmp.lt.s32.totalorder %s15, 1
      %s184 = scalar_select %p183, %s15, 1
      %s185 = smul.addr %s184, 8
      %s186 = smul.addr %s185, 8
      %s187 = scalar_lea.vmem %s4, %s186
      %p188 = scmp.lt.s32.totalorder %s15, 1
      %s189 = scalar_select %p188, %s15, 1
      %s190 = smul.addr %s189, 16
      %s191 = smul.addr %s190, 8
      %s192 = scalar_lea.vmem %s0, %s191
      %p193 = scmp.lt.s32.totalorder %s15, 1
      %s194 = scalar_select %p193, %s15, 1
      %s195 = smul.addr %s194, 8
      %s196 = smul.addr %s195, 8
      %s197 = scalar_lea.vmem %s4, %s196
      %v199 = vld [vmem:[%s192] sm:$0xff]
      %v200 = vld [vmem:[%s192 + $0x8] sm:$0xff]
      %v201 = vld [vmem:[%s192 + $0x10] sm:$0xff]
      %v202 = vld [vmem:[%s192 + $0x18] sm:$0xff]
      %v203 = vpack.c.bf16 %v199, %v199
      %v204 = vpack.c.bf16 %v200, %v200
      %v205 = vpack.c.bf16 %v201, %v201
      %v206 = vpack.c.bf16 %v202, %v202
      %s207 = scalar_lea.vmem %s192, 32
      %v208 = vld [vmem:[%s207] sm:$0xff]
      %v209 = vld [vmem:[%s207 + $0x8] sm:$0xff]
      %v210 = vld [vmem:[%s207 + $0x10] sm:$0xff]
      %v211 = vld [vmem:[%s207 + $0x18] sm:$0xff]
      %v212 = vpack.c.bf16 %v208, %v208
      %v213 = vpack.c.bf16 %v209, %v209
      %v214 = vpack.c.bf16 %v210, %v210
      %v215 = vpack.c.bf16 %v211, %v211
      %s216 = scalar_lea.vmem %s192, 64
      %v217 = vld [vmem:[%s216] sm:$0xff]
      %v218 = vld [vmem:[%s216 + $0x8] sm:$0xff]
      %v219 = vld [vmem:[%s216 + $0x10] sm:$0xff]
      %v220 = vld [vmem:[%s216 + $0x18] sm:$0xff]
      %v221 = vpack.c.bf16 %v217, %v217
      %v222 = vpack.c.bf16 %v218, %v218
      %v223 = vpack.c.bf16 %v219, %v219
      %v224 = vpack.c.bf16 %v220, %v220
      %s225 = scalar_lea.vmem %s192, 96
      %v226 = vld [vmem:[%s225] sm:$0xff]
      %v227 = vld [vmem:[%s225 + $0x8] sm:$0xff]
      %v228 = vld [vmem:[%s225 + $0x10] sm:$0xff]
      %v229 = vld [vmem:[%s225 + $0x18] sm:$0xff]
      %v230 = vpack.c.bf16 %v226, %v226
      %v231 = vpack.c.bf16 %v227, %v227
      %v232 = vpack.c.bf16 %v228, %v228
      %v233 = vpack.c.bf16 %v229, %v229
      %v234 = vld [vmem:[%s1] sm:$0xf]
      %v235 = vld [vmem:[%s1 + $0x4] sm:$0xf]
      %v236 = vld [vmem:[%s1 + $0x8] sm:$0xf]
      %v237 = vld [vmem:[%s1 + $0xc] sm:$0xf]
      %v238 = vld [vmem:[%s1 + $0x10] sm:$0xf]
      %v239 = vld [vmem:[%s1 + $0x14] sm:$0xf]
      %v240 = vld [vmem:[%s1 + $0x18] sm:$0xf]
      %v241 = vld [vmem:[%s1 + $0x1c] sm:$0xf]
      %s242 = scalar_lea.vmem %s1, 32
      %v243 = vld [vmem:[%s242] sm:$0xf]
      %v244 = vld [vmem:[%s242 + $0x4] sm:$0xf]
      %v245 = vld [vmem:[%s242 + $0x8] sm:$0xf]
      %v246 = vld [vmem:[%s242 + $0xc] sm:$0xf]
      %v247 = vld [vmem:[%s242 + $0x10] sm:$0xf]
      %v248 = vld [vmem:[%s242 + $0x14] sm:$0xf]
      %v249 = vld [vmem:[%s242 + $0x18] sm:$0xf]
      %v250 = vld [vmem:[%s242 + $0x1c] sm:$0xf]
      %v259 = vunpack.c.l.b16 %v243
      %v260 = vunpack.c.l.b16 %v244
      %v261 = vunpack.c.l.b16 %v245
      %v262 = vunpack.c.l.b16 %v246
      %v263 = vunpack.c.l.b16 %v247
      %v264 = vunpack.c.l.b16 %v248
      %v265 = vunpack.c.l.b16 %v249
      %v266 = vunpack.c.l.b16 %v250
      %v267 = vpack.c.b16 %v260, %v259
      %v268 = vpack.c.b16 %v262, %v261
      %v269 = vpack.c.b16 %v264, %v263
      %v270 = vpack.c.b16 %v266, %v265
      %v275 = vunpack.c.l.b16 %v212
      %v276 = vunpack.c.l.b16 %v213
      %v277 = vunpack.c.l.b16 %v214
      %v278 = vunpack.c.l.b16 %v215
      %v279 = vpack.c.b16 %v276, %v275
      %v280 = vpack.c.b16 %v278, %v277
      %vm283 = vcmask 261120
      %v285 = vsel %vm283, %v267, 0
      %v288 = vsel %vm283, %v268, 0
      %v291 = vsel %vm283, %v269, 0
      %v294 = vsel %vm283, %v270, 0
      %296 = vmatpush.bf16.msra.mxu0 0
      %297 = vmatpush.bf16.msra.mxu0 0
      %298 = vmatpush.bf16.msra.mxu0 0
      %299 = vmatpush.bf16.msra.mxu0 0
      %300 = vmatpush.bf16.msra.mxu0 0
      %301 = vmatpush.bf16.msra.mxu0 0
      %302 = vmatpush.bf16.msra.mxu0 %v280
      %303 = vmatpush.bf16.msra.mxu0 %v279
      %304 = vmatmul.bf16.gmra.mxu0 %v285
      %v305 = vpop.f32.mrf.mxu0
      %v306 = vadd.f32 0.0, %v305
      %v307 = vpop.f32.mrf.mxu0
      %v308 = vadd.f32 0.0, %v307
      %309 = vmatmul.bf16.gmra.mxu0 %v288
      %v310 = vpop.f32.mrf.mxu0
      %v311 = vadd.f32 0.0, %v310
      %v312 = vpop.f32.mrf.mxu0
      %v313 = vadd.f32 0.0, %v312
      %314 = vmatmul.bf16.gmra.mxu0 %v291
      %v315 = vpop.f32.mrf.mxu0
      %v316 = vadd.f32 0.0, %v315
      %v317 = vpop.f32.mrf.mxu0
      %v318 = vadd.f32 0.0, %v317
      %319 = vmatmul.bf16.gmra.mxu0 %v294
      %v320 = vpop.f32.mrf.mxu0
      %v321 = vadd.f32 0.0, %v320
      %v322 = vpop.f32.mrf.mxu0
      %v323 = vadd.f32 0.0, %v322
      %324 = vdwg.mxu0
      %v333 = vunpack.c.l.b16 %v234
      %v334 = vunpack.c.l.b16 %v235
      %v335 = vunpack.c.l.b16 %v236
      %v336 = vunpack.c.l.b16 %v237
      %v337 = vunpack.c.l.b16 %v238
      %v338 = vunpack.c.l.b16 %v239
      %v339 = vunpack.c.l.b16 %v240
      %v340 = vunpack.c.l.b16 %v241
      %v341 = vpack.c.b16 %v334, %v333
      %v342 = vpack.c.b16 %v336, %v335
      %v343 = vpack.c.b16 %v338, %v337
      %v344 = vpack.c.b16 %v340, %v339
      %v349 = vunpack.c.l.b16 %v203
      %v350 = vunpack.c.l.b16 %v204
      %v351 = vunpack.c.l.b16 %v205
      %v352 = vunpack.c.l.b16 %v206
      %v353 = vpack.c.b16 %v350, %v349
      %v354 = vpack.c.b16 %v352, %v351
      %v358 = vsel %vm283, %v341, 0
      %v361 = vsel %vm283, %v342, 0
      %v364 = vsel %vm283, %v343, 0
      %v367 = vsel %vm283, %v344, 0
      %369 = vmatpush.bf16.msra.mxu0 0
      %370 = vmatpush.bf16.msra.mxu0 0
      %371 = vmatpush.bf16.msra.mxu0 0
      %372 = vmatpush.bf16.msra.mxu0 0
      %373 = vmatpush.bf16.msra.mxu0 0
      %374 = vmatpush.bf16.msra.mxu0 0
      %375 = vmatpush.bf16.msra.mxu0 %v354
      %376 = vmatpush.bf16.msra.mxu0 %v353
      %377 = vmatmul.bf16.gmra.mxu0 %v358
      %v378 = vpop.f32.mrf.mxu0
      %v379 = vadd.f32 %v306, %v378
      %v380 = vpop.f32.mrf.mxu0
      %v381 = vadd.f32 %v308, %v380
      %382 = vmatmul.bf16.gmra.mxu0 %v361
      %v383 = vpop.f32.mrf.mxu0
      %v384 = vadd.f32 %v311, %v383
      %v385 = vpop.f32.mrf.mxu0
      %v386 = vadd.f32 %v313, %v385
      %387 = vmatmul.bf16.gmra.mxu0 %v364
      %v388 = vpop.f32.mrf.mxu0
      %v389 = vadd.f32 %v316, %v388
      %v390 = vpop.f32.mrf.mxu0
      %v391 = vadd.f32 %v318, %v390
      %392 = vmatmul.bf16.gmra.mxu0 %v367
      %v393 = vpop.f32.mrf.mxu0
      %v394 = vadd.f32 %v321, %v393
      %v395 = vpop.f32.mrf.mxu0
      %v396 = vadd.f32 %v323, %v395
      %397 = vdwg.mxu0
      %s398 = scalar_lea.vmem %s1, 64
      %v399 = vld [vmem:[%s398] sm:$0xf]
      %v400 = vld [vmem:[%s398 + $0x4] sm:$0xf]
      %v401 = vld [vmem:[%s398 + $0x8] sm:$0xf]
      %v402 = vld [vmem:[%s398 + $0xc] sm:$0xf]
      %v403 = vld [vmem:[%s398 + $0x10] sm:$0xf]
      %v404 = vld [vmem:[%s398 + $0x14] sm:$0xf]
      %v405 = vld [vmem:[%s398 + $0x18] sm:$0xf]
      %v406 = vld [vmem:[%s398 + $0x1c] sm:$0xf]
      %v415 = vunpack.c.l.b16 %v399
      %v416 = vunpack.c.l.b16 %v400
      %v417 = vunpack.c.l.b16 %v401
      %v418 = vunpack.c.l.b16 %v402
      %v419 = vunpack.c.l.b16 %v403
      %v420 = vunpack.c.l.b16 %v404
      %v421 = vunpack.c.l.b16 %v405
      %v422 = vunpack.c.l.b16 %v406
      %v423 = vpack.c.b16 %v416, %v415
      %v424 = vpack.c.b16 %v418, %v417
      %v425 = vpack.c.b16 %v420, %v419
      %v426 = vpack.c.b16 %v422, %v421
      %427 = vrot.lane.b32.xlu0 %v353, 127
      %v428 = vpop.permute.xlu0 %427
      %429 = vrot.lane.b32.xlu0 %v354, 127
      %v430 = vpop.permute.xlu0 %429
      %v434 = vsel %vm283, %v423, 0
      %v437 = vsel %vm283, %v424, 0
      %v440 = vsel %vm283, %v425, 0
      %v443 = vsel %vm283, %v426, 0
      %445 = vmatpush.bf16.msra.mxu0 0
      %446 = vmatpush.bf16.msra.mxu0 0
      %447 = vmatpush.bf16.msra.mxu0 0
      %448 = vmatpush.bf16.msra.mxu0 0
      %449 = vmatpush.bf16.msra.mxu0 0
      %450 = vmatpush.bf16.msra.mxu0 0
      %451 = vmatpush.bf16.msra.mxu0 %v430
      %452 = vmatpush.bf16.msra.mxu0 %v428
      %453 = vmatmul.bf16.gmra.mxu0 %v434
      %v454 = vpop.f32.mrf.mxu0
      %v455 = vadd.f32 0.0, %v454
      %v456 = vpop.f32.mrf.mxu0
      %v457 = vadd.f32 0.0, %v456
      %458 = vmatmul.bf16.gmra.mxu0 %v437
      %v459 = vpop.f32.mrf.mxu0
      %v460 = vadd.f32 0.0, %v459
      %v461 = vpop.f32.mrf.mxu0
      %v462 = vadd.f32 0.0, %v461
      %463 = vmatmul.bf16.gmra.mxu0 %v440
      %v464 = vpop.f32.mrf.mxu0
      %v465 = vadd.f32 0.0, %v464
      %v466 = vpop.f32.mrf.mxu0
      %v467 = vadd.f32 0.0, %v466
      %468 = vmatmul.bf16.gmra.mxu0 %v443
      %v469 = vpop.f32.mrf.mxu0
      %v470 = vadd.f32 0.0, %v469
      %v471 = vpop.f32.mrf.mxu0
      %v472 = vadd.f32 0.0, %v471
      %473 = vdwg.mxu0
      %v474 = vadd.f32 %v379, %v455
      %v475 = vadd.f32 %v381, %v457
      %v476 = vadd.f32 %v384, %v460
      %v477 = vadd.f32 %v386, %v462
      %v478 = vadd.f32 %v389, %v465
      %v479 = vadd.f32 %v391, %v467
      %v480 = vadd.f32 %v394, %v470
      %v481 = vadd.f32 %v396, %v472
      %s482 = scalar_lea.vmem %s1, 96
      %v483 = vld [vmem:[%s482] sm:$0xf]
      %v484 = vld [vmem:[%s482 + $0x4] sm:$0xf]
      %v485 = vld [vmem:[%s482 + $0x8] sm:$0xf]
      %v486 = vld [vmem:[%s482 + $0xc] sm:$0xf]
      %v487 = vld [vmem:[%s482 + $0x10] sm:$0xf]
      %v488 = vld [vmem:[%s482 + $0x14] sm:$0xf]
      %v489 = vld [vmem:[%s482 + $0x18] sm:$0xf]
      %v490 = vld [vmem:[%s482 + $0x1c] sm:$0xf]
      %v499 = vunpack.c.l.b16 %v483
      %v500 = vunpack.c.l.b16 %v484
      %v501 = vunpack.c.l.b16 %v485
      %v502 = vunpack.c.l.b16 %v486
      %v503 = vunpack.c.l.b16 %v487
      %v504 = vunpack.c.l.b16 %v488
      %v505 = vunpack.c.l.b16 %v489
      %v506 = vunpack.c.l.b16 %v490
      %v507 = vpack.c.b16 %v500, %v499
      %v508 = vpack.c.b16 %v502, %v501
      %v509 = vpack.c.b16 %v504, %v503
      %v510 = vpack.c.b16 %v506, %v505
      %v515 = vunpack.c.l.b16 %v221
      %v516 = vunpack.c.l.b16 %v222
      %v517 = vunpack.c.l.b16 %v223
      %v518 = vunpack.c.l.b16 %v224
      %v519 = vpack.c.b16 %v516, %v515
      %v520 = vpack.c.b16 %v518, %v517
      %v524 = vsel %vm283, %v507, 0
      %v527 = vsel %vm283, %v508, 0
      %v530 = vsel %vm283, %v509, 0
      %v533 = vsel %vm283, %v510, 0
      %535 = vmatpush.bf16.msra.mxu0 0
      %536 = vmatpush.bf16.msra.mxu0 0
      %537 = vmatpush.bf16.msra.mxu0 0
      %538 = vmatpush.bf16.msra.mxu0 0
      %539 = vmatpush.bf16.msra.mxu0 0
      %540 = vmatpush.bf16.msra.mxu0 0
      %541 = vmatpush.bf16.msra.mxu0 %v520
      %542 = vmatpush.bf16.msra.mxu0 %v519
      %543 = vmatmul.bf16.gmra.mxu0 %v524
      %v544 = vpop.f32.mrf.mxu0
      %v545 = vadd.f32 0.0, %v544
      %v546 = vpop.f32.mrf.mxu0
      %v547 = vadd.f32 0.0, %v546
      %548 = vmatmul.bf16.gmra.mxu0 %v527
      %v549 = vpop.f32.mrf.mxu0
      %v550 = vadd.f32 0.0, %v549
      %v551 = vpop.f32.mrf.mxu0
      %v552 = vadd.f32 0.0, %v551
      %553 = vmatmul.bf16.gmra.mxu0 %v530
      %v554 = vpop.f32.mrf.mxu0
      %v555 = vadd.f32 0.0, %v554
      %v556 = vpop.f32.mrf.mxu0
      %v557 = vadd.f32 0.0, %v556
      %558 = vmatmul.bf16.gmra.mxu0 %v533
      %v559 = vpop.f32.mrf.mxu0
      %v560 = vadd.f32 0.0, %v559
      %v561 = vpop.f32.mrf.mxu0
      %v562 = vadd.f32 0.0, %v561
      %563 = vdwg.mxu0
      %v564 = vadd.f32 %v474, %v545
      %v565 = vadd.f32 %v475, %v547
      %v566 = vadd.f32 %v476, %v550
      %v567 = vadd.f32 %v477, %v552
      %v568 = vadd.f32 %v478, %v555
      %v569 = vadd.f32 %v479, %v557
      %v570 = vadd.f32 %v480, %v560
      %v571 = vadd.f32 %v481, %v562
      %s572 = scalar_lea.vmem %s1, 128
      %v573 = vld [vmem:[%s572] sm:$0xf]
      %v574 = vld [vmem:[%s572 + $0x4] sm:$0xf]
      %v575 = vld [vmem:[%s572 + $0x8] sm:$0xf]
      %v576 = vld [vmem:[%s572 + $0xc] sm:$0xf]
      %v577 = vld [vmem:[%s572 + $0x10] sm:$0xf]
      %v578 = vld [vmem:[%s572 + $0x14] sm:$0xf]
      %v579 = vld [vmem:[%s572 + $0x18] sm:$0xf]
      %v580 = vld [vmem:[%s572 + $0x1c] sm:$0xf]
      %v589 = vunpack.c.l.b16 %v573
      %v590 = vunpack.c.l.b16 %v574
      %v591 = vunpack.c.l.b16 %v575
      %v592 = vunpack.c.l.b16 %v576
      %v593 = vunpack.c.l.b16 %v577
      %v594 = vunpack.c.l.b16 %v578
      %v595 = vunpack.c.l.b16 %v579
      %v596 = vunpack.c.l.b16 %v580
      %v597 = vpack.c.b16 %v590, %v589
      %v598 = vpack.c.b16 %v592, %v591
      %v599 = vpack.c.b16 %v594, %v593
      %v600 = vpack.c.b16 %v596, %v595
      %v605 = vunpack.c.l.b16 %v230
      %v606 = vunpack.c.l.b16 %v231
      %v607 = vunpack.c.l.b16 %v232
      %v608 = vunpack.c.l.b16 %v233
      %v609 = vpack.c.b16 %v606, %v605
      %v610 = vpack.c.b16 %v608, %v607
      %v614 = vsel %vm283, %v597, 0
      %v617 = vsel %vm283, %v598, 0
      %v620 = vsel %vm283, %v599, 0
      %v623 = vsel %vm283, %v600, 0
      %625 = vmatpush.bf16.msra.mxu0 0
      %626 = vmatpush.bf16.msra.mxu0 0
      %627 = vmatpush.bf16.msra.mxu0 0
      %628 = vmatpush.bf16.msra.mxu0 0
      %629 = vmatpush.bf16.msra.mxu0 0
      %630 = vmatpush.bf16.msra.mxu0 0
      %631 = vmatpush.bf16.msra.mxu0 %v610
      %632 = vmatpush.bf16.msra.mxu0 %v609
      %633 = vmatmul.bf16.gmra.mxu0 %v614
      %v634 = vpop.f32.mrf.mxu0
      %v635 = vadd.f32 0.0, %v634
      %v636 = vpop.f32.mrf.mxu0
      %v637 = vadd.f32 0.0, %v636
      %638 = vmatmul.bf16.gmra.mxu0 %v617
      %v639 = vpop.f32.mrf.mxu0
      %v640 = vadd.f32 0.0, %v639
      %v641 = vpop.f32.mrf.mxu0
      %v642 = vadd.f32 0.0, %v641
      %643 = vmatmul.bf16.gmra.mxu0 %v620
      %v644 = vpop.f32.mrf.mxu0
      %v645 = vadd.f32 0.0, %v644
      %v646 = vpop.f32.mrf.mxu0
      %v647 = vadd.f32 0.0, %v646
      %648 = vmatmul.bf16.gmra.mxu0 %v623
      %v649 = vpop.f32.mrf.mxu0
      %v650 = vadd.f32 0.0, %v649
      %v651 = vpop.f32.mrf.mxu0
      %v652 = vadd.f32 0.0, %v651
      %653 = vdwg.mxu0
      %v654 = vadd.f32 %v564, %v635
      %v655 = vadd.f32 %v565, %v637
      %v656 = vadd.f32 %v566, %v640
      %v657 = vadd.f32 %v567, %v642
      %v658 = vadd.f32 %v568, %v645
      %v659 = vadd.f32 %v569, %v647
      %v660 = vadd.f32 %v570, %v650
      %v661 = vadd.f32 %v571, %v652
      %s662 = scalar_lea.vmem %s1, 160
      %v663 = vld [vmem:[%s662] sm:$0xf]
      %v664 = vld [vmem:[%s662 + $0x4] sm:$0xf]
      %v665 = vld [vmem:[%s662 + $0x8] sm:$0xf]
      %v666 = vld [vmem:[%s662 + $0xc] sm:$0xf]
      %v667 = vld [vmem:[%s662 + $0x10] sm:$0xf]
      %v668 = vld [vmem:[%s662 + $0x14] sm:$0xf]
      %v669 = vld [vmem:[%s662 + $0x18] sm:$0xf]
      %v670 = vld [vmem:[%s662 + $0x1c] sm:$0xf]
      %v679 = vunpack.c.l.b16 %v663
      %v680 = vunpack.c.l.b16 %v664
      %v681 = vunpack.c.l.b16 %v665
      %v682 = vunpack.c.l.b16 %v666
      %v683 = vunpack.c.l.b16 %v667
      %v684 = vunpack.c.l.b16 %v668
      %v685 = vunpack.c.l.b16 %v669
      %v686 = vunpack.c.l.b16 %v670
      %v687 = vpack.c.b16 %v680, %v679
      %v688 = vpack.c.b16 %v682, %v681
      %v689 = vpack.c.b16 %v684, %v683
      %v690 = vpack.c.b16 %v686, %v685
      %691 = vrot.lane.b32.xlu0 %v519, 127
      %v692 = vpop.permute.xlu0 %691
      %693 = vrot.lane.b32.xlu0 %v520, 127
      %v694 = vpop.permute.xlu0 %693
      %v698 = vsel %vm283, %v687, 0
      %v701 = vsel %vm283, %v688, 0
      %v704 = vsel %vm283, %v689, 0
      %v707 = vsel %vm283, %v690, 0
      %709 = vmatpush.bf16.msra.mxu0 0
      %710 = vmatpush.bf16.msra.mxu0 0
      %711 = vmatpush.bf16.msra.mxu0 0
      %712 = vmatpush.bf16.msra.mxu0 0
      %713 = vmatpush.bf16.msra.mxu0 0
      %714 = vmatpush.bf16.msra.mxu0 0
      %715 = vmatpush.bf16.msra.mxu0 %v694
      %716 = vmatpush.bf16.msra.mxu0 %v692
      %717 = vmatmul.bf16.gmra.mxu0 %v698
      %v718 = vpop.f32.mrf.mxu0
      %v719 = vadd.f32 0.0, %v718
      %v720 = vpop.f32.mrf.mxu0
      %v721 = vadd.f32 0.0, %v720
      %722 = vmatmul.bf16.gmra.mxu0 %v701
      %v723 = vpop.f32.mrf.mxu0
      %v724 = vadd.f32 0.0, %v723
      %v725 = vpop.f32.mrf.mxu0
      %v726 = vadd.f32 0.0, %v725
      %727 = vmatmul.bf16.gmra.mxu0 %v704
      %v728 = vpop.f32.mrf.mxu0
      %v729 = vadd.f32 0.0, %v728
      %v730 = vpop.f32.mrf.mxu0
      %v731 = vadd.f32 0.0, %v730
      %732 = vmatmul.bf16.gmra.mxu0 %v707
      %v733 = vpop.f32.mrf.mxu0
      %v734 = vadd.f32 0.0, %v733
      %v735 = vpop.f32.mrf.mxu0
      %v736 = vadd.f32 0.0, %v735
      %737 = vdwg.mxu0
      %v738 = vadd.f32 %v654, %v719
      %v739 = vadd.f32 %v655, %v721
      %v740 = vadd.f32 %v656, %v724
      %v741 = vadd.f32 %v657, %v726
      %v742 = vadd.f32 %v658, %v729
      %v743 = vadd.f32 %v659, %v731
      %v744 = vadd.f32 %v660, %v734
      %v745 = vadd.f32 %v661, %v736
      %s746 = scalar_lea.vmem %s1, 192
      %v747 = vld [vmem:[%s746] sm:$0xf]
      %v748 = vld [vmem:[%s746 + $0x4] sm:$0xf]
      %v749 = vld [vmem:[%s746 + $0x8] sm:$0xf]
      %v750 = vld [vmem:[%s746 + $0xc] sm:$0xf]
      %v751 = vld [vmem:[%s746 + $0x10] sm:$0xf]
      %v752 = vld [vmem:[%s746 + $0x14] sm:$0xf]
      %v753 = vld [vmem:[%s746 + $0x18] sm:$0xf]
      %v754 = vld [vmem:[%s746 + $0x1c] sm:$0xf]
      %v763 = vunpack.c.l.b16 %v747
      %v764 = vunpack.c.l.b16 %v748
      %v765 = vunpack.c.l.b16 %v749
      %v766 = vunpack.c.l.b16 %v750
      %v767 = vunpack.c.l.b16 %v751
      %v768 = vunpack.c.l.b16 %v752
      %v769 = vunpack.c.l.b16 %v753
      %v770 = vunpack.c.l.b16 %v754
      %v771 = vpack.c.b16 %v764, %v763
      %v772 = vpack.c.b16 %v766, %v765
      %v773 = vpack.c.b16 %v768, %v767
      %v774 = vpack.c.b16 %v770, %v769
      %775 = vrot.lane.b32.xlu0 %v353, 125
      %v776 = vpop.permute.xlu0 %775
      %777 = vrot.lane.b32.xlu0 %v354, 125
      %v778 = vpop.permute.xlu0 %777
      %v782 = vsel %vm283, %v771, 0
      %v785 = vsel %vm283, %v772, 0
      %v788 = vsel %vm283, %v773, 0
      %v791 = vsel %vm283, %v774, 0
      %793 = vmatpush.bf16.msra.mxu0 0
      %794 = vmatpush.bf16.msra.mxu0 0
      %795 = vmatpush.bf16.msra.mxu0 0
      %796 = vmatpush.bf16.msra.mxu0 0
      %797 = vmatpush.bf16.msra.mxu0 0
      %798 = vmatpush.bf16.msra.mxu0 0
      %799 = vmatpush.bf16.msra.mxu0 %v778
      %800 = vmatpush.bf16.msra.mxu0 %v776
      %801 = vmatmul.bf16.gmra.mxu0 %v782
      %v802 = vpop.f32.mrf.mxu0
      %v803 = vadd.f32 0.0, %v802
      %v804 = vpop.f32.mrf.mxu0
      %v805 = vadd.f32 0.0, %v804
      %806 = vmatmul.bf16.gmra.mxu0 %v785
      %v807 = vpop.f32.mrf.mxu0
      %v808 = vadd.f32 0.0, %v807
      %v809 = vpop.f32.mrf.mxu0
      %v810 = vadd.f32 0.0, %v809
      %811 = vmatmul.bf16.gmra.mxu0 %v788
      %v812 = vpop.f32.mrf.mxu0
      %v813 = vadd.f32 0.0, %v812
      %v814 = vpop.f32.mrf.mxu0
      %v815 = vadd.f32 0.0, %v814
      %816 = vmatmul.bf16.gmra.mxu0 %v791
      %v817 = vpop.f32.mrf.mxu0
      %v818 = vadd.f32 0.0, %v817
      %v819 = vpop.f32.mrf.mxu0
      %v820 = vadd.f32 0.0, %v819
      %821 = vdwg.mxu0
      %v822 = vadd.f32 %v738, %v803
      %v823 = vadd.f32 %v739, %v805
      %v824 = vadd.f32 %v740, %v808
      %v825 = vadd.f32 %v741, %v810
      %v826 = vadd.f32 %v742, %v813
      %v827 = vadd.f32 %v743, %v815
      %v828 = vadd.f32 %v744, %v818
      %v829 = vadd.f32 %v745, %v820
      %s830 = scalar_lea.vmem %s1, 224
      %v831 = vld [vmem:[%s830] sm:$0xf]
      %v832 = vld [vmem:[%s830 + $0x4] sm:$0xf]
      %v833 = vld [vmem:[%s830 + $0x8] sm:$0xf]
      %v834 = vld [vmem:[%s830 + $0xc] sm:$0xf]
      %v835 = vld [vmem:[%s830 + $0x10] sm:$0xf]
      %v836 = vld [vmem:[%s830 + $0x14] sm:$0xf]
      %v837 = vld [vmem:[%s830 + $0x18] sm:$0xf]
      %v838 = vld [vmem:[%s830 + $0x1c] sm:$0xf]
      %v847 = vunpack.c.l.b16 %v831
      %v848 = vunpack.c.l.b16 %v832
      %v849 = vunpack.c.l.b16 %v833
      %v850 = vunpack.c.l.b16 %v834
      %v851 = vunpack.c.l.b16 %v835
      %v852 = vunpack.c.l.b16 %v836
      %v853 = vunpack.c.l.b16 %v837
      %v854 = vunpack.c.l.b16 %v838
      %v855 = vpack.c.b16 %v848, %v847
      %v856 = vpack.c.b16 %v850, %v849
      %v857 = vpack.c.b16 %v852, %v851
      %v858 = vpack.c.b16 %v854, %v853
      %859 = vrot.lane.b32.xlu0 %v279, 125
      %v860 = vpop.permute.xlu0 %859
      %861 = vrot.lane.b32.xlu0 %v280, 125
      %v862 = vpop.permute.xlu0 %861
      %v866 = vsel %vm283, %v855, 0
      %v869 = vsel %vm283, %v856, 0
      %v872 = vsel %vm283, %v857, 0
      %v875 = vsel %vm283, %v858, 0
      %877 = vmatpush.bf16.msra.mxu0 0
      %878 = vmatpush.bf16.msra.mxu0 0
      %879 = vmatpush.bf16.msra.mxu0 0
      %880 = vmatpush.bf16.msra.mxu0 0
      %881 = vmatpush.bf16.msra.mxu0 0
      %882 = vmatpush.bf16.msra.mxu0 0
      %883 = vmatpush.bf16.msra.mxu0 %v862
      %884 = vmatpush.bf16.msra.mxu0 %v860
      %885 = vmatmul.bf16.gmra.mxu0 %v866
      %v886 = vpop.f32.mrf.mxu0
      %v887 = vadd.f32 0.0, %v886
      %v888 = vpop.f32.mrf.mxu0
      %v889 = vadd.f32 0.0, %v888
      %890 = vmatmul.bf16.gmra.mxu0 %v869
      %v891 = vpop.f32.mrf.mxu0
      %v892 = vadd.f32 0.0, %v891
      %v893 = vpop.f32.mrf.mxu0
      %v894 = vadd.f32 0.0, %v893
      %895 = vmatmul.bf16.gmra.mxu0 %v872
      %v896 = vpop.f32.mrf.mxu0
      %v897 = vadd.f32 0.0, %v896
      %v898 = vpop.f32.mrf.mxu0
      %v899 = vadd.f32 0.0, %v898
      %900 = vmatmul.bf16.gmra.mxu0 %v875
      %v901 = vpop.f32.mrf.mxu0
      %v902 = vadd.f32 0.0, %v901
      %v903 = vpop.f32.mrf.mxu0
      %v904 = vadd.f32 0.0, %v903
      %905 = vdwg.mxu0
      %v906 = vadd.f32 %v822, %v887
      %v907 = vadd.f32 %v823, %v889
      %v908 = vadd.f32 %v824, %v892
      %v909 = vadd.f32 %v825, %v894
      %v910 = vadd.f32 %v826, %v897
      %v911 = vadd.f32 %v827, %v899
      %v912 = vadd.f32 %v828, %v902
      %v913 = vadd.f32 %v829, %v904
      %s914 = scalar_lea.vmem %s1, 256
      %v915 = vld [vmem:[%s914] sm:$0xf]
      %v916 = vld [vmem:[%s914 + $0x4] sm:$0xf]
      %v917 = vld [vmem:[%s914 + $0x8] sm:$0xf]
      %v918 = vld [vmem:[%s914 + $0xc] sm:$0xf]
      %v919 = vld [vmem:[%s914 + $0x10] sm:$0xf]
      %v920 = vld [vmem:[%s914 + $0x14] sm:$0xf]
      %v921 = vld [vmem:[%s914 + $0x18] sm:$0xf]
      %v922 = vld [vmem:[%s914 + $0x1c] sm:$0xf]
      %v931 = vunpack.c.l.b16 %v915
      %v932 = vunpack.c.l.b16 %v916
      %v933 = vunpack.c.l.b16 %v917
      %v934 = vunpack.c.l.b16 %v918
      %v935 = vunpack.c.l.b16 %v919
      %v936 = vunpack.c.l.b16 %v920
      %v937 = vunpack.c.l.b16 %v921
      %v938 = vunpack.c.l.b16 %v922
      %v939 = vpack.c.b16 %v932, %v931
      %v940 = vpack.c.b16 %v934, %v933
      %v941 = vpack.c.b16 %v936, %v935
      %v942 = vpack.c.b16 %v938, %v937
      %943 = vrot.lane.b32.xlu0 %v353, 124
      %v944 = vpop.permute.xlu0 %943
      %945 = vrot.lane.b32.xlu0 %v354, 124
      %v946 = vpop.permute.xlu0 %945
      %v950 = vsel %vm283, %v939, 0
      %v953 = vsel %vm283, %v940, 0
      %v956 = vsel %vm283, %v941, 0
      %v959 = vsel %vm283, %v942, 0
      %961 = vmatpush.bf16.msra.mxu0 0
      %962 = vmatpush.bf16.msra.mxu0 0
      %963 = vmatpush.bf16.msra.mxu0 0
      %964 = vmatpush.bf16.msra.mxu0 0
      %965 = vmatpush.bf16.msra.mxu0 0
      %966 = vmatpush.bf16.msra.mxu0 0
      %967 = vmatpush.bf16.msra.mxu0 %v946
      %968 = vmatpush.bf16.msra.mxu0 %v944
      %969 = vmatmul.bf16.gmra.mxu0 %v950
      %v970 = vpop.f32.mrf.mxu0
      %v971 = vadd.f32 0.0, %v970
      %v972 = vpop.f32.mrf.mxu0
      %v973 = vadd.f32 0.0, %v972
      %974 = vmatmul.bf16.gmra.mxu0 %v953
      %v975 = vpop.f32.mrf.mxu0
      %v976 = vadd.f32 0.0, %v975
      %v977 = vpop.f32.mrf.mxu0
      %v978 = vadd.f32 0.0, %v977
      %979 = vmatmul.bf16.gmra.mxu0 %v956
      %v980 = vpop.f32.mrf.mxu0
      %v981 = vadd.f32 0.0, %v980
      %v982 = vpop.f32.mrf.mxu0
      %v983 = vadd.f32 0.0, %v982
      %984 = vmatmul.bf16.gmra.mxu0 %v959
      %v985 = vpop.f32.mrf.mxu0
      %v986 = vadd.f32 0.0, %v985
      %v987 = vpop.f32.mrf.mxu0
      %v988 = vadd.f32 0.0, %v987
      %989 = vdwg.mxu0
      %v990 = vadd.f32 %v906, %v971
      %v991 = vadd.f32 %v907, %v973
      %v992 = vadd.f32 %v908, %v976
      %v993 = vadd.f32 %v909, %v978
      %v994 = vadd.f32 %v910, %v981
      %v995 = vadd.f32 %v911, %v983
      %v996 = vadd.f32 %v912, %v986
      %v997 = vadd.f32 %v913, %v988
      %v998 = vld [vmem:[%s2] sm:$0xff]
      %v999 = vld [vmem:[%s2 + $0x8] sm:$0xff]
      %v1000 = vld [vmem:[%s2 + $0x10] sm:$0xff]
      %v1001 = vld [vmem:[%s2 + $0x18] sm:$0xff]
      %v1002 = vld [vmem:[%s2 + $0x20] sm:$0xff]
      %v1003 = vld [vmem:[%s2 + $0x28] sm:$0xff]
      %v1004 = vld [vmem:[%s2 + $0x30] sm:$0xff]
      %v1005 = vld [vmem:[%s2 + $0x38] sm:$0xff]
      %1007 = vset.pattern.permute.xlu0 0
      %1008 = vperm.xlu0 %1007, %v998
      %v1009 = vpop.permute.xlu0 %1008
      %1012 = vset.pattern.permute.xlu0 0
      %1013 = vperm.xlu0 %1012, %v999
      %v1014 = vpop.permute.xlu0 %1013
      %1017 = vset.pattern.permute.xlu0 0
      %1018 = vperm.xlu0 %1017, %v1000
      %v1019 = vpop.permute.xlu0 %1018
      %1022 = vset.pattern.permute.xlu0 0
      %1023 = vperm.xlu0 %1022, %v1001
      %v1024 = vpop.permute.xlu0 %1023
      %1027 = vset.pattern.permute.xlu0 0
      %1028 = vperm.xlu0 %1027, %v1002
      %v1029 = vpop.permute.xlu0 %1028
      %1032 = vset.pattern.permute.xlu0 0
      %1033 = vperm.xlu0 %1032, %v1003
      %v1034 = vpop.permute.xlu0 %1033
      %1037 = vset.pattern.permute.xlu0 0
      %1038 = vperm.xlu0 %1037, %v1004
      %v1039 = vpop.permute.xlu0 %1038
      %1042 = vset.pattern.permute.xlu0 0
      %1043 = vperm.xlu0 %1042, %v1005
      %v1044 = vpop.permute.xlu0 %1043
      %v1046 = vadd.f32 %v990, %v1009
      %v1047 = vadd.f32 %v991, %v1014
      %v1048 = vadd.f32 %v992, %v1019
      %v1049 = vadd.f32 %v993, %v1024
      %v1050 = vadd.f32 %v994, %v1029
      %v1051 = vadd.f32 %v995, %v1034
      %v1052 = vadd.f32 %v996, %v1039
      %v1053 = vadd.f32 %v997, %v1044
      %v1054 = vld [vmem:[%s3] sm:$0x1]
      %v1056 = vperm.slane %v1054, 0
      %v1058 = vmul.f32 %v1046, %v1056
      %v1059 = vmul.f32 %v1047, %v1056
      %v1060 = vmul.f32 %v1048, %v1056
      %v1061 = vmul.f32 %v1049, %v1056
      %v1062 = vmul.f32 %v1050, %v1056
      %v1063 = vmul.f32 %v1051, %v1056
      %v1064 = vmul.f32 %v1052, %v1056
      %v1065 = vmul.f32 %v1053, %v1056
      %vm1066 = vcmask 48128
      %v1067 = vsel %vm1066, %v1058, 0.0
      %1068 = vadd.xlane.f32.xlu0 %v1067
      %v1069 = vpop.xlane.xlu0 %1068
      %v1070 = vsel %vm1066, %v1059, 0.0
      %1071 = vadd.xlane.f32.xlu0 %v1070
      %v1072 = vpop.xlane.xlu0 %1071
      %v1073 = vsel %vm1066, %v1060, 0.0
      %1074 = vadd.xlane.f32.xlu0 %v1073
      %v1075 = vpop.xlane.xlu0 %1074
      %v1076 = vsel %vm1066, %v1061, 0.0
      %1077 = vadd.xlane.f32.xlu0 %v1076
      %v1078 = vpop.xlane.xlu0 %1077
      %v1079 = vsel %vm1066, %v1062, 0.0
      %1080 = vadd.xlane.f32.xlu0 %v1079
      %v1081 = vpop.xlane.xlu0 %1080
      %v1082 = vsel %vm1066, %v1063, 0.0
      %1083 = vadd.xlane.f32.xlu0 %v1082
      %v1084 = vpop.xlane.xlu0 %1083
      %v1085 = vsel %vm1066, %v1064, 0.0
      %1086 = vadd.xlane.f32.xlu0 %v1085
      %v1087 = vpop.xlane.xlu0 %1086
      %v1088 = vsel %vm1066, %v1065, 0.0
      %1089 = vadd.xlane.f32.xlu0 %v1088
      %v1090 = vpop.xlane.xlu0 %1089
      %v1091 = vmul.f32 %v1046, %v1046
      %v1092 = vmul.f32 %v1047, %v1047
      %v1093 = vmul.f32 %v1048, %v1048
      %v1094 = vmul.f32 %v1049, %v1049
      %v1095 = vmul.f32 %v1050, %v1050
      %v1096 = vmul.f32 %v1051, %v1051
      %v1097 = vmul.f32 %v1052, %v1052
      %v1098 = vmul.f32 %v1053, %v1053
      %v1099 = vmul.f32 %v1091, %v1056
      %v1100 = vmul.f32 %v1092, %v1056
      %v1101 = vmul.f32 %v1093, %v1056
      %v1102 = vmul.f32 %v1094, %v1056
      %v1103 = vmul.f32 %v1095, %v1056
      %v1104 = vmul.f32 %v1096, %v1056
      %v1105 = vmul.f32 %v1097, %v1056
      %v1106 = vmul.f32 %v1098, %v1056
      %v1107 = vsel %vm1066, %v1099, 0.0
      %1108 = vadd.xlane.f32.xlu0 %v1107
      %v1109 = vpop.xlane.xlu0 %1108
      %v1110 = vsel %vm1066, %v1100, 0.0
      %1111 = vadd.xlane.f32.xlu0 %v1110
      %v1112 = vpop.xlane.xlu0 %1111
      %v1113 = vsel %vm1066, %v1101, 0.0
      %1114 = vadd.xlane.f32.xlu0 %v1113
      %v1115 = vpop.xlane.xlu0 %1114
      %v1116 = vsel %vm1066, %v1102, 0.0
      %1117 = vadd.xlane.f32.xlu0 %v1116
      %v1118 = vpop.xlane.xlu0 %1117
      %v1119 = vsel %vm1066, %v1103, 0.0
      %1120 = vadd.xlane.f32.xlu0 %v1119
      %v1121 = vpop.xlane.xlu0 %1120
      %v1122 = vsel %vm1066, %v1104, 0.0
      %1123 = vadd.xlane.f32.xlu0 %v1122
      %v1124 = vpop.xlane.xlu0 %1123
      %v1125 = vsel %vm1066, %v1105, 0.0
      %1126 = vadd.xlane.f32.xlu0 %v1125
      %v1127 = vpop.xlane.xlu0 %1126
      %v1128 = vsel %vm1066, %v1106, 0.0
      %1129 = vadd.xlane.f32.xlu0 %v1128
      %v1130 = vpop.xlane.xlu0 %1129
      %v1131 = vmul.f32 %v1069, 0.25
      %v1132 = vmul.f32 %v1072, 0.25
      %v1133 = vmul.f32 %v1075, 0.25
      %v1134 = vmul.f32 %v1078, 0.25
      %v1135 = vmul.f32 %v1081, 0.25
      %v1136 = vmul.f32 %v1084, 0.25
      %v1137 = vmul.f32 %v1087, 0.25
      %v1138 = vmul.f32 %v1090, 0.25
      %v1139 = vmul.f32 %v1109, 0.25
      %v1140 = vmul.f32 %v1112, 0.25
      %v1141 = vmul.f32 %v1115, 0.25
      %v1142 = vmul.f32 %v1118, 0.25
      %v1143 = vmul.f32 %v1121, 0.25
      %v1144 = vmul.f32 %v1124, 0.25
      %v1145 = vmul.f32 %v1127, 0.25
      %v1146 = vmul.f32 %v1130, 0.25
      %v1147 = vmul.f32 %v1131, %v1131
      %v1148 = vmul.f32 %v1132, %v1132
      %v1149 = vmul.f32 %v1133, %v1133
      %v1150 = vmul.f32 %v1134, %v1134
      %v1151 = vmul.f32 %v1135, %v1135
      %v1152 = vmul.f32 %v1136, %v1136
      %v1153 = vmul.f32 %v1137, %v1137
      %v1154 = vmul.f32 %v1138, %v1138
      %v1155 = vsub.f32 %v1139, %v1147
      %v1156 = vsub.f32 %v1140, %v1148
      %v1157 = vsub.f32 %v1141, %v1149
      %v1158 = vsub.f32 %v1142, %v1150
      %v1159 = vsub.f32 %v1143, %v1151
      %v1160 = vsub.f32 %v1144, %v1152
      %v1161 = vsub.f32 %v1145, %v1153
      %v1162 = vsub.f32 %v1146, %v1154
      %v1163 = vmax.f32 %v1155, 0.0
      %v1164 = vmax.f32 %v1156, 0.0
      %v1165 = vmax.f32 %v1157, 0.0
      %v1166 = vmax.f32 %v1158, 0.0
      %v1167 = vmax.f32 %v1159, 0.0
      %v1168 = vmax.f32 %v1160, 0.0
      %v1169 = vmax.f32 %v1161, 0.0
      %v1170 = vmax.f32 %v1162, 0.0
      %v1171 = vsub.f32 %v1046, %v1131
      %v1172 = vsub.f32 %v1047, %v1132
      %v1173 = vsub.f32 %v1048, %v1133
      %v1174 = vsub.f32 %v1049, %v1134
      %v1175 = vsub.f32 %v1050, %v1135
      %v1176 = vsub.f32 %v1051, %v1136
      %v1177 = vsub.f32 %v1052, %v1137
      %v1178 = vsub.f32 %v1053, %v1138
      %v1179 = vadd.f32 %v1163, 1e-05
      %v1180 = vadd.f32 %v1164, 1e-05
      %v1181 = vadd.f32 %v1165, 1e-05
      %v1182 = vadd.f32 %v1166, 1e-05
      %v1183 = vadd.f32 %v1167, 1e-05
      %v1184 = vadd.f32 %v1168, 1e-05
      %v1185 = vadd.f32 %v1169, 1e-05
      %v1186 = vadd.f32 %v1170, 1e-05
      %v1187 = vrsqrt.pop %v1179
      %v1188 = vmul.f32 %v1187, %v1179
      %v1189 = vmul.f32 %v1188, %v1187
      %v1190 = vmul.f32 0.5, %v1189
      %v1191 = vsub.f32 1.5, %v1190
      %v1192 = vmul.f32 %v1187, %v1191
      %vm1193 = vweird.f32 %v1179
      %vm1194 = vweird.f32 %v1187
      %vm1195 = vmor %vm1193, %vm1194
      %v1196 = vsel %vm1195, %v1187, %v1192
      %v1197 = vrsqrt.pop %v1180
      %v1198 = vmul.f32 %v1197, %v1180
      %v1199 = vmul.f32 %v1198, %v1197
      %v1200 = vmul.f32 0.5, %v1199
      %v1201 = vsub.f32 1.5, %v1200
      %v1202 = vmul.f32 %v1197, %v1201
      %vm1203 = vweird.f32 %v1180
      %vm1204 = vweird.f32 %v1197
      %vm1205 = vmor %vm1203, %vm1204
      %v1206 = vsel %vm1205, %v1197, %v1202
      %v1207 = vrsqrt.pop %v1181
      %v1208 = vmul.f32 %v1207, %v1181
      %v1209 = vmul.f32 %v1208, %v1207
      %v1210 = vmul.f32 0.5, %v1209
      %v1211 = vsub.f32 1.5, %v1210
      %v1212 = vmul.f32 %v1207, %v1211
      %vm1213 = vweird.f32 %v1181
      %vm1214 = vweird.f32 %v1207
      %vm1215 = vmor %vm1213, %vm1214
      %v1216 = vsel %vm1215, %v1207, %v1212
      %v1217 = vrsqrt.pop %v1182
      %v1218 = vmul.f32 %v1217, %v1182
      %v1219 = vmul.f32 %v1218, %v1217
      %v1220 = vmul.f32 0.5, %v1219
      %v1221 = vsub.f32 1.5, %v1220
      %v1222 = vmul.f32 %v1217, %v1221
      %vm1223 = vweird.f32 %v1182
      %vm1224 = vweird.f32 %v1217
      %vm1225 = vmor %vm1223, %vm1224
      %v1226 = vsel %vm1225, %v1217, %v1222
      %v1227 = vrsqrt.pop %v1183
      %v1228 = vmul.f32 %v1227, %v1183
      %v1229 = vmul.f32 %v1228, %v1227
      %v1230 = vmul.f32 0.5, %v1229
      %v1231 = vsub.f32 1.5, %v1230
      %v1232 = vmul.f32 %v1227, %v1231
      %vm1233 = vweird.f32 %v1183
      %vm1234 = vweird.f32 %v1227
      %vm1235 = vmor %vm1233, %vm1234
      %v1236 = vsel %vm1235, %v1227, %v1232
      %v1237 = vrsqrt.pop %v1184
      %v1238 = vmul.f32 %v1237, %v1184
      %v1239 = vmul.f32 %v1238, %v1237
      %v1240 = vmul.f32 0.5, %v1239
      %v1241 = vsub.f32 1.5, %v1240
      %v1242 = vmul.f32 %v1237, %v1241
      %vm1243 = vweird.f32 %v1184
      %vm1244 = vweird.f32 %v1237
      %vm1245 = vmor %vm1243, %vm1244
      %v1246 = vsel %vm1245, %v1237, %v1242
      %v1247 = vrsqrt.pop %v1185
      %v1248 = vmul.f32 %v1247, %v1185
      %v1249 = vmul.f32 %v1248, %v1247
      %v1250 = vmul.f32 0.5, %v1249
      %v1251 = vsub.f32 1.5, %v1250
      %v1252 = vmul.f32 %v1247, %v1251
      %vm1253 = vweird.f32 %v1185
      %vm1254 = vweird.f32 %v1247
      %vm1255 = vmor %vm1253, %vm1254
      %v1256 = vsel %vm1255, %v1247, %v1252
      %v1257 = vrsqrt.pop %v1186
      %v1258 = vmul.f32 %v1257, %v1186
      %v1259 = vmul.f32 %v1258, %v1257
      %v1260 = vmul.f32 0.5, %v1259
      %v1261 = vsub.f32 1.5, %v1260
      %v1262 = vmul.f32 %v1257, %v1261
      %vm1263 = vweird.f32 %v1186
      %vm1264 = vweird.f32 %v1257
      %vm1265 = vmor %vm1263, %vm1264
      %v1266 = vsel %vm1265, %v1257, %v1262
      %v1267 = vmul.f32 %v1171, %v1196
      %v1268 = vmul.f32 %v1172, %v1206
      %v1269 = vmul.f32 %v1173, %v1216
      %v1270 = vmul.f32 %v1174, %v1226
      %v1271 = vmul.f32 %v1175, %v1236
      %v1272 = vmul.f32 %v1176, %v1246
      %v1273 = vmul.f32 %v1177, %v1256
      %v1274 = vmul.f32 %v1178, %v1266
      %v1275 = vmax.f32 %v1267, 0.0
      %v1276 = vmax.f32 %v1268, 0.0
      %v1277 = vmax.f32 %v1269, 0.0
      %v1278 = vmax.f32 %v1270, 0.0
      %v1279 = vmax.f32 %v1271, 0.0
      %v1280 = vmax.f32 %v1272, 0.0
      %v1281 = vmax.f32 %v1273, 0.0
      %v1282 = vmax.f32 %v1274, 0.0
      %1283 = vst.msk [vmem:[%s197] sm:$0xff] %vm1066, %v1275
      %1284 = vst.msk [vmem:[%s197 + $0x8] sm:$0xff] %vm1066, %v1276
      %1285 = vst.msk [vmem:[%s197 + $0x10] sm:$0xff] %vm1066, %v1277
      %1286 = vst.msk [vmem:[%s197 + $0x18] sm:$0xff] %vm1066, %v1278
      %1287 = vst.msk [vmem:[%s197 + $0x20] sm:$0xff] %vm1066, %v1279
      %1288 = vst.msk [vmem:[%s197 + $0x28] sm:$0xff] %vm1066, %v1280
      %1289 = vst.msk [vmem:[%s197 + $0x30] sm:$0xff] %vm1066, %v1281
      %1290 = vst.msk [vmem:[%s197 + $0x38] sm:$0xff] %vm1066, %v1282
      %p1291 = scmp.lt.s32.totalorder %s15, 1
      %s1292 = scalar_select %p1291, %s15, 1
      %s1293 = smul.addr %s1292, 8
      %s1294 = smul.addr %s1293, 8
      %s1295 = scalar_lea.vmem %s4, %s1294
      // Predicated region
      $region37: #{encoder_forward.9} parent=35 // pred_check
        %p1296 = pneg %p122
      $region38: #{encoder_forward.9} parent=35 // pred_check_branch
        %1298 = sbr.rel (%p1296) target = $region40
      $region39: #{encoder_forward.9} parent=35 // pred_region
        _
      $region40: #{encoder_forward.9} parent=35 // pred_fallthru
        _
    $region36: #{encoder_forward.9} parent=5 // pred_fallthru
      _
    %p1299 = scmp.le.s32.totalorder 2, %s10
    // Predicated region
    $region41: #{encoder_forward.9} parent=5 // pred_check
      %p1300 = pneg %p1299
    $region42: #{encoder_forward.9} parent=5 // pred_check_branch
      %1302 = sbr.rel (%p1300) target = $region44
    $region43: #{encoder_forward.9} parent=5 // pred_region
      %s1303 = ssub.s32 %s10, 2
      // Predicated region
      $region45: #{encoder_forward.9} parent=43 // pred_check
        %p1304 = pneg %p128
      $region46: #{encoder_forward.9} parent=43 // pred_check_branch
        %1306 = sbr.rel (%p1304) target = $region48
      $region47: #{encoder_forward.9} parent=43 // pred_region
        %p1307 = scmp.lt.s32.totalorder %s16, 1
        %s1308 = scalar_select %p1307, %s16, 1
        %s1309 = smul.addr %s1308, 8
        %s1310 = smul.addr %s1309, 8
        %s1311 = scalar_lea.vmem %s4, %s1310
      $region48: #{encoder_forward.9} parent=43 // pred_fallthru
        _
    $region44: #{encoder_forward.9} parent=5 // pred_fallthru
      _
  $region6: #{encoder_forward.9} parent=0 // loop_footer
    %s14 = sadd.s32 1, %s10
  $region7: #{encoder_forward.9} parent=0 // loop_footer_branch
    %9 = sbr.rel target = $region3
  $region8: #{encoder_forward.9} parent=0 // loop_exit
    _

</llo_original>
